<compile_context>
chip_gen: v7x
topology: tpu7x:2x2x1
jax: 0.10.0
libtpu: 0.0.40
codegen_flags: <defaults>
</compile_context>

<pallas_src>
import math
import jax
import jax.numpy as jnp
from jax.experimental import pallas as pl
from jax.experimental.pallas import tpu as pltpu


def _pick_tile(n, cap, quantum):
    """Largest multiple of `quantum` that divides n and is <= cap (fallback n)."""
    t = (min(n, cap) // quantum) * quantum
    while t >= quantum:
        if n % t == 0:
            return t
        t -= quantum
    return n


def _num_tensorcores():
    """TensorCores per chip that share the 'parallel' grid axis (v7x has 2)."""
    try:
        kind = jax.devices()[0].device_kind.lower()
    except Exception:
        return 1
    return 2 if ("v7" in kind or "tpu7" in kind) else 1


def _lstm_tile(B):
    """Largest batch tile (grid is a serial loop on one TC), but keep >= n_tc
    grid steps so v7x's second TensorCore gets work; cap per-step rows at 256."""
    if B % 8 != 0:
        return B                                   # odd batch: single tile
    tb = _pick_tile(B, 256, 8)                     # largest 8-multiple divisor
    n_tc = _num_tensorcores()
    while n_tc > 1 and B // tb < n_tc and (tb // 2) % 8 == 0 and B % (tb // 2) == 0:
        tb //= 2
    return tb


# ----------------------------------------------------------------------------
# Fused LSTM: one grid step per batch tile, in-kernel time loop.
# Gate layout (PyTorch order): [i, f, g, o], each H wide (lane-aligned for H%128==0).
# ----------------------------------------------------------------------------
def _lstm_recurrence(x_ref, wih_ref, whh_ref, b_ref, h0_ref, c0_ref, gx_sc, hs_sc):
    TB, T, D = x_ref.shape
    H = h0_ref.shape[-1]
    aligned = (TB % 8 == 0)

    # One XLU transpose (off the recurrent critical path): batch-major x ->
    # time-major, then ONE (T*TB, D) @ (D, 4H) bf16 MXU matmul for all steps.
    # NOTE: gx_sc is f32; for very long T on v7x (64 MiB VMEM) store it bf16
    # or tile the time loop.
    x_tm = jnp.swapaxes(x_ref[...], 0, 1).reshape(T * TB, D).astype(jnp.bfloat16)
    gx_sc[...] = (jnp.dot(x_tm, wih_ref[...], preferred_element_type=jnp.float32)
                  + b_ref[...])                      # b = b_ih + b_hh (pre-summed)

    def step(t, carry):
        h, c = carry
        off = pl.multiple_of(t * TB, 8) if aligned else t * TB
        # contiguous, sublane-aligned read of this step's pre-projected gates
        g = (gx_sc[pl.ds(off, TB), :]
             + jnp.dot(h.astype(jnp.bfloat16), whh_ref[...],
                       preferred_element_type=jnp.float32))        # (TB, 4H) f32
        i_g = jax.nn.sigmoid(g[:, 0 * H:1 * H])
        f_g = jax.nn.sigmoid(g[:, 1 * H:2 * H])
        g_g = jnp.tanh(g[:, 2 * H:3 * H])
        o_g = jax.nn.sigmoid(g[:, 3 * H:4 * H])
        c_new = f_g * c + i_g * g_g
        h_new = o_g * jnp.tanh(c_new)
        if hs_sc is not None:
            hs_sc[pl.ds(off, TB), :] = h_new         # aligned unmasked dense store
        return h_new, c_new

    return jax.lax.fori_loop(0, T, step, (h0_ref[...], c0_ref[...]),
                             unroll=min(T, 8))


def lstm_enc_kernel(x_ref, wih_ref, whh_ref, b_ref, h0_ref, c0_ref,
                    hfin_ref, cfin_ref, xmean_ref, gx_sc):
    """Encoder variant: no hseq output (it is discarded by the model)."""
    h_fin, c_fin = _lstm_recurrence(x_ref, wih_ref, whh_ref, b_ref,
                                    h0_ref, c0_ref, gx_sc, None)
    hfin_ref[...] = h_fin
    cfin_ref[...] = c_fin
    # fused mean_t(enc_input) for sim_loss (saves one HBM re-read of enc_input)
    xmean_ref[...] = jnp.mean(x_ref[...], axis=1)


def lstm_dec_kernel(x_ref, wih_ref, whh_ref, b_ref, h0_ref, c0_ref,
                    hseq_ref, hfin_ref, cfin_ref, hmean_ref, gx_sc, hs_sc):
    TB, T, _ = x_ref.shape
    H = h0_ref.shape[-1]
    h_fin, c_fin = _lstm_recurrence(x_ref, wih_ref, whh_ref, b_ref,
                                    h0_ref, c0_ref, gx_sc, hs_sc)
    hfin_ref[...] = h_fin
    cfin_ref[...] = c_fin
    hs_tm = hs_sc[...].reshape(T, TB, H)
    # single in-VMEM transpose back to batch-major (instead of TB strided reads)
    hseq_ref[...] = jnp.swapaxes(hs_tm, 0, 1)
    # fused mean_t(h) for sim_loss (saves one HBM re-read of de_output)
    hmean_ref[...] = jnp.mean(hs_tm, axis=0)


def _lstm_common_specs(tb, T, D, H):
    in_specs = [
        pl.BlockSpec((tb, T, D), lambda i: (i, 0, 0)),
        pl.BlockSpec((D, 4 * H), lambda i: (0, 0)),
        pl.BlockSpec((H, 4 * H), lambda i: (0, 0)),
        pl.BlockSpec((1, 4 * H), lambda i: (0, 0)),
        pl.BlockSpec((tb, H), lambda i: (i, 0)),
        pl.BlockSpec((tb, H), lambda i: (i, 0)),
    ]
    return in_specs


def lstm_run_enc(x, w_ih, w_hh, b, h0, c0):
    """x: (B, T, D) f32 batch-major.  Returns (h_T, c_T, mean_t(x))."""
    B, T, D = x.shape
    H = h0.shape[-1]
    tb = _lstm_tile(B)
    return pl.pallas_call(
        lstm_enc_kernel,
        out_shape=(jax.ShapeDtypeStruct((B, H), jnp.float32),
                   jax.ShapeDtypeStruct((B, H), jnp.float32),
                   jax.ShapeDtypeStruct((B, D), jnp.float32)),
        grid_spec=pltpu.PrefetchScalarGridSpec(
            num_scalar_prefetch=0,
            grid=(B // tb,),
            in_specs=_lstm_common_specs(tb, T, D, H),
            out_specs=[
                pl.BlockSpec((tb, H), lambda i: (i, 0)),
                pl.BlockSpec((tb, H), lambda i: (i, 0)),
                pl.BlockSpec((tb, D), lambda i: (i, 0)),
            ],
            scratch_shapes=[pltpu.VMEM((tb * T, 4 * H), jnp.float32)],
        ),
        compiler_params=pltpu.CompilerParams(
            dimension_semantics=("parallel",),
            vmem_limit_bytes=32 * 1024 * 1024),
    )(x, w_ih, w_hh, b, h0, c0)


def lstm_run_dec(x, w_ih, w_hh, b, h0, c0):
    """Returns (hseq (B,T,H), h_T, c_T, mean_t(h))."""
    B, T, D = x.shape
    H = h0.shape[-1]
    tb = _lstm_tile(B)
    return pl.pallas_call(
        lstm_dec_kernel,
        out_shape=(jax.ShapeDtypeStruct((B, T, H), jnp.float32),
                   jax.ShapeDtypeStruct((B, H), jnp.float32),
                   jax.ShapeDtypeStruct((B, H), jnp.float32),
                   jax.ShapeDtypeStruct((B, H), jnp.float32)),
        grid_spec=pltpu.PrefetchScalarGridSpec(
            num_scalar_prefetch=0,
            grid=(B // tb,),
            in_specs=_lstm_common_specs(tb, T, D, H),
            out_specs=[
                pl.BlockSpec((tb, T, H), lambda i: (i, 0, 0)),
                pl.BlockSpec((tb, H), lambda i: (i, 0)),
                pl.BlockSpec((tb, H), lambda i: (i, 0)),
                pl.BlockSpec((tb, H), lambda i: (i, 0)),
            ],
            scratch_shapes=[
                pltpu.VMEM((tb * T, 4 * H), jnp.float32),   # hoisted gate projection
                pltpu.VMEM((tb * T, H), jnp.float32),       # time-major hidden history
            ],
        ),
        compiler_params=pltpu.CompilerParams(
            dimension_semantics=("parallel",),
            vmem_limit_bytes=32 * 1024 * 1024),
    )(x, w_ih, w_hh, b, h0, c0)


# ----------------------------------------------------------------------------
# Tiled FC (+ fused cross-entropy): logits written to HBM once, never re-read.
# grid = (M tiles [parallel], V tiles [arbitrary, innermost]); per-row online
# max / logsumexp / target-logit accumulate in VMEM scratch across V tiles.
# ----------------------------------------------------------------------------
def fc_ce_kernel(x_ref, w_ref, b_ref, tgt_ref, logits_ref, nll_ref,
                 xb_sc, m_sc, l_sc, tl_sc):
    j = pl.program_id(1)
    nj = pl.num_programs(1)
    tn = logits_ref.shape[-1]

    @pl.when(j == 0)
    def _():
        # x stays VMEM-resident across the vocab sweep; cast to bf16 ONCE.
        xb_sc[...] = x_ref[...].astype(jnp.bfloat16)
        m_sc[...] = jnp.full_like(m_sc, -jnp.inf)
        l_sc[...] = jnp.zeros_like(l_sc)
        tl_sc[...] = jnp.zeros_like(tl_sc)

    logits = (jnp.dot(xb_sc[...], w_ref[...], preferred_element_type=jnp.float32)
              + b_ref[...])
    logits_ref[...] = logits                               # lane-dense f32 tile out

    # online logsumexp across vocab tiles
    m_prev = m_sc[...]
    m_new = jnp.maximum(m_prev, jnp.max(logits, axis=-1, keepdims=True))
    l_sc[...] = (l_sc[...] * jnp.exp(m_prev - m_new)
                 + jnp.sum(jnp.exp(logits - m_new), axis=-1, keepdims=True))
    m_sc[...] = m_new

    # target-logit gather for the columns owned by this vocab tile
    # NOTE: targets are assumed in [0, V) (PyTorch CrossEntropyLoss default,
    # no ignore_index); out-of-range targets would silently yield tl = 0.
    cols = jax.lax.broadcasted_iota(jnp.int32, logits.shape, 1) + j * tn
    tl_sc[...] += jnp.sum(jnp.where(cols == tgt_ref[...], logits, 0.0),
                          axis=-1, keepdims=True)

    @pl.when(j == nj - 1)
    def _():
        nll_ref[...] = (m_sc[...] + jnp.log(l_sc[...])) - tl_sc[...]


def fc_ce_run(x2d, w, b2d, tgt2d):
    M, H = x2d.shape
    V = w.shape[1]
    tm = _pick_tile(M, 256, 128) if M % 128 == 0 else _pick_tile(M, 256, 8)
    tn = _pick_tile(V, 1024, 256) if V % 256 == 0 else _pick_tile(V, 1024, 128)
    grid = (M // tm, V // tn)
    return pl.pallas_call(
        fc_ce_kernel,
        out_shape=(jax.ShapeDtypeStruct((M, V), jnp.float32),
                   jax.ShapeDtypeStruct((M, 1), jnp.float32)),
        grid_spec=pltpu.PrefetchScalarGridSpec(
            num_scalar_prefetch=0,
            grid=grid,
            in_specs=[
                pl.BlockSpec((tm, H), lambda i, j: (i, 0)),
                pl.BlockSpec((H, tn), lambda i, j: (0, j)),
                pl.BlockSpec((1, tn), lambda i, j: (0, j)),
                pl.BlockSpec((tm, 1), lambda i, j: (i, 0)),
            ],
            out_specs=[
                pl.BlockSpec((tm, tn), lambda i, j: (i, j)),
                pl.BlockSpec((tm, 1), lambda i, j: (i, 0)),
            ],
            scratch_shapes=[pltpu.VMEM((tm, H), jnp.bfloat16),
                            pltpu.VMEM((tm, 1), jnp.float32),
                            pltpu.VMEM((tm, 1), jnp.float32),
                            pltpu.VMEM((tm, 1), jnp.float32)],
        ),
        compiler_params=pltpu.CompilerParams(
            dimension_semantics=("parallel", "arbitrary"),
            vmem_limit_bytes=32 * 1024 * 1024),          # v7x-safe (64 MiB physical)
    )(x2d, w, b2d, tgt2d)


# ----------------------------------------------------------------------------
# sim_loss = exp(-mean(cosine_similarity(mean_t(enc_input), mean_t(de_output))))
# The time-means are produced by the LSTM kernels; this only does (B,D)x(B,H).
# ----------------------------------------------------------------------------
def sim_kernel(a_ref, d_ref, sim_ref):
    a = a_ref[...]                                      # (B, D) = mean_t(enc_input)
    d = d_ref[...]                                      # (B, H) = mean_t(de_output)
    eps = 1e-8
    na = jnp.maximum(jnp.sqrt(jnp.sum(a * a, axis=-1, keepdims=True)), eps)
    nd = jnp.maximum(jnp.sqrt(jnp.sum(d * d, axis=-1, keepdims=True)), eps)
    cos = jnp.sum(a * d, axis=-1, keepdims=True) / (na * nd)       # (B, 1)
    sim_ref[...] = jnp.exp(-jnp.mean(cos, axis=0, keepdims=True))  # (1, 1)


def sim_run(enc_mean, dec_mean):
    return pl.pallas_call(
        sim_kernel,
        out_shape=jax.ShapeDtypeStruct((1, 1), jnp.float32),
        in_specs=[pl.BlockSpec(memory_space=pltpu.MemorySpace.VMEM)] * 2,
        out_specs=pl.BlockSpec(memory_space=pltpu.MemorySpace.VMEM),
    )(enc_mean, dec_mean)


# ----------------------------------------------------------------------------
# Seq2seq forward (glue in plain JAX; hot paths above in Pallas)
# ----------------------------------------------------------------------------
def seq2seq_forward(params, enc_input, dec_input, dec_output):
    B, Te, D = enc_input.shape
    _, Td, _ = dec_input.shape
    H = params["enc_whh"].shape[0]
    V = params["fc_w"].shape[1]
    # cosine_similarity(mean_t(enc_input), mean_t(de_output)) needs equal dims
    assert D == H, "in_features must equal hidden_size for sim_loss"

    zeros = jnp.zeros((B, H), jnp.float32)
    enc_b = params["enc_b_ih"] + params["enc_b_hh"]
    dec_b = params["dec_b_ih"] + params["dec_b_hh"]

    ht, ct, enc_mean = lstm_run_enc(enc_input, params["enc_wih"],
                                    params["enc_whh"], enc_b, zeros, zeros)
    de_output, _, _, dec_mean = lstm_run_dec(dec_input, params["dec_wih"],
                                             params["dec_whh"], dec_b, ht, ct)

    logits2d, nll = fc_ce_run(de_output.reshape(B * Td, H),
                              params["fc_w"], params["fc_b"],
                              dec_output.reshape(B * Td, 1).astype(jnp.int32))
    output = logits2d.reshape(B, Td, V)
    # per-example CE mean averaged over batch == global mean (no padding/ignore)
    enc_dec_loss = jnp.mean(nll)
    sim_loss = sim_run(enc_mean, dec_mean)[0, 0]
    return output, de_output, enc_dec_loss, sim_loss


def init_params(key, in_features, hidden, ntoken, ninp):
    ks = jax.random.split(key, 11)
    s = 1.0 / math.sqrt(hidden)
    u = lambda k, shape: jax.random.uniform(k, shape, jnp.float32, -s, s)
    bf = jnp.bfloat16
    return dict(
        enc_wih=u(ks[0], (in_features, 4 * hidden)).astype(bf),
        enc_whh=u(ks[1], (hidden, 4 * hidden)).astype(bf),
        enc_b_ih=u(ks[2], (1, 4 * hidden)),
        enc_b_hh=u(ks[3], (1, 4 * hidden)),
        dec_wih=u(ks[4], (in_features, 4 * hidden)).astype(bf),
        dec_whh=u(ks[5], (hidden, 4 * hidden)).astype(bf),
        dec_b_ih=u(ks[6], (1, 4 * hidden)),
        dec_b_hh=u(ks[7], (1, 4 * hidden)),
        fc_w=u(ks[8], (hidden, ntoken)).astype(bf),
        fc_b=u(ks[9], (1, ntoken)),
        # TODO(synk): nn.Embedding is defined in the module but unused in forward();
        # a lookup would just be jnp.take(params["embedding"], ids, axis=0).
        embedding=jax.random.normal(ks[10], (ntoken, ninp), jnp.float32),
    )


# ----------------------------------------------------------------------------
# Pure-JAX reference (same bf16 matmul inputs / f32 accumulation) for checking
# ----------------------------------------------------------------------------
def _ref_forward(params, enc_input, dec_input, dec_output):
    B, Te, D = enc_input.shape
    _, Td, _ = dec_input.shape
    H = params["enc_whh"].shape[0]
    V = params["fc_w"].shape[1]

    def lstm_ref(x, wih, whh, b, h0, c0):
        def step(carry, x_t):
            h, c = carry
            g = (jnp.dot(x_t.astype(jnp.bfloat16), wih, preferred_element_type=jnp.float32)
                 + jnp.dot(h.astype(jnp.bfloat16), whh, preferred_element_type=jnp.float32)
                 + b)
            i_g = jax.nn.sigmoid(g[:, 0:H])
            f_g = jax.nn.sigmoid(g[:, H:2 * H])
            g_g = jnp.tanh(g[:, 2 * H:3 * H])
            o_g = jax.nn.sigmoid(g[:, 3 * H:4 * H])
            c = f_g * c + i_g * g_g
            h = o_g * jnp.tanh(c)
            return (h, c), h
        (hT, cT), hs = jax.lax.scan(step, (h0, c0), jnp.transpose(x, (1, 0, 2)))
        return jnp.transpose(hs, (1, 0, 2)), hT, cT

    zeros = jnp.zeros((B, H), jnp.float32)
    _, ht, ct = lstm_ref(enc_input, params["enc_wih"], params["enc_whh"],
                         params["enc_b_ih"] + params["enc_b_hh"], zeros, zeros)
    de_out, _, _ = lstm_ref(dec_input, params["dec_wih"], params["dec_whh"],
                            params["dec_b_ih"] + params["dec_b_hh"], ht, ct)
    logits = (jnp.dot(de_out.reshape(B * Td, H).astype(jnp.bfloat16), params["fc_w"],
                      preferred_element_type=jnp.float32) + params["fc_b"])
    logp = jax.nn.log_softmax(logits, axis=-1)
    tgt = dec_output.reshape(B * Td).astype(jnp.int32)
    nll = -jnp.take_along_axis(logp, tgt[:, None], axis=-1)[:, 0]
    ce = jnp.mean(nll)
    a = jnp.mean(enc_input, axis=1)
    d = jnp.mean(de_out, axis=1)
    eps = 1e-8
    na = jnp.maximum(jnp.linalg.norm(a, axis=-1), eps)
    nd = jnp.maximum(jnp.linalg.norm(d, axis=-1), eps)
    cos = jnp.sum(a * d, axis=-1) / (na * nd)
    sim = jnp.exp(-jnp.mean(cos))
    return logits.reshape(B, Td, V), de_out, ce, sim


if __name__ == "__main__":
    B, Te, Td = 16, 8, 8
    D = H = 128      # cosine_similarity(avg_enc, avg_dec) requires in_features == hidden_size
    V = 2048         # ntoken (2 vocab tiles -> exercises the fused online-CE path)
    ninp = 64

    key = jax.random.PRNGKey(0)
    kp, k1, k2, k3 = jax.random.split(key, 4)
    params = init_params(kp, D, H, V, ninp)
    enc_input = jax.random.normal(k1, (B, Te, D), jnp.float32)
    dec_input = jax.random.normal(k2, (B, Td, D), jnp.float32)
    dec_output = jax.random.randint(k3, (B, Td), 0, V, jnp.int32)

    fwd = jax.jit(seq2seq_forward)
    output, de_out, enc_dec_loss, sim_loss = fwd(params, enc_input, dec_input, dec_output)
    jax.block_until_ready((output, de_out, enc_dec_loss, sim_loss))

    assert output.shape == (B, Td, V)
    assert de_out.shape == (B, Td, H)
    assert enc_dec_loss.shape == () and sim_loss.shape == ()

    # correctness check against a pure-JAX reference (same bf16/f32 mixed precision)
    r_out, r_de, r_ce, r_sim = jax.jit(_ref_forward)(params, enc_input, dec_input, dec_output)
    assert jnp.allclose(de_out, r_de, atol=5e-2, rtol=5e-2)
    assert jnp.allclose(output, r_out, atol=5e-2, rtol=5e-2)
    assert jnp.allclose(enc_dec_loss, r_ce, atol=5e-2, rtol=5e-2)
    assert jnp.allclose(sim_loss, r_sim, atol=5e-2, rtol=5e-2)

    print("KERNEL_OK")
</pallas_src>

<mosaic_0001>
module attributes {stable_mosaic.version = 11 : i64} {
  func.func @lstm_enc_kernel(%arg0: i32, %arg1: memref<16x8x128xf32, #tpu.memory_space<vmem>>, %arg2: memref<128x512xbf16, #tpu.memory_space<vmem>>, %arg3: memref<128x512xbf16, #tpu.memory_space<vmem>>, %arg4: memref<1x512xf32, #tpu.memory_space<vmem>>, %arg5: memref<16x128xf32, #tpu.memory_space<vmem>>, %arg6: memref<16x128xf32, #tpu.memory_space<vmem>>, %arg7: memref<16x128xf32, #tpu.memory_space<vmem>>, %arg8: memref<16x128xf32, #tpu.memory_space<vmem>>, %arg9: memref<16x128xf32, #tpu.memory_space<vmem>>, %arg10: memref<128x512xf32, #tpu.memory_space<vmem>>) attributes {dimension_semantics = [#tpu.dimension_semantics<parallel>], iteration_bounds = array<i64: 1>, scalar_prefetch = 0 : i64, scratch_operands = 1 : i64, tpu.core_type = #tpu.core_type<tc>, window_params = [{transform_indices = @transform_0, window_bounds = array<i64: 16, 8, 128>}, {pipeline_mode = #tpu.pipeline_mode<synchronous>, transform_indices = @transform_1, window_bounds = array<i64: 128, 512>}, {pipeline_mode = #tpu.pipeline_mode<synchronous>, transform_indices = @transform_2, window_bounds = array<i64: 128, 512>}, {pipeline_mode = #tpu.pipeline_mode<synchronous>, transform_indices = @transform_3, window_bounds = array<i64: 1, 512>}, {transform_indices = @transform_4, window_bounds = array<i64: 16, 128>}, {transform_indices = @transform_5, window_bounds = array<i64: 16, 128>}, {transform_indices = @transform_6, window_bounds = array<i64: 16, 128>}, {transform_indices = @transform_7, window_bounds = array<i64: 16, 128>}, {transform_indices = @transform_8, window_bounds = array<i64: 16, 128>}]} {
    %c0 = arith.constant 0 : index
    %c0_0 = arith.constant 0 : index
    %c0_1 = arith.constant 0 : index
    %0 = vector.load %arg1[%c0, %c0_0, %c0_1] : memref<16x8x128xf32, #tpu.memory_space<vmem>>, vector<16x8x128xf32>
    %1 = tpu.transpose %0, [1, 0, 2] : vector<16x8x128xf32> -> vector<8x16x128xf32>
    %2 = vector.shape_cast %1 : vector<8x16x128xf32> to vector<128x128xf32>
    %3 = arith.truncf %2 : vector<128x128xf32> to vector<128x128xbf16>
    %c0_2 = arith.constant 0 : index
    %c0_3 = arith.constant 0 : index
    %4 = vector.load %arg2[%c0_2, %c0_3] : memref<128x512xbf16, #tpu.memory_space<vmem>>, vector<128x512xbf16>
    %cst = arith.constant dense<0.000000e+00> : vector<128x512xf32>
    %5 = tpu.matmul %3, %4, %cst {dimension_numbers = #tpu.dot_dimension_numbers<[1], [0], [0], [1], [0, 0, 1, 1], [], []>} : vector<128x128xbf16>, vector<128x512xbf16>, vector<128x512xf32> -> vector<128x512xf32>
    %c0_4 = arith.constant 0 : index
    %c0_5 = arith.constant 0 : index
    %6 = vector.load %arg4[%c0_4, %c0_5] : memref<1x512xf32, #tpu.memory_space<vmem>>, vector<1x512xf32>
    %7 = vector.broadcast %6 : vector<1x512xf32> to vector<128x512xf32>
    %8 = arith.addf %5, %7 : vector<128x512xf32>
    %c0_6 = arith.constant 0 : index
    %c0_7 = arith.constant 0 : index
    %9 = vector.load %arg10[%c0_6, %c0_7] : memref<128x512xf32, #tpu.memory_space<vmem>>, vector<128x512xf32>
    tpu.vector_store %arg10[%c0_6, %c0_7], %8 {strides = array<i32>} : memref<128x512xf32, #tpu.memory_space<vmem>>, vector<128x512xf32>,
    %c0_8 = arith.constant 0 : index
    %c0_9 = arith.constant 0 : index
    %10 = vector.load %arg5[%c0_8, %c0_9] : memref<16x128xf32, #tpu.memory_space<vmem>>, vector<16x128xf32>
    %c0_10 = arith.constant 0 : index
    %c0_11 = arith.constant 0 : index
    %11 = vector.load %arg6[%c0_10, %c0_11] : memref<16x128xf32, #tpu.memory_space<vmem>>, vector<16x128xf32>
    %c0_i32 = arith.constant 0 : i32
    %c16_i32 = arith.constant 16 : i32
    %12 = arith.muli %c0_i32, %c16_i32 : i32
    %13 = tpu.assume_multiple %12, 8 : i32
    %14 = arith.index_cast %13 : i32 to index
    %c0_12 = arith.constant 0 : index
    %15 = vector.load %arg10[%14, %c0_12] : memref<128x512xf32, #tpu.memory_space<vmem>>, vector<16x512xf32>
    %16 = arith.truncf %10 : vector<16x128xf32> to vector<16x128xbf16>
    %c0_13 = arith.constant 0 : index
    %c0_14 = arith.constant 0 : index
    %17 = vector.load %arg3[%c0_13, %c0_14] : memref<128x512xbf16, #tpu.memory_space<vmem>>, vector<128x512xbf16>
    %cst_15 = arith.constant dense<0.000000e+00> : vector<16x512xf32>
    %18 = tpu.matmul %16, %17, %cst_15 {dimension_numbers = #tpu.dot_dimension_numbers<[1], [0], [0], [1], [0, 0, 1, 1], [], []>} : vector<16x128xbf16>, vector<128x512xbf16>, vector<16x512xf32> -> vector<16x512xf32>
    %19 = arith.addf %15, %18 : vector<16x512xf32>
    %20 = vector.extract_strided_slice %19 {offsets = [0, 0], sizes = [16, 128], strides = [1, 1]} : vector<16x512xf32> to vector<16x128xf32>
    %21 = arith.negf %20 : vector<16x128xf32>
    %22 = math.exp %21 : vector<16x128xf32>
    %cst_16 = arith.constant 1.000000e+00 : f32
    %23 = vector.broadcast %cst_16 : f32 to vector<16x128xf32>
    %24 = arith.addf %23, %22 : vector<16x128xf32>
    %25 = arith.divf %23, %24 : vector<16x128xf32>
    %26 = vector.extract_strided_slice %19 {offsets = [0, 128], sizes = [16, 128], strides = [1, 1]} : vector<16x512xf32> to vector<16x128xf32>
    %27 = arith.negf %26 : vector<16x128xf32>
    %28 = math.exp %27 : vector<16x128xf32>
    %cst_17 = arith.constant 1.000000e+00 : f32
    %29 = vector.broadcast %cst_17 : f32 to vector<16x128xf32>
    %30 = arith.addf %29, %28 : vector<16x128xf32>
    %31 = arith.divf %29, %30 : vector<16x128xf32>
    %32 = vector.extract_strided_slice %19 {offsets = [0, 256], sizes = [16, 128], strides = [1, 1]} : vector<16x512xf32> to vector<16x128xf32>
    %33 = math.tanh %32 : vector<16x128xf32>
    %34 = vector.extract_strided_slice %19 {offsets = [0, 384], sizes = [16, 128], strides = [1, 1]} : vector<16x512xf32> to vector<16x128xf32>
    %35 = arith.negf %34 : vector<16x128xf32>
    %36 = math.exp %35 : vector<16x128xf32>
    %cst_18 = arith.constant 1.000000e+00 : f32
    %37 = vector.broadcast %cst_18 : f32 to vector<16x128xf32>
    %38 = arith.addf %37, %36 : vector<16x128xf32>
    %39 = arith.divf %37, %38 : vector<16x128xf32>
    %40 = arith.mulf %31, %11 : vector<16x128xf32>
    %41 = arith.mulf %25, %33 : vector<16x128xf32>
    %42 = arith.addf %40, %41 : vector<16x128xf32>
    %43 = math.tanh %42 : vector<16x128xf32>
    %44 = arith.mulf %39, %43 : vector<16x128xf32>
    %c1_i32 = arith.constant 1 : i32
    %c16_i32_19 = arith.constant 16 : i32
    %45 = arith.muli %c1_i32, %c16_i32_19 : i32
    %46 = tpu.assume_multiple %45, 8 : i32
    %47 = arith.index_cast %46 : i32 to index
    %c0_20 = arith.constant 0 : index
    %48 = vector.load %arg10[%47, %c0_20] : memref<128x512xf32, #tpu.memory_space<vmem>>, vector<16x512xf32>
    %49 = arith.truncf %44 : vector<16x128xf32> to vector<16x128xbf16>
    %c0_21 = arith.constant 0 : index
    %c0_22 = arith.constant 0 : index
    %50 = vector.load %arg3[%c0_21, %c0_22] : memref<128x512xbf16, #tpu.memory_space<vmem>>, vector<128x512xbf16>
    %cst_23 = arith.constant dense<0.000000e+00> : vector<16x512xf32>
    %51 = tpu.matmul %49, %50, %cst_23 {dimension_numbers = #tpu.dot_dimension_numbers<[1], [0], [0], [1], [0, 0, 1, 1], [], []>} : vector<16x128xbf16>, vector<128x512xbf16>, vector<16x512xf32> -> vector<16x512xf32>
    %52 = arith.addf %48, %51 : vector<16x512xf32>
    %53 = vector.extract_strided_slice %52 {offsets = [0, 0], sizes = [16, 128], strides = [1, 1]} : vector<16x512xf32> to vector<16x128xf32>
    %54 = arith.negf %53 : vector<16x128xf32>
    %55 = math.exp %54 : vector<16x128xf32>
    %cst_24 = arith.constant 1.000000e+00 : f32
    %56 = vector.broadcast %cst_24 : f32 to vector<16x128xf32>
    %57 = arith.addf %56, %55 : vector<16x128xf32>
    %58 = arith.divf %56, %57 : vector<16x128xf32>
    %59 = vector.extract_strided_slice %52 {offsets = [0, 128], sizes = [16, 128], strides = [1, 1]} : vector<16x512xf32> to vector<16x128xf32>
    %60 = arith.negf %59 : vector<16x128xf32>
    %61 = math.exp %60 : vector<16x128xf32>
    %cst_25 = arith.constant 1.000000e+00 : f32
    %62 = vector.broadcast %cst_25 : f32 to vector<16x128xf32>
    %63 = arith.addf %62, %61 : vector<16x128xf32>
    %64 = arith.divf %62, %63 : vector<16x128xf32>
    %65 = vector.extract_strided_slice %52 {offsets = [0, 256], sizes = [16, 128], strides = [1, 1]} : vector<16x512xf32> to vector<16x128xf32>
    %66 = math.tanh %65 : vector<16x128xf32>
    %67 = vector.extract_strided_slice %52 {offsets = [0, 384], sizes = [16, 128], strides = [1, 1]} : vector<16x512xf32> to vector<16x128xf32>
    %68 = arith.negf %67 : vector<16x128xf32>
    %69 = math.exp %68 : vector<16x128xf32>
    %cst_26 = arith.constant 1.000000e+00 : f32
    %70 = vector.broadcast %cst_26 : f32 to vector<16x128xf32>
    %71 = arith.addf %70, %69 : vector<16x128xf32>
    %72 = arith.divf %70, %71 : vector<16x128xf32>
    %73 = arith.mulf %64, %42 : vector<16x128xf32>
    %74 = arith.mulf %58, %66 : vector<16x128xf32>
    %75 = arith.addf %73, %74 : vector<16x128xf32>
    %76 = math.tanh %75 : vector<16x128xf32>
    %77 = arith.mulf %72, %76 : vector<16x128xf32>
    %c2_i32 = arith.constant 2 : i32
    %c16_i32_27 = arith.constant 16 : i32
    %78 = arith.muli %c2_i32, %c16_i32_27 : i32
    %79 = tpu.assume_multiple %78, 8 : i32
    %80 = arith.index_cast %79 : i32 to index
    %c0_28 = arith.constant 0 : index
    %81 = vector.load %arg10[%80, %c0_28] : memref<128x512xf32, #tpu.memory_space<vmem>>, vector<16x512xf32>
    %82 = arith.truncf %77 : vector<16x128xf32> to vector<16x128xbf16>
    %c0_29 = arith.constant 0 : index
    %c0_30 = arith.constant 0 : index
    %83 = vector.load %arg3[%c0_29, %c0_30] : memref<128x512xbf16, #tpu.memory_space<vmem>>, vector<128x512xbf16>
    %cst_31 = arith.constant dense<0.000000e+00> : vector<16x512xf32>
    %84 = tpu.matmul %82, %83, %cst_31 {dimension_numbers = #tpu.dot_dimension_numbers<[1], [0], [0], [1], [0, 0, 1, 1], [], []>} : vector<16x128xbf16>, vector<128x512xbf16>, vector<16x512xf32> -> vector<16x512xf32>
    %85 = arith.addf %81, %84 : vector<16x512xf32>
    %86 = vector.extract_strided_slice %85 {offsets = [0, 0], sizes = [16, 128], strides = [1, 1]} : vector<16x512xf32> to vector<16x128xf32>
    %87 = arith.negf %86 : vector<16x128xf32>
    %88 = math.exp %87 : vector<16x128xf32>
    %cst_32 = arith.constant 1.000000e+00 : f32
    %89 = vector.broadcast %cst_32 : f32 to vector<16x128xf32>
    %90 = arith.addf %89, %88 : vector<16x128xf32>
    %91 = arith.divf %89, %90 : vector<16x128xf32>
    %92 = vector.extract_strided_slice %85 {offsets = [0, 128], sizes = [16, 128], strides = [1, 1]} : vector<16x512xf32> to vector<16x128xf32>
    %93 = arith.negf %92 : vector<16x128xf32>
    %94 = math.exp %93 : vector<16x128xf32>
    %cst_33 = arith.constant 1.000000e+00 : f32
    %95 = vector.broadcast %cst_33 : f32 to vector<16x128xf32>
    %96 = arith.addf %95, %94 : vector<16x128xf32>
    %97 = arith.divf %95, %96 : vector<16x128xf32>
    %98 = vector.extract_strided_slice %85 {offsets = [0, 256], sizes = [16, 128], strides = [1, 1]} : vector<16x512xf32> to vector<16x128xf32>
    %99 = math.tanh %98 : vector<16x128xf32>
    %100 = vector.extract_strided_slice %85 {offsets = [0, 384], sizes = [16, 128], strides = [1, 1]} : vector<16x512xf32> to vector<16x128xf32>
    %101 = arith.negf %100 : vector<16x128xf32>
    %102 = math.exp %101 : vector<16x128xf32>
    %cst_34 = arith.constant 1.000000e+00 : f32
    %103 = vector.broadcast %cst_34 : f32 to vector<16x128xf32>
    %104 = arith.addf %103, %102 : vector<16x128xf32>
    %105 = arith.divf %103, %104 : vector<16x128xf32>
    %106 = arith.mulf %97, %75 : vector<16x128xf32>
    %107 = arith.mulf %91, %99 : vector<16x128xf32>
    %108 = arith.addf %106, %107 : vector<16x128xf32>
    %109 = math.tanh %108 : vector<16x128xf32>
    %110 = arith.mulf %105, %109 : vector<16x128xf32>
    %c3_i32 = arith.constant 3 : i32
    %c16_i32_35 = arith.constant 16 : i32
    %111 = arith.muli %c3_i32, %c16_i32_35 : i32
    %112 = tpu.assume_multiple %111, 8 : i32
    %113 = arith.index_cast %112 : i32 to index
    %c0_36 = arith.constant 0 : index
    %114 = vector.load %arg10[%113, %c0_36] : memref<128x512xf32, #tpu.memory_space<vmem>>, vector<16x512xf32>
    %115 = arith.truncf %110 : vector<16x128xf32> to vector<16x128xbf16>
    %c0_37 = arith.constant 0 : index
    %c0_38 = arith.constant 0 : index
    %116 = vector.load %arg3[%c0_37, %c0_38] : memref<128x512xbf16, #tpu.memory_space<vmem>>, vector<128x512xbf16>
    %cst_39 = arith.constant dense<0.000000e+00> : vector<16x512xf32>
    %117 = tpu.matmul %115, %116, %cst_39 {dimension_numbers = #tpu.dot_dimension_numbers<[1], [0], [0], [1], [0, 0, 1, 1], [], []>} : vector<16x128xbf16>, vector<128x512xbf16>, vector<16x512xf32> -> vector<16x512xf32>
    %118 = arith.addf %114, %117 : vector<16x512xf32>
    %119 = vector.extract_strided_slice %118 {offsets = [0, 0], sizes = [16, 128], strides = [1, 1]} : vector<16x512xf32> to vector<16x128xf32>
    %120 = arith.negf %119 : vector<16x128xf32>
    %121 = math.exp %120 : vector<16x128xf32>
    %cst_40 = arith.constant 1.000000e+00 : f32
    %122 = vector.broadcast %cst_40 : f32 to vector<16x128xf32>
    %123 = arith.addf %122, %121 : vector<16x128xf32>
    %124 = arith.divf %122, %123 : vector<16x128xf32>
    %125 = vector.extract_strided_slice %118 {offsets = [0, 128], sizes = [16, 128], strides = [1, 1]} : vector<16x512xf32> to vector<16x128xf32>
    %126 = arith.negf %125 : vector<16x128xf32>
    %127 = math.exp %126 : vector<16x128xf32>
    %cst_41 = arith.constant 1.000000e+00 : f32
    %128 = vector.broadcast %cst_41 : f32 to vector<16x128xf32>
    %129 = arith.addf %128, %127 : vector<16x128xf32>
    %130 = arith.divf %128, %129 : vector<16x128xf32>
    %131 = vector.extract_strided_slice %118 {offsets = [0, 256], sizes = [16, 128], strides = [1, 1]} : vector<16x512xf32> to vector<16x128xf32>
    %132 = math.tanh %131 : vector<16x128xf32>
    %133 = vector.extract_strided_slice %118 {offsets = [0, 384], sizes = [16, 128], strides = [1, 1]} : vector<16x512xf32> to vector<16x128xf32>
    %134 = arith.negf %133 : vector<16x128xf32>
    %135 = math.exp %134 : vector<16x128xf32>
    %cst_42 = arith.constant 1.000000e+00 : f32
    %136 = vector.broadcast %cst_42 : f32 to vector<16x128xf32>
    %137 = arith.addf %136, %135 : vector<16x128xf32>
    %138 = arith.divf %136, %137 : vector<16x128xf32>
    %139 = arith.mulf %130, %108 : vector<16x128xf32>
    %140 = arith.mulf %124, %132 : vector<16x128xf32>
    %141 = arith.addf %139, %140 : vector<16x128xf32>
    %142 = math.tanh %141 : vector<16x128xf32>
    %143 = arith.mulf %138, %142 : vector<16x128xf32>
    %c4_i32 = arith.constant 4 : i32
    %c16_i32_43 = arith.constant 16 : i32
    %144 = arith.muli %c4_i32, %c16_i32_43 : i32
    %145 = tpu.assume_multiple %144, 8 : i32
    %146 = arith.index_cast %145 : i32 to index
    %c0_44 = arith.constant 0 : index
    %147 = vector.load %arg10[%146, %c0_44] : memref<128x512xf32, #tpu.memory_space<vmem>>, vector<16x512xf32>
    %148 = arith.truncf %143 : vector<16x128xf32> to vector<16x128xbf16>
    %c0_45 = arith.constant 0 : index
    %c0_46 = arith.constant 0 : index
    %149 = vector.load %arg3[%c0_45, %c0_46] : memref<128x512xbf16, #tpu.memory_space<vmem>>, vector<128x512xbf16>
    %cst_47 = arith.constant dense<0.000000e+00> : vector<16x512xf32>
    %150 = tpu.matmul %148, %149, %cst_47 {dimension_numbers = #tpu.dot_dimension_numbers<[1], [0], [0], [1], [0, 0, 1, 1], [], []>} : vector<16x128xbf16>, vector<128x512xbf16>, vector<16x512xf32> -> vector<16x512xf32>
    %151 = arith.addf %147, %150 : vector<16x512xf32>
    %152 = vector.extract_strided_slice %151 {offsets = [0, 0], sizes = [16, 128], strides = [1, 1]} : vector<16x512xf32> to vector<16x128xf32>
    %153 = arith.negf %152 : vector<16x128xf32>
    %154 = math.exp %153 : vector<16x128xf32>
    %cst_48 = arith.constant 1.000000e+00 : f32
    %155 = vector.broadcast %cst_48 : f32 to vector<16x128xf32>
    %156 = arith.addf %155, %154 : vector<16x128xf32>
    %157 = arith.divf %155, %156 : vector<16x128xf32>
    %158 = vector.extract_strided_slice %151 {offsets = [0, 128], sizes = [16, 128], strides = [1, 1]} : vector<16x512xf32> to vector<16x128xf32>
    %159 = arith.negf %158 : vector<16x128xf32>
    %160 = math.exp %159 : vector<16x128xf32>
    %cst_49 = arith.constant 1.000000e+00 : f32
    %161 = vector.broadcast %cst_49 : f32 to vector<16x128xf32>
    %162 = arith.addf %161, %160 : vector<16x128xf32>
    %163 = arith.divf %161, %162 : vector<16x128xf32>
    %164 = vector.extract_strided_slice %151 {offsets = [0, 256], sizes = [16, 128], strides = [1, 1]} : vector<16x512xf32> to vector<16x128xf32>
    %165 = math.tanh %164 : vector<16x128xf32>
    %166 = vector.extract_strided_slice %151 {offsets = [0, 384], sizes = [16, 128], strides = [1, 1]} : vector<16x512xf32> to vector<16x128xf32>
    %167 = arith.negf %166 : vector<16x128xf32>
    %168 = math.exp %167 : vector<16x128xf32>
    %cst_50 = arith.constant 1.000000e+00 : f32
    %169 = vector.broadcast %cst_50 : f32 to vector<16x128xf32>
    %170 = arith.addf %169, %168 : vector<16x128xf32>
    %171 = arith.divf %169, %170 : vector<16x128xf32>
    %172 = arith.mulf %163, %141 : vector<16x128xf32>
    %173 = arith.mulf %157, %165 : vector<16x128xf32>
    %174 = arith.addf %172, %173 : vector<16x128xf32>
    %175 = math.tanh %174 : vector<16x128xf32>
    %176 = arith.mulf %171, %175 : vector<16x128xf32>
    %c5_i32 = arith.constant 5 : i32
    %c16_i32_51 = arith.constant 16 : i32
    %177 = arith.muli %c5_i32, %c16_i32_51 : i32
    %178 = tpu.assume_multiple %177, 8 : i32
    %179 = arith.index_cast %178 : i32 to index
    %c0_52 = arith.constant 0 : index
    %180 = vector.load %arg10[%179, %c0_52] : memref<128x512xf32, #tpu.memory_space<vmem>>, vector<16x512xf32>
    %181 = arith.truncf %176 : vector<16x128xf32> to vector<16x128xbf16>
    %c0_53 = arith.constant 0 : index
    %c0_54 = arith.constant 0 : index
    %182 = vector.load %arg3[%c0_53, %c0_54] : memref<128x512xbf16, #tpu.memory_space<vmem>>, vector<128x512xbf16>
    %cst_55 = arith.constant dense<0.000000e+00> : vector<16x512xf32>
    %183 = tpu.matmul %181, %182, %cst_55 {dimension_numbers = #tpu.dot_dimension_numbers<[1], [0], [0], [1], [0, 0, 1, 1], [], []>} : vector<16x128xbf16>, vector<128x512xbf16>, vector<16x512xf32> -> vector<16x512xf32>
    %184 = arith.addf %180, %183 : vector<16x512xf32>
    %185 = vector.extract_strided_slice %184 {offsets = [0, 0], sizes = [16, 128], strides = [1, 1]} : vector<16x512xf32> to vector<16x128xf32>
    %186 = arith.negf %185 : vector<16x128xf32>
    %187 = math.exp %186 : vector<16x128xf32>
    %cst_56 = arith.constant 1.000000e+00 : f32
    %188 = vector.broadcast %cst_56 : f32 to vector<16x128xf32>
    %189 = arith.addf %188, %187 : vector<16x128xf32>
    %190 = arith.divf %188, %189 : vector<16x128xf32>
    %191 = vector.extract_strided_slice %184 {offsets = [0, 128], sizes = [16, 128], strides = [1, 1]} : vector<16x512xf32> to vector<16x128xf32>
    %192 = arith.negf %191 : vector<16x128xf32>
    %193 = math.exp %192 : vector<16x128xf32>
    %cst_57 = arith.constant 1.000000e+00 : f32
    %194 = vector.broadcast %cst_57 : f32 to vector<16x128xf32>
    %195 = arith.addf %194, %193 : vector<16x128xf32>
    %196 = arith.divf %194, %195 : vector<16x128xf32>
    %197 = vector.extract_strided_slice %184 {offsets = [0, 256], sizes = [16, 128], strides = [1, 1]} : vector<16x512xf32> to vector<16x128xf32>
    %198 = math.tanh %197 : vector<16x128xf32>
    %199 = vector.extract_strided_slice %184 {offsets = [0, 384], sizes = [16, 128], strides = [1, 1]} : vector<16x512xf32> to vector<16x128xf32>
    %200 = arith.negf %199 : vector<16x128xf32>
    %201 = math.exp %200 : vector<16x128xf32>
    %cst_58 = arith.constant 1.000000e+00 : f32
    %202 = vector.broadcast %cst_58 : f32 to vector<16x128xf32>
    %203 = arith.addf %202, %201 : vector<16x128xf32>
    %204 = arith.divf %202, %203 : vector<16x128xf32>
    %205 = arith.mulf %196, %174 : vector<16x128xf32>
    %206 = arith.mulf %190, %198 : vector<16x128xf32>
    %207 = arith.addf %205, %206 : vector<16x128xf32>
    %208 = math.tanh %207 : vector<16x128xf32>
    %209 = arith.mulf %204, %208 : vector<16x128xf32>
    %c6_i32 = arith.constant 6 : i32
    %c16_i32_59 = arith.constant 16 : i32
    %210 = arith.muli %c6_i32, %c16_i32_59 : i32
    %211 = tpu.assume_multiple %210, 8 : i32
    %212 = arith.index_cast %211 : i32 to index
    %c0_60 = arith.constant 0 : index
    %213 = vector.load %arg10[%212, %c0_60] : memref<128x512xf32, #tpu.memory_space<vmem>>, vector<16x512xf32>
    %214 = arith.truncf %209 : vector<16x128xf32> to vector<16x128xbf16>
    %c0_61 = arith.constant 0 : index
    %c0_62 = arith.constant 0 : index
    %215 = vector.load %arg3[%c0_61, %c0_62] : memref<128x512xbf16, #tpu.memory_space<vmem>>, vector<128x512xbf16>
    %cst_63 = arith.constant dense<0.000000e+00> : vector<16x512xf32>
    %216 = tpu.matmul %214, %215, %cst_63 {dimension_numbers = #tpu.dot_dimension_numbers<[1], [0], [0], [1], [0, 0, 1, 1], [], []>} : vector<16x128xbf16>, vector<128x512xbf16>, vector<16x512xf32> -> vector<16x512xf32>
    %217 = arith.addf %213, %216 : vector<16x512xf32>
    %218 = vector.extract_strided_slice %217 {offsets = [0, 0], sizes = [16, 128], strides = [1, 1]} : vector<16x512xf32> to vector<16x128xf32>
    %219 = arith.negf %218 : vector<16x128xf32>
    %220 = math.exp %219 : vector<16x128xf32>
    %cst_64 = arith.constant 1.000000e+00 : f32
    %221 = vector.broadcast %cst_64 : f32 to vector<16x128xf32>
    %222 = arith.addf %221, %220 : vector<16x128xf32>
    %223 = arith.divf %221, %222 : vector<16x128xf32>
    %224 = vector.extract_strided_slice %217 {offsets = [0, 128], sizes = [16, 128], strides = [1, 1]} : vector<16x512xf32> to vector<16x128xf32>
    %225 = arith.negf %224 : vector<16x128xf32>
    %226 = math.exp %225 : vector<16x128xf32>
    %cst_65 = arith.constant 1.000000e+00 : f32
    %227 = vector.broadcast %cst_65 : f32 to vector<16x128xf32>
    %228 = arith.addf %227, %226 : vector<16x128xf32>
    %229 = arith.divf %227, %228 : vector<16x128xf32>
    %230 = vector.extract_strided_slice %217 {offsets = [0, 256], sizes = [16, 128], strides = [1, 1]} : vector<16x512xf32> to vector<16x128xf32>
    %231 = math.tanh %230 : vector<16x128xf32>
    %232 = vector.extract_strided_slice %217 {offsets = [0, 384], sizes = [16, 128], strides = [1, 1]} : vector<16x512xf32> to vector<16x128xf32>
    %233 = arith.negf %232 : vector<16x128xf32>
    %234 = math.exp %233 : vector<16x128xf32>
    %cst_66 = arith.constant 1.000000e+00 : f32
    %235 = vector.broadcast %cst_66 : f32 to vector<16x128xf32>
    %236 = arith.addf %235, %234 : vector<16x128xf32>
    %237 = arith.divf %235, %236 : vector<16x128xf32>
    %238 = arith.mulf %229, %207 : vector<16x128xf32>
    %239 = arith.mulf %223, %231 : vector<16x128xf32>
    %240 = arith.addf %238, %239 : vector<16x128xf32>
    %241 = math.tanh %240 : vector<16x128xf32>
    %242 = arith.mulf %237, %241 : vector<16x128xf32>
    %c7_i32 = arith.constant 7 : i32
    %c16_i32_67 = arith.constant 16 : i32
    %243 = arith.muli %c7_i32, %c16_i32_67 : i32
    %244 = tpu.assume_multiple %243, 8 : i32
    %245 = arith.index_cast %244 : i32 to index
    %c0_68 = arith.constant 0 : index
    %246 = vector.load %arg10[%245, %c0_68] : memref<128x512xf32, #tpu.memory_space<vmem>>, vector<16x512xf32>
    %247 = arith.truncf %242 : vector<16x128xf32> to vector<16x128xbf16>
    %c0_69 = arith.constant 0 : index
    %c0_70 = arith.constant 0 : index
    %248 = vector.load %arg3[%c0_69, %c0_70] : memref<128x512xbf16, #tpu.memory_space<vmem>>, vector<128x512xbf16>
    %cst_71 = arith.constant dense<0.000000e+00> : vector<16x512xf32>
    %249 = tpu.matmul %247, %248, %cst_71 {dimension_numbers = #tpu.dot_dimension_numbers<[1], [0], [0], [1], [0, 0, 1, 1], [], []>} : vector<16x128xbf16>, vector<128x512xbf16>, vector<16x512xf32> -> vector<16x512xf32>
    %250 = arith.addf %246, %249 : vector<16x512xf32>
    %251 = vector.extract_strided_slice %250 {offsets = [0, 0], sizes = [16, 128], strides = [1, 1]} : vector<16x512xf32> to vector<16x128xf32>
    %252 = arith.negf %251 : vector<16x128xf32>
    %253 = math.exp %252 : vector<16x128xf32>
    %cst_72 = arith.constant 1.000000e+00 : f32
    %254 = vector.broadcast %cst_72 : f32 to vector<16x128xf32>
    %255 = arith.addf %254, %253 : vector<16x128xf32>
    %256 = arith.divf %254, %255 : vector<16x128xf32>
    %257 = vector.extract_strided_slice %250 {offsets = [0, 128], sizes = [16, 128], strides = [1, 1]} : vector<16x512xf32> to vector<16x128xf32>
    %258 = arith.negf %257 : vector<16x128xf32>
    %259 = math.exp %258 : vector<16x128xf32>
    %cst_73 = arith.constant 1.000000e+00 : f32
    %260 = vector.broadcast %cst_73 : f32 to vector<16x128xf32>
    %261 = arith.addf %260, %259 : vector<16x128xf32>
    %262 = arith.divf %260, %261 : vector<16x128xf32>
    %263 = vector.extract_strided_slice %250 {offsets = [0, 256], sizes = [16, 128], strides = [1, 1]} : vector<16x512xf32> to vector<16x128xf32>
    %264 = math.tanh %263 : vector<16x128xf32>
    %265 = vector.extract_strided_slice %250 {offsets = [0, 384], sizes = [16, 128], strides = [1, 1]} : vector<16x512xf32> to vector<16x128xf32>
    %266 = arith.negf %265 : vector<16x128xf32>
    %267 = math.exp %266 : vector<16x128xf32>
    %cst_74 = arith.constant 1.000000e+00 : f32
    %268 = vector.broadcast %cst_74 : f32 to vector<16x128xf32>
    %269 = arith.addf %268, %267 : vector<16x128xf32>
    %270 = arith.divf %268, %269 : vector<16x128xf32>
    %271 = arith.mulf %262, %240 : vector<16x128xf32>
    %272 = arith.mulf %256, %264 : vector<16x128xf32>
    %273 = arith.addf %271, %272 : vector<16x128xf32>
    %274 = math.tanh %273 : vector<16x128xf32>
    %275 = arith.mulf %270, %274 : vector<16x128xf32>
    %c8_i32 = arith.constant 8 : i32
    %c0_75 = arith.constant 0 : index
    %c0_76 = arith.constant 0 : index
    %276 = vector.load %arg7[%c0_75, %c0_76] : memref<16x128xf32, #tpu.memory_space<vmem>>, vector<16x128xf32>
    tpu.vector_store %arg7[%c0_75, %c0_76], %275 {strides = array<i32>} : memref<16x128xf32, #tpu.memory_space<vmem>>, vector<16x128xf32>,
    %c0_77 = arith.constant 0 : index
    %c0_78 = arith.constant 0 : index
    %277 = vector.load %arg8[%c0_77, %c0_78] : memref<16x128xf32, #tpu.memory_space<vmem>>, vector<16x128xf32>
    tpu.vector_store %arg8[%c0_77, %c0_78], %273 {strides = array<i32>} : memref<16x128xf32, #tpu.memory_space<vmem>>, vector<16x128xf32>,
    %c0_79 = arith.constant 0 : index
    %c0_80 = arith.constant 0 : index
    %c0_81 = arith.constant 0 : index
    %278 = vector.load %arg1[%c0_79, %c0_80, %c0_81] : memref<16x8x128xf32, #tpu.memory_space<vmem>>, vector<16x8x128xf32>
    %cst_82 = arith.constant dense<0.000000e+00> : vector<16x128xf32>
    %279 = vector.multi_reduction <add>, %278, %cst_82 [1] : vector<16x8x128xf32> to vector<16x128xf32>
    %cst_83 = arith.constant 8.000000e+00 : f32
    %280 = vector.broadcast %cst_83 : f32 to vector<16x128xf32>
    %281 = arith.divf %279, %280 : vector<16x128xf32>
    %c0_84 = arith.constant 0 : index
    %c0_85 = arith.constant 0 : index
    %282 = vector.load %arg9[%c0_84, %c0_85] : memref<16x128xf32, #tpu.memory_space<vmem>>, vector<16x128xf32>
    tpu.vector_store %arg9[%c0_84, %c0_85], %281 {strides = array<i32>} : memref<16x128xf32, #tpu.memory_space<vmem>>, vector<16x128xf32>,
    return
  }
  func.func @transform_0(%arg0: i32) -> (i32, i32, i32) {
    %c0_i32 = arith.constant 0 : i32
    %c0_i32_0 = arith.constant 0 : i32
    %c0_i32_1 = arith.constant 0 : i32
    return %arg0, %c0_i32, %c0_i32_0 : i32, i32, i32
  }
  func.func @transform_1(%arg0: i32) -> (i32, i32) {
    %c0_i32 = arith.constant 0 : i32
    %c0_i32_0 = arith.constant 0 : i32
    %c0_i32_1 = arith.constant 0 : i32
    return %c0_i32, %c0_i32_0 : i32, i32
  }
  func.func @transform_2(%arg0: i32) -> (i32, i32) {
    %c0_i32 = arith.constant 0 : i32
    %c0_i32_0 = arith.constant 0 : i32
    %c0_i32_1 = arith.constant 0 : i32
    return %c0_i32, %c0_i32_0 : i32, i32
  }
  func.func @transform_3(%arg0: i32) -> (i32, i32) {
    %c0_i32 = arith.constant 0 : i32
    %c0_i32_0 = arith.constant 0 : i32
    %c0_i32_1 = arith.constant 0 : i32
    return %c0_i32, %c0_i32_0 : i32, i32
  }
  func.func @transform_4(%arg0: i32) -> (i32, i32) {
    %c0_i32 = arith.constant 0 : i32
    %c0_i32_0 = arith.constant 0 : i32
    return %arg0, %c0_i32 : i32, i32
  }
  func.func @transform_5(%arg0: i32) -> (i32, i32) {
    %c0_i32 = arith.constant 0 : i32
    %c0_i32_0 = arith.constant 0 : i32
    return %arg0, %c0_i32 : i32, i32
  }
  func.func @transform_6(%arg0: i32) -> (i32, i32) {
    %c0_i32 = arith.constant 0 : i32
    %c0_i32_0 = arith.constant 0 : i32
    return %arg0, %c0_i32 : i32, i32
  }
  func.func @transform_7(%arg0: i32) -> (i32, i32) {
    %c0_i32 = arith.constant 0 : i32
    %c0_i32_0 = arith.constant 0 : i32
    return %arg0, %c0_i32 : i32, i32
  }
  func.func @transform_8(%arg0: i32) -> (i32, i32) {
    %c0_i32 = arith.constant 0 : i32
    %c0_i32_0 = arith.constant 0 : i32
    return %arg0, %c0_i32 : i32, i32
  }
}

module attributes {stable_mosaic.version = 11 : i64} {
  func.func @lstm_dec_kernel(%arg0: i32, %arg1: memref<16x8x128xf32, #tpu.memory_space<vmem>>, %arg2: memref<128x512xbf16, #tpu.memory_space<vmem>>, %arg3: memref<128x512xbf16, #tpu.memory_space<vmem>>, %arg4: memref<1x512xf32, #tpu.memory_space<vmem>>, %arg5: memref<16x128xf32, #tpu.memory_space<vmem>>, %arg6: memref<16x128xf32, #tpu.memory_space<vmem>>, %arg7: memref<16x8x128xf32, #tpu.memory_space<vmem>>, %arg8: memref<16x128xf32, #tpu.memory_space<vmem>>, %arg9: memref<16x128xf32, #tpu.memory_space<vmem>>, %arg10: memref<16x128xf32, #tpu.memory_space<vmem>>, %arg11: memref<128x512xf32, #tpu.memory_space<vmem>>, %arg12: memref<128x128xf32, #tpu.memory_space<vmem>>) attributes {dimension_semantics = [#tpu.dimension_semantics<parallel>], iteration_bounds = array<i64: 1>, scalar_prefetch = 0 : i64, scratch_operands = 2 : i64, tpu.core_type = #tpu.core_type<tc>, window_params = [{transform_indices = @transform_0, window_bounds = array<i64: 16, 8, 128>}, {pipeline_mode = #tpu.pipeline_mode<synchronous>, transform_indices = @transform_1, window_bounds = array<i64: 128, 512>}, {pipeline_mode = #tpu.pipeline_mode<synchronous>, transform_indices = @transform_2, window_bounds = array<i64: 128, 512>}, {pipeline_mode = #tpu.pipeline_mode<synchronous>, transform_indices = @transform_3, window_bounds = array<i64: 1, 512>}, {transform_indices = @transform_4, window_bounds = array<i64: 16, 128>}, {transform_indices = @transform_5, window_bounds = array<i64: 16, 128>}, {transform_indices = @transform_6, window_bounds = array<i64: 16, 8, 128>}, {transform_indices = @transform_7, window_bounds = array<i64: 16, 128>}, {transform_indices = @transform_8, window_bounds = array<i64: 16, 128>}, {transform_indices = @transform_9, window_bounds = array<i64: 16, 128>}]} {
    %c0 = arith.constant 0 : index
    %c0_0 = arith.constant 0 : index
    %c0_1 = arith.constant 0 : index
    %0 = vector.load %arg1[%c0, %c0_0, %c0_1] : memref<16x8x128xf32, #tpu.memory_space<vmem>>, vector<16x8x128xf32>
    %1 = tpu.transpose %0, [1, 0, 2] : vector<16x8x128xf32> -> vector<8x16x128xf32>
    %2 = vector.shape_cast %1 : vector<8x16x128xf32> to vector<128x128xf32>
    %3 = arith.truncf %2 : vector<128x128xf32> to vector<128x128xbf16>
    %c0_2 = arith.constant 0 : index
    %c0_3 = arith.constant 0 : index
    %4 = vector.load %arg2[%c0_2, %c0_3] : memref<128x512xbf16, #tpu.memory_space<vmem>>, vector<128x512xbf16>
    %cst = arith.constant dense<0.000000e+00> : vector<128x512xf32>
    %5 = tpu.matmul %3, %4, %cst {dimension_numbers = #tpu.dot_dimension_numbers<[1], [0], [0], [1], [0, 0, 1, 1], [], []>} : vector<128x128xbf16>, vector<128x512xbf16>, vector<128x512xf32> -> vector<128x512xf32>
    %c0_4 = arith.constant 0 : index
    %c0_5 = arith.constant 0 : index
    %6 = vector.load %arg4[%c0_4, %c0_5] : memref<1x512xf32, #tpu.memory_space<vmem>>, vector<1x512xf32>
    %7 = vector.broadcast %6 : vector<1x512xf32> to vector<128x512xf32>
    %8 = arith.addf %5, %7 : vector<128x512xf32>
    %c0_6 = arith.constant 0 : index
    %c0_7 = arith.constant 0 : index
    %9 = vector.load %arg11[%c0_6, %c0_7] : memref<128x512xf32, #tpu.memory_space<vmem>>, vector<128x512xf32>
    tpu.vector_store %arg11[%c0_6, %c0_7], %8 {strides = array<i32>} : memref<128x512xf32, #tpu.memory_space<vmem>>, vector<128x512xf32>,
    %c0_8 = arith.constant 0 : index
    %c0_9 = arith.constant 0 : index
    %10 = vector.load %arg5[%c0_8, %c0_9] : memref<16x128xf32, #tpu.memory_space<vmem>>, vector<16x128xf32>
    %c0_10 = arith.constant 0 : index
    %c0_11 = arith.constant 0 : index
    %11 = vector.load %arg6[%c0_10, %c0_11] : memref<16x128xf32, #tpu.memory_space<vmem>>, vector<16x128xf32>
    %c0_i32 = arith.constant 0 : i32
    %c16_i32 = arith.constant 16 : i32
    %12 = arith.muli %c0_i32, %c16_i32 : i32
    %13 = tpu.assume_multiple %12, 8 : i32
    %14 = arith.index_cast %13 : i32 to index
    %c0_12 = arith.constant 0 : index
    %15 = vector.load %arg11[%14, %c0_12] : memref<128x512xf32, #tpu.memory_space<vmem>>, vector<16x512xf32>
    %16 = arith.truncf %10 : vector<16x128xf32> to vector<16x128xbf16>
    %c0_13 = arith.constant 0 : index
    %c0_14 = arith.constant 0 : index
    %17 = vector.load %arg3[%c0_13, %c0_14] : memref<128x512xbf16, #tpu.memory_space<vmem>>, vector<128x512xbf16>
    %cst_15 = arith.constant dense<0.000000e+00> : vector<16x512xf32>
    %18 = tpu.matmul %16, %17, %cst_15 {dimension_numbers = #tpu.dot_dimension_numbers<[1], [0], [0], [1], [0, 0, 1, 1], [], []>} : vector<16x128xbf16>, vector<128x512xbf16>, vector<16x512xf32> -> vector<16x512xf32>
    %19 = arith.addf %15, %18 : vector<16x512xf32>
    %20 = vector.extract_strided_slice %19 {offsets = [0, 0], sizes = [16, 128], strides = [1, 1]} : vector<16x512xf32> to vector<16x128xf32>
    %21 = arith.negf %20 : vector<16x128xf32>
    %22 = math.exp %21 : vector<16x128xf32>
    %cst_16 = arith.constant 1.000000e+00 : f32
    %23 = vector.broadcast %cst_16 : f32 to vector<16x128xf32>
    %24 = arith.addf %23, %22 : vector<16x128xf32>
    %25 = arith.divf %23, %24 : vector<16x128xf32>
    %26 = vector.extract_strided_slice %19 {offsets = [0, 128], sizes = [16, 128], strides = [1, 1]} : vector<16x512xf32> to vector<16x128xf32>
    %27 = arith.negf %26 : vector<16x128xf32>
    %28 = math.exp %27 : vector<16x128xf32>
    %cst_17 = arith.constant 1.000000e+00 : f32
    %29 = vector.broadcast %cst_17 : f32 to vector<16x128xf32>
    %30 = arith.addf %29, %28 : vector<16x128xf32>
    %31 = arith.divf %29, %30 : vector<16x128xf32>
    %32 = vector.extract_strided_slice %19 {offsets = [0, 256], sizes = [16, 128], strides = [1, 1]} : vector<16x512xf32> to vector<16x128xf32>
    %33 = math.tanh %32 : vector<16x128xf32>
    %34 = vector.extract_strided_slice %19 {offsets = [0, 384], sizes = [16, 128], strides = [1, 1]} : vector<16x512xf32> to vector<16x128xf32>
    %35 = arith.negf %34 : vector<16x128xf32>
    %36 = math.exp %35 : vector<16x128xf32>
    %cst_18 = arith.constant 1.000000e+00 : f32
    %37 = vector.broadcast %cst_18 : f32 to vector<16x128xf32>
    %38 = arith.addf %37, %36 : vector<16x128xf32>
    %39 = arith.divf %37, %38 : vector<16x128xf32>
    %40 = arith.mulf %31, %11 : vector<16x128xf32>
    %41 = arith.mulf %25, %33 : vector<16x128xf32>
    %42 = arith.addf %40, %41 : vector<16x128xf32>
    %43 = math.tanh %42 : vector<16x128xf32>
    %44 = arith.mulf %39, %43 : vector<16x128xf32>
    %45 = arith.index_cast %13 : i32 to index
    %c0_19 = arith.constant 0 : index
    %46 = vector.load %arg12[%45, %c0_19] : memref<128x128xf32, #tpu.memory_space<vmem>>, vector<16x128xf32>
    tpu.vector_store %arg12[%45, %c0_19], %44 {strides = array<i32>} : memref<128x128xf32, #tpu.memory_space<vmem>>, vector<16x128xf32>,
    %c1_i32 = arith.constant 1 : i32
    %c16_i32_20 = arith.constant 16 : i32
    %47 = arith.muli %c1_i32, %c16_i32_20 : i32
    %48 = tpu.assume_multiple %47, 8 : i32
    %49 = arith.index_cast %48 : i32 to index
    %c0_21 = arith.constant 0 : index
    %50 = vector.load %arg11[%49, %c0_21] : memref<128x512xf32, #tpu.memory_space<vmem>>, vector<16x512xf32>
    %51 = arith.truncf %44 : vector<16x128xf32> to vector<16x128xbf16>
    %c0_22 = arith.constant 0 : index
    %c0_23 = arith.constant 0 : index
    %52 = vector.load %arg3[%c0_22, %c0_23] : memref<128x512xbf16, #tpu.memory_space<vmem>>, vector<128x512xbf16>
    %cst_24 = arith.constant dense<0.000000e+00> : vector<16x512xf32>
    %53 = tpu.matmul %51, %52, %cst_24 {dimension_numbers = #tpu.dot_dimension_numbers<[1], [0], [0], [1], [0, 0, 1, 1], [], []>} : vector<16x128xbf16>, vector<128x512xbf16>, vector<16x512xf32> -> vector<16x512xf32>
    %54 = arith.addf %50, %53 : vector<16x512xf32>
    %55 = vector.extract_strided_slice %54 {offsets = [0, 0], sizes = [16, 128], strides = [1, 1]} : vector<16x512xf32> to vector<16x128xf32>
    %56 = arith.negf %55 : vector<16x128xf32>
    %57 = math.exp %56 : vector<16x128xf32>
    %cst_25 = arith.constant 1.000000e+00 : f32
    %58 = vector.broadcast %cst_25 : f32 to vector<16x128xf32>
    %59 = arith.addf %58, %57 : vector<16x128xf32>
    %60 = arith.divf %58, %59 : vector<16x128xf32>
    %61 = vector.extract_strided_slice %54 {offsets = [0, 128], sizes = [16, 128], strides = [1, 1]} : vector<16x512xf32> to vector<16x128xf32>
    %62 = arith.negf %61 : vector<16x128xf32>
    %63 = math.exp %62 : vector<16x128xf32>
    %cst_26 = arith.constant 1.000000e+00 : f32
    %64 = vector.broadcast %cst_26 : f32 to vector<16x128xf32>
    %65 = arith.addf %64, %63 : vector<16x128xf32>
    %66 = arith.divf %64, %65 : vector<16x128xf32>
    %67 = vector.extract_strided_slice %54 {offsets = [0, 256], sizes = [16, 128], strides = [1, 1]} : vector<16x512xf32> to vector<16x128xf32>
    %68 = math.tanh %67 : vector<16x128xf32>
    %69 = vector.extract_strided_slice %54 {offsets = [0, 384], sizes = [16, 128], strides = [1, 1]} : vector<16x512xf32> to vector<16x128xf32>
    %70 = arith.negf %69 : vector<16x128xf32>
    %71 = math.exp %70 : vector<16x128xf32>
    %cst_27 = arith.constant 1.000000e+00 : f32
    %72 = vector.broadcast %cst_27 : f32 to vector<16x128xf32>
    %73 = arith.addf %72, %71 : vector<16x128xf32>
    %74 = arith.divf %72, %73 : vector<16x128xf32>
    %75 = arith.mulf %66, %42 : vector<16x128xf32>
    %76 = arith.mulf %60, %68 : vector<16x128xf32>
    %77 = arith.addf %75, %76 : vector<16x128xf32>
    %78 = math.tanh %77 : vector<16x128xf32>
    %79 = arith.mulf %74, %78 : vector<16x128xf32>
    %80 = arith.index_cast %48 : i32 to index
    %c0_28 = arith.constant 0 : index
    %81 = vector.load %arg12[%80, %c0_28] : memref<128x128xf32, #tpu.memory_space<vmem>>, vector<16x128xf32>
    tpu.vector_store %arg12[%80, %c0_28], %79 {strides = array<i32>} : memref<128x128xf32, #tpu.memory_space<vmem>>, vector<16x128xf32>,
    %c2_i32 = arith.constant 2 : i32
    %c16_i32_29 = arith.constant 16 : i32
    %82 = arith.muli %c2_i32, %c16_i32_29 : i32
    %83 = tpu.assume_multiple %82, 8 : i32
    %84 = arith.index_cast %83 : i32 to index
    %c0_30 = arith.constant 0 : index
    %85 = vector.load %arg11[%84, %c0_30] : memref<128x512xf32, #tpu.memory_space<vmem>>, vector<16x512xf32>
    %86 = arith.truncf %79 : vector<16x128xf32> to vector<16x128xbf16>
    %c0_31 = arith.constant 0 : index
    %c0_32 = arith.constant 0 : index
    %87 = vector.load %arg3[%c0_31, %c0_32] : memref<128x512xbf16, #tpu.memory_space<vmem>>, vector<128x512xbf16>
    %cst_33 = arith.constant dense<0.000000e+00> : vector<16x512xf32>
    %88 = tpu.matmul %86, %87, %cst_33 {dimension_numbers = #tpu.dot_dimension_numbers<[1], [0], [0], [1], [0, 0, 1, 1], [], []>} : vector<16x128xbf16>, vector<128x512xbf16>, vector<16x512xf32> -> vector<16x512xf32>
    %89 = arith.addf %85, %88 : vector<16x512xf32>
    %90 = vector.extract_strided_slice %89 {offsets = [0, 0], sizes = [16, 128], strides = [1, 1]} : vector<16x512xf32> to vector<16x128xf32>
    %91 = arith.negf %90 : vector<16x128xf32>
    %92 = math.exp %91 : vector<16x128xf32>
    %cst_34 = arith.constant 1.000000e+00 : f32
    %93 = vector.broadcast %cst_34 : f32 to vector<16x128xf32>
    %94 = arith.addf %93, %92 : vector<16x128xf32>
    %95 = arith.divf %93, %94 : vector<16x128xf32>
    %96 = vector.extract_strided_slice %89 {offsets = [0, 128], sizes = [16, 128], strides = [1, 1]} : vector<16x512xf32> to vector<16x128xf32>
    %97 = arith.negf %96 : vector<16x128xf32>
    %98 = math.exp %97 : vector<16x128xf32>
    %cst_35 = arith.constant 1.000000e+00 : f32
    %99 = vector.broadcast %cst_35 : f32 to vector<16x128xf32>
    %100 = arith.addf %99, %98 : vector<16x128xf32>
    %101 = arith.divf %99, %100 : vector<16x128xf32>
    %102 = vector.extract_strided_slice %89 {offsets = [0, 256], sizes = [16, 128], strides = [1, 1]} : vector<16x512xf32> to vector<16x128xf32>
    %103 = math.tanh %102 : vector<16x128xf32>
    %104 = vector.extract_strided_slice %89 {offsets = [0, 384], sizes = [16, 128], strides = [1, 1]} : vector<16x512xf32> to vector<16x128xf32>
    %105 = arith.negf %104 : vector<16x128xf32>
    %106 = math.exp %105 : vector<16x128xf32>
    %cst_36 = arith.constant 1.000000e+00 : f32
    %107 = vector.broadcast %cst_36 : f32 to vector<16x128xf32>
    %108 = arith.addf %107, %106 : vector<16x128xf32>
    %109 = arith.divf %107, %108 : vector<16x128xf32>
    %110 = arith.mulf %101, %77 : vector<16x128xf32>
    %111 = arith.mulf %95, %103 : vector<16x128xf32>
    %112 = arith.addf %110, %111 : vector<16x128xf32>
    %113 = math.tanh %112 : vector<16x128xf32>
    %114 = arith.mulf %109, %113 : vector<16x128xf32>
    %115 = arith.index_cast %83 : i32 to index
    %c0_37 = arith.constant 0 : index
    %116 = vector.load %arg12[%115, %c0_37] : memref<128x128xf32, #tpu.memory_space<vmem>>, vector<16x128xf32>
    tpu.vector_store %arg12[%115, %c0_37], %114 {strides = array<i32>} : memref<128x128xf32, #tpu.memory_space<vmem>>, vector<16x128xf32>,
    %c3_i32 = arith.constant 3 : i32
    %c16_i32_38 = arith.constant 16 : i32
    %117 = arith.muli %c3_i32, %c16_i32_38 : i32
    %118 = tpu.assume_multiple %117, 8 : i32
    %119 = arith.index_cast %118 : i32 to index
    %c0_39 = arith.constant 0 : index
    %120 = vector.load %arg11[%119, %c0_39] : memref<128x512xf32, #tpu.memory_space<vmem>>, vector<16x512xf32>
    %121 = arith.truncf %114 : vector<16x128xf32> to vector<16x128xbf16>
    %c0_40 = arith.constant 0 : index
    %c0_41 = arith.constant 0 : index
    %122 = vector.load %arg3[%c0_40, %c0_41] : memref<128x512xbf16, #tpu.memory_space<vmem>>, vector<128x512xbf16>
    %cst_42 = arith.constant dense<0.000000e+00> : vector<16x512xf32>
    %123 = tpu.matmul %121, %122, %cst_42 {dimension_numbers = #tpu.dot_dimension_numbers<[1], [0], [0], [1], [0, 0, 1, 1], [], []>} : vector<16x128xbf16>, vector<128x512xbf16>, vector<16x512xf32> -> vector<16x512xf32>
    %124 = arith.addf %120, %123 : vector<16x512xf32>
    %125 = vector.extract_strided_slice %124 {offsets = [0, 0], sizes = [16, 128], strides = [1, 1]} : vector<16x512xf32> to vector<16x128xf32>
    %126 = arith.negf %125 : vector<16x128xf32>
    %127 = math.exp %126 : vector<16x128xf32>
    %cst_43 = arith.constant 1.000000e+00 : f32
    %128 = vector.broadcast %cst_43 : f32 to vector<16x128xf32>
    %129 = arith.addf %128, %127 : vector<16x128xf32>
    %130 = arith.divf %128, %129 : vector<16x128xf32>
    %131 = vector.extract_strided_slice %124 {offsets = [0, 128], sizes = [16, 128], strides = [1, 1]} : vector<16x512xf32> to vector<16x128xf32>
    %132 = arith.negf %131 : vector<16x128xf32>
    %133 = math.exp %132 : vector<16x128xf32>
    %cst_44 = arith.constant 1.000000e+00 : f32
    %134 = vector.broadcast %cst_44 : f32 to vector<16x128xf32>
    %135 = arith.addf %134, %133 : vector<16x128xf32>
    %136 = arith.divf %134, %135 : vector<16x128xf32>
    %137 = vector.extract_strided_slice %124 {offsets = [0, 256], sizes = [16, 128], strides = [1, 1]} : vector<16x512xf32> to vector<16x128xf32>
    %138 = math.tanh %137 : vector<16x128xf32>
    %139 = vector.extract_strided_slice %124 {offsets = [0, 384], sizes = [16, 128], strides = [1, 1]} : vector<16x512xf32> to vector<16x128xf32>
    %140 = arith.negf %139 : vector<16x128xf32>
    %141 = math.exp %140 : vector<16x128xf32>
    %cst_45 = arith.constant 1.000000e+00 : f32
    %142 = vector.broadcast %cst_45 : f32 to vector<16x128xf32>
    %143 = arith.addf %142, %141 : vector<16x128xf32>
    %144 = arith.divf %142, %143 : vector<16x128xf32>
    %145 = arith.mulf %136, %112 : vector<16x128xf32>
    %146 = arith.mulf %130, %138 : vector<16x128xf32>
    %147 = arith.addf %145, %146 : vector<16x128xf32>
    %148 = math.tanh %147 : vector<16x128xf32>
    %149 = arith.mulf %144, %148 : vector<16x128xf32>
    %150 = arith.index_cast %118 : i32 to index
    %c0_46 = arith.constant 0 : index
    %151 = vector.load %arg12[%150, %c0_46] : memref<128x128xf32, #tpu.memory_space<vmem>>, vector<16x128xf32>
    tpu.vector_store %arg12[%150, %c0_46], %149 {strides = array<i32>} : memref<128x128xf32, #tpu.memory_space<vmem>>, vector<16x128xf32>,
    %c4_i32 = arith.constant 4 : i32
    %c16_i32_47 = arith.constant 16 : i32
    %152 = arith.muli %c4_i32, %c16_i32_47 : i32
    %153 = tpu.assume_multiple %152, 8 : i32
    %154 = arith.index_cast %153 : i32 to index
    %c0_48 = arith.constant 0 : index
    %155 = vector.load %arg11[%154, %c0_48] : memref<128x512xf32, #tpu.memory_space<vmem>>, vector<16x512xf32>
    %156 = arith.truncf %149 : vector<16x128xf32> to vector<16x128xbf16>
    %c0_49 = arith.constant 0 : index
    %c0_50 = arith.constant 0 : index
    %157 = vector.load %arg3[%c0_49, %c0_50] : memref<128x512xbf16, #tpu.memory_space<vmem>>, vector<128x512xbf16>
    %cst_51 = arith.constant dense<0.000000e+00> : vector<16x512xf32>
    %158 = tpu.matmul %156, %157, %cst_51 {dimension_numbers = #tpu.dot_dimension_numbers<[1], [0], [0], [1], [0, 0, 1, 1], [], []>} : vector<16x128xbf16>, vector<128x512xbf16>, vector<16x512xf32> -> vector<16x512xf32>
    %159 = arith.addf %155, %158 : vector<16x512xf32>
    %160 = vector.extract_strided_slice %159 {offsets = [0, 0], sizes = [16, 128], strides = [1, 1]} : vector<16x512xf32> to vector<16x128xf32>
    %161 = arith.negf %160 : vector<16x128xf32>
    %162 = math.exp %161 : vector<16x128xf32>
    %cst_52 = arith.constant 1.000000e+00 : f32
    %163 = vector.broadcast %cst_52 : f32 to vector<16x128xf32>
    %164 = arith.addf %163, %162 : vector<16x128xf32>
    %165 = arith.divf %163, %164 : vector<16x128xf32>
    %166 = vector.extract_strided_slice %159 {offsets = [0, 128], sizes = [16, 128], strides = [1, 1]} : vector<16x512xf32> to vector<16x128xf32>
    %167 = arith.negf %166 : vector<16x128xf32>
    %168 = math.exp %167 : vector<16x128xf32>
    %cst_53 = arith.constant 1.000000e+00 : f32
    %169 = vector.broadcast %cst_53 : f32 to vector<16x128xf32>
    %170 = arith.addf %169, %168 : vector<16x128xf32>
    %171 = arith.divf %169, %170 : vector<16x128xf32>
    %172 = vector.extract_strided_slice %159 {offsets = [0, 256], sizes = [16, 128], strides = [1, 1]} : vector<16x512xf32> to vector<16x128xf32>
    %173 = math.tanh %172 : vector<16x128xf32>
    %174 = vector.extract_strided_slice %159 {offsets = [0, 384], sizes = [16, 128], strides = [1, 1]} : vector<16x512xf32> to vector<16x128xf32>
    %175 = arith.negf %174 : vector<16x128xf32>
    %176 = math.exp %175 : vector<16x128xf32>
    %cst_54 = arith.constant 1.000000e+00 : f32
    %177 = vector.broadcast %cst_54 : f32 to vector<16x128xf32>
    %178 = arith.addf %177, %176 : vector<16x128xf32>
    %179 = arith.divf %177, %178 : vector<16x128xf32>
    %180 = arith.mulf %171, %147 : vector<16x128xf32>
    %181 = arith.mulf %165, %173 : vector<16x128xf32>
    %182 = arith.addf %180, %181 : vector<16x128xf32>
    %183 = math.tanh %182 : vector<16x128xf32>
    %184 = arith.mulf %179, %183 : vector<16x128xf32>
    %185 = arith.index_cast %153 : i32 to index
    %c0_55 = arith.constant 0 : index
    %186 = vector.load %arg12[%185, %c0_55] : memref<128x128xf32, #tpu.memory_space<vmem>>, vector<16x128xf32>
    tpu.vector_store %arg12[%185, %c0_55], %184 {strides = array<i32>} : memref<128x128xf32, #tpu.memory_space<vmem>>, vector<16x128xf32>,
    %c5_i32 = arith.constant 5 : i32
    %c16_i32_56 = arith.constant 16 : i32
    %187 = arith.muli %c5_i32, %c16_i32_56 : i32
    %188 = tpu.assume_multiple %187, 8 : i32
    %189 = arith.index_cast %188 : i32 to index
    %c0_57 = arith.constant 0 : index
    %190 = vector.load %arg11[%189, %c0_57] : memref<128x512xf32, #tpu.memory_space<vmem>>, vector<16x512xf32>
    %191 = arith.truncf %184 : vector<16x128xf32> to vector<16x128xbf16>
    %c0_58 = arith.constant 0 : index
    %c0_59 = arith.constant 0 : index
    %192 = vector.load %arg3[%c0_58, %c0_59] : memref<128x512xbf16, #tpu.memory_space<vmem>>, vector<128x512xbf16>
    %cst_60 = arith.constant dense<0.000000e+00> : vector<16x512xf32>
    %193 = tpu.matmul %191, %192, %cst_60 {dimension_numbers = #tpu.dot_dimension_numbers<[1], [0], [0], [1], [0, 0, 1, 1], [], []>} : vector<16x128xbf16>, vector<128x512xbf16>, vector<16x512xf32> -> vector<16x512xf32>
    %194 = arith.addf %190, %193 : vector<16x512xf32>
    %195 = vector.extract_strided_slice %194 {offsets = [0, 0], sizes = [16, 128], strides = [1, 1]} : vector<16x512xf32> to vector<16x128xf32>
    %196 = arith.negf %195 : vector<16x128xf32>
    %197 = math.exp %196 : vector<16x128xf32>
    %cst_61 = arith.constant 1.000000e+00 : f32
    %198 = vector.broadcast %cst_61 : f32 to vector<16x128xf32>
    %199 = arith.addf %198, %197 : vector<16x128xf32>
    %200 = arith.divf %198, %199 : vector<16x128xf32>
    %201 = vector.extract_strided_slice %194 {offsets = [0, 128], sizes = [16, 128], strides = [1, 1]} : vector<16x512xf32> to vector<16x128xf32>
    %202 = arith.negf %201 : vector<16x128xf32>
    %203 = math.exp %202 : vector<16x128xf32>
    %cst_62 = arith.constant 1.000000e+00 : f32
    %204 = vector.broadcast %cst_62 : f32 to vector<16x128xf32>
    %205 = arith.addf %204, %203 : vector<16x128xf32>
    %206 = arith.divf %204, %205 : vector<16x128xf32>
    %207 = vector.extract_strided_slice %194 {offsets = [0, 256], sizes = [16, 128], strides = [1, 1]} : vector<16x512xf32> to vector<16x128xf32>
    %208 = math.tanh %207 : vector<16x128xf32>
    %209 = vector.extract_strided_slice %194 {offsets = [0, 384], sizes = [16, 128], strides = [1, 1]} : vector<16x512xf32> to vector<16x128xf32>
    %210 = arith.negf %209 : vector<16x128xf32>
    %211 = math.exp %210 : vector<16x128xf32>
    %cst_63 = arith.constant 1.000000e+00 : f32
    %212 = vector.broadcast %cst_63 : f32 to vector<16x128xf32>
    %213 = arith.addf %212, %211 : vector<16x128xf32>
    %214 = arith.divf %212, %213 : vector<16x128xf32>
    %215 = arith.mulf %206, %182 : vector<16x128xf32>
    %216 = arith.mulf %200, %208 : vector<16x128xf32>
    %217 = arith.addf %215, %216 : vector<16x128xf32>
    %218 = math.tanh %217 : vector<16x128xf32>
    %219 = arith.mulf %214, %218 : vector<16x128xf32>
    %220 = arith.index_cast %188 : i32 to index
    %c0_64 = arith.constant 0 : index
    %221 = vector.load %arg12[%220, %c0_64] : memref<128x128xf32, #tpu.memory_space<vmem>>, vector<16x128xf32>
    tpu.vector_store %arg12[%220, %c0_64], %219 {strides = array<i32>} : memref<128x128xf32, #tpu.memory_space<vmem>>, vector<16x128xf32>,
    %c6_i32 = arith.constant 6 : i32
    %c16_i32_65 = arith.constant 16 : i32
    %222 = arith.muli %c6_i32, %c16_i32_65 : i32
    %223 = tpu.assume_multiple %222, 8 : i32
    %224 = arith.index_cast %223 : i32 to index
    %c0_66 = arith.constant 0 : index
    %225 = vector.load %arg11[%224, %c0_66] : memref<128x512xf32, #tpu.memory_space<vmem>>, vector<16x512xf32>
    %226 = arith.truncf %219 : vector<16x128xf32> to vector<16x128xbf16>
    %c0_67 = arith.constant 0 : index
    %c0_68 = arith.constant 0 : index
    %227 = vector.load %arg3[%c0_67, %c0_68] : memref<128x512xbf16, #tpu.memory_space<vmem>>, vector<128x512xbf16>
    %cst_69 = arith.constant dense<0.000000e+00> : vector<16x512xf32>
    %228 = tpu.matmul %226, %227, %cst_69 {dimension_numbers = #tpu.dot_dimension_numbers<[1], [0], [0], [1], [0, 0, 1, 1], [], []>} : vector<16x128xbf16>, vector<128x512xbf16>, vector<16x512xf32> -> vector<16x512xf32>
    %229 = arith.addf %225, %228 : vector<16x512xf32>
    %230 = vector.extract_strided_slice %229 {offsets = [0, 0], sizes = [16, 128], strides = [1, 1]} : vector<16x512xf32> to vector<16x128xf32>
    %231 = arith.negf %230 : vector<16x128xf32>
    %232 = math.exp %231 : vector<16x128xf32>
    %cst_70 = arith.constant 1.000000e+00 : f32
    %233 = vector.broadcast %cst_70 : f32 to vector<16x128xf32>
    %234 = arith.addf %233, %232 : vector<16x128xf32>
    %235 = arith.divf %233, %234 : vector<16x128xf32>
    %236 = vector.extract_strided_slice %229 {offsets = [0, 128], sizes = [16, 128], strides = [1, 1]} : vector<16x512xf32> to vector<16x128xf32>
    %237 = arith.negf %236 : vector<16x128xf32>
    %238 = math.exp %237 : vector<16x128xf32>
    %cst_71 = arith.constant 1.000000e+00 : f32
    %239 = vector.broadcast %cst_71 : f32 to vector<16x128xf32>
    %240 = arith.addf %239, %238 : vector<16x128xf32>
    %241 = arith.divf %239, %240 : vector<16x128xf32>
    %242 = vector.extract_strided_slice %229 {offsets = [0, 256], sizes = [16, 128], strides = [1, 1]} : vector<16x512xf32> to vector<16x128xf32>
    %243 = math.tanh %242 : vector<16x128xf32>
    %244 = vector.extract_strided_slice %229 {offsets = [0, 384], sizes = [16, 128], strides = [1, 1]} : vector<16x512xf32> to vector<16x128xf32>
    %245 = arith.negf %244 : vector<16x128xf32>
    %246 = math.exp %245 : vector<16x128xf32>
    %cst_72 = arith.constant 1.000000e+00 : f32
    %247 = vector.broadcast %cst_72 : f32 to vector<16x128xf32>
    %248 = arith.addf %247, %246 : vector<16x128xf32>
    %249 = arith.divf %247, %248 : vector<16x128xf32>
    %250 = arith.mulf %241, %217 : vector<16x128xf32>
    %251 = arith.mulf %235, %243 : vector<16x128xf32>
    %252 = arith.addf %250, %251 : vector<16x128xf32>
    %253 = math.tanh %252 : vector<16x128xf32>
    %254 = arith.mulf %249, %253 : vector<16x128xf32>
    %255 = arith.index_cast %223 : i32 to index
    %c0_73 = arith.constant 0 : index
    %256 = vector.load %arg12[%255, %c0_73] : memref<128x128xf32, #tpu.memory_space<vmem>>, vector<16x128xf32>
    tpu.vector_store %arg12[%255, %c0_73], %254 {strides = array<i32>} : memref<128x128xf32, #tpu.memory_space<vmem>>, vector<16x128xf32>,
    %c7_i32 = arith.constant 7 : i32
    %c16_i32_74 = arith.constant 16 : i32
    %257 = arith.muli %c7_i32, %c16_i32_74 : i32
    %258 = tpu.assume_multiple %257, 8 : i32
    %259 = arith.index_cast %258 : i32 to index
    %c0_75 = arith.constant 0 : index
    %260 = vector.load %arg11[%259, %c0_75] : memref<128x512xf32, #tpu.memory_space<vmem>>, vector<16x512xf32>
    %261 = arith.truncf %254 : vector<16x128xf32> to vector<16x128xbf16>
    %c0_76 = arith.constant 0 : index
    %c0_77 = arith.constant 0 : index
    %262 = vector.load %arg3[%c0_76, %c0_77] : memref<128x512xbf16, #tpu.memory_space<vmem>>, vector<128x512xbf16>
    %cst_78 = arith.constant dense<0.000000e+00> : vector<16x512xf32>
    %263 = tpu.matmul %261, %262, %cst_78 {dimension_numbers = #tpu.dot_dimension_numbers<[1], [0], [0], [1], [0, 0, 1, 1], [], []>} : vector<16x128xbf16>, vector<128x512xbf16>, vector<16x512xf32> -> vector<16x512xf32>
    %264 = arith.addf %260, %263 : vector<16x512xf32>
    %265 = vector.extract_strided_slice %264 {offsets = [0, 0], sizes = [16, 128], strides = [1, 1]} : vector<16x512xf32> to vector<16x128xf32>
    %266 = arith.negf %265 : vector<16x128xf32>
    %267 = math.exp %266 : vector<16x128xf32>
    %cst_79 = arith.constant 1.000000e+00 : f32
    %268 = vector.broadcast %cst_79 : f32 to vector<16x128xf32>
    %269 = arith.addf %268, %267 : vector<16x128xf32>
    %270 = arith.divf %268, %269 : vector<16x128xf32>
    %271 = vector.extract_strided_slice %264 {offsets = [0, 128], sizes = [16, 128], strides = [1, 1]} : vector<16x512xf32> to vector<16x128xf32>
    %272 = arith.negf %271 : vector<16x128xf32>
    %273 = math.exp %272 : vector<16x128xf32>
    %cst_80 = arith.constant 1.000000e+00 : f32
    %274 = vector.broadcast %cst_80 : f32 to vector<16x128xf32>
    %275 = arith.addf %274, %273 : vector<16x128xf32>
    %276 = arith.divf %274, %275 : vector<16x128xf32>
    %277 = vector.extract_strided_slice %264 {offsets = [0, 256], sizes = [16, 128], strides = [1, 1]} : vector<16x512xf32> to vector<16x128xf32>
    %278 = math.tanh %277 : vector<16x128xf32>
    %279 = vector.extract_strided_slice %264 {offsets = [0, 384], sizes = [16, 128], strides = [1, 1]} : vector<16x512xf32> to vector<16x128xf32>
    %280 = arith.negf %279 : vector<16x128xf32>
    %281 = math.exp %280 : vector<16x128xf32>
    %cst_81 = arith.constant 1.000000e+00 : f32
    %282 = vector.broadcast %cst_81 : f32 to vector<16x128xf32>
    %283 = arith.addf %282, %281 : vector<16x128xf32>
    %284 = arith.divf %282, %283 : vector<16x128xf32>
    %285 = arith.mulf %276, %252 : vector<16x128xf32>
    %286 = arith.mulf %270, %278 : vector<16x128xf32>
    %287 = arith.addf %285, %286 : vector<16x128xf32>
    %288 = math.tanh %287 : vector<16x128xf32>
    %289 = arith.mulf %284, %288 : vector<16x128xf32>
    %290 = arith.index_cast %258 : i32 to index
    %c0_82 = arith.constant 0 : index
    %291 = vector.load %arg12[%290, %c0_82] : memref<128x128xf32, #tpu.memory_space<vmem>>, vector<16x128xf32>
    tpu.vector_store %arg12[%290, %c0_82], %289 {strides = array<i32>} : memref<128x128xf32, #tpu.memory_space<vmem>>, vector<16x128xf32>,
    %c8_i32 = arith.constant 8 : i32
    %c0_83 = arith.constant 0 : index
    %c0_84 = arith.constant 0 : index
    %292 = vector.load %arg8[%c0_83, %c0_84] : memref<16x128xf32, #tpu.memory_space<vmem>>, vector<16x128xf32>
    tpu.vector_store %arg8[%c0_83, %c0_84], %289 {strides = array<i32>} : memref<16x128xf32, #tpu.memory_space<vmem>>, vector<16x128xf32>,
    %c0_85 = arith.constant 0 : index
    %c0_86 = arith.constant 0 : index
    %293 = vector.load %arg9[%c0_85, %c0_86] : memref<16x128xf32, #tpu.memory_space<vmem>>, vector<16x128xf32>
    tpu.vector_store %arg9[%c0_85, %c0_86], %287 {strides = array<i32>} : memref<16x128xf32, #tpu.memory_space<vmem>>, vector<16x128xf32>,
    %c0_87 = arith.constant 0 : index
    %c0_88 = arith.constant 0 : index
    %294 = vector.load %arg12[%c0_87, %c0_88] : memref<128x128xf32, #tpu.memory_space<vmem>>, vector<128x128xf32>
    %295 = vector.shape_cast %294 : vector<128x128xf32> to vector<8x16x128xf32>
    %296 = tpu.transpose %295, [1, 0, 2] : vector<8x16x128xf32> -> vector<16x8x128xf32>
    %c0_89 = arith.constant 0 : index
    %c0_90 = arith.constant 0 : index
    %c0_91 = arith.constant 0 : index
    %297 = vector.load %arg7[%c0_89, %c0_90, %c0_91] : memref<16x8x128xf32, #tpu.memory_space<vmem>>, vector<16x8x128xf32>
    tpu.vector_store %arg7[%c0_89, %c0_90, %c0_91], %296 {strides = array<i32>} : memref<16x8x128xf32, #tpu.memory_space<vmem>>, vector<16x8x128xf32>,
    %cst_92 = arith.constant dense<0.000000e+00> : vector<16x128xf32>
    %298 = vector.multi_reduction <add>, %295, %cst_92 [0] : vector<8x16x128xf32> to vector<16x128xf32>
    %cst_93 = arith.constant 8.000000e+00 : f32
    %299 = vector.broadcast %cst_93 : f32 to vector<16x128xf32>
    %300 = arith.divf %298, %299 : vector<16x128xf32>
    %c0_94 = arith.constant 0 : index
    %c0_95 = arith.constant 0 : index
    %301 = vector.load %arg10[%c0_94, %c0_95] : memref<16x128xf32, #tpu.memory_space<vmem>>, vector<16x128xf32>
    tpu.vector_store %arg10[%c0_94, %c0_95], %300 {strides = array<i32>} : memref<16x128xf32, #tpu.memory_space<vmem>>, vector<16x128xf32>,
    return
  }
  func.func @transform_0(%arg0: i32) -> (i32, i32, i32) {
    %c0_i32 = arith.constant 0 : i32
    %c0_i32_0 = arith.constant 0 : i32
    %c0_i32_1 = arith.constant 0 : i32
    return %arg0, %c0_i32, %c0_i32_0 : i32, i32, i32
  }
  func.func @transform_1(%arg0: i32) -> (i32, i32) {
    %c0_i32 = arith.constant 0 : i32
    %c0_i32_0 = arith.constant 0 : i32
    %c0_i32_1 = arith.constant 0 : i32
    return %c0_i32, %c0_i32_0 : i32, i32
  }
  func.func @transform_2(%arg0: i32) -> (i32, i32) {
    %c0_i32 = arith.constant 0 : i32
    %c0_i32_0 = arith.constant 0 : i32
    %c0_i32_1 = arith.constant 0 : i32
    return %c0_i32, %c0_i32_0 : i32, i32
  }
  func.func @transform_3(%arg0: i32) -> (i32, i32) {
    %c0_i32 = arith.constant 0 : i32
    %c0_i32_0 = arith.constant 0 : i32
    %c0_i32_1 = arith.constant 0 : i32
    return %c0_i32, %c0_i32_0 : i32, i32
  }
  func.func @transform_4(%arg0: i32) -> (i32, i32) {
    %c0_i32 = arith.constant 0 : i32
    %c0_i32_0 = arith.constant 0 : i32
    return %arg0, %c0_i32 : i32, i32
  }
  func.func @transform_5(%arg0: i32) -> (i32, i32) {
    %c0_i32 = arith.constant 0 : i32
    %c0_i32_0 = arith.constant 0 : i32
    return %arg0, %c0_i32 : i32, i32
  }
  func.func @transform_6(%arg0: i32) -> (i32, i32, i32) {
    %c0_i32 = arith.constant 0 : i32
    %c0_i32_0 = arith.constant 0 : i32
    %c0_i32_1 = arith.constant 0 : i32
    return %arg0, %c0_i32, %c0_i32_0 : i32, i32, i32
  }
  func.func @transform_7(%arg0: i32) -> (i32, i32) {
    %c0_i32 = arith.constant 0 : i32
    %c0_i32_0 = arith.constant 0 : i32
    return %arg0, %c0_i32 : i32, i32
  }
  func.func @transform_8(%arg0: i32) -> (i32, i32) {
    %c0_i32 = arith.constant 0 : i32
    %c0_i32_0 = arith.constant 0 : i32
    return %arg0, %c0_i32 : i32, i32
  }
  func.func @transform_9(%arg0: i32) -> (i32, i32) {
    %c0_i32 = arith.constant 0 : i32
    %c0_i32_0 = arith.constant 0 : i32
    return %arg0, %c0_i32 : i32, i32
  }
}

module attributes {stable_mosaic.version = 11 : i64} {
  func.func @sim_kernel(%arg0: memref<16x128xf32, #tpu.memory_space<vmem>>, %arg1: memref<16x128xf32, #tpu.memory_space<vmem>>, %arg2: memref<1x1xf32, #tpu.memory_space<vmem>>) attributes {dimension_semantics = [], scalar_prefetch = 0 : i64, scratch_operands = 0 : i64, tpu.core_type = #tpu.core_type<tc>} {
    %c0 = arith.constant 0 : index
    %c0_0 = arith.constant 0 : index
    %0 = vector.load %arg0[%c0, %c0_0] : memref<16x128xf32, #tpu.memory_space<vmem>>, vector<16x128xf32>
    %c0_1 = arith.constant 0 : index
    %c0_2 = arith.constant 0 : index
    %1 = vector.load %arg1[%c0_1, %c0_2] : memref<16x128xf32, #tpu.memory_space<vmem>>, vector<16x128xf32>
    %2 = arith.mulf %0, %0 : vector<16x128xf32>
    %cst = arith.constant dense<0.000000e+00> : vector<16xf32>
    %3 = vector.multi_reduction <add>, %2, %cst [1] : vector<16x128xf32> to vector<16xf32>
    %4 = vector.shape_cast %3 : vector<16xf32> to vector<16x1xf32>
    %5 = math.sqrt %4 : vector<16x1xf32>
    %cst_3 = arith.constant 9.99999993E-9 : f32
    %6 = vector.broadcast %cst_3 : f32 to vector<16x1xf32>
    %7 = arith.maximumf %5, %6 : vector<16x1xf32>
    %8 = arith.mulf %1, %1 : vector<16x128xf32>
    %cst_4 = arith.constant dense<0.000000e+00> : vector<16xf32>
    %9 = vector.multi_reduction <add>, %8, %cst_4 [1] : vector<16x128xf32> to vector<16xf32>
    %10 = vector.shape_cast %9 : vector<16xf32> to vector<16x1xf32>
    %11 = math.sqrt %10 : vector<16x1xf32>
    %cst_5 = arith.constant 9.99999993E-9 : f32
    %12 = vector.broadcast %cst_5 : f32 to vector<16x1xf32>
    %13 = arith.maximumf %11, %12 : vector<16x1xf32>
    %14 = arith.mulf %0, %1 : vector<16x128xf32>
    %cst_6 = arith.constant dense<0.000000e+00> : vector<16xf32>
    %15 = vector.multi_reduction <add>, %14, %cst_6 [1] : vector<16x128xf32> to vector<16xf32>
    %16 = vector.shape_cast %15 : vector<16xf32> to vector<16x1xf32>
    %17 = arith.mulf %7, %13 : vector<16x1xf32>
    %18 = arith.divf %16, %17 : vector<16x1xf32>
    %cst_7 = arith.constant dense<0.000000e+00> : vector<1xf32>
    %19 = vector.multi_reduction <add>, %18, %cst_7 [0] : vector<16x1xf32> to vector<1xf32>
    %20 = vector.shape_cast %19 : vector<1xf32> to vector<1x1xf32>
    %cst_8 = arith.constant 1.600000e+01 : f32
    %21 = vector.broadcast %cst_8 : f32 to vector<1x1xf32>
    %22 = arith.divf %20, %21 : vector<1x1xf32>
    %cst_9 = arith.constant 0.000000e+00 : f32
    %23 = vector.broadcast %cst_9 : f32 to vector<1x1xf32>
    %24 = arith.subf %23, %22 : vector<1x1xf32>
    %25 = math.exp %24 : vector<1x1xf32>
    %c0_10 = arith.constant 0 : index
    %c0_11 = arith.constant 0 : index
    %26 = vector.load %arg2[%c0_10, %c0_11] : memref<1x1xf32, #tpu.memory_space<vmem>>, vector<1x1xf32>
    tpu.vector_store %arg2[%c0_10, %c0_11], %25 {strides = array<i32>} : memref<1x1xf32, #tpu.memory_space<vmem>>, vector<1x1xf32>,
    return
  }
}

module attributes {stable_mosaic.version = 11 : i64} {
  func.func @fc_ce_kernel(%arg0: i32, %arg1: i32, %arg2: memref<128x128xf32, #tpu.memory_space<vmem>>, %arg3: memref<128x1024xbf16, #tpu.memory_space<vmem>>, %arg4: memref<1x1024xf32, #tpu.memory_space<vmem>>, %arg5: memref<128x1xi32, #tpu.memory_space<vmem>>, %arg6: memref<128x1024xf32, #tpu.memory_space<vmem>>, %arg7: memref<128x1xf32, #tpu.memory_space<vmem>>, %arg8: memref<128x128xbf16, #tpu.memory_space<vmem>>, %arg9: memref<128x1xf32, #tpu.memory_space<vmem>>, %arg10: memref<128x1xf32, #tpu.memory_space<vmem>>, %arg11: memref<128x1xf32, #tpu.memory_space<vmem>>) attributes {dimension_semantics = [#tpu.dimension_semantics<parallel>, #tpu.dimension_semantics<arbitrary>], iteration_bounds = array<i64: 1, 2>, scalar_prefetch = 0 : i64, scratch_operands = 4 : i64, tpu.core_type = #tpu.core_type<tc>, window_params = [{transform_indices = @transform_0, window_bounds = array<i64: 128, 128>}, {transform_indices = @transform_1, window_bounds = array<i64: 128, 1024>}, {transform_indices = @transform_2, window_bounds = array<i64: 1, 1024>}, {transform_indices = @transform_3, window_bounds = array<i64: 128, 1>}, {transform_indices = @transform_4, window_bounds = array<i64: 128, 1024>}, {transform_indices = @transform_5, window_bounds = array<i64: 128, 1>}]} {
    %c0_i32 = arith.constant 0 : i32
    %0 = arith.cmpi eq, %arg1, %c0_i32 : i32
    %1 = arith.extui %0 : i1 to i32
    %c0_i32_0 = arith.constant 0 : i32
    %2 = arith.cmpi ne, %1, %c0_i32_0 : i32
    scf.if %2 {
      %c0_27 = arith.constant 0 : index
      %c0_28 = arith.constant 0 : index
      %43 = vector.load %arg2[%c0_27, %c0_28] : memref<128x128xf32, #tpu.memory_space<vmem>>, vector<128x128xf32>
      %44 = arith.truncf %43 : vector<128x128xf32> to vector<128x128xbf16>
      %c0_29 = arith.constant 0 : index
      %c0_30 = arith.constant 0 : index
      %45 = vector.load %arg8[%c0_29, %c0_30] : memref<128x128xbf16, #tpu.memory_space<vmem>>, vector<128x128xbf16>
      tpu.vector_store %arg8[%c0_29, %c0_30], %44 {strides = array<i32>} : memref<128x128xbf16, #tpu.memory_space<vmem>>, vector<128x128xbf16>,
      %cst_31 = arith.constant 0xFF800000 : f32
      %46 = vector.broadcast %cst_31 : f32 to vector<128x1xf32>
      %c0_32 = arith.constant 0 : index
      %c0_33 = arith.constant 0 : index
      %47 = vector.load %arg9[%c0_32, %c0_33] : memref<128x1xf32, #tpu.memory_space<vmem>>, vector<128x1xf32>
      tpu.vector_store %arg9[%c0_32, %c0_33], %46 {strides = array<i32>} : memref<128x1xf32, #tpu.memory_space<vmem>>, vector<128x1xf32>,
      %cst_34 = arith.constant 0.000000e+00 : f32
      %48 = vector.broadcast %cst_34 : f32 to vector<128x1xf32>
      %c0_35 = arith.constant 0 : index
      %c0_36 = arith.constant 0 : index
      %49 = vector.load %arg10[%c0_35, %c0_36] : memref<128x1xf32, #tpu.memory_space<vmem>>, vector<128x1xf32>
      tpu.vector_store %arg10[%c0_35, %c0_36], %48 {strides = array<i32>} : memref<128x1xf32, #tpu.memory_space<vmem>>, vector<128x1xf32>,
      %cst_37 = arith.constant 0.000000e+00 : f32
      %50 = vector.broadcast %cst_37 : f32 to vector<128x1xf32>
      %c0_38 = arith.constant 0 : index
      %c0_39 = arith.constant 0 : index
      %51 = vector.load %arg11[%c0_38, %c0_39] : memref<128x1xf32, #tpu.memory_space<vmem>>, vector<128x1xf32>
      tpu.vector_store %arg11[%c0_38, %c0_39], %50 {strides = array<i32>} : memref<128x1xf32, #tpu.memory_space<vmem>>, vector<128x1xf32>,
    } else {
    }
    %c0 = arith.constant 0 : index
    %c0_1 = arith.constant 0 : index
    %3 = vector.load %arg8[%c0, %c0_1] : memref<128x128xbf16, #tpu.memory_space<vmem>>, vector<128x128xbf16>
    %c0_2 = arith.constant 0 : index
    %c0_3 = arith.constant 0 : index
    %4 = vector.load %arg3[%c0_2, %c0_3] : memref<128x1024xbf16, #tpu.memory_space<vmem>>, vector<128x1024xbf16>
    %cst = arith.constant dense<0.000000e+00> : vector<128x1024xf32>
    %5 = tpu.matmul %3, %4, %cst {dimension_numbers = #tpu.dot_dimension_numbers<[1], [0], [0], [1], [0, 0, 1, 1], [], []>} : vector<128x128xbf16>, vector<128x1024xbf16>, vector<128x1024xf32> -> vector<128x1024xf32>
    %c0_4 = arith.constant 0 : index
    %c0_5 = arith.constant 0 : index
    %6 = vector.load %arg4[%c0_4, %c0_5] : memref<1x1024xf32, #tpu.memory_space<vmem>>, vector<1x1024xf32>
    %7 = vector.broadcast %6 : vector<1x1024xf32> to vector<128x1024xf32>
    %8 = arith.addf %5, %7 : vector<128x1024xf32>
    %c0_6 = arith.constant 0 : index
    %c0_7 = arith.constant 0 : index
    %9 = vector.load %arg6[%c0_6, %c0_7] : memref<128x1024xf32, #tpu.memory_space<vmem>>, vector<128x1024xf32>
    tpu.vector_store %arg6[%c0_6, %c0_7], %8 {strides = array<i32>} : memref<128x1024xf32, #tpu.memory_space<vmem>>, vector<128x1024xf32>,
    %c0_8 = arith.constant 0 : index
    %c0_9 = arith.constant 0 : index
    %10 = vector.load %arg9[%c0_8, %c0_9] : memref<128x1xf32, #tpu.memory_space<vmem>>, vector<128x1xf32>
    %cst_10 = arith.constant dense<0xFF800000> : vector<128xf32>
    %11 = vector.multi_reduction <maximumf>, %8, %cst_10 [1] : vector<128x1024xf32> to vector<128xf32>
    %12 = vector.shape_cast %11 : vector<128xf32> to vector<128x1xf32>
    %13 = arith.maximumf %10, %12 : vector<128x1xf32>
    %c0_11 = arith.constant 0 : index
    %c0_12 = arith.constant 0 : index
    %14 = vector.load %arg10[%c0_11, %c0_12] : memref<128x1xf32, #tpu.memory_space<vmem>>, vector<128x1xf32>
    %15 = arith.subf %10, %13 : vector<128x1xf32>
    %16 = math.exp %15 : vector<128x1xf32>
    %17 = arith.mulf %14, %16 : vector<128x1xf32>
    %18 = vector.broadcast %13 : vector<128x1xf32> to vector<128x1024xf32>
    %19 = arith.subf %8, %18 : vector<128x1024xf32>
    %20 = math.exp %19 : vector<128x1024xf32>
    %cst_13 = arith.constant dense<0.000000e+00> : vector<128xf32>
    %21 = vector.multi_reduction <add>, %20, %cst_13 [1] : vector<128x1024xf32> to vector<128xf32>
    %22 = vector.shape_cast %21 : vector<128xf32> to vector<128x1xf32>
    %23 = arith.addf %17, %22 : vector<128x1xf32>
    %c0_14 = arith.constant 0 : index
    %c0_15 = arith.constant 0 : index
    %24 = vector.load %arg10[%c0_14, %c0_15] : memref<128x1xf32, #tpu.memory_space<vmem>>, vector<128x1xf32>
    tpu.vector_store %arg10[%c0_14, %c0_15], %23 {strides = array<i32>} : memref<128x1xf32, #tpu.memory_space<vmem>>, vector<128x1xf32>,
    %c0_16 = arith.constant 0 : index
    %c0_17 = arith.constant 0 : index
    %25 = vector.load %arg9[%c0_16, %c0_17] : memref<128x1xf32, #tpu.memory_space<vmem>>, vector<128x1xf32>
    tpu.vector_store %arg9[%c0_16, %c0_17], %13 {strides = array<i32>} : memref<128x1xf32, #tpu.memory_space<vmem>>, vector<128x1xf32>,
    %26 = tpu.iota {dimensions = array<i32: 1>} : vector<128x1024xi32>
    %c1024_i32 = arith.constant 1024 : i32
    %27 = arith.muli %arg1, %c1024_i32 : i32
    %28 = vector.broadcast %27 : i32 to vector<128x1024xi32>
    %29 = arith.addi %26, %28 : vector<128x1024xi32>
    %c0_18 = arith.constant 0 : index
    %c0_19 = arith.constant 0 : index
    %30 = vector.load %arg11[%c0_18, %c0_19] : memref<128x1xf32, #tpu.memory_space<vmem>>, vector<128x1xf32>
    %c0_20 = arith.constant 0 : index
    %c0_21 = arith.constant 0 : index
    %31 = vector.load %arg5[%c0_20, %c0_21] : memref<128x1xi32, #tpu.memory_space<vmem>>, vector<128x1xi32>
    %32 = vector.broadcast %31 : vector<128x1xi32> to vector<128x1024xi32>
    %33 = arith.cmpi eq, %29, %32 : vector<128x1024xi32>
    %cst_22 = arith.constant 0.000000e+00 : f32
    %34 = vector.broadcast %cst_22 : f32 to vector<128x1024xf32>
    %35 = arith.select %33, %8, %34 : vector<128x1024xi1>, vector<128x1024xf32>
    %cst_23 = arith.constant dense<0.000000e+00> : vector<128xf32>
    %36 = vector.multi_reduction <add>, %35, %cst_23 [1] : vector<128x1024xf32> to vector<128xf32>
    %37 = vector.shape_cast %36 : vector<128xf32> to vector<128x1xf32>
    %38 = arith.addf %30, %37 : vector<128x1xf32>
    %c0_24 = arith.constant 0 : index
    %c0_25 = arith.constant 0 : index
    %39 = vector.load %arg11[%c0_24, %c0_25] : memref<128x1xf32, #tpu.memory_space<vmem>>, vector<128x1xf32>
    tpu.vector_store %arg11[%c0_24, %c0_25], %38 {strides = array<i32>} : memref<128x1xf32, #tpu.memory_space<vmem>>, vector<128x1xf32>,
    %c1_i32 = arith.constant 1 : i32
    %40 = arith.cmpi eq, %arg1, %c1_i32 : i32
    %41 = arith.extui %40 : i1 to i32
    %c0_i32_26 = arith.constant 0 : i32
    %42 = arith.cmpi ne, %41, %c0_i32_26 : i32
    scf.if %42 {
      %c0_27 = arith.constant 0 : index
      %c0_28 = arith.constant 0 : index
      %43 = vector.load %arg9[%c0_27, %c0_28] : memref<128x1xf32, #tpu.memory_space<vmem>>, vector<128x1xf32>
      %c0_29 = arith.constant 0 : index
      %c0_30 = arith.constant 0 : index
      %44 = vector.load %arg10[%c0_29, %c0_30] : memref<128x1xf32, #tpu.memory_space<vmem>>, vector<128x1xf32>
      %45 = math.log %44 : vector<128x1xf32>
      %46 = arith.addf %43, %45 : vector<128x1xf32>
      %c0_31 = arith.constant 0 : index
      %c0_32 = arith.constant 0 : index
      %47 = vector.load %arg11[%c0_31, %c0_32] : memref<128x1xf32, #tpu.memory_space<vmem>>, vector<128x1xf32>
      %48 = arith.subf %46, %47 : vector<128x1xf32>
      %c0_33 = arith.constant 0 : index
      %c0_34 = arith.constant 0 : index
      %49 = vector.load %arg7[%c0_33, %c0_34] : memref<128x1xf32, #tpu.memory_space<vmem>>, vector<128x1xf32>
      tpu.vector_store %arg7[%c0_33, %c0_34], %48 {strides = array<i32>} : memref<128x1xf32, #tpu.memory_space<vmem>>, vector<128x1xf32>,
    } else {
    }
    return
  }
  func.func @transform_0(%arg0: i32, %arg1: i32) -> (i32, i32) {
    %c0_i32 = arith.constant 0 : i32
    %c0_i32_0 = arith.constant 0 : i32
    return %arg0, %c0_i32 : i32, i32
  }
  func.func @transform_1(%arg0: i32, %arg1: i32) -> (i32, i32) {
    %c0_i32 = arith.constant 0 : i32
    %c0_i32_0 = arith.constant 0 : i32
    return %c0_i32, %arg1 : i32, i32
  }
  func.func @transform_2(%arg0: i32, %arg1: i32) -> (i32, i32) {
    %c0_i32 = arith.constant 0 : i32
    %c0_i32_0 = arith.constant 0 : i32
    return %c0_i32, %arg1 : i32, i32
  }
  func.func @transform_3(%arg0: i32, %arg1: i32) -> (i32, i32) {
    %c0_i32 = arith.constant 0 : i32
    %c0_i32_0 = arith.constant 0 : i32
    return %arg0, %c0_i32 : i32, i32
  }
  func.func @transform_4(%arg0: i32, %arg1: i32) -> (i32, i32) {
    %c0_i32 = arith.constant 0 : i32
    return %arg0, %arg1 : i32, i32
  }
  func.func @transform_5(%arg0: i32, %arg1: i32) -> (i32, i32) {
    %c0_i32 = arith.constant 0 : i32
    %c0_i32_0 = arith.constant 0 : i32
    return %arg0, %c0_i32 : i32, i32
  }
}

</mosaic_0001>

<llo_original>
// kernel: seq2seq_forward.7
$region0: #{seq2seq_forward.7}
  #allocation0 [shape = 'u32[]', space=smem, size = 0x4, offset = 0x4, fixed_abs, tag = 'smem constant byte address 0x4 - core index']
  #allocation1 [shape = 'u32[144,128]{1,0:T(1,128)}', space=vmem, size = 0x12000, scoped, tag = 'internal scratch']
  %s0 = inlined_call_operand.vmem [shape: f32[16,128], index: 0, kind: input, shape index: {}]
  %s1 = inlined_call_operand.vmem [shape: f32[16,128], index: 1, kind: input, shape index: {}]
  %s2 = inlined_call_operand.hbm [shape: f32[1,1], index: 2, kind: output, shape index: {}]
  %s3 = sld [smem:[#allocation0]]
  $region18: #{seq2seq_forward.7} parent=0
    _
  %s5 = ssub.s32 1, %s3
  %s6 = scalar_select 0, %s5, %s3
  $region1: #{seq2seq_forward.7} parent=0
    #allocation2 [shape = 'u8[512]{0}', space=vmem, size = 0x400, scoped, tag = 'output window, operand 0, single buffered']
    #allocation3 [shape = 's32[1]{0}', space=sflag, size = 0x4, scoped, tag = 'scoped memory for seq2seq_forward.7']
    %7 = vsyncpa [#allocation3], 0
    // Predicated region
    $region2: #{seq2seq_forward.7} parent=1 // pred_check
      _
    $region3: #{seq2seq_forward.7} parent=1 // pred_check_branch
      %9 = sbr.rel (0) target = $region5
    $region4: #{seq2seq_forward.7} parent=1 // pred_region
      _
    $region5: #{seq2seq_forward.7} parent=1 // pred_fallthru
      _
    // Predicated region
    $region6: #{seq2seq_forward.7} parent=1 // pred_check
      _
    $region7: #{seq2seq_forward.7} parent=1 // pred_check_branch
      %11 = sbr.rel (0) target = $region9
    $region8: #{seq2seq_forward.7} parent=1 // pred_region
      _
    $region9: #{seq2seq_forward.7} parent=1 // pred_fallthru
      _
    %v12 = vld [vmem:[%s0] sm:$0xff]
    %v13 = vld [vmem:[%s0 + $0x8] sm:$0xff]
    %v14 = vld [vmem:[%s1] sm:$0xff]
    %v15 = vld [vmem:[%s1 + $0x8] sm:$0xff]
    %v16 = vmul.f32 %v12, %v12
    %v17 = vmul.f32 %v13, %v13
    %18 = vadd.xlane.f32.xlu0 %v16
    %v19 = vpop.xlane.xlu0 %18
    %20 = vadd.xlane.f32.xlu0 %v17
    %v21 = vpop.xlane.xlu0 %20
    %v22 = vrsqrt.pop %v19
    %v23 = vmul.f32 %v19, %v22
    %vm24 = vcmp.eq.f32.partialorder %v19, inf
    %v25 = vsel %vm24, %v19, %v23
    %vm26 = vcmp.eq.f32.partialorder %v19, 0.0
    %v27 = vand.u32 %v19, 2147483648
    %v28 = vsel %vm26, %v27, %v25
    %v29 = vrsqrt.pop %v21
    %v30 = vmul.f32 %v21, %v29
    %vm31 = vcmp.eq.f32.partialorder %v21, inf
    %v32 = vsel %vm31, %v21, %v30
    %vm33 = vcmp.eq.f32.partialorder %v21, 0.0
    %v34 = vand.u32 %v21, 2147483648
    %v35 = vsel %vm33, %v34, %v32
    %v36 = vmax.f32 %v28, 1e-08
    %v37 = vmax.f32 %v35, 1e-08
    %v38 = vmul.f32 %v14, %v14
    %v39 = vmul.f32 %v15, %v15
    %40 = vadd.xlane.f32.xlu0 %v38
    %v41 = vpop.xlane.xlu0 %40
    %42 = vadd.xlane.f32.xlu0 %v39
    %v43 = vpop.xlane.xlu0 %42
    %v44 = vrsqrt.pop %v41
    %v45 = vmul.f32 %v41, %v44
    %vm46 = vcmp.eq.f32.partialorder %v41, inf
    %v47 = vsel %vm46, %v41, %v45
    %vm48 = vcmp.eq.f32.partialorder %v41, 0.0
    %v49 = vand.u32 %v41, 2147483648
    %v50 = vsel %vm48, %v49, %v47
    %v51 = vrsqrt.pop %v43
    %v52 = vmul.f32 %v43, %v51
    %vm53 = vcmp.eq.f32.partialorder %v43, inf
    %v54 = vsel %vm53, %v43, %v52
    %vm55 = vcmp.eq.f32.partialorder %v43, 0.0
    %v56 = vand.u32 %v43, 2147483648
    %v57 = vsel %vm55, %v56, %v54
    %v58 = vmax.f32 %v50, 1e-08
    %v59 = vmax.f32 %v57, 1e-08
    %v60 = vmul.f32 %v12, %v14
    %v61 = vmul.f32 %v13, %v15
    %62 = vadd.xlane.f32.xlu0 %v60
    %v63 = vpop.xlane.xlu0 %62
    %64 = vadd.xlane.f32.xlu0 %v61
    %v65 = vpop.xlane.xlu0 %64
    %v66 = vmul.f32 %v36, %v58
    %v67 = vmul.f32 %v37, %v59
    %v68 = vrcp.pop %v66
    %v69 = vmul.f32 %v63, %v68
    %v70 = vrcp.pop %v67
    %v71 = vmul.f32 %v65, %v70
    %v72 = vadd.f32 %v69, %v71
    %v73 = vrot.slane %v72, 4
    %v74 = vadd.f32 %v72, %v73
    %v75 = vrot.slane %v74, 2
    %v76 = vadd.f32 %v74, %v75
    %v77 = vrot.slane %v76, 1
    %v78 = vadd.f32 %v76, %v77
    %v79 = vrcp.pop 16.0
    %v80 = vmul.f32 %v78, %v79
    %v81 = vsub.f32 0.0, %v80
    %v82 = vmul.f32 %v81, 1.442695
    %v83 = vpow.pop %v82
    %vm84 = vcmask 0
    %85 = vst.msk [vmem:[#allocation2] sm:$0x1] %vm84, %v83
    // Predicated region
    $region10: #{seq2seq_forward.7} parent=1 // pred_check
      _
    $region11: #{seq2seq_forward.7} parent=1 // pred_check_branch
      %87 = sbr.rel (0) target = $region13
    $region12: #{seq2seq_forward.7} parent=1 // pred_region
      %s89 = ssub.s32 16, 16
      %90 = vsyncadd [#allocation3], %s89
      %s92 = sshll.u32 [#allocation2], 4
      %s93 = int_to_ptr.vmem [resolvable:$true] %s92
      %95 = dma.vmem_to_hbm [thread:$0]  %s93, 16, %s2, [#allocation3]
    $region13: #{seq2seq_forward.7} parent=1 // pred_fallthru
      _
    // Predicated region
    $region14: #{seq2seq_forward.7} parent=1 // pred_check
      _
    $region15: #{seq2seq_forward.7} parent=1 // pred_check_branch
      %97 = sbr.rel (0) target = $region17
    $region16: #{seq2seq_forward.7} parent=1 // pred_region
      %98 = dma.done [#allocation3], 16
    $region17: #{seq2seq_forward.7} parent=1 // pred_fallthru
      _
    %99 = vsyncpa [#allocation3], 1

// kernel: seq2seq_forward.4
$region0: #{seq2seq_forward.4}
  #allocation0 [shape = 'u32[]', space=smem, size = 0x4, offset = 0x4, fixed_abs, tag = 'smem constant byte address 0x4 - core index']
  #allocation1 [shape = 'u32[144,128]{1,0:T(1,128)}', space=vmem, size = 0x12000, scoped, tag = 'internal scratch']
  #allocation2 [shape = 'f32[128,512]{1,0:T(8,128)}', space=vmem, size = 0x40000, scoped, tag = 'scratch operand']
  %s0 = inlined_call_operand.hbm [shape: f32[16,8,128], index: 0, kind: input, shape index: {}]
  %s1 = inlined_call_operand.hbm [shape: bf16[128,512], index: 1, kind: input, shape index: {}]
  %s2 = inlined_call_operand.hbm [shape: bf16[128,512], index: 2, kind: input, shape index: {}]
  %s3 = inlined_call_operand.vmem [shape: f32[1,512], index: 3, kind: input, shape index: {}]
  %s4 = inlined_call_operand.vmem [shape: f32[16,128], index: 4, kind: input, shape index: {}, may-alias: {4,5}]
  %s5 = inlined_call_operand.vmem [shape: f32[16,128], index: 5, kind: input, shape index: {}, may-alias: {4,5}]
  %s6 = inlined_call_operand.vmem [shape: f32[16,128], index: 6, kind: output, shape index: {0}]
  %s7 = inlined_call_operand.vmem [shape: f32[16,128], index: 7, kind: output, shape index: {1}]
  %s8 = inlined_call_operand.vmem [shape: f32[16,128], index: 8, kind: output, shape index: {2}]
  %9 = xla_tuple %s6, %s7, %s8
  %s10 = sld [smem:[#allocation0]]
  $region62: #{seq2seq_forward.4} parent=0
    _
  %s12 = ssub.s32 1, %s10
  %s13 = scalar_select 0, %s12, %s10
  $region1: #{seq2seq_forward.4} parent=0
    #allocation3 [shape = 'u8[65536]{0}', space=vmem, size = 0x10000, scoped, tag = 'input window, operand 0, single buffered']
    #allocation4 [shape = 's32[1]{0}', space=sflag, size = 0x4, scoped, tag = 'scoped memory for seq2seq_forward.4']
    #allocation5 [shape = 'u8[131072]{0}', space=vmem, size = 0x20000, scoped, tag = 'input window, operand 1, single buffered']
    #allocation6 [shape = 's32[1]{0}', space=sflag, size = 0x4, scoped, tag = 'scoped memory for seq2seq_forward.4']
    #allocation7 [shape = 'u8[131072]{0}', space=vmem, size = 0x20000, scoped, tag = 'input window, operand 2, single buffered']
    %14 = vsyncpa [#allocation4], 0
    %15 = vsyncpa [#allocation6], 0
    // Predicated region
    $region2: #{seq2seq_forward.4} parent=1 // pred_check
      _
    $region3: #{seq2seq_forward.4} parent=1 // pred_check_branch
      %17 = sbr.rel (0) target = $region5
    $region4: #{seq2seq_forward.4} parent=1 // pred_region
      %s19 = ssub.s32 2048, 2048
      %20 = vsyncadd [#allocation4], %s19
      %s21 = sshll.u32 [#allocation3], 4
      %s22 = int_to_ptr.vmem [resolvable:$true] %s21
      %27 = dma.hbm_to_vmem [thread:$0]  %s0, 2048, %s22, [#allocation4], 128, 128, 8
    $region5: #{seq2seq_forward.4} parent=1 // pred_fallthru
      _
    // Predicated region
    $region6: #{seq2seq_forward.4} parent=1 // pred_check
      _
    $region7: #{seq2seq_forward.4} parent=1 // pred_check_branch
      %29 = sbr.rel (0) target = $region9
    $region8: #{seq2seq_forward.4} parent=1 // pred_region
      %s31 = ssub.s32 4096, 4096
      %32 = vsyncadd [#allocation6], %s31
      %s33 = sshll.u32 [#allocation5], 4
      %s34 = int_to_ptr.vmem [resolvable:$true] %s33
      %39 = dma.hbm_to_vmem [thread:$0]  %s1, 4096, %s34, [#allocation6], 256, 256, 16
    $region9: #{seq2seq_forward.4} parent=1 // pred_fallthru
      _
    // Predicated region
    $region10: #{seq2seq_forward.4} parent=1 // pred_check
      _
    $region11: #{seq2seq_forward.4} parent=1 // pred_check_branch
      %41 = sbr.rel (0) target = $region13
    $region12: #{seq2seq_forward.4} parent=1 // pred_region
      %s43 = ssub.s32 4096, 4096
      %44 = vsyncadd [#allocation6], %s43
      %s45 = sshll.u32 [#allocation7], 4
      %s46 = int_to_ptr.vmem [resolvable:$true] %s45
      %51 = dma.hbm_to_vmem [thread:$0]  %s2, 4096, %s46, [#allocation6], 256, 256, 16
    $region13: #{seq2seq_forward.4} parent=1 // pred_fallthru
      _
    // Predicated region
    $region14: #{seq2seq_forward.4} parent=1 // pred_check
      _
    $region15: #{seq2seq_forward.4} parent=1 // pred_check_branch
      %53 = sbr.rel (0) target = $region17
    $region16: #{seq2seq_forward.4} parent=1 // pred_region
      _
    $region17: #{seq2seq_forward.4} parent=1 // pred_fallthru
      _
    // Predicated region
    $region18: #{seq2seq_forward.4} parent=1 // pred_check
      _
    $region19: #{seq2seq_forward.4} parent=1 // pred_check_branch
      %55 = sbr.rel (0) target = $region21
    $region20: #{seq2seq_forward.4} parent=1 // pred_region
      _
    $region21: #{seq2seq_forward.4} parent=1 // pred_fallthru
      _
    // Predicated region
    $region22: #{seq2seq_forward.4} parent=1 // pred_check
      _
    $region23: #{seq2seq_forward.4} parent=1 // pred_check_branch
      %57 = sbr.rel (0) target = $region25
    $region24: #{seq2seq_forward.4} parent=1 // pred_region
      _
    $region25: #{seq2seq_forward.4} parent=1 // pred_fallthru
      _
    // Predicated region
    $region26: #{seq2seq_forward.4} parent=1 // pred_check
      _
    $region27: #{seq2seq_forward.4} parent=1 // pred_check_branch
      %59 = sbr.rel (0) target = $region29
    $region28: #{seq2seq_forward.4} parent=1 // pred_region
      %60 = dma.done [#allocation4], 2048
    $region29: #{seq2seq_forward.4} parent=1 // pred_fallthru
      _
    // Predicated region
    $region30: #{seq2seq_forward.4} parent=1 // pred_check
      _
    $region31: #{seq2seq_forward.4} parent=1 // pred_check_branch
      %62 = sbr.rel (0) target = $region33
    $region32: #{seq2seq_forward.4} parent=1 // pred_region
      %63 = dma.done [#allocation6], 4096
    $region33: #{seq2seq_forward.4} parent=1 // pred_fallthru
      _
    // Predicated region
    $region34: #{seq2seq_forward.4} parent=1 // pred_check
      _
    $region35: #{seq2seq_forward.4} parent=1 // pred_check_branch
      %65 = sbr.rel (0) target = $region37
    $region36: #{seq2seq_forward.4} parent=1 // pred_region
      %66 = dma.done [#allocation6], 4096
    $region37: #{seq2seq_forward.4} parent=1 // pred_fallthru
      _
    %v68 = vld [vmem:[#allocation3] sm:$0xff]
    %v69 = vld [vmem:[#allocation3 + $0x8] sm:$0xff]
    %v70 = vld [vmem:[#allocation3 + $0x10] sm:$0xff]
    %v71 = vld [vmem:[#allocation3 + $0x18] sm:$0xff]
    %v72 = vld [vmem:[#allocation3 + $0x20] sm:$0xff]
    %v73 = vld [vmem:[#allocation3 + $0x28] sm:$0xff]
    %v74 = vld [vmem:[#allocation3 + $0x30] sm:$0xff]
    %v75 = vld [vmem:[#allocation3 + $0x38] sm:$0xff]
    %v76 = vld [vmem:[#allocation3 + $0x40] sm:$0xff]
    %v77 = vld [vmem:[#allocation3 + $0x48] sm:$0xff]
    %v78 = vld [vmem:[#allocation3 + $0x50] sm:$0xff]
    %v79 = vld [vmem:[#allocation3 + $0x58] sm:$0xff]
    %v80 = vld [vmem:[#allocation3 + $0x60] sm:$0xff]
    %v81 = vld [vmem:[#allocation3 + $0x68] sm:$0xff]
    %v82 = vld [vmem:[#allocation3 + $0x70] sm:$0xff]
    %v83 = vld [vmem:[#allocation3 + $0x78] sm:$0xff]
    %v84 = vcombine.low %v68, %v70
    %v85 = vcombine.high %v68, %v70
    %v87 = vunpack.c.l.s4 1983009808
    %v88 = vunpack.c.0.s8 %v87
    %v89 = vlaneseq
    %v90 = vshrl.u32 %v89, 7
    %v91 = vsub.s32 %v88, %v90
    %v92 = vrot.slane %v84, %v91
    %v94 = vunpack.c.l.s4 1983009808
    %v95 = vunpack.c.0.s8 %v94
    %v96 = vlaneseq
    %v97 = vshrl.u32 %v96, 7
    %v98 = vsub.s32 %v95, %v97
    %v99 = vrot.slane %v85, %v98
    %v100 = vcombine.low %v69, %v71
    %v101 = vcombine.high %v69, %v71
    %v103 = vunpack.c.l.s4 1983009808
    %v104 = vunpack.c.0.s8 %v103
    %v105 = vlaneseq
    %v106 = vshrl.u32 %v105, 7
    %v107 = vsub.s32 %v104, %v106
    %v108 = vrot.slane %v100, %v107
    %v110 = vunpack.c.l.s4 1983009808
    %v111 = vunpack.c.0.s8 %v110
    %v112 = vlaneseq
    %v113 = vshrl.u32 %v112, 7
    %v114 = vsub.s32 %v111, %v113
    %v115 = vrot.slane %v101, %v114
    %v116 = vcombine.low %v72, %v74
    %v117 = vcombine.high %v72, %v74
    %v119 = vunpack.c.l.s4 1983009808
    %v120 = vunpack.c.0.s8 %v119
    %v121 = vlaneseq
    %v122 = vshrl.u32 %v121, 7
    %v123 = vsub.s32 %v120, %v122
    %v124 = vrot.slane %v116, %v123
    %v126 = vunpack.c.l.s4 1983009808
    %v127 = vunpack.c.0.s8 %v126
    %v128 = vlaneseq
    %v129 = vshrl.u32 %v128, 7
    %v130 = vsub.s32 %v127, %v129
    %v131 = vrot.slane %v117, %v130
    %v132 = vcombine.low %v73, %v75
    %v133 = vcombine.high %v73, %v75
    %v135 = vunpack.c.l.s4 1983009808
    %v136 = vunpack.c.0.s8 %v135
    %v137 = vlaneseq
    %v138 = vshrl.u32 %v137, 7
    %v139 = vsub.s32 %v136, %v138
    %v140 = vrot.slane %v132, %v139
    %v142 = vunpack.c.l.s4 1983009808
    %v143 = vunpack.c.0.s8 %v142
    %v144 = vlaneseq
    %v145 = vshrl.u32 %v144, 7
    %v146 = vsub.s32 %v143, %v145
    %v147 = vrot.slane %v133, %v146
    %v148 = vcombine.low %v92, %v108
    %v149 = vcombine.high %v92, %v108
    %v151 = vunpack.c.l.s4 1934713408
    %v152 = vunpack.c.0.s8 %v151
    %v153 = vlaneseq
    %v154 = vshrl.u32 %v153, 7
    %v155 = vsub.s32 %v152, %v154
    %v156 = vrot.slane %v148, %v155
    %v158 = vunpack.c.l.s4 1934713408
    %v159 = vunpack.c.0.s8 %v158
    %v160 = vlaneseq
    %v161 = vshrl.u32 %v160, 7
    %v162 = vsub.s32 %v159, %v161
    %v163 = vrot.slane %v149, %v162
    %v164 = vcombine.low %v99, %v115
    %v165 = vcombine.high %v99, %v115
    %v167 = vunpack.c.l.s4 1934713408
    %v168 = vunpack.c.0.s8 %v167
    %v169 = vlaneseq
    %v170 = vshrl.u32 %v169, 7
    %v171 = vsub.s32 %v168, %v170
    %v172 = vrot.slane %v164, %v171
    %v174 = vunpack.c.l.s4 1934713408
    %v175 = vunpack.c.0.s8 %v174
    %v176 = vlaneseq
    %v177 = vshrl.u32 %v176, 7
    %v178 = vsub.s32 %v175, %v177
    %v179 = vrot.slane %v165, %v178
    %v180 = vcombine.low %v124, %v140
    %v181 = vcombine.high %v124, %v140
    %v183 = vunpack.c.l.s4 1934713408
    %v184 = vunpack.c.0.s8 %v183
    %v185 = vlaneseq
    %v186 = vshrl.u32 %v185, 7
    %v187 = vsub.s32 %v184, %v186
    %v188 = vrot.slane %v180, %v187
    %v190 = vunpack.c.l.s4 1934713408
    %v191 = vunpack.c.0.s8 %v190
    %v192 = vlaneseq
    %v193 = vshrl.u32 %v192, 7
    %v194 = vsub.s32 %v191, %v193
    %v195 = vrot.slane %v181, %v194
    %v196 = vcombine.low %v131, %v147
    %v197 = vcombine.high %v131, %v147
    %v199 = vunpack.c.l.s4 1934713408
    %v200 = vunpack.c.0.s8 %v199
    %v201 = vlaneseq
    %v202 = vshrl.u32 %v201, 7
    %v203 = vsub.s32 %v200, %v202
    %v204 = vrot.slane %v196, %v203
    %v206 = vunpack.c.l.s4 1934713408
    %v207 = vunpack.c.0.s8 %v206
    %v208 = vlaneseq
    %v209 = vshrl.u32 %v208, 7
    %v210 = vsub.s32 %v207, %v209
    %v211 = vrot.slane %v197, %v210
    %v212 = vcombine.low %v156, %v188
    %v213 = vcombine.high %v156, %v188
    %v214 = vcombine.low %v163, %v195
    %v215 = vcombine.high %v163, %v195
    %v216 = vcombine.low %v172, %v204
    %v217 = vcombine.high %v172, %v204
    %v218 = vcombine.low %v179, %v211
    %v219 = vcombine.high %v179, %v211
    %v220 = vcombine.low %v76, %v78
    %v221 = vcombine.high %v76, %v78
    %v223 = vunpack.c.l.s4 1983009808
    %v224 = vunpack.c.0.s8 %v223
    %v225 = vlaneseq
    %v226 = vshrl.u32 %v225, 7
    %v227 = vsub.s32 %v224, %v226
    %v228 = vrot.slane %v220, %v227
    %v230 = vunpack.c.l.s4 1983009808
    %v231 = vunpack.c.0.s8 %v230
    %v232 = vlaneseq
    %v233 = vshrl.u32 %v232, 7
    %v234 = vsub.s32 %v231, %v233
    %v235 = vrot.slane %v221, %v234
    %v236 = vcombine.low %v77, %v79
    %v237 = vcombine.high %v77, %v79
    %v239 = vunpack.c.l.s4 1983009808
    %v240 = vunpack.c.0.s8 %v239
    %v241 = vlaneseq
    %v242 = vshrl.u32 %v241, 7
    %v243 = vsub.s32 %v240, %v242
    %v244 = vrot.slane %v236, %v243
    %v246 = vunpack.c.l.s4 1983009808
    %v247 = vunpack.c.0.s8 %v246
    %v248 = vlaneseq
    %v249 = vshrl.u32 %v248, 7
    %v250 = vsub.s32 %v247, %v249
    %v251 = vrot.slane %v237, %v250
    %v252 = vcombine.low %v80, %v82
    %v253 = vcombine.high %v80, %v82
    %v255 = vunpack.c.l.s4 1983009808
    %v256 = vunpack.c.0.s8 %v255
    %v257 = vlaneseq
    %v258 = vshrl.u32 %v257, 7
    %v259 = vsub.s32 %v256, %v258
    %v260 = vrot.slane %v252, %v259
    %v262 = vunpack.c.l.s4 1983009808
    %v263 = vunpack.c.0.s8 %v262
    %v264 = vlaneseq
    %v265 = vshrl.u32 %v264, 7
    %v266 = vsub.s32 %v263, %v265
    %v267 = vrot.slane %v253, %v266
    %v268 = vcombine.low %v81, %v83
    %v269 = vcombine.high %v81, %v83
    %v271 = vunpack.c.l.s4 1983009808
    %v272 = vunpack.c.0.s8 %v271
    %v273 = vlaneseq
    %v274 = vshrl.u32 %v273, 7
    %v275 = vsub.s32 %v272, %v274
    %v276 = vrot.slane %v268, %v275
    %v278 = vunpack.c.l.s4 1983009808
    %v279 = vunpack.c.0.s8 %v278
    %v280 = vlaneseq
    %v281 = vshrl.u32 %v280, 7
    %v282 = vsub.s32 %v279, %v281
    %v283 = vrot.slane %v269, %v282
    %v284 = vcombine.low %v228, %v244
    %v285 = vcombine.high %v228, %v244
    %v287 = vunpack.c.l.s4 1934713408
    %v288 = vunpack.c.0.s8 %v287
    %v289 = vlaneseq
    %v290 = vshrl.u32 %v289, 7
    %v291 = vsub.s32 %v288, %v290
    %v292 = vrot.slane %v284, %v291
    %v294 = vunpack.c.l.s4 1934713408
    %v295 = vunpack.c.0.s8 %v294
    %v296 = vlaneseq
    %v297 = vshrl.u32 %v296, 7
    %v298 = vsub.s32 %v295, %v297
    %v299 = vrot.slane %v285, %v298
    %v300 = vcombine.low %v235, %v251
    %v301 = vcombine.high %v235, %v251
    %v303 = vunpack.c.l.s4 1934713408
    %v304 = vunpack.c.0.s8 %v303
    %v305 = vlaneseq
    %v306 = vshrl.u32 %v305, 7
    %v307 = vsub.s32 %v304, %v306
    %v308 = vrot.slane %v300, %v307
    %v310 = vunpack.c.l.s4 1934713408
    %v311 = vunpack.c.0.s8 %v310
    %v312 = vlaneseq
    %v313 = vshrl.u32 %v312, 7
    %v314 = vsub.s32 %v311, %v313
    %v315 = vrot.slane %v301, %v314
    %v316 = vcombine.low %v260, %v276
    %v317 = vcombine.high %v260, %v276
    %v319 = vunpack.c.l.s4 1934713408
    %v320 = vunpack.c.0.s8 %v319
    %v321 = vlaneseq
    %v322 = vshrl.u32 %v321, 7
    %v323 = vsub.s32 %v320, %v322
    %v324 = vrot.slane %v316, %v323
    %v326 = vunpack.c.l.s4 1934713408
    %v327 = vunpack.c.0.s8 %v326
    %v328 = vlaneseq
    %v329 = vshrl.u32 %v328, 7
    %v330 = vsub.s32 %v327, %v329
    %v331 = vrot.slane %v317, %v330
    %v332 = vcombine.low %v267, %v283
    %v333 = vcombine.high %v267, %v283
    %v335 = vunpack.c.l.s4 1934713408
    %v336 = vunpack.c.0.s8 %v335
    %v337 = vlaneseq
    %v338 = vshrl.u32 %v337, 7
    %v339 = vsub.s32 %v336, %v338
    %v340 = vrot.slane %v332, %v339
    %v342 = vunpack.c.l.s4 1934713408
    %v343 = vunpack.c.0.s8 %v342
    %v344 = vlaneseq
    %v345 = vshrl.u32 %v344, 7
    %v346 = vsub.s32 %v343, %v345
    %v347 = vrot.slane %v333, %v346
    %v348 = vcombine.low %v292, %v324
    %v349 = vcombine.high %v292, %v324
    %v350 = vcombine.low %v299, %v331
    %v351 = vcombine.high %v299, %v331
    %v352 = vcombine.low %v308, %v340
    %v353 = vcombine.high %v308, %v340
    %v354 = vcombine.low %v315, %v347
    %v355 = vcombine.high %v315, %v347
    %v356 = vpack.c.bf16 %v348, %v212
    %v357 = vpack.c.bf16 %v349, %v213
    %v358 = vpack.c.bf16 %v350, %v214
    %v359 = vpack.c.bf16 %v351, %v215
    %v360 = vpack.c.bf16 %v352, %v216
    %v361 = vpack.c.bf16 %v353, %v217
    %v362 = vpack.c.bf16 %v354, %v218
    %v363 = vpack.c.bf16 %v355, %v219
    %v364 = vld [vmem:[#allocation5] sm:$0xff]
    %v365 = vld [vmem:[#allocation5 + $0x8] sm:$0xff]
    %v366 = vld [vmem:[#allocation5 + $0x10] sm:$0xff]
    %v367 = vld [vmem:[#allocation5 + $0x18] sm:$0xff]
    %v368 = vld [vmem:[#allocation5 + $0x20] sm:$0xff]
    %v369 = vld [vmem:[#allocation5 + $0x28] sm:$0xff]
    %v370 = vld [vmem:[#allocation5 + $0x30] sm:$0xff]
    %v371 = vld [vmem:[#allocation5 + $0x38] sm:$0xff]
    %v372 = vld [vmem:[#allocation5 + $0x40] sm:$0xff]
    %v373 = vld [vmem:[#allocation5 + $0x48] sm:$0xff]
    %v374 = vld [vmem:[#allocation5 + $0x50] sm:$0xff]
    %v375 = vld [vmem:[#allocation5 + $0x58] sm:$0xff]
    %v376 = vld [vmem:[#allocation5 + $0x60] sm:$0xff]
    %v377 = vld [vmem:[#allocation5 + $0x68] sm:$0xff]
    %v378 = vld [vmem:[#allocation5 + $0x70] sm:$0xff]
    %v379 = vld [vmem:[#allocation5 + $0x78] sm:$0xff]
    %v380 = vld [vmem:[#allocation5 + $0x80] sm:$0xff]
    %v381 = vld [vmem:[#allocation5 + $0x88] sm:$0xff]
    %v382 = vld [vmem:[#allocation5 + $0x90] sm:$0xff]
    %v383 = vld [vmem:[#allocation5 + $0x98] sm:$0xff]
    %v384 = vld [vmem:[#allocation5 + $0xa0] sm:$0xff]
    %v385 = vld [vmem:[#allocation5 + $0xa8] sm:$0xff]
    %v386 = vld [vmem:[#allocation5 + $0xb0] sm:$0xff]
    %v387 = vld [vmem:[#allocation5 + $0xb8] sm:$0xff]
    %v388 = vld [vmem:[#allocation5 + $0xc0] sm:$0xff]
    %v389 = vld [vmem:[#allocation5 + $0xc8] sm:$0xff]
    %v390 = vld [vmem:[#allocation5 + $0xd0] sm:$0xff]
    %v391 = vld [vmem:[#allocation5 + $0xd8] sm:$0xff]
    %v392 = vld [vmem:[#allocation5 + $0xe0] sm:$0xff]
    %v393 = vld [vmem:[#allocation5 + $0xe8] sm:$0xff]
    %v394 = vld [vmem:[#allocation5 + $0xf0] sm:$0xff]
    %v395 = vld [vmem:[#allocation5 + $0xf8] sm:$0xff]
    %v396 = vld [vmem:[%s3] sm:$0xf]
    %v398 = vlaneseq
    %v399 = vshrl.u32 %v398, 7
    %v400 = vsub.s32 0, %v399
    %v401 = vrot.slane %v396, %v400
    %v402 = vlaneseq
    %v403 = vshrl.u32 %v402, 7
    %v404 = vsub.s32 1, %v403
    %v405 = vrot.slane %v396, %v404
    %v406 = vlaneseq
    %v407 = vshrl.u32 %v406, 7
    %v408 = vsub.s32 2, %v407
    %v409 = vrot.slane %v396, %v408
    %v410 = vlaneseq
    %v411 = vshrl.u32 %v410, 7
    %v412 = vsub.s32 3, %v411
    %v413 = vrot.slane %v396, %v412
    %v450 = vunpack.c.l.b16 %v364
    %v451 = vunpack.c.h.b16 %v364
    %v452 = vunpack.c.l.b16 %v365
    %v453 = vunpack.c.h.b16 %v365
    %v454 = vunpack.c.l.b16 %v366
    %v455 = vunpack.c.h.b16 %v366
    %v456 = vunpack.c.l.b16 %v367
    %v457 = vunpack.c.h.b16 %v367
    %v458 = vunpack.c.l.b16 %v368
    %v459 = vunpack.c.h.b16 %v368
    %v460 = vunpack.c.l.b16 %v369
    %v461 = vunpack.c.h.b16 %v369
    %v462 = vunpack.c.l.b16 %v370
    %v463 = vunpack.c.h.b16 %v370
    %v464 = vunpack.c.l.b16 %v371
    %v465 = vunpack.c.h.b16 %v371
    %v466 = vunpack.c.l.b16 %v372
    %v467 = vunpack.c.h.b16 %v372
    %v468 = vunpack.c.l.b16 %v373
    %v469 = vunpack.c.h.b16 %v373
    %v470 = vunpack.c.l.b16 %v374
    %v471 = vunpack.c.h.b16 %v374
    %v472 = vunpack.c.l.b16 %v375
    %v473 = vunpack.c.h.b16 %v375
    %v474 = vunpack.c.l.b16 %v376
    %v475 = vunpack.c.h.b16 %v376
    %v476 = vunpack.c.l.b16 %v377
    %v477 = vunpack.c.h.b16 %v377
    %v478 = vunpack.c.l.b16 %v378
    %v479 = vunpack.c.h.b16 %v378
    %v480 = vunpack.c.l.b16 %v379
    %v481 = vunpack.c.h.b16 %v379
    %v482 = vunpack.c.l.b16 %v380
    %v483 = vunpack.c.h.b16 %v380
    %v484 = vunpack.c.l.b16 %v381
    %v485 = vunpack.c.h.b16 %v381
    %v486 = vunpack.c.l.b16 %v382
    %v487 = vunpack.c.h.b16 %v382
    %v488 = vunpack.c.l.b16 %v383
    %v489 = vunpack.c.h.b16 %v383
    %v490 = vunpack.c.l.b16 %v384
    %v491 = vunpack.c.h.b16 %v384
    %v492 = vunpack.c.l.b16 %v385
    %v493 = vunpack.c.h.b16 %v385
    %v494 = vunpack.c.l.b16 %v386
    %v495 = vunpack.c.h.b16 %v386
    %v496 = vunpack.c.l.b16 %v387
    %v497 = vunpack.c.h.b16 %v387
    %v498 = vunpack.c.l.b16 %v388
    %v499 = vunpack.c.h.b16 %v388
    %v500 = vunpack.c.l.b16 %v389
    %v501 = vunpack.c.h.b16 %v389
    %v502 = vunpack.c.l.b16 %v390
    %v503 = vunpack.c.h.b16 %v390
    %v504 = vunpack.c.l.b16 %v391
    %v505 = vunpack.c.h.b16 %v391
    %v506 = vunpack.c.l.b16 %v392
    %v507 = vunpack.c.h.b16 %v392
    %v508 = vunpack.c.l.b16 %v393
    %v509 = vunpack.c.h.b16 %v393
    %v510 = vunpack.c.l.b16 %v394
    %v511 = vunpack.c.h.b16 %v394
    %v512 = vunpack.c.l.b16 %v395
    %v513 = vunpack.c.h.b16 %v395
    %v514 = vpack.c.b16 %v454, %v450
    %v515 = vpack.c.b16 %v455, %v451
    %v516 = vpack.c.b16 %v456, %v452
    %v517 = vpack.c.b16 %v457, %v453
    %v518 = vpack.c.b16 %v462, %v458
    %v519 = vpack.c.b16 %v463, %v459
    %v520 = vpack.c.b16 %v464, %v460
    %v521 = vpack.c.b16 %v465, %v461
    %v522 = vpack.c.b16 %v470, %v466
    %v523 = vpack.c.b16 %v471, %v467
    %v524 = vpack.c.b16 %v472, %v468
    %v525 = vpack.c.b16 %v473, %v469
    %v526 = vpack.c.b16 %v478, %v474
    %v527 = vpack.c.b16 %v479, %v475
    %v528 = vpack.c.b16 %v480, %v476
    %v529 = vpack.c.b16 %v481, %v477
    %v530 = vpack.c.b16 %v486, %v482
    %v531 = vpack.c.b16 %v487, %v483
    %v532 = vpack.c.b16 %v488, %v484
    %v533 = vpack.c.b16 %v489, %v485
    %v534 = vpack.c.b16 %v494, %v490
    %v535 = vpack.c.b16 %v495, %v491
    %v536 = vpack.c.b16 %v496, %v492
    %v537 = vpack.c.b16 %v497, %v493
    %v538 = vpack.c.b16 %v502, %v498
    %v539 = vpack.c.b16 %v503, %v499
    %v540 = vpack.c.b16 %v504, %v500
    %v541 = vpack.c.b16 %v505, %v501
    %v542 = vpack.c.b16 %v510, %v506
    %v543 = vpack.c.b16 %v511, %v507
    %v544 = vpack.c.b16 %v512, %v508
    %v545 = vpack.c.b16 %v513, %v509
    %578 = vmatprep.subr.bf16.mxu0 %v515
    %579 = vmatpush1.bf16.msra.mxu0 %v514
    %580 = vmatprep.subr.bf16.mxu0 %v519
    %581 = vmatpush1.bf16.msra.mxu0 %v518
    %582 = vmatprep.subr.bf16.mxu0 %v523
    %583 = vmatpush1.bf16.msra.mxu0 %v522
    %584 = vmatprep.subr.bf16.mxu0 %v527
    %585 = vmatpush1.bf16.msra.mxu0 %v526
    %586 = vmatprep.subr.bf16.mxu0 %v531
    %587 = vmatpush1.bf16.msra.mxu0 %v530
    %588 = vmatprep.subr.bf16.mxu0 %v535
    %589 = vmatpush1.bf16.msra.mxu0 %v534
    %590 = vmatprep.subr.bf16.mxu0 %v539
    %591 = vmatpush1.bf16.msra.mxu0 %v538
    %592 = vmatprep.subr.bf16.mxu0 %v543
    %593 = vmatpush1.bf16.msra.mxu0 %v542
    %594 = vmatprep.subr.bf16.mxu0 0
    %595 = vmatpush1.bf16.msra.mxu0 0
    %596 = vmatprep.subr.bf16.mxu0 0
    %597 = vmatpush1.bf16.msra.mxu0 0
    %598 = vmatprep.subr.bf16.mxu0 0
    %599 = vmatpush1.bf16.msra.mxu0 0
    %600 = vmatprep.subr.bf16.mxu0 0
    %601 = vmatpush1.bf16.msra.mxu0 0
    %602 = vmatprep.subr.bf16.mxu0 0
    %603 = vmatpush1.bf16.msra.mxu0 0
    %604 = vmatprep.subr.bf16.mxu0 0
    %605 = vmatpush1.bf16.msra.mxu0 0
    %606 = vmatprep.subr.bf16.mxu0 0
    %607 = vmatpush1.bf16.msra.mxu0 0
    %608 = vmatprep.subr.bf16.mxu0 0
    %609 = vmatpush1.bf16.msra.mxu0 0
    %610 = vmatprep.mubr.bf16.mxu0 0
    %611 = vmatmul.mubr.bf16.gmra.mrb[0].mxu0 %v356
    %v612 = vpop.f32.mrb[0].mxu0
    %v613 = vadd.f32 %v401, %v612
    %v614 = vpop.f32.mrb[0].mxu0
    %v615 = vadd.f32 %v405, %v614
    %v616 = vpop.f32.mrb[0].mxu0
    %v617 = vadd.f32 %v401, %v616
    %v618 = vpop.f32.mrb[0].mxu0
    %v619 = vadd.f32 %v405, %v618
    %620 = vmatprep.mubr.bf16.mxu0 0
    %621 = vmatmul.mubr.bf16.gmra.mrb[0].mxu0 %v357
    %v622 = vpop.f32.mrb[0].mxu0
    %v623 = vadd.f32 %v401, %v622
    %v624 = vpop.f32.mrb[0].mxu0
    %v625 = vadd.f32 %v405, %v624
    %v626 = vpop.f32.mrb[0].mxu0
    %v627 = vadd.f32 %v401, %v626
    %v628 = vpop.f32.mrb[0].mxu0
    %v629 = vadd.f32 %v405, %v628
    %630 = vmatprep.mubr.bf16.mxu0 0
    %631 = vmatmul.mubr.bf16.gmra.mrb[0].mxu0 %v358
    %v632 = vpop.f32.mrb[0].mxu0
    %v633 = vadd.f32 %v401, %v632
    %v634 = vpop.f32.mrb[0].mxu0
    %v635 = vadd.f32 %v405, %v634
    %v636 = vpop.f32.mrb[0].mxu0
    %v637 = vadd.f32 %v401, %v636
    %v638 = vpop.f32.mrb[0].mxu0
    %v639 = vadd.f32 %v405, %v638
    %640 = vmatprep.mubr.bf16.mxu0 0
    %641 = vmatmul.mubr.bf16.gmra.mrb[0].mxu0 %v359
    %v642 = vpop.f32.mrb[0].mxu0
    %v643 = vadd.f32 %v401, %v642
    %v644 = vpop.f32.mrb[0].mxu0
    %v645 = vadd.f32 %v405, %v644
    %v646 = vpop.f32.mrb[0].mxu0
    %v647 = vadd.f32 %v401, %v646
    %v648 = vpop.f32.mrb[0].mxu0
    %v649 = vadd.f32 %v405, %v648
    %650 = vmatprep.mubr.bf16.mxu0 0
    %651 = vmatmul.mubr.bf16.gmra.mrb[0].mxu0 %v360
    %v652 = vpop.f32.mrb[0].mxu0
    %v653 = vadd.f32 %v401, %v652
    %v654 = vpop.f32.mrb[0].mxu0
    %v655 = vadd.f32 %v405, %v654
    %v656 = vpop.f32.mrb[0].mxu0
    %v657 = vadd.f32 %v401, %v656
    %v658 = vpop.f32.mrb[0].mxu0
    %v659 = vadd.f32 %v405, %v658
    %660 = vmatprep.mubr.bf16.mxu0 0
    %661 = vmatmul.mubr.bf16.gmra.mrb[0].mxu0 %v361
    %v662 = vpop.f32.mrb[0].mxu0
    %v663 = vadd.f32 %v401, %v662
    %v664 = vpop.f32.mrb[0].mxu0
    %v665 = vadd.f32 %v405, %v664
    %v666 = vpop.f32.mrb[0].mxu0
    %v667 = vadd.f32 %v401, %v666
    %v668 = vpop.f32.mrb[0].mxu0
    %v669 = vadd.f32 %v405, %v668
    %670 = vmatprep.mubr.bf16.mxu0 0
    %671 = vmatmul.mubr.bf16.gmra.mrb[0].mxu0 %v362
    %v672 = vpop.f32.mrb[0].mxu0
    %v673 = vadd.f32 %v401, %v672
    %v674 = vpop.f32.mrb[0].mxu0
    %v675 = vadd.f32 %v405, %v674
    %v676 = vpop.f32.mrb[0].mxu0
    %v677 = vadd.f32 %v401, %v676
    %v678 = vpop.f32.mrb[0].mxu0
    %v679 = vadd.f32 %v405, %v678
    %680 = vmatprep.mubr.bf16.mxu0 0
    %681 = vmatmul.mubr.bf16.gmra.mrb[0].mxu0 %v363
    %v682 = vpop.f32.mrb[0].mxu0
    %v683 = vadd.f32 %v401, %v682
    %v684 = vpop.f32.mrb[0].mxu0
    %v685 = vadd.f32 %v405, %v684
    %v686 = vpop.f32.mrb[0].mxu0
    %v687 = vadd.f32 %v401, %v686
    %v688 = vpop.f32.mrb[0].mxu0
    %v689 = vadd.f32 %v405, %v688
    %690 = vdwg.mxu0
    %691 = vmatprep.subr.bf16.mxu0 %v517
    %692 = vmatpush1.bf16.msra.mxu0 %v516
    %693 = vmatprep.subr.bf16.mxu0 %v521
    %694 = vmatpush1.bf16.msra.mxu0 %v520
    %695 = vmatprep.subr.bf16.mxu0 %v525
    %696 = vmatpush1.bf16.msra.mxu0 %v524
    %697 = vmatprep.subr.bf16.mxu0 %v529
    %698 = vmatpush1.bf16.msra.mxu0 %v528
    %699 = vmatprep.subr.bf16.mxu0 %v533
    %700 = vmatpush1.bf16.msra.mxu0 %v532
    %701 = vmatprep.subr.bf16.mxu0 %v537
    %702 = vmatpush1.bf16.msra.mxu0 %v536
    %703 = vmatprep.subr.bf16.mxu0 %v541
    %704 = vmatpush1.bf16.msra.mxu0 %v540
    %705 = vmatprep.subr.bf16.mxu0 %v545
    %706 = vmatpush1.bf16.msra.mxu0 %v544
    %707 = vmatprep.subr.bf16.mxu0 0
    %708 = vmatpush1.bf16.msra.mxu0 0
    %709 = vmatprep.subr.bf16.mxu0 0
    %710 = vmatpush1.bf16.msra.mxu0 0
    %711 = vmatprep.subr.bf16.mxu0 0
    %712 = vmatpush1.bf16.msra.mxu0 0
    %713 = vmatprep.subr.bf16.mxu0 0
    %714 = vmatpush1.bf16.msra.mxu0 0
    %715 = vmatprep.subr.bf16.mxu0 0
    %716 = vmatpush1.bf16.msra.mxu0 0
    %717 = vmatprep.subr.bf16.mxu0 0
    %718 = vmatpush1.bf16.msra.mxu0 0
    %719 = vmatprep.subr.bf16.mxu0 0
    %720 = vmatpush1.bf16.msra.mxu0 0
    %721 = vmatprep.subr.bf16.mxu0 0
    %722 = vmatpush1.bf16.msra.mxu0 0
    %723 = vmatprep.mubr.bf16.mxu0 0
    %724 = vmatmul.mubr.bf16.gmra.mrb[0].mxu0 %v356
    %v725 = vpop.f32.mrb[0].mxu0
    %v726 = vadd.f32 %v409, %v725
    %v727 = vpop.f32.mrb[0].mxu0
    %v728 = vadd.f32 %v413, %v727
    %v729 = vpop.f32.mrb[0].mxu0
    %v730 = vadd.f32 %v409, %v729
    %v731 = vpop.f32.mrb[0].mxu0
    %v732 = vadd.f32 %v413, %v731
    %733 = vmatprep.mubr.bf16.mxu0 0
    %734 = vmatmul.mubr.bf16.gmra.mrb[0].mxu0 %v357
    %v735 = vpop.f32.mrb[0].mxu0
    %v736 = vadd.f32 %v409, %v735
    %v737 = vpop.f32.mrb[0].mxu0
    %v738 = vadd.f32 %v413, %v737
    %v739 = vpop.f32.mrb[0].mxu0
    %v740 = vadd.f32 %v409, %v739
    %v741 = vpop.f32.mrb[0].mxu0
    %v742 = vadd.f32 %v413, %v741
    %743 = vmatprep.mubr.bf16.mxu0 0
    %744 = vmatmul.mubr.bf16.gmra.mrb[0].mxu0 %v358
    %v745 = vpop.f32.mrb[0].mxu0
    %v746 = vadd.f32 %v409, %v745
    %v747 = vpop.f32.mrb[0].mxu0
    %v748 = vadd.f32 %v413, %v747
    %v749 = vpop.f32.mrb[0].mxu0
    %v750 = vadd.f32 %v409, %v749
    %v751 = vpop.f32.mrb[0].mxu0
    %v752 = vadd.f32 %v413, %v751
    %753 = vmatprep.mubr.bf16.mxu0 0
    %754 = vmatmul.mubr.bf16.gmra.mrb[0].mxu0 %v359
    %v755 = vpop.f32.mrb[0].mxu0
    %v756 = vadd.f32 %v409, %v755
    %v757 = vpop.f32.mrb[0].mxu0
    %v758 = vadd.f32 %v413, %v757
    %v759 = vpop.f32.mrb[0].mxu0
    %v760 = vadd.f32 %v409, %v759
    %v761 = vpop.f32.mrb[0].mxu0
    %v762 = vadd.f32 %v413, %v761
    %763 = vmatprep.mubr.bf16.mxu0 0
    %764 = vmatmul.mubr.bf16.gmra.mrb[0].mxu0 %v360
    %v765 = vpop.f32.mrb[0].mxu0
    %v766 = vadd.f32 %v409, %v765
    %v767 = vpop.f32.mrb[0].mxu0
    %v768 = vadd.f32 %v413, %v767
    %v769 = vpop.f32.mrb[0].mxu0
    %v770 = vadd.f32 %v409, %v769
    %v771 = vpop.f32.mrb[0].mxu0
    %v772 = vadd.f32 %v413, %v771
    %773 = vmatprep.mubr.bf16.mxu0 0
    %774 = vmatmul.mubr.bf16.gmra.mrb[0].mxu0 %v361
    %v775 = vpop.f32.mrb[0].mxu0
    %v776 = vadd.f32 %v409, %v775
    %v777 = vpop.f32.mrb[0].mxu0
    %v778 = vadd.f32 %v413, %v777
    %v779 = vpop.f32.mrb[0].mxu0
    %v780 = vadd.f32 %v409, %v779
    %v781 = vpop.f32.mrb[0].mxu0
    %v782 = vadd.f32 %v413, %v781
    %783 = vmatprep.mubr.bf16.mxu0 0
    %784 = vmatmul.mubr.bf16.gmra.mrb[0].mxu0 %v362
    %v785 = vpop.f32.mrb[0].mxu0
    %v786 = vadd.f32 %v409, %v785
    %v787 = vpop.f32.mrb[0].mxu0
    %v788 = vadd.f32 %v413, %v787
    %v789 = vpop.f32.mrb[0].mxu0
    %v790 = vadd.f32 %v409, %v789
    %v791 = vpop.f32.mrb[0].mxu0
    %v792 = vadd.f32 %v413, %v791
    %793 = vmatprep.mubr.bf16.mxu0 0
    %794 = vmatmul.mubr.bf16.gmra.mrb[0].mxu0 %v363
    %v795 = vpop.f32.mrb[0].mxu0
    %v796 = vadd.f32 %v409, %v795
    %v797 = vpop.f32.mrb[0].mxu0
    %v798 = vadd.f32 %v413, %v797
    %v799 = vpop.f32.mrb[0].mxu0
    %v800 = vadd.f32 %v409, %v799
    %v801 = vpop.f32.mrb[0].mxu0
    %v802 = vadd.f32 %v413, %v801
    %803 = vdwg.mxu0
    %804 = vst [vmem:[#allocation2] sm:$0xff] %v613
    %805 = vst [vmem:[#allocation2 + $0x8] sm:$0xff] %v615
    %806 = vst [vmem:[#allocation2 + $0x10] sm:$0xff] %v726
    %807 = vst [vmem:[#allocation2 + $0x18] sm:$0xff] %v728
    %808 = vst [vmem:[#allocation2 + $0x20] sm:$0xff] %v617
    %809 = vst [vmem:[#allocation2 + $0x28] sm:$0xff] %v619
    %810 = vst [vmem:[#allocation2 + $0x30] sm:$0xff] %v730
    %811 = vst [vmem:[#allocation2 + $0x38] sm:$0xff] %v732
    %812 = vst [vmem:[#allocation2 + $0x40] sm:$0xff] %v623
    %813 = vst [vmem:[#allocation2 + $0x48] sm:$0xff] %v625
    %814 = vst [vmem:[#allocation2 + $0x50] sm:$0xff] %v736
    %815 = vst [vmem:[#allocation2 + $0x58] sm:$0xff] %v738
    %816 = vst [vmem:[#allocation2 + $0x60] sm:$0xff] %v627
    %817 = vst [vmem:[#allocation2 + $0x68] sm:$0xff] %v629
    %818 = vst [vmem:[#allocation2 + $0x70] sm:$0xff] %v740
    %819 = vst [vmem:[#allocation2 + $0x78] sm:$0xff] %v742
    %820 = vst [vmem:[#allocation2 + $0x80] sm:$0xff] %v633
    %821 = vst [vmem:[#allocation2 + $0x88] sm:$0xff] %v635
    %822 = vst [vmem:[#allocation2 + $0x90] sm:$0xff] %v746
    %823 = vst [vmem:[#allocation2 + $0x98] sm:$0xff] %v748
    %824 = vst [vmem:[#allocation2 + $0xa0] sm:$0xff] %v637
    %825 = vst [vmem:[#allocation2 + $0xa8] sm:$0xff] %v639
    %826 = vst [vmem:[#allocation2 + $0xb0] sm:$0xff] %v750
    %827 = vst [vmem:[#allocation2 + $0xb8] sm:$0xff] %v752
    %828 = vst [vmem:[#allocation2 + $0xc0] sm:$0xff] %v643
    %829 = vst [vmem:[#allocation2 + $0xc8] sm:$0xff] %v645
    %830 = vst [vmem:[#allocation2 + $0xd0] sm:$0xff] %v756
    %831 = vst [vmem:[#allocation2 + $0xd8] sm:$0xff] %v758
    %832 = vst [vmem:[#allocation2 + $0xe0] sm:$0xff] %v647
    %833 = vst [vmem:[#allocation2 + $0xe8] sm:$0xff] %v649
    %834 = vst [vmem:[#allocation2 + $0xf0] sm:$0xff] %v760
    %835 = vst [vmem:[#allocation2 + $0xf8] sm:$0xff] %v762
    %836 = vst [vmem:[#allocation2 + $0x100] sm:$0xff] %v653
    %837 = vst [vmem:[#allocation2 + $0x108] sm:$0xff] %v655
    %838 = vst [vmem:[#allocation2 + $0x110] sm:$0xff] %v766
    %839 = vst [vmem:[#allocation2 + $0x118] sm:$0xff] %v768
    %840 = vst [vmem:[#allocation2 + $0x120] sm:$0xff] %v657
    %841 = vst [vmem:[#allocation2 + $0x128] sm:$0xff] %v659
    %842 = vst [vmem:[#allocation2 + $0x130] sm:$0xff] %v770
    %843 = vst [vmem:[#allocation2 + $0x138] sm:$0xff] %v772
    %844 = vst [vmem:[#allocation2 + $0x140] sm:$0xff] %v663
    %845 = vst [vmem:[#allocation2 + $0x148] sm:$0xff] %v665
    %846 = vst [vmem:[#allocation2 + $0x150] sm:$0xff] %v776
    %847 = vst [vmem:[#allocation2 + $0x158] sm:$0xff] %v778
    %848 = vst [vmem:[#allocation2 + $0x160] sm:$0xff] %v667
    %849 = vst [vmem:[#allocation2 + $0x168] sm:$0xff] %v669
    %850 = vst [vmem:[#allocation2 + $0x170] sm:$0xff] %v780
    %851 = vst [vmem:[#allocation2 + $0x178] sm:$0xff] %v782
    %852 = vst [vmem:[#allocation2 + $0x180] sm:$0xff] %v673
    %853 = vst [vmem:[#allocation2 + $0x188] sm:$0xff] %v675
    %854 = vst [vmem:[#allocation2 + $0x190] sm:$0xff] %v786
    %855 = vst [vmem:[#allocation2 + $0x198] sm:$0xff] %v788
    %856 = vst [vmem:[#allocation2 + $0x1a0] sm:$0xff] %v677
    %857 = vst [vmem:[#allocation2 + $0x1a8] sm:$0xff] %v679
    %858 = vst [vmem:[#allocation2 + $0x1b0] sm:$0xff] %v790
    %859 = vst [vmem:[#allocation2 + $0x1b8] sm:$0xff] %v792
    %860 = vst [vmem:[#allocation2 + $0x1c0] sm:$0xff] %v683
    %861 = vst [vmem:[#allocation2 + $0x1c8] sm:$0xff] %v685
    %862 = vst [vmem:[#allocation2 + $0x1d0] sm:$0xff] %v796
    %863 = vst [vmem:[#allocation2 + $0x1d8] sm:$0xff] %v798
    %864 = vst [vmem:[#allocation2 + $0x1e0] sm:$0xff] %v687
    %865 = vst [vmem:[#allocation2 + $0x1e8] sm:$0xff] %v689
    %866 = vst [vmem:[#allocation2 + $0x1f0] sm:$0xff] %v800
    %867 = vst [vmem:[#allocation2 + $0x1f8] sm:$0xff] %v802
    %v868 = vld [vmem:[%s4] sm:$0xff]
    %v869 = vld [vmem:[%s4 + $0x8] sm:$0xff]
    %v870 = vld [vmem:[%s5] sm:$0xff]
    %v871 = vld [vmem:[%s5 + $0x8] sm:$0xff]
    %s872 = smul.u32 0, 4
    %s873 = smul.addr %s872, 8
    %s874 = scalar_lea.vmem [#allocation2], %s873
    %v875 = vld [vmem:[%s874] sm:$0xff]
    %v876 = vld [vmem:[%s874 + $0x8] sm:$0xff]
    %v877 = vld [vmem:[%s874 + $0x10] sm:$0xff]
    %v878 = vld [vmem:[%s874 + $0x18] sm:$0xff]
    %v879 = vld [vmem:[%s874 + $0x20] sm:$0xff]
    %v880 = vld [vmem:[%s874 + $0x28] sm:$0xff]
    %v881 = vld [vmem:[%s874 + $0x30] sm:$0xff]
    %v882 = vld [vmem:[%s874 + $0x38] sm:$0xff]
    %v883 = vpack.c.bf16 %v869, %v868
    %v884 = vld [vmem:[#allocation7] sm:$0xff]
    %v885 = vld [vmem:[#allocation7 + $0x8] sm:$0xff]
    %v886 = vld [vmem:[#allocation7 + $0x10] sm:$0xff]
    %v887 = vld [vmem:[#allocation7 + $0x18] sm:$0xff]
    %v888 = vld [vmem:[#allocation7 + $0x20] sm:$0xff]
    %v889 = vld [vmem:[#allocation7 + $0x28] sm:$0xff]
    %v890 = vld [vmem:[#allocation7 + $0x30] sm:$0xff]
    %v891 = vld [vmem:[#allocation7 + $0x38] sm:$0xff]
    %v892 = vld [vmem:[#allocation7 + $0x40] sm:$0xff]
    %v893 = vld [vmem:[#allocation7 + $0x48] sm:$0xff]
    %v894 = vld [vmem:[#allocation7 + $0x50] sm:$0xff]
    %v895 = vld [vmem:[#allocation7 + $0x58] sm:$0xff]
    %v896 = vld [vmem:[#allocation7 + $0x60] sm:$0xff]
    %v897 = vld [vmem:[#allocation7 + $0x68] sm:$0xff]
    %v898 = vld [vmem:[#allocation7 + $0x70] sm:$0xff]
    %v899 = vld [vmem:[#allocation7 + $0x78] sm:$0xff]
    %v900 = vld [vmem:[#allocation7 + $0x80] sm:$0xff]
    %v901 = vld [vmem:[#allocation7 + $0x88] sm:$0xff]
    %v902 = vld [vmem:[#allocation7 + $0x90] sm:$0xff]
    %v903 = vld [vmem:[#allocation7 + $0x98] sm:$0xff]
    %v904 = vld [vmem:[#allocation7 + $0xa0] sm:$0xff]
    %v905 = vld [vmem:[#allocation7 + $0xa8] sm:$0xff]
    %v906 = vld [vmem:[#allocation7 + $0xb0] sm:$0xff]
    %v907 = vld [vmem:[#allocation7 + $0xb8] sm:$0xff]
    %v908 = vld [vmem:[#allocation7 + $0xc0] sm:$0xff]
    %v909 = vld [vmem:[#allocation7 + $0xc8] sm:$0xff]
    %v910 = vld [vmem:[#allocation7 + $0xd0] sm:$0xff]
    %v911 = vld [vmem:[#allocation7 + $0xd8] sm:$0xff]
    %v912 = vld [vmem:[#allocation7 + $0xe0] sm:$0xff]
    %v913 = vld [vmem:[#allocation7 + $0xe8] sm:$0xff]
    %v914 = vld [vmem:[#allocation7 + $0xf0] sm:$0xff]
    %v915 = vld [vmem:[#allocation7 + $0xf8] sm:$0xff]
    %v948 = vunpack.c.l.b16 %v884
    %v949 = vunpack.c.h.b16 %v884
    %v950 = vunpack.c.l.b16 %v885
    %v951 = vunpack.c.h.b16 %v885
    %v952 = vunpack.c.l.b16 %v886
    %v953 = vunpack.c.h.b16 %v886
    %v954 = vunpack.c.l.b16 %v887
    %v955 = vunpack.c.h.b16 %v887
    %v956 = vunpack.c.l.b16 %v888
    %v957 = vunpack.c.h.b16 %v888
    %v958 = vunpack.c.l.b16 %v889
    %v959 = vunpack.c.h.b16 %v889
    %v960 = vunpack.c.l.b16 %v890
    %v961 = vunpack.c.h.b16 %v890
    %v962 = vunpack.c.l.b16 %v891
    %v963 = vunpack.c.h.b16 %v891
    %v964 = vunpack.c.l.b16 %v892
    %v965 = vunpack.c.h.b16 %v892
    %v966 = vunpack.c.l.b16 %v893
    %v967 = vunpack.c.h.b16 %v893
    %v968 = vunpack.c.l.b16 %v894
    %v969 = vunpack.c.h.b16 %v894
    %v970 = vunpack.c.l.b16 %v895
    %v971 = vunpack.c.h.b16 %v895
    %v972 = vunpack.c.l.b16 %v896
    %v973 = vunpack.c.h.b16 %v896
    %v974 = vunpack.c.l.b16 %v897
    %v975 = vunpack.c.h.b16 %v897
    %v976 = vunpack.c.l.b16 %v898
    %v977 = vunpack.c.h.b16 %v898
    %v978 = vunpack.c.l.b16 %v899
    %v979 = vunpack.c.h.b16 %v899
    %v980 = vunpack.c.l.b16 %v900
    %v981 = vunpack.c.h.b16 %v900
    %v982 = vunpack.c.l.b16 %v901
    %v983 = vunpack.c.h.b16 %v901
    %v984 = vunpack.c.l.b16 %v902
    %v985 = vunpack.c.h.b16 %v902
    %v986 = vunpack.c.l.b16 %v903
    %v987 = vunpack.c.h.b16 %v903
    %v988 = vunpack.c.l.b16 %v904
    %v989 = vunpack.c.h.b16 %v904
    %v990 = vunpack.c.l.b16 %v905
    %v991 = vunpack.c.h.b16 %v905
    %v992 = vunpack.c.l.b16 %v906
    %v993 = vunpack.c.h.b16 %v906
    %v994 = vunpack.c.l.b16 %v907
    %v995 = vunpack.c.h.b16 %v907
    %v996 = vunpack.c.l.b16 %v908
    %v997 = vunpack.c.h.b16 %v908
    %v998 = vunpack.c.l.b16 %v909
    %v999 = vunpack.c.h.b16 %v909
    %v1000 = vunpack.c.l.b16 %v910
    %v1001 = vunpack.c.h.b16 %v910
    %v1002 = vunpack.c.l.b16 %v911
    %v1003 = vunpack.c.h.b16 %v911
    %v1004 = vunpack.c.l.b16 %v912
    %v1005 = vunpack.c.h.b16 %v912
    %v1006 = vunpack.c.l.b16 %v913
    %v1007 = vunpack.c.h.b16 %v913
    %v1008 = vunpack.c.l.b16 %v914
    %v1009 = vunpack.c.h.b16 %v914
    %v1010 = vunpack.c.l.b16 %v915
    %v1011 = vunpack.c.h.b16 %v915
    %v1012 = vpack.c.b16 %v952, %v948
    %v1013 = vpack.c.b16 %v953, %v949
    %v1014 = vpack.c.b16 %v954, %v950
    %v1015 = vpack.c.b16 %v955, %v951
    %v1016 = vpack.c.b16 %v960, %v956
    %v1017 = vpack.c.b16 %v961, %v957
    %v1018 = vpack.c.b16 %v962, %v958
    %v1019 = vpack.c.b16 %v963, %v959
    %v1020 = vpack.c.b16 %v968, %v964
    %v1021 = vpack.c.b16 %v969, %v965
    %v1022 = vpack.c.b16 %v970, %v966
    %v1023 = vpack.c.b16 %v971, %v967
    %v1024 = vpack.c.b16 %v976, %v972
    %v1025 = vpack.c.b16 %v977, %v973
    %v1026 = vpack.c.b16 %v978, %v974
    %v1027 = vpack.c.b16 %v979, %v975
    %v1028 = vpack.c.b16 %v984, %v980
    %v1029 = vpack.c.b16 %v985, %v981
    %v1030 = vpack.c.b16 %v986, %v982
    %v1031 = vpack.c.b16 %v987, %v983
    %v1032 = vpack.c.b16 %v992, %v988
    %v1033 = vpack.c.b16 %v993, %v989
    %v1034 = vpack.c.b16 %v994, %v990
    %v1035 = vpack.c.b16 %v995, %v991
    %v1036 = vpack.c.b16 %v1000, %v996
    %v1037 = vpack.c.b16 %v1001, %v997
    %v1038 = vpack.c.b16 %v1002, %v998
    %v1039 = vpack.c.b16 %v1003, %v999
    %v1040 = vpack.c.b16 %v1008, %v1004
    %v1041 = vpack.c.b16 %v1009, %v1005
    %v1042 = vpack.c.b16 %v1010, %v1006
    %v1043 = vpack.c.b16 %v1011, %v1007
    %1076 = vmatprep.subr.bf16.mxu0 %v1013
    %1077 = vmatpush1.bf16.msra.mxu0 %v1012
    %1078 = vmatprep.subr.bf16.mxu0 %v1017
    %1079 = vmatpush1.bf16.msra.mxu0 %v1016
    %1080 = vmatprep.subr.bf16.mxu0 %v1021
    %1081 = vmatpush1.bf16.msra.mxu0 %v1020
    %1082 = vmatprep.subr.bf16.mxu0 %v1025
    %1083 = vmatpush1.bf16.msra.mxu0 %v1024
    %1084 = vmatprep.subr.bf16.mxu0 %v1029
    %1085 = vmatpush1.bf16.msra.mxu0 %v1028
    %1086 = vmatprep.subr.bf16.mxu0 %v1033
    %1087 = vmatpush1.bf16.msra.mxu0 %v1032
    %1088 = vmatprep.subr.bf16.mxu0 %v1037
    %1089 = vmatpush1.bf16.msra.mxu0 %v1036
    %1090 = vmatprep.subr.bf16.mxu0 %v1041
    %1091 = vmatpush1.bf16.msra.mxu0 %v1040
    %1092 = vmatprep.subr.bf16.mxu0 0
    %1093 = vmatpush1.bf16.msra.mxu0 0
    %1094 = vmatprep.subr.bf16.mxu0 0
    %1095 = vmatpush1.bf16.msra.mxu0 0
    %1096 = vmatprep.subr.bf16.mxu0 0
    %1097 = vmatpush1.bf16.msra.mxu0 0
    %1098 = vmatprep.subr.bf16.mxu0 0
    %1099 = vmatpush1.bf16.msra.mxu0 0
    %1100 = vmatprep.subr.bf16.mxu0 0
    %1101 = vmatpush1.bf16.msra.mxu0 0
    %1102 = vmatprep.subr.bf16.mxu0 0
    %1103 = vmatpush1.bf16.msra.mxu0 0
    %1104 = vmatprep.subr.bf16.mxu0 0
    %1105 = vmatpush1.bf16.msra.mxu0 0
    %1106 = vmatprep.subr.bf16.mxu0 0
    %1107 = vmatpush1.bf16.msra.mxu0 0
    %1108 = vmatprep.mubr.bf16.mxu0 0
    %1109 = vmatmul.mubr.bf16.gmra.mrb[0].mxu0 %v883
    %v1110 = vpop.f32.mrb[0].mxu0
    %v1111 = vadd.f32 0.0, %v1110
    %v1112 = vpop.f32.mrb[0].mxu0
    %v1113 = vadd.f32 0.0, %v1112
    %v1114 = vpop.f32.mrb[0].mxu0
    %v1115 = vadd.f32 0.0, %v1114
    %v1116 = vpop.f32.mrb[0].mxu0
    %v1117 = vadd.f32 0.0, %v1116
    %1118 = vdwg.mxu0
    %1119 = vmatprep.subr.bf16.mxu0 %v1015
    %1120 = vmatpush1.bf16.msra.mxu0 %v1014
    %1121 = vmatprep.subr.bf16.mxu0 %v1019
    %1122 = vmatpush1.bf16.msra.mxu0 %v1018
    %1123 = vmatprep.subr.bf16.mxu0 %v1023
    %1124 = vmatpush1.bf16.msra.mxu0 %v1022
    %1125 = vmatprep.subr.bf16.mxu0 %v1027
    %1126 = vmatpush1.bf16.msra.mxu0 %v1026
    %1127 = vmatprep.subr.bf16.mxu0 %v1031
    %1128 = vmatpush1.bf16.msra.mxu0 %v1030
    %1129 = vmatprep.subr.bf16.mxu0 %v1035
    %1130 = vmatpush1.bf16.msra.mxu0 %v1034
    %1131 = vmatprep.subr.bf16.mxu0 %v1039
    %1132 = vmatpush1.bf16.msra.mxu0 %v1038
    %1133 = vmatprep.subr.bf16.mxu0 %v1043
    %1134 = vmatpush1.bf16.msra.mxu0 %v1042
    %1135 = vmatprep.subr.bf16.mxu0 0
    %1136 = vmatpush1.bf16.msra.mxu0 0
    %1137 = vmatprep.subr.bf16.mxu0 0
    %1138 = vmatpush1.bf16.msra.mxu0 0
    %1139 = vmatprep.subr.bf16.mxu0 0
    %1140 = vmatpush1.bf16.msra.mxu0 0
    %1141 = vmatprep.subr.bf16.mxu0 0
    %1142 = vmatpush1.bf16.msra.mxu0 0
    %1143 = vmatprep.subr.bf16.mxu0 0
    %1144 = vmatpush1.bf16.msra.mxu0 0
    %1145 = vmatprep.subr.bf16.mxu0 0
    %1146 = vmatpush1.bf16.msra.mxu0 0
    %1147 = vmatprep.subr.bf16.mxu0 0
    %1148 = vmatpush1.bf16.msra.mxu0 0
    %1149 = vmatprep.subr.bf16.mxu0 0
    %1150 = vmatpush1.bf16.msra.mxu0 0
    %1151 = vmatprep.mubr.bf16.mxu0 0
    %1152 = vmatmul.mubr.bf16.gmra.mrb[0].mxu0 %v883
    %v1153 = vpop.f32.mrb[0].mxu0
    %v1154 = vadd.f32 0.0, %v1153
    %v1155 = vpop.f32.mrb[0].mxu0
    %v1156 = vadd.f32 0.0, %v1155
    %v1157 = vpop.f32.mrb[0].mxu0
    %v1158 = vadd.f32 0.0, %v1157
    %v1159 = vpop.f32.mrb[0].mxu0
    %v1160 = vadd.f32 0.0, %v1159
    %1161 = vdwg.mxu0
    %v1162 = vadd.f32 %v875, %v1111
    %v1163 = vadd.f32 %v876, %v1113
    %v1164 = vadd.f32 %v877, %v1154
    %v1165 = vadd.f32 %v878, %v1156
    %v1166 = vadd.f32 %v879, %v1115
    %v1167 = vadd.f32 %v880, %v1117
    %v1168 = vadd.f32 %v881, %v1158
    %v1169 = vadd.f32 %v882, %v1160
    %v1170 = vxor.u32 %v1162, 2147483648
    %v1171 = vxor.u32 %v1166, 2147483648
    %v1172 = vmul.f32 %v1170, 1.442695
    %v1173 = vpow.pop %v1172
    %v1174 = vmul.f32 %v1171, 1.442695
    %v1175 = vpow.pop %v1174
    %v1176 = vadd.f32 %v1173, 1.0
    %v1177 = vadd.f32 %v1175, 1.0
    %v1178 = vrcp.pop %v1176
    %v1179 = vmul.f32 1.0, %v1178
    %v1180 = vrcp.pop %v1177
    %v1181 = vmul.f32 1.0, %v1180
    %v1182 = vxor.u32 %v1163, 2147483648
    %v1183 = vxor.u32 %v1167, 2147483648
    %v1184 = vmul.f32 %v1182, 1.442695
    %v1185 = vpow.pop %v1184
    %v1186 = vmul.f32 %v1183, 1.442695
    %v1187 = vpow.pop %v1186
    %v1188 = vadd.f32 %v1185, 1.0
    %v1189 = vadd.f32 %v1187, 1.0
    %v1190 = vrcp.pop %v1188
    %v1191 = vmul.f32 1.0, %v1190
    %v1192 = vrcp.pop %v1189
    %v1193 = vmul.f32 1.0, %v1192
    %v1194 = vtanh.pop %v1164
    %v1195 = vtanh.pop %v1168
    %v1196 = vxor.u32 %v1165, 2147483648
    %v1197 = vxor.u32 %v1169, 2147483648
    %v1198 = vmul.f32 %v1196, 1.442695
    %v1199 = vpow.pop %v1198
    %v1200 = vmul.f32 %v1197, 1.442695
    %v1201 = vpow.pop %v1200
    %v1202 = vadd.f32 %v1199, 1.0
    %v1203 = vadd.f32 %v1201, 1.0
    %v1204 = vrcp.pop %v1202
    %v1205 = vmul.f32 1.0, %v1204
    %v1206 = vrcp.pop %v1203
    %v1207 = vmul.f32 1.0, %v1206
    %v1208 = vmul.f32 %v1191, %v870
    %v1209 = vmul.f32 %v1193, %v871
    %v1210 = vmul.f32 %v1179, %v1194
    %v1211 = vmul.f32 %v1181, %v1195
    %v1212 = vadd.f32 %v1208, %v1210
    %v1213 = vadd.f32 %v1209, %v1211
    %v1214 = vtanh.pop %v1212
    %v1215 = vtanh.pop %v1213
    %v1216 = vmul.f32 %v1205, %v1214
    %v1217 = vmul.f32 %v1207, %v1215
    %s1218 = smul.u32 2, 4
    %s1219 = smul.addr %s1218, 8
    %s1220 = scalar_lea.vmem [#allocation2], %s1219
    %v1221 = vld [vmem:[%s1220] sm:$0xff]
    %v1222 = vld [vmem:[%s1220 + $0x8] sm:$0xff]
    %v1223 = vld [vmem:[%s1220 + $0x10] sm:$0xff]
    %v1224 = vld [vmem:[%s1220 + $0x18] sm:$0xff]
    %v1225 = vld [vmem:[%s1220 + $0x20] sm:$0xff]
    %v1226 = vld [vmem:[%s1220 + $0x28] sm:$0xff]
    %v1227 = vld [vmem:[%s1220 + $0x30] sm:$0xff]
    %v1228 = vld [vmem:[%s1220 + $0x38] sm:$0xff]
    %v1229 = vpack.c.bf16 %v1217, %v1216
    %1230 = vmatprep.subr.bf16.mxu0 %v1013
    %1231 = vmatpush1.bf16.msra.mxu0 %v1012
    %1232 = vmatprep.subr.bf16.mxu0 %v1017
    %1233 = vmatpush1.bf16.msra.mxu0 %v1016
    %1234 = vmatprep.subr.bf16.mxu0 %v1021
    %1235 = vmatpush1.bf16.msra.mxu0 %v1020
    %1236 = vmatprep.subr.bf16.mxu0 %v1025
    %1237 = vmatpush1.bf16.msra.mxu0 %v1024
    %1238 = vmatprep.subr.bf16.mxu0 %v1029
    %1239 = vmatpush1.bf16.msra.mxu0 %v1028
    %1240 = vmatprep.subr.bf16.mxu0 %v1033
    %1241 = vmatpush1.bf16.msra.mxu0 %v1032
    %1242 = vmatprep.subr.bf16.mxu0 %v1037
    %1243 = vmatpush1.bf16.msra.mxu0 %v1036
    %1244 = vmatprep.subr.bf16.mxu0 %v1041
    %1245 = vmatpush1.bf16.msra.mxu0 %v1040
    %1246 = vmatprep.subr.bf16.mxu0 0
    %1247 = vmatpush1.bf16.msra.mxu0 0
    %1248 = vmatprep.subr.bf16.mxu0 0
    %1249 = vmatpush1.bf16.msra.mxu0 0
    %1250 = vmatprep.subr.bf16.mxu0 0
    %1251 = vmatpush1.bf16.msra.mxu0 0
    %1252 = vmatprep.subr.bf16.mxu0 0
    %1253 = vmatpush1.bf16.msra.mxu0 0
    %1254 = vmatprep.subr.bf16.mxu0 0
    %1255 = vmatpush1.bf16.msra.mxu0 0
    %1256 = vmatprep.subr.bf16.mxu0 0
    %1257 = vmatpush1.bf16.msra.mxu0 0
    %1258 = vmatprep.subr.bf16.mxu0 0
    %1259 = vmatpush1.bf16.msra.mxu0 0
    %1260 = vmatprep.subr.bf16.mxu0 0
    %1261 = vmatpush1.bf16.msra.mxu0 0
    %1262 = vmatprep.mubr.bf16.mxu0 0
    %1263 = vmatmul.mubr.bf16.gmra.mrb[0].mxu0 %v1229
    %v1264 = vpop.f32.mrb[0].mxu0
    %v1265 = vadd.f32 0.0, %v1264
    %v1266 = vpop.f32.mrb[0].mxu0
    %v1267 = vadd.f32 0.0, %v1266
    %v1268 = vpop.f32.mrb[0].mxu0
    %v1269 = vadd.f32 0.0, %v1268
    %v1270 = vpop.f32.mrb[0].mxu0
    %v1271 = vadd.f32 0.0, %v1270
    %1272 = vdwg.mxu0
    %1273 = vmatprep.subr.bf16.mxu0 %v1015
    %1274 = vmatpush1.bf16.msra.mxu0 %v1014
    %1275 = vmatprep.subr.bf16.mxu0 %v1019
    %1276 = vmatpush1.bf16.msra.mxu0 %v1018
    %1277 = vmatprep.subr.bf16.mxu0 %v1023
    %1278 = vmatpush1.bf16.msra.mxu0 %v1022
    %1279 = vmatprep.subr.bf16.mxu0 %v1027
    %1280 = vmatpush1.bf16.msra.mxu0 %v1026
    %1281 = vmatprep.subr.bf16.mxu0 %v1031
    %1282 = vmatpush1.bf16.msra.mxu0 %v1030
    %1283 = vmatprep.subr.bf16.mxu0 %v1035
    %1284 = vmatpush1.bf16.msra.mxu0 %v1034
    %1285 = vmatprep.subr.bf16.mxu0 %v1039
    %1286 = vmatpush1.bf16.msra.mxu0 %v1038
    %1287 = vmatprep.subr.bf16.mxu0 %v1043
    %1288 = vmatpush1.bf16.msra.mxu0 %v1042
    %1289 = vmatprep.subr.bf16.mxu0 0
    %1290 = vmatpush1.bf16.msra.mxu0 0
    %1291 = vmatprep.subr.bf16.mxu0 0
    %1292 = vmatpush1.bf16.msra.mxu0 0
    %1293 = vmatprep.subr.bf16.mxu0 0
    %1294 = vmatpush1.bf16.msra.mxu0 0
    %1295 = vmatprep.subr.bf16.mxu0 0
    %1296 = vmatpush1.bf16.msra.mxu0 0
    %1297 = vmatprep.subr.bf16.mxu0 0
    %1298 = vmatpush1.bf16.msra.mxu0 0
    %1299 = vmatprep.subr.bf16.mxu0 0
    %1300 = vmatpush1.bf16.msra.mxu0 0
    %1301 = vmatprep.subr.bf16.mxu0 0
    %1302 = vmatpush1.bf16.msra.mxu0 0
    %1303 = vmatprep.subr.bf16.mxu0 0
    %1304 = vmatpush1.bf16.msra.mxu0 0
    %1305 = vmatprep.mubr.bf16.mxu0 0
    %1306 = vmatmul.mubr.bf16.gmra.mrb[0].mxu0 %v1229
    %v1307 = vpop.f32.mrb[0].mxu0
    %v1308 = vadd.f32 0.0, %v1307
    %v1309 = vpop.f32.mrb[0].mxu0
    %v1310 = vadd.f32 0.0, %v1309
    %v1311 = vpop.f32.mrb[0].mxu0
    %v1312 = vadd.f32 0.0, %v1311
    %v1313 = vpop.f32.mrb[0].mxu0
    %v1314 = vadd.f32 0.0, %v1313
    %1315 = vdwg.mxu0
    %v1316 = vadd.f32 %v1221, %v1265
    %v1317 = vadd.f32 %v1222, %v1267
    %v1318 = vadd.f32 %v1223, %v1308
    %v1319 = vadd.f32 %v1224, %v1310
    %v1320 = vadd.f32 %v1225, %v1269
    %v1321 = vadd.f32 %v1226, %v1271
    %v1322 = vadd.f32 %v1227, %v1312
    %v1323 = vadd.f32 %v1228, %v1314
    %v1324 = vxor.u32 %v1316, 2147483648
    %v1325 = vxor.u32 %v1320, 2147483648
    %v1326 = vmul.f32 %v1324, 1.442695
    %v1327 = vpow.pop %v1326
    %v1328 = vmul.f32 %v1325, 1.442695
    %v1329 = vpow.pop %v1328
    %v1330 = vadd.f32 %v1327, 1.0
    %v1331 = vadd.f32 %v1329, 1.0
    %v1332 = vrcp.pop %v1330
    %v1333 = vmul.f32 1.0, %v1332
    %v1334 = vrcp.pop %v1331
    %v1335 = vmul.f32 1.0, %v1334
    %v1336 = vxor.u32 %v1317, 2147483648
    %v1337 = vxor.u32 %v1321, 2147483648
    %v1338 = vmul.f32 %v1336, 1.442695
    %v1339 = vpow.pop %v1338
    %v1340 = vmul.f32 %v1337, 1.442695
    %v1341 = vpow.pop %v1340
    %v1342 = vadd.f32 %v1339, 1.0
    %v1343 = vadd.f32 %v1341, 1.0
    %v1344 = vrcp.pop %v1342
    %v1345 = vmul.f32 1.0, %v1344
    %v1346 = vrcp.pop %v1343
    %v1347 = vmul.f32 1.0, %v1346
    %v1348 = vtanh.pop %v1318
    %v1349 = vtanh.pop %v1322
    %v1350 = vxor.u32 %v1319, 2147483648
    %v1351 = vxor.u32 %v1323, 2147483648
    %v1352 = vmul.f32 %v1350, 1.442695
    %v1353 = vpow.pop %v1352
    %v1354 = vmul.f32 %v1351, 1.442695
    %v1355 = vpow.pop %v1354
    %v1356 = vadd.f32 %v1353, 1.0
    %v1357 = vadd.f32 %v1355, 1.0
    %v1358 = vrcp.pop %v1356
    %v1359 = vmul.f32 1.0, %v1358
    %v1360 = vrcp.pop %v1357
    %v1361 = vmul.f32 1.0, %v1360
    %v1362 = vmul.f32 %v1345, %v1212
    %v1363 = vmul.f32 %v1347, %v1213
    %v1364 = vmul.f32 %v1333, %v1348
    %v1365 = vmul.f32 %v1335, %v1349
    %v1366 = vadd.f32 %v1362, %v1364
    %v1367 = vadd.f32 %v1363, %v1365
    %v1368 = vtanh.pop %v1366
    %v1369 = vtanh.pop %v1367
    %v1370 = vmul.f32 %v1359, %v1368
    %v1371 = vmul.f32 %v1361, %v1369
    %s1372 = smul.u32 4, 4
    %s1373 = smul.addr %s1372, 8
    %s1374 = scalar_lea.vmem [#allocation2], %s1373
    %v1375 = vld [vmem:[%s1374] sm:$0xff]
    %v1376 = vld [vmem:[%s1374 + $0x8] sm:$0xff]
    %v1377 = vld [vmem:[%s1374 + $0x10] sm:$0xff]
    %v1378 = vld [vmem:[%s1374 + $0x18] sm:$0xff]
    %v1379 = vld [vmem:[%s1374 + $0x20] sm:$0xff]
    %v1380 = vld [vmem:[%s1374 + $0x28] sm:$0xff]
    %v1381 = vld [vmem:[%s1374 + $0x30] sm:$0xff]
    %v1382 = vld [vmem:[%s1374 + $0x38] sm:$0xff]
    %v1383 = vpack.c.bf16 %v1371, %v1370
    %1384 = vmatprep.subr.bf16.mxu0 %v1013
    %1385 = vmatpush1.bf16.msra.mxu0 %v1012
    %1386 = vmatprep.subr.bf16.mxu0 %v1017
    %1387 = vmatpush1.bf16.msra.mxu0 %v1016
    %1388 = vmatprep.subr.bf16.mxu0 %v1021
    %1389 = vmatpush1.bf16.msra.mxu0 %v1020
    %1390 = vmatprep.subr.bf16.mxu0 %v1025
    %1391 = vmatpush1.bf16.msra.mxu0 %v1024
    %1392 = vmatprep.subr.bf16.mxu0 %v1029
    %1393 = vmatpush1.bf16.msra.mxu0 %v1028
    %1394 = vmatprep.subr.bf16.mxu0 %v1033
    %1395 = vmatpush1.bf16.msra.mxu0 %v1032
    %1396 = vmatprep.subr.bf16.mxu0 %v1037
    %1397 = vmatpush1.bf16.msra.mxu0 %v1036
    %1398 = vmatprep.subr.bf16.mxu0 %v1041
    %1399 = vmatpush1.bf16.msra.mxu0 %v1040
    %1400 = vmatprep.subr.bf16.mxu0 0
    %1401 = vmatpush1.bf16.msra.mxu0 0
    %1402 = vmatprep.subr.bf16.mxu0 0
    %1403 = vmatpush1.bf16.msra.mxu0 0
    %1404 = vmatprep.subr.bf16.mxu0 0
    %1405 = vmatpush1.bf16.msra.mxu0 0
    %1406 = vmatprep.subr.bf16.mxu0 0
    %1407 = vmatpush1.bf16.msra.mxu0 0
    %1408 = vmatprep.subr.bf16.mxu0 0
    %1409 = vmatpush1.bf16.msra.mxu0 0
    %1410 = vmatprep.subr.bf16.mxu0 0
    %1411 = vmatpush1.bf16.msra.mxu0 0
    %1412 = vmatprep.subr.bf16.mxu0 0
    %1413 = vmatpush1.bf16.msra.mxu0 0
    %1414 = vmatprep.subr.bf16.mxu0 0
    %1415 = vmatpush1.bf16.msra.mxu0 0
    %1416 = vmatprep.mubr.bf16.mxu0 0
    %1417 = vmatmul.mubr.bf16.gmra.mrb[0].mxu0 %v1383
    %v1418 = vpop.f32.mrb[0].mxu0
    %v1419 = vadd.f32 0.0, %v1418
    %v1420 = vpop.f32.mrb[0].mxu0
    %v1421 = vadd.f32 0.0, %v1420
    %v1422 = vpop.f32.mrb[0].mxu0
    %v1423 = vadd.f32 0.0, %v1422
    %v1424 = vpop.f32.mrb[0].mxu0
    %v1425 = vadd.f32 0.0, %v1424
    %1426 = vdwg.mxu0
    %1427 = vmatprep.subr.bf16.mxu0 %v1015
    %1428 = vmatpush1.bf16.msra.mxu0 %v1014
    %1429 = vmatprep.subr.bf16.mxu0 %v1019
    %1430 = vmatpush1.bf16.msra.mxu0 %v1018
    %1431 = vmatprep.subr.bf16.mxu0 %v1023
    %1432 = vmatpush1.bf16.msra.mxu0 %v1022
    %1433 = vmatprep.subr.bf16.mxu0 %v1027
    %1434 = vmatpush1.bf16.msra.mxu0 %v1026
    %1435 = vmatprep.subr.bf16.mxu0 %v1031
    %1436 = vmatpush1.bf16.msra.mxu0 %v1030
    %1437 = vmatprep.subr.bf16.mxu0 %v1035
    %1438 = vmatpush1.bf16.msra.mxu0 %v1034
    %1439 = vmatprep.subr.bf16.mxu0 %v1039
    %1440 = vmatpush1.bf16.msra.mxu0 %v1038
    %1441 = vmatprep.subr.bf16.mxu0 %v1043
    %1442 = vmatpush1.bf16.msra.mxu0 %v1042
    %1443 = vmatprep.subr.bf16.mxu0 0
    %1444 = vmatpush1.bf16.msra.mxu0 0
    %1445 = vmatprep.subr.bf16.mxu0 0
    %1446 = vmatpush1.bf16.msra.mxu0 0
    %1447 = vmatprep.subr.bf16.mxu0 0
    %1448 = vmatpush1.bf16.msra.mxu0 0
    %1449 = vmatprep.subr.bf16.mxu0 0
    %1450 = vmatpush1.bf16.msra.mxu0 0
    %1451 = vmatprep.subr.bf16.mxu0 0
    %1452 = vmatpush1.bf16.msra.mxu0 0
    %1453 = vmatprep.subr.bf16.mxu0 0
    %1454 = vmatpush1.bf16.msra.mxu0 0
    %1455 = vmatprep.subr.bf16.mxu0 0
    %1456 = vmatpush1.bf16.msra.mxu0 0
    %1457 = vmatprep.subr.bf16.mxu0 0
    %1458 = vmatpush1.bf16.msra.mxu0 0
    %1459 = vmatprep.mubr.bf16.mxu0 0
    %1460 = vmatmul.mubr.bf16.gmra.mrb[0].mxu0 %v1383
    %v1461 = vpop.f32.mrb[0].mxu0
    %v1462 = vadd.f32 0.0, %v1461
    %v1463 = vpop.f32.mrb[0].mxu0
    %v1464 = vadd.f32 0.0, %v1463
    %v1465 = vpop.f32.mrb[0].mxu0
    %v1466 = vadd.f32 0.0, %v1465
    %v1467 = vpop.f32.mrb[0].mxu0
    %v1468 = vadd.f32 0.0, %v1467
    %1469 = vdwg.mxu0
    %v1470 = vadd.f32 %v1375, %v1419
    %v1471 = vadd.f32 %v1376, %v1421
    %v1472 = vadd.f32 %v1377, %v1462
    %v1473 = vadd.f32 %v1378, %v1464
    %v1474 = vadd.f32 %v1379, %v1423
    %v1475 = vadd.f32 %v1380, %v1425
    %v1476 = vadd.f32 %v1381, %v1466
    %v1477 = vadd.f32 %v1382, %v1468
    %v1478 = vxor.u32 %v1470, 2147483648
    %v1479 = vxor.u32 %v1474, 2147483648
    %v1480 = vmul.f32 %v1478, 1.442695
    %v1481 = vpow.pop %v1480
    %v1482 = vmul.f32 %v1479, 1.442695
    %v1483 = vpow.pop %v1482
    %v1484 = vadd.f32 %v1481, 1.0
    %v1485 = vadd.f32 %v1483, 1.0
    %v1486 = vrcp.pop %v1484
    %v1487 = vmul.f32 1.0, %v1486
    %v1488 = vrcp.pop %v1485
    %v1489 = vmul.f32 1.0, %v1488
    %v1490 = vxor.u32 %v1471, 2147483648
    %v1491 = vxor.u32 %v1475, 2147483648
    %v1492 = vmul.f32 %v1490, 1.442695
    %v1493 = vpow.pop %v1492
    %v1494 = vmul.f32 %v1491, 1.442695
    %v1495 = vpow.pop %v1494
    %v1496 = vadd.f32 %v1493, 1.0
    %v1497 = vadd.f32 %v1495, 1.0
    %v1498 = vrcp.pop %v1496
    %v1499 = vmul.f32 1.0, %v1498
    %v1500 = vrcp.pop %v1497
    %v1501 = vmul.f32 1.0, %v1500
    %v1502 = vtanh.pop %v1472
    %v1503 = vtanh.pop %v1476
    %v1504 = vxor.u32 %v1473, 2147483648
    %v1505 = vxor.u32 %v1477, 2147483648
    %v1506 = vmul.f32 %v1504, 1.442695
    %v1507 = vpow.pop %v1506
    %v1508 = vmul.f32 %v1505, 1.442695
    %v1509 = vpow.pop %v1508
    %v1510 = vadd.f32 %v1507, 1.0
    %v1511 = vadd.f32 %v1509, 1.0
    %v1512 = vrcp.pop %v1510
    %v1513 = vmul.f32 1.0, %v1512
    %v1514 = vrcp.pop %v1511
    %v1515 = vmul.f32 1.0, %v1514
    %v1516 = vmul.f32 %v1499, %v1366
    %v1517 = vmul.f32 %v1501, %v1367
    %v1518 = vmul.f32 %v1487, %v1502
    %v1519 = vmul.f32 %v1489, %v1503
    %v1520 = vadd.f32 %v1516, %v1518
    %v1521 = vadd.f32 %v1517, %v1519
    %v1522 = vtanh.pop %v1520
    %v1523 = vtanh.pop %v1521
    %v1524 = vmul.f32 %v1513, %v1522
    %v1525 = vmul.f32 %v1515, %v1523
    %s1526 = smul.u32 6, 4
    %s1527 = smul.addr %s1526, 8
    %s1528 = scalar_lea.vmem [#allocation2], %s1527
    %v1529 = vld [vmem:[%s1528] sm:$0xff]
    %v1530 = vld [vmem:[%s1528 + $0x8] sm:$0xff]
    %v1531 = vld [vmem:[%s1528 + $0x10] sm:$0xff]
    %v1532 = vld [vmem:[%s1528 + $0x18] sm:$0xff]
    %v1533 = vld [vmem:[%s1528 + $0x20] sm:$0xff]
    %v1534 = vld [vmem:[%s1528 + $0x28] sm:$0xff]
    %v1535 = vld [vmem:[%s1528 + $0x30] sm:$0xff]
    %v1536 = vld [vmem:[%s1528 + $0x38] sm:$0xff]
    %v1537 = vpack.c.bf16 %v1525, %v1524
    %1538 = vmatprep.subr.bf16.mxu0 %v1013
    %1539 = vmatpush1.bf16.msra.mxu0 %v1012
    %1540 = vmatprep.subr.bf16.mxu0 %v1017
    %1541 = vmatpush1.bf16.msra.mxu0 %v1016
    %1542 = vmatprep.subr.bf16.mxu0 %v1021
    %1543 = vmatpush1.bf16.msra.mxu0 %v1020
    %1544 = vmatprep.subr.bf16.mxu0 %v1025
    %1545 = vmatpush1.bf16.msra.mxu0 %v1024
    %1546 = vmatprep.subr.bf16.mxu0 %v1029
    %1547 = vmatpush1.bf16.msra.mxu0 %v1028
    %1548 = vmatprep.subr.bf16.mxu0 %v1033
    %1549 = vmatpush1.bf16.msra.mxu0 %v1032
    %1550 = vmatprep.subr.bf16.mxu0 %v1037
    %1551 = vmatpush1.bf16.msra.mxu0 %v1036
    %1552 = vmatprep.subr.bf16.mxu0 %v1041
    %1553 = vmatpush1.bf16.msra.mxu0 %v1040
    %1554 = vmatprep.subr.bf16.mxu0 0
    %1555 = vmatpush1.bf16.msra.mxu0 0
    %1556 = vmatprep.subr.bf16.mxu0 0
    %1557 = vmatpush1.bf16.msra.mxu0 0
    %1558 = vmatprep.subr.bf16.mxu0 0
    %1559 = vmatpush1.bf16.msra.mxu0 0
    %1560 = vmatprep.subr.bf16.mxu0 0
    %1561 = vmatpush1.bf16.msra.mxu0 0
    %1562 = vmatprep.subr.bf16.mxu0 0
    %1563 = vmatpush1.bf16.msra.mxu0 0
    %1564 = vmatprep.subr.bf16.mxu0 0
    %1565 = vmatpush1.bf16.msra.mxu0 0
    %1566 = vmatprep.subr.bf16.mxu0 0
    %1567 = vmatpush1.bf16.msra.mxu0 0
    %1568 = vmatprep.subr.bf16.mxu0 0
    %1569 = vmatpush1.bf16.msra.mxu0 0
    %1570 = vmatprep.mubr.bf16.mxu0 0
    %1571 = vmatmul.mubr.bf16.gmra.mrb[0].mxu0 %v1537
    %v1572 = vpop.f32.mrb[0].mxu0
    %v1573 = vadd.f32 0.0, %v1572
    %v1574 = vpop.f32.mrb[0].mxu0
    %v1575 = vadd.f32 0.0, %v1574
    %v1576 = vpop.f32.mrb[0].mxu0
    %v1577 = vadd.f32 0.0, %v1576
    %v1578 = vpop.f32.mrb[0].mxu0
    %v1579 = vadd.f32 0.0, %v1578
    %1580 = vdwg.mxu0
    %1581 = vmatprep.subr.bf16.mxu0 %v1015
    %1582 = vmatpush1.bf16.msra.mxu0 %v1014
    %1583 = vmatprep.subr.bf16.mxu0 %v1019
    %1584 = vmatpush1.bf16.msra.mxu0 %v1018
    %1585 = vmatprep.subr.bf16.mxu0 %v1023
    %1586 = vmatpush1.bf16.msra.mxu0 %v1022
    %1587 = vmatprep.subr.bf16.mxu0 %v1027
    %1588 = vmatpush1.bf16.msra.mxu0 %v1026
    %1589 = vmatprep.subr.bf16.mxu0 %v1031
    %1590 = vmatpush1.bf16.msra.mxu0 %v1030
    %1591 = vmatprep.subr.bf16.mxu0 %v1035
    %1592 = vmatpush1.bf16.msra.mxu0 %v1034
    %1593 = vmatprep.subr.bf16.mxu0 %v1039
    %1594 = vmatpush1.bf16.msra.mxu0 %v1038
    %1595 = vmatprep.subr.bf16.mxu0 %v1043
    %1596 = vmatpush1.bf16.msra.mxu0 %v1042
    %1597 = vmatprep.subr.bf16.mxu0 0
    %1598 = vmatpush1.bf16.msra.mxu0 0
    %1599 = vmatprep.subr.bf16.mxu0 0
    %1600 = vmatpush1.bf16.msra.mxu0 0
    %1601 = vmatprep.subr.bf16.mxu0 0
    %1602 = vmatpush1.bf16.msra.mxu0 0
    %1603 = vmatprep.subr.bf16.mxu0 0
    %1604 = vmatpush1.bf16.msra.mxu0 0
    %1605 = vmatprep.subr.bf16.mxu0 0
    %1606 = vmatpush1.bf16.msra.mxu0 0
    %1607 = vmatprep.subr.bf16.mxu0 0
    %1608 = vmatpush1.bf16.msra.mxu0 0
    %1609 = vmatprep.subr.bf16.mxu0 0
    %1610 = vmatpush1.bf16.msra.mxu0 0
    %1611 = vmatprep.subr.bf16.mxu0 0
    %1612 = vmatpush1.bf16.msra.mxu0 0
    %1613 = vmatprep.mubr.bf16.mxu0 0
    %1614 = vmatmul.mubr.bf16.gmra.mrb[0].mxu0 %v1537
    %v1615 = vpop.f32.mrb[0].mxu0
    %v1616 = vadd.f32 0.0, %v1615
    %v1617 = vpop.f32.mrb[0].mxu0
    %v1618 = vadd.f32 0.0, %v1617
    %v1619 = vpop.f32.mrb[0].mxu0
    %v1620 = vadd.f32 0.0, %v1619
    %v1621 = vpop.f32.mrb[0].mxu0
    %v1622 = vadd.f32 0.0, %v1621
    %1623 = vdwg.mxu0
    %v1624 = vadd.f32 %v1529, %v1573
    %v1625 = vadd.f32 %v1530, %v1575
    %v1626 = vadd.f32 %v1531, %v1616
    %v1627 = vadd.f32 %v1532, %v1618
    %v1628 = vadd.f32 %v1533, %v1577
    %v1629 = vadd.f32 %v1534, %v1579
    %v1630 = vadd.f32 %v1535, %v1620
    %v1631 = vadd.f32 %v1536, %v1622
    %v1632 = vxor.u32 %v1624, 2147483648
    %v1633 = vxor.u32 %v1628, 2147483648
    %v1634 = vmul.f32 %v1632, 1.442695
    %v1635 = vpow.pop %v1634
    %v1636 = vmul.f32 %v1633, 1.442695
    %v1637 = vpow.pop %v1636
    %v1638 = vadd.f32 %v1635, 1.0
    %v1639 = vadd.f32 %v1637, 1.0
    %v1640 = vrcp.pop %v1638
    %v1641 = vmul.f32 1.0, %v1640
    %v1642 = vrcp.pop %v1639
    %v1643 = vmul.f32 1.0, %v1642
    %v1644 = vxor.u32 %v1625, 2147483648
    %v1645 = vxor.u32 %v1629, 2147483648
    %v1646 = vmul.f32 %v1644, 1.442695
    %v1647 = vpow.pop %v1646
    %v1648 = vmul.f32 %v1645, 1.442695
    %v1649 = vpow.pop %v1648
    %v1650 = vadd.f32 %v1647, 1.0
    %v1651 = vadd.f32 %v1649, 1.0
    %v1652 = vrcp.pop %v1650
    %v1653 = vmul.f32 1.0, %v1652
    %v1654 = vrcp.pop %v1651
    %v1655 = vmul.f32 1.0, %v1654
    %v1656 = vtanh.pop %v1626
    %v1657 = vtanh.pop %v1630
    %v1658 = vxor.u32 %v1627, 2147483648
    %v1659 = vxor.u32 %v1631, 2147483648
    %v1660 = vmul.f32 %v1658, 1.442695
    %v1661 = vpow.pop %v1660
    %v1662 = vmul.f32 %v1659, 1.442695
    %v1663 = vpow.pop %v1662
    %v1664 = vadd.f32 %v1661, 1.0
    %v1665 = vadd.f32 %v1663, 1.0
    %v1666 = vrcp.pop %v1664
    %v1667 = vmul.f32 1.0, %v1666
    %v1668 = vrcp.pop %v1665
    %v1669 = vmul.f32 1.0, %v1668
    %v1670 = vmul.f32 %v1653, %v1520
    %v1671 = vmul.f32 %v1655, %v1521
    %v1672 = vmul.f32 %v1641, %v1656
    %v1673 = vmul.f32 %v1643, %v1657
    %v1674 = vadd.f32 %v1670, %v1672
    %v1675 = vadd.f32 %v1671, %v1673
    %v1676 = vtanh.pop %v1674
    %v1677 = vtanh.pop %v1675
    %v1678 = vmul.f32 %v1667, %v1676
    %v1679 = vmul.f32 %v1669, %v1677
    %s1680 = smul.u32 8, 4
    %s1681 = smul.addr %s1680, 8
    %s1682 = scalar_lea.vmem [#allocation2], %s1681
    %v1683 = vld [vmem:[%s1682] sm:$0xff]
    %v1684 = vld [vmem:[%s1682 + $0x8] sm:$0xff]
    %v1685 = vld [vmem:[%s1682 + $0x10] sm:$0xff]
    %v1686 = vld [vmem:[%s1682 + $0x18] sm:$0xff]
    %v1687 = vld [vmem:[%s1682 + $0x20] sm:$0xff]
    %v1688 = vld [vmem:[%s1682 + $0x28] sm:$0xff]
    %v1689 = vld [vmem:[%s1682 + $0x30] sm:$0xff]
    %v1690 = vld [vmem:[%s1682 + $0x38] sm:$0xff]
    %v1691 = vpack.c.bf16 %v1679, %v1678
    %1692 = vmatprep.subr.bf16.mxu0 %v1013
    %1693 = vmatpush1.bf16.msra.mxu0 %v1012
    %1694 = vmatprep.subr.bf16.mxu0 %v1017
    %1695 = vmatpush1.bf16.msra.mxu0 %v1016
    %1696 = vmatprep.subr.bf16.mxu0 %v1021
    %1697 = vmatpush1.bf16.msra.mxu0 %v1020
    %1698 = vmatprep.subr.bf16.mxu0 %v1025
    %1699 = vmatpush1.bf16.msra.mxu0 %v1024
    %1700 = vmatprep.subr.bf16.mxu0 %v1029
    %1701 = vmatpush1.bf16.msra.mxu0 %v1028
    %1702 = vmatprep.subr.bf16.mxu0 %v1033
    %1703 = vmatpush1.bf16.msra.mxu0 %v1032
    %1704 = vmatprep.subr.bf16.mxu0 %v1037
    %1705 = vmatpush1.bf16.msra.mxu0 %v1036
    %1706 = vmatprep.subr.bf16.mxu0 %v1041
    %1707 = vmatpush1.bf16.msra.mxu0 %v1040
    %1708 = vmatprep.subr.bf16.mxu0 0
    %1709 = vmatpush1.bf16.msra.mxu0 0
    %1710 = vmatprep.subr.bf16.mxu0 0
    %1711 = vmatpush1.bf16.msra.mxu0 0
    %1712 = vmatprep.subr.bf16.mxu0 0
    %1713 = vmatpush1.bf16.msra.mxu0 0
    %1714 = vmatprep.subr.bf16.mxu0 0
    %1715 = vmatpush1.bf16.msra.mxu0 0
    %1716 = vmatprep.subr.bf16.mxu0 0
    %1717 = vmatpush1.bf16.msra.mxu0 0
    %1718 = vmatprep.subr.bf16.mxu0 0
    %1719 = vmatpush1.bf16.msra.mxu0 0
    %1720 = vmatprep.subr.bf16.mxu0 0
    %1721 = vmatpush1.bf16.msra.mxu0 0
    %1722 = vmatprep.subr.bf16.mxu0 0
    %1723 = vmatpush1.bf16.msra.mxu0 0
    %1724 = vmatprep.mubr.bf16.mxu0 0
    %1725 = vmatmul.mubr.bf16.gmra.mrb[0].mxu0 %v1691
    %v1726 = vpop.f32.mrb[0].mxu0
    %v1727 = vadd.f32 0.0, %v1726
    %v1728 = vpop.f32.mrb[0].mxu0
    %v1729 = vadd.f32 0.0, %v1728
    %v1730 = vpop.f32.mrb[0].mxu0
    %v1731 = vadd.f32 0.0, %v1730
    %v1732 = vpop.f32.mrb[0].mxu0
    %v1733 = vadd.f32 0.0, %v1732
    %1734 = vdwg.mxu0
    %1735 = vmatprep.subr.bf16.mxu0 %v1015
    %1736 = vmatpush1.bf16.msra.mxu0 %v1014
    %1737 = vmatprep.subr.bf16.mxu0 %v1019
    %1738 = vmatpush1.bf16.msra.mxu0 %v1018
    %1739 = vmatprep.subr.bf16.mxu0 %v1023
    %1740 = vmatpush1.bf16.msra.mxu0 %v1022
    %1741 = vmatprep.subr.bf16.mxu0 %v1027
    %1742 = vmatpush1.bf16.msra.mxu0 %v1026
    %1743 = vmatprep.subr.bf16.mxu0 %v1031
    %1744 = vmatpush1.bf16.msra.mxu0 %v1030
    %1745 = vmatprep.subr.bf16.mxu0 %v1035
    %1746 = vmatpush1.bf16.msra.mxu0 %v1034
    %1747 = vmatprep.subr.bf16.mxu0 %v1039
    %1748 = vmatpush1.bf16.msra.mxu0 %v1038
    %1749 = vmatprep.subr.bf16.mxu0 %v1043
    %1750 = vmatpush1.bf16.msra.mxu0 %v1042
    %1751 = vmatprep.subr.bf16.mxu0 0
    %1752 = vmatpush1.bf16.msra.mxu0 0
    %1753 = vmatprep.subr.bf16.mxu0 0
    %1754 = vmatpush1.bf16.msra.mxu0 0
    %1755 = vmatprep.subr.bf16.mxu0 0
    %1756 = vmatpush1.bf16.msra.mxu0 0
    %1757 = vmatprep.subr.bf16.mxu0 0
    %1758 = vmatpush1.bf16.msra.mxu0 0
    %1759 = vmatprep.subr.bf16.mxu0 0
    %1760 = vmatpush1.bf16.msra.mxu0 0
    %1761 = vmatprep.subr.bf16.mxu0 0
    %1762 = vmatpush1.bf16.msra.mxu0 0
    %1763 = vmatprep.subr.bf16.mxu0 0
    %1764 = vmatpush1.bf16.msra.mxu0 0
    %1765 = vmatprep.subr.bf16.mxu0 0
    %1766 = vmatpush1.bf16.msra.mxu0 0
    %1767 = vmatprep.mubr.bf16.mxu0 0
    %1768 = vmatmul.mubr.bf16.gmra.mrb[0].mxu0 %v1691
    %v1769 = vpop.f32.mrb[0].mxu0
    %v1770 = vadd.f32 0.0, %v1769
    %v1771 = vpop.f32.mrb[0].mxu0
    %v1772 = vadd.f32 0.0, %v1771
    %v1773 = vpop.f32.mrb[0].mxu0
    %v1774 = vadd.f32 0.0, %v1773
    %v1775 = vpop.f32.mrb[0].mxu0
    %v1776 = vadd.f32 0.0, %v1775
    %1777 = vdwg.mxu0
    %v1778 = vadd.f32 %v1683, %v1727
    %v1779 = vadd.f32 %v1684, %v1729
    %v1780 = vadd.f32 %v1685, %v1770
    %v1781 = vadd.f32 %v1686, %v1772
    %v1782 = vadd.f32 %v1687, %v1731
    %v1783 = vadd.f32 %v1688, %v1733
    %v1784 = vadd.f32 %v1689, %v1774
    %v1785 = vadd.f32 %v1690, %v1776
    %v1786 = vxor.u32 %v1778, 2147483648
    %v1787 = vxor.u32 %v1782, 2147483648
    %v1788 = vmul.f32 %v1786, 1.442695
    %v1789 = vpow.pop %v1788
    %v1790 = vmul.f32 %v1787, 1.442695
    %v1791 = vpow.pop %v1790
    %v1792 = vadd.f32 %v1789, 1.0
    %v1793 = vadd.f32 %v1791, 1.0
    %v1794 = vrcp.pop %v1792
    %v1795 = vmul.f32 1.0, %v1794
    %v1796 = vrcp.pop %v1793
    %v1797 = vmul.f32 1.0, %v1796
    %v1798 = vxor.u32 %v1779, 2147483648
    %v1799 = vxor.u32 %v1783, 2147483648
    %v1800 = vmul.f32 %v1798, 1.442695
    %v1801 = vpow.pop %v1800
    %v1802 = vmul.f32 %v1799, 1.442695
    %v1803 = vpow.pop %v1802
    %v1804 = vadd.f32 %v1801, 1.0
    %v1805 = vadd.f32 %v1803, 1.0
    %v1806 = vrcp.pop %v1804
    %v1807 = vmul.f32 1.0, %v1806
    %v1808 = vrcp.pop %v1805
    %v1809 = vmul.f32 1.0, %v1808
    %v1810 = vtanh.pop %v1780
    %v1811 = vtanh.pop %v1784
    %v1812 = vxor.u32 %v1781, 2147483648
    %v1813 = vxor.u32 %v1785, 2147483648
    %v1814 = vmul.f32 %v1812, 1.442695
    %v1815 = vpow.pop %v1814
    %v1816 = vmul.f32 %v1813, 1.442695
    %v1817 = vpow.pop %v1816
    %v1818 = vadd.f32 %v1815, 1.0
    %v1819 = vadd.f32 %v1817, 1.0
    %v1820 = vrcp.pop %v1818
    %v1821 = vmul.f32 1.0, %v1820
    %v1822 = vrcp.pop %v1819
    %v1823 = vmul.f32 1.0, %v1822
    %v1824 = vmul.f32 %v1807, %v1674
    %v1825 = vmul.f32 %v1809, %v1675
    %v1826 = vmul.f32 %v1795, %v1810
    %v1827 = vmul.f32 %v1797, %v1811
    %v1828 = vadd.f32 %v1824, %v1826
    %v1829 = vadd.f32 %v1825, %v1827
    %v1830 = vtanh.pop %v1828
    %v1831 = vtanh.pop %v1829
    %v1832 = vmul.f32 %v1821, %v1830
    %v1833 = vmul.f32 %v1823, %v1831
    %s1834 = smul.u32 10, 4
    %s1835 = smul.addr %s1834, 8
    %s1836 = scalar_lea.vmem [#allocation2], %s1835
    %v1837 = vld [vmem:[%s1836] sm:$0xff]
    %v1838 = vld [vmem:[%s1836 + $0x8] sm:$0xff]
    %v1839 = vld [vmem:[%s1836 + $0x10] sm:$0xff]
    %v1840 = vld [vmem:[%s1836 + $0x18] sm:$0xff]
    %v1841 = vld [vmem:[%s1836 + $0x20] sm:$0xff]
    %v1842 = vld [vmem:[%s1836 + $0x28] sm:$0xff]
    %v1843 = vld [vmem:[%s1836 + $0x30] sm:$0xff]
    %v1844 = vld [vmem:[%s1836 + $0x38] sm:$0xff]
    %v1845 = vpack.c.bf16 %v1833, %v1832
    %1846 = vmatprep.subr.bf16.mxu0 %v1013
    %1847 = vmatpush1.bf16.msra.mxu0 %v1012
    %1848 = vmatprep.subr.bf16.mxu0 %v1017
    %1849 = vmatpush1.bf16.msra.mxu0 %v1016
    %1850 = vmatprep.subr.bf16.mxu0 %v1021
    %1851 = vmatpush1.bf16.msra.mxu0 %v1020
    %1852 = vmatprep.subr.bf16.mxu0 %v1025
    %1853 = vmatpush1.bf16.msra.mxu0 %v1024
    %1854 = vmatprep.subr.bf16.mxu0 %v1029
    %1855 = vmatpush1.bf16.msra.mxu0 %v1028
    %1856 = vmatprep.subr.bf16.mxu0 %v1033
    %1857 = vmatpush1.bf16.msra.mxu0 %v1032
    %1858 = vmatprep.subr.bf16.mxu0 %v1037
    %1859 = vmatpush1.bf16.msra.mxu0 %v1036
    %1860 = vmatprep.subr.bf16.mxu0 %v1041
    %1861 = vmatpush1.bf16.msra.mxu0 %v1040
    %1862 = vmatprep.subr.bf16.mxu0 0
    %1863 = vmatpush1.bf16.msra.mxu0 0
    %1864 = vmatprep.subr.bf16.mxu0 0
    %1865 = vmatpush1.bf16.msra.mxu0 0
    %1866 = vmatprep.subr.bf16.mxu0 0
    %1867 = vmatpush1.bf16.msra.mxu0 0
    %1868 = vmatprep.subr.bf16.mxu0 0
    %1869 = vmatpush1.bf16.msra.mxu0 0
    %1870 = vmatprep.subr.bf16.mxu0 0
    %1871 = vmatpush1.bf16.msra.mxu0 0
    %1872 = vmatprep.subr.bf16.mxu0 0
    %1873 = vmatpush1.bf16.msra.mxu0 0
    %1874 = vmatprep.subr.bf16.mxu0 0
    %1875 = vmatpush1.bf16.msra.mxu0 0
    %1876 = vmatprep.subr.bf16.mxu0 0
    %1877 = vmatpush1.bf16.msra.mxu0 0
    %1878 = vmatprep.mubr.bf16.mxu0 0
    %1879 = vmatmul.mubr.bf16.gmra.mrb[0].mxu0 %v1845
    %v1880 = vpop.f32.mrb[0].mxu0
    %v1881 = vadd.f32 0.0, %v1880
    %v1882 = vpop.f32.mrb[0].mxu0
    %v1883 = vadd.f32 0.0, %v1882
    %v1884 = vpop.f32.mrb[0].mxu0
    %v1885 = vadd.f32 0.0, %v1884
    %v1886 = vpop.f32.mrb[0].mxu0
    %v1887 = vadd.f32 0.0, %v1886
    %1888 = vdwg.mxu0
    %1889 = vmatprep.subr.bf16.mxu0 %v1015
    %1890 = vmatpush1.bf16.msra.mxu0 %v1014
    %1891 = vmatprep.subr.bf16.mxu0 %v1019
    %1892 = vmatpush1.bf16.msra.mxu0 %v1018
    %1893 = vmatprep.subr.bf16.mxu0 %v1023
    %1894 = vmatpush1.bf16.msra.mxu0 %v1022
    %1895 = vmatprep.subr.bf16.mxu0 %v1027
    %1896 = vmatpush1.bf16.msra.mxu0 %v1026
    %1897 = vmatprep.subr.bf16.mxu0 %v1031
    %1898 = vmatpush1.bf16.msra.mxu0 %v1030
    %1899 = vmatprep.subr.bf16.mxu0 %v1035
    %1900 = vmatpush1.bf16.msra.mxu0 %v1034
    %1901 = vmatprep.subr.bf16.mxu0 %v1039
    %1902 = vmatpush1.bf16.msra.mxu0 %v1038
    %1903 = vmatprep.subr.bf16.mxu0 %v1043
    %1904 = vmatpush1.bf16.msra.mxu0 %v1042
    %1905 = vmatprep.subr.bf16.mxu0 0
    %1906 = vmatpush1.bf16.msra.mxu0 0
    %1907 = vmatprep.subr.bf16.mxu0 0
    %1908 = vmatpush1.bf16.msra.mxu0 0
    %1909 = vmatprep.subr.bf16.mxu0 0
    %1910 = vmatpush1.bf16.msra.mxu0 0
    %1911 = vmatprep.subr.bf16.mxu0 0
    %1912 = vmatpush1.bf16.msra.mxu0 0
    %1913 = vmatprep.subr.bf16.mxu0 0
    %1914 = vmatpush1.bf16.msra.mxu0 0
    %1915 = vmatprep.subr.bf16.mxu0 0
    %1916 = vmatpush1.bf16.msra.mxu0 0
    %1917 = vmatprep.subr.bf16.mxu0 0
    %1918 = vmatpush1.bf16.msra.mxu0 0
    %1919 = vmatprep.subr.bf16.mxu0 0
    %1920 = vmatpush1.bf16.msra.mxu0 0
    %1921 = vmatprep.mubr.bf16.mxu0 0
    %1922 = vmatmul.mubr.bf16.gmra.mrb[0].mxu0 %v1845
    %v1923 = vpop.f32.mrb[0].mxu0
    %v1924 = vadd.f32 0.0, %v1923
    %v1925 = vpop.f32.mrb[0].mxu0
    %v1926 = vadd.f32 0.0, %v1925
    %v1927 = vpop.f32.mrb[0].mxu0
    %v1928 = vadd.f32 0.0, %v1927
    %v1929 = vpop.f32.mrb[0].mxu0
    %v1930 = vadd.f32 0.0, %v1929
    %1931 = vdwg.mxu0
    %v1932 = vadd.f32 %v1837, %v1881
    %v1933 = vadd.f32 %v1838, %v1883
    %v1934 = vadd.f32 %v1839, %v1924
    %v1935 = vadd.f32 %v1840, %v1926
    %v1936 = vadd.f32 %v1841, %v1885
    %v1937 = vadd.f32 %v1842, %v1887
    %v1938 = vadd.f32 %v1843, %v1928
    %v1939 = vadd.f32 %v1844, %v1930
    %v1940 = vxor.u32 %v1932, 2147483648
    %v1941 = vxor.u32 %v1936, 2147483648
    %v1942 = vmul.f32 %v1940, 1.442695
    %v1943 = vpow.pop %v1942
    %v1944 = vmul.f32 %v1941, 1.442695
    %v1945 = vpow.pop %v1944
    %v1946 = vadd.f32 %v1943, 1.0
    %v1947 = vadd.f32 %v1945, 1.0
    %v1948 = vrcp.pop %v1946
    %v1949 = vmul.f32 1.0, %v1948
    %v1950 = vrcp.pop %v1947
    %v1951 = vmul.f32 1.0, %v1950
    %v1952 = vxor.u32 %v1933, 2147483648
    %v1953 = vxor.u32 %v1937, 2147483648
    %v1954 = vmul.f32 %v1952, 1.442695
    %v1955 = vpow.pop %v1954
    %v1956 = vmul.f32 %v1953, 1.442695
    %v1957 = vpow.pop %v1956
    %v1958 = vadd.f32 %v1955, 1.0
    %v1959 = vadd.f32 %v1957, 1.0
    %v1960 = vrcp.pop %v1958
    %v1961 = vmul.f32 1.0, %v1960
    %v1962 = vrcp.pop %v1959
    %v1963 = vmul.f32 1.0, %v1962
    %v1964 = vtanh.pop %v1934
    %v1965 = vtanh.pop %v1938
    %v1966 = vxor.u32 %v1935, 2147483648
    %v1967 = vxor.u32 %v1939, 2147483648
    %v1968 = vmul.f32 %v1966, 1.442695
    %v1969 = vpow.pop %v1968
    %v1970 = vmul.f32 %v1967, 1.442695
    %v1971 = vpow.pop %v1970
    %v1972 = vadd.f32 %v1969, 1.0
    %v1973 = vadd.f32 %v1971, 1.0
    %v1974 = vrcp.pop %v1972
    %v1975 = vmul.f32 1.0, %v1974
    %v1976 = vrcp.pop %v1973
    %v1977 = vmul.f32 1.0, %v1976
    %v1978 = vmul.f32 %v1961, %v1828
    %v1979 = vmul.f32 %v1963, %v1829
    %v1980 = vmul.f32 %v1949, %v1964
    %v1981 = vmul.f32 %v1951, %v1965
    %v1982 = vadd.f32 %v1978, %v1980
    %v1983 = vadd.f32 %v1979, %v1981
    %v1984 = vtanh.pop %v1982
    %v1985 = vtanh.pop %v1983
    %v1986 = vmul.f32 %v1975, %v1984
    %v1987 = vmul.f32 %v1977, %v1985
    %s1988 = smul.u32 12, 4
    %s1989 = smul.addr %s1988, 8
    %s1990 = scalar_lea.vmem [#allocation2], %s1989
    %v1991 = vld [vmem:[%s1990] sm:$0xff]
    %v1992 = vld [vmem:[%s1990 + $0x8] sm:$0xff]
    %v1993 = vld [vmem:[%s1990 + $0x10] sm:$0xff]
    %v1994 = vld [vmem:[%s1990 + $0x18] sm:$0xff]
    %v1995 = vld [vmem:[%s1990 + $0x20] sm:$0xff]
    %v1996 = vld [vmem:[%s1990 + $0x28] sm:$0xff]
    %v1997 = vld [vmem:[%s1990 + $0x30] sm:$0xff]
    %v1998 = vld [vmem:[%s1990 + $0x38] sm:$0xff]
    %v1999 = vpack.c.bf16 %v1987, %v1986
    %2000 = vmatprep.subr.bf16.mxu0 %v1013
    %2001 = vmatpush1.bf16.msra.mxu0 %v1012
    %2002 = vmatprep.subr.bf16.mxu0 %v1017
    %2003 = vmatpush1.bf16.msra.mxu0 %v1016
    %2004 = vmatprep.subr.bf16.mxu0 %v1021
    %2005 = vmatpush1.bf16.msra.mxu0 %v1020
    %2006 = vmatprep.subr.bf16.mxu0 %v1025
    %2007 = vmatpush1.bf16.msra.mxu0 %v1024
    %2008 = vmatprep.subr.bf16.mxu0 %v1029
    %2009 = vmatpush1.bf16.msra.mxu0 %v1028
    %2010 = vmatprep.subr.bf16.mxu0 %v1033
    %2011 = vmatpush1.bf16.msra.mxu0 %v1032
    %2012 = vmatprep.subr.bf16.mxu0 %v1037
    %2013 = vmatpush1.bf16.msra.mxu0 %v1036
    %2014 = vmatprep.subr.bf16.mxu0 %v1041
    %2015 = vmatpush1.bf16.msra.mxu0 %v1040
    %2016 = vmatprep.subr.bf16.mxu0 0
    %2017 = vmatpush1.bf16.msra.mxu0 0
    %2018 = vmatprep.subr.bf16.mxu0 0
    %2019 = vmatpush1.bf16.msra.mxu0 0
    %2020 = vmatprep.subr.bf16.mxu0 0
    %2021 = vmatpush1.bf16.msra.mxu0 0
    %2022 = vmatprep.subr.bf16.mxu0 0
    %2023 = vmatpush1.bf16.msra.mxu0 0
    %2024 = vmatprep.subr.bf16.mxu0 0
    %2025 = vmatpush1.bf16.msra.mxu0 0
    %2026 = vmatprep.subr.bf16.mxu0 0
    %2027 = vmatpush1.bf16.msra.mxu0 0
    %2028 = vmatprep.subr.bf16.mxu0 0
    %2029 = vmatpush1.bf16.msra.mxu0 0
    %2030 = vmatprep.subr.bf16.mxu0 0
    %2031 = vmatpush1.bf16.msra.mxu0 0
    %2032 = vmatprep.mubr.bf16.mxu0 0
    %2033 = vmatmul.mubr.bf16.gmra.mrb[0].mxu0 %v1999
    %v2034 = vpop.f32.mrb[0].mxu0
    %v2035 = vadd.f32 0.0, %v2034
    %v2036 = vpop.f32.mrb[0].mxu0
    %v2037 = vadd.f32 0.0, %v2036
    %v2038 = vpop.f32.mrb[0].mxu0
    %v2039 = vadd.f32 0.0, %v2038
    %v2040 = vpop.f32.mrb[0].mxu0
    %v2041 = vadd.f32 0.0, %v2040
    %2042 = vdwg.mxu0
    %2043 = vmatprep.subr.bf16.mxu0 %v1015
    %2044 = vmatpush1.bf16.msra.mxu0 %v1014
    %2045 = vmatprep.subr.bf16.mxu0 %v1019
    %2046 = vmatpush1.bf16.msra.mxu0 %v1018
    %2047 = vmatprep.subr.bf16.mxu0 %v1023
    %2048 = vmatpush1.bf16.msra.mxu0 %v1022
    %2049 = vmatprep.subr.bf16.mxu0 %v1027
    %2050 = vmatpush1.bf16.msra.mxu0 %v1026
    %2051 = vmatprep.subr.bf16.mxu0 %v1031
    %2052 = vmatpush1.bf16.msra.mxu0 %v1030
    %2053 = vmatprep.subr.bf16.mxu0 %v1035
    %2054 = vmatpush1.bf16.msra.mxu0 %v1034
    %2055 = vmatprep.subr.bf16.mxu0 %v1039
    %2056 = vmatpush1.bf16.msra.mxu0 %v1038
    %2057 = vmatprep.subr.bf16.mxu0 %v1043
    %2058 = vmatpush1.bf16.msra.mxu0 %v1042
    %2059 = vmatprep.subr.bf16.mxu0 0
    %2060 = vmatpush1.bf16.msra.mxu0 0
    %2061 = vmatprep.subr.bf16.mxu0 0
    %2062 = vmatpush1.bf16.msra.mxu0 0
    %2063 = vmatprep.subr.bf16.mxu0 0
    %2064 = vmatpush1.bf16.msra.mxu0 0
    %2065 = vmatprep.subr.bf16.mxu0 0
    %2066 = vmatpush1.bf16.msra.mxu0 0
    %2067 = vmatprep.subr.bf16.mxu0 0
    %2068 = vmatpush1.bf16.msra.mxu0 0
    %2069 = vmatprep.subr.bf16.mxu0 0
    %2070 = vmatpush1.bf16.msra.mxu0 0
    %2071 = vmatprep.subr.bf16.mxu0 0
    %2072 = vmatpush1.bf16.msra.mxu0 0
    %2073 = vmatprep.subr.bf16.mxu0 0
    %2074 = vmatpush1.bf16.msra.mxu0 0
    %2075 = vmatprep.mubr.bf16.mxu0 0
    %2076 = vmatmul.mubr.bf16.gmra.mrb[0].mxu0 %v1999
    %v2077 = vpop.f32.mrb[0].mxu0
    %v2078 = vadd.f32 0.0, %v2077
    %v2079 = vpop.f32.mrb[0].mxu0
    %v2080 = vadd.f32 0.0, %v2079
    %v2081 = vpop.f32.mrb[0].mxu0
    %v2082 = vadd.f32 0.0, %v2081
    %v2083 = vpop.f32.mrb[0].mxu0
    %v2084 = vadd.f32 0.0, %v2083
    %2085 = vdwg.mxu0
    %v2086 = vadd.f32 %v1991, %v2035
    %v2087 = vadd.f32 %v1992, %v2037
    %v2088 = vadd.f32 %v1993, %v2078
    %v2089 = vadd.f32 %v1994, %v2080
    %v2090 = vadd.f32 %v1995, %v2039
    %v2091 = vadd.f32 %v1996, %v2041
    %v2092 = vadd.f32 %v1997, %v2082
    %v2093 = vadd.f32 %v1998, %v2084
    %v2094 = vxor.u32 %v2086, 2147483648
    %v2095 = vxor.u32 %v2090, 2147483648
    %v2096 = vmul.f32 %v2094, 1.442695
    %v2097 = vpow.pop %v2096
    %v2098 = vmul.f32 %v2095, 1.442695
    %v2099 = vpow.pop %v2098
    %v2100 = vadd.f32 %v2097, 1.0
    %v2101 = vadd.f32 %v2099, 1.0
    %v2102 = vrcp.pop %v2100
    %v2103 = vmul.f32 1.0, %v2102
    %v2104 = vrcp.pop %v2101
    %v2105 = vmul.f32 1.0, %v2104
    %v2106 = vxor.u32 %v2087, 2147483648
    %v2107 = vxor.u32 %v2091, 2147483648
    %v2108 = vmul.f32 %v2106, 1.442695
    %v2109 = vpow.pop %v2108
    %v2110 = vmul.f32 %v2107, 1.442695
    %v2111 = vpow.pop %v2110
    %v2112 = vadd.f32 %v2109, 1.0
    %v2113 = vadd.f32 %v2111, 1.0
    %v2114 = vrcp.pop %v2112
    %v2115 = vmul.f32 1.0, %v2114
    %v2116 = vrcp.pop %v2113
    %v2117 = vmul.f32 1.0, %v2116
    %v2118 = vtanh.pop %v2088
    %v2119 = vtanh.pop %v2092
    %v2120 = vxor.u32 %v2089, 2147483648
    %v2121 = vxor.u32 %v2093, 2147483648
    %v2122 = vmul.f32 %v2120, 1.442695
    %v2123 = vpow.pop %v2122
    %v2124 = vmul.f32 %v2121, 1.442695
    %v2125 = vpow.pop %v2124
    %v2126 = vadd.f32 %v2123, 1.0
    %v2127 = vadd.f32 %v2125, 1.0
    %v2128 = vrcp.pop %v2126
    %v2129 = vmul.f32 1.0, %v2128
    %v2130 = vrcp.pop %v2127
    %v2131 = vmul.f32 1.0, %v2130
    %v2132 = vmul.f32 %v2115, %v1982
    %v2133 = vmul.f32 %v2117, %v1983
    %v2134 = vmul.f32 %v2103, %v2118
    %v2135 = vmul.f32 %v2105, %v2119
    %v2136 = vadd.f32 %v2132, %v2134
    %v2137 = vadd.f32 %v2133, %v2135
    %v2138 = vtanh.pop %v2136
    %v2139 = vtanh.pop %v2137
    %v2140 = vmul.f32 %v2129, %v2138
    %v2141 = vmul.f32 %v2131, %v2139
    %s2142 = smul.u32 14, 4
    %s2143 = smul.addr %s2142, 8
    %s2144 = scalar_lea.vmem [#allocation2], %s2143
    %v2145 = vld [vmem:[%s2144] sm:$0xff]
    %v2146 = vld [vmem:[%s2144 + $0x8] sm:$0xff]
    %v2147 = vld [vmem:[%s2144 + $0x10] sm:$0xff]
    %v2148 = vld [vmem:[%s2144 + $0x18] sm:$0xff]
    %v2149 = vld [vmem:[%s2144 + $0x20] sm:$0xff]
    %v2150 = vld [vmem:[%s2144 + $0x28] sm:$0xff]
    %v2151 = vld [vmem:[%s2144 + $0x30] sm:$0xff]
    %v2152 = vld [vmem:[%s2144 + $0x38] sm:$0xff]
    %v2153 = vpack.c.bf16 %v2141, %v2140
    %2154 = vmatprep.subr.bf16.mxu0 %v1013
    %2155 = vmatpush1.bf16.msra.mxu0 %v1012
    %2156 = vmatprep.subr.bf16.mxu0 %v1017
    %2157 = vmatpush1.bf16.msra.mxu0 %v1016
    %2158 = vmatprep.subr.bf16.mxu0 %v1021
    %2159 = vmatpush1.bf16.msra.mxu0 %v1020
    %2160 = vmatprep.subr.bf16.mxu0 %v1025
    %2161 = vmatpush1.bf16.msra.mxu0 %v1024
    %2162 = vmatprep.subr.bf16.mxu0 %v1029
    %2163 = vmatpush1.bf16.msra.mxu0 %v1028
    %2164 = vmatprep.subr.bf16.mxu0 %v1033
    %2165 = vmatpush1.bf16.msra.mxu0 %v1032
    %2166 = vmatprep.subr.bf16.mxu0 %v1037
    %2167 = vmatpush1.bf16.msra.mxu0 %v1036
    %2168 = vmatprep.subr.bf16.mxu0 %v1041
    %2169 = vmatpush1.bf16.msra.mxu0 %v1040
    %2170 = vmatprep.subr.bf16.mxu0 0
    %2171 = vmatpush1.bf16.msra.mxu0 0
    %2172 = vmatprep.subr.bf16.mxu0 0
    %2173 = vmatpush1.bf16.msra.mxu0 0
    %2174 = vmatprep.subr.bf16.mxu0 0
    %2175 = vmatpush1.bf16.msra.mxu0 0
    %2176 = vmatprep.subr.bf16.mxu0 0
    %2177 = vmatpush1.bf16.msra.mxu0 0
    %2178 = vmatprep.subr.bf16.mxu0 0
    %2179 = vmatpush1.bf16.msra.mxu0 0
    %2180 = vmatprep.subr.bf16.mxu0 0
    %2181 = vmatpush1.bf16.msra.mxu0 0
    %2182 = vmatprep.subr.bf16.mxu0 0
    %2183 = vmatpush1.bf16.msra.mxu0 0
    %2184 = vmatprep.subr.bf16.mxu0 0
    %2185 = vmatpush1.bf16.msra.mxu0 0
    %2186 = vmatprep.mubr.bf16.mxu0 0
    %2187 = vmatmul.mubr.bf16.gmra.mrb[0].mxu0 %v2153
    %v2188 = vpop.f32.mrb[0].mxu0
    %v2189 = vadd.f32 0.0, %v2188
    %v2190 = vpop.f32.mrb[0].mxu0
    %v2191 = vadd.f32 0.0, %v2190
    %v2192 = vpop.f32.mrb[0].mxu0
    %v2193 = vadd.f32 0.0, %v2192
    %v2194 = vpop.f32.mrb[0].mxu0
    %v2195 = vadd.f32 0.0, %v2194
    %2196 = vdwg.mxu0
    %2197 = vmatprep.subr.bf16.mxu0 %v1015
    %2198 = vmatpush1.bf16.msra.mxu0 %v1014
    %2199 = vmatprep.subr.bf16.mxu0 %v1019
    %2200 = vmatpush1.bf16.msra.mxu0 %v1018
    %2201 = vmatprep.subr.bf16.mxu0 %v1023
    %2202 = vmatpush1.bf16.msra.mxu0 %v1022
    %2203 = vmatprep.subr.bf16.mxu0 %v1027
    %2204 = vmatpush1.bf16.msra.mxu0 %v1026
    %2205 = vmatprep.subr.bf16.mxu0 %v1031
    %2206 = vmatpush1.bf16.msra.mxu0 %v1030
    %2207 = vmatprep.subr.bf16.mxu0 %v1035
    %2208 = vmatpush1.bf16.msra.mxu0 %v1034
    %2209 = vmatprep.subr.bf16.mxu0 %v1039
    %2210 = vmatpush1.bf16.msra.mxu0 %v1038
    %2211 = vmatprep.subr.bf16.mxu0 %v1043
    %2212 = vmatpush1.bf16.msra.mxu0 %v1042
    %2213 = vmatprep.subr.bf16.mxu0 0
    %2214 = vmatpush1.bf16.msra.mxu0 0
    %2215 = vmatprep.subr.bf16.mxu0 0
    %2216 = vmatpush1.bf16.msra.mxu0 0
    %2217 = vmatprep.subr.bf16.mxu0 0
    %2218 = vmatpush1.bf16.msra.mxu0 0
    %2219 = vmatprep.subr.bf16.mxu0 0
    %2220 = vmatpush1.bf16.msra.mxu0 0
    %2221 = vmatprep.subr.bf16.mxu0 0
    %2222 = vmatpush1.bf16.msra.mxu0 0
    %2223 = vmatprep.subr.bf16.mxu0 0
    %2224 = vmatpush1.bf16.msra.mxu0 0
    %2225 = vmatprep.subr.bf16.mxu0 0
    %2226 = vmatpush1.bf16.msra.mxu0 0
    %2227 = vmatprep.subr.bf16.mxu0 0
    %2228 = vmatpush1.bf16.msra.mxu0 0
    %2229 = vmatprep.mubr.bf16.mxu0 0
    %2230 = vmatmul.mubr.bf16.gmra.mrb[0].mxu0 %v2153
    %v2231 = vpop.f32.mrb[0].mxu0
    %v2232 = vadd.f32 0.0, %v2231
    %v2233 = vpop.f32.mrb[0].mxu0
    %v2234 = vadd.f32 0.0, %v2233
    %v2235 = vpop.f32.mrb[0].mxu0
    %v2236 = vadd.f32 0.0, %v2235
    %v2237 = vpop.f32.mrb[0].mxu0
    %v2238 = vadd.f32 0.0, %v2237
    %2239 = vdwg.mxu0
    %v2240 = vadd.f32 %v2145, %v2189
    %v2241 = vadd.f32 %v2146, %v2191
    %v2242 = vadd.f32 %v2147, %v2232
    %v2243 = vadd.f32 %v2148, %v2234
    %v2244 = vadd.f32 %v2149, %v2193
    %v2245 = vadd.f32 %v2150, %v2195
    %v2246 = vadd.f32 %v2151, %v2236
    %v2247 = vadd.f32 %v2152, %v2238
    %v2248 = vxor.u32 %v2240, 2147483648
    %v2249 = vxor.u32 %v2244, 2147483648
    %v2250 = vmul.f32 %v2248, 1.442695
    %v2251 = vpow.pop %v2250
    %v2252 = vmul.f32 %v2249, 1.442695
    %v2253 = vpow.pop %v2252
    %v2254 = vadd.f32 %v2251, 1.0
    %v2255 = vadd.f32 %v2253, 1.0
    %v2256 = vrcp.pop %v2254
    %v2257 = vmul.f32 1.0, %v2256
    %v2258 = vrcp.pop %v2255
    %v2259 = vmul.f32 1.0, %v2258
    %v2260 = vxor.u32 %v2241, 2147483648
    %v2261 = vxor.u32 %v2245, 2147483648
    %v2262 = vmul.f32 %v2260, 1.442695
    %v2263 = vpow.pop %v2262
    %v2264 = vmul.f32 %v2261, 1.442695
    %v2265 = vpow.pop %v2264
    %v2266 = vadd.f32 %v2263, 1.0
    %v2267 = vadd.f32 %v2265, 1.0
    %v2268 = vrcp.pop %v2266
    %v2269 = vmul.f32 1.0, %v2268
    %v2270 = vrcp.pop %v2267
    %v2271 = vmul.f32 1.0, %v2270
    %v2272 = vtanh.pop %v2242
    %v2273 = vtanh.pop %v2246
    %v2274 = vxor.u32 %v2243, 2147483648
    %v2275 = vxor.u32 %v2247, 2147483648
    %v2276 = vmul.f32 %v2274, 1.442695
    %v2277 = vpow.pop %v2276
    %v2278 = vmul.f32 %v2275, 1.442695
    %v2279 = vpow.pop %v2278
    %v2280 = vadd.f32 %v2277, 1.0
    %v2281 = vadd.f32 %v2279, 1.0
    %v2282 = vrcp.pop %v2280
    %v2283 = vmul.f32 1.0, %v2282
    %v2284 = vrcp.pop %v2281
    %v2285 = vmul.f32 1.0, %v2284
    %v2286 = vmul.f32 %v2269, %v2136
    %v2287 = vmul.f32 %v2271, %v2137
    %v2288 = vmul.f32 %v2257, %v2272
    %v2289 = vmul.f32 %v2259, %v2273
    %v2290 = vadd.f32 %v2286, %v2288
    %v2291 = vadd.f32 %v2287, %v2289
    %v2292 = vtanh.pop %v2290
    %v2293 = vtanh.pop %v2291
    %v2294 = vmul.f32 %v2283, %v2292
    %v2295 = vmul.f32 %v2285, %v2293
    %2296 = vst [vmem:[%s6] sm:$0xff] %v2294
    %2297 = vst [vmem:[%s6 + $0x8] sm:$0xff] %v2295
    %2298 = vst [vmem:[%s7] sm:$0xff] %v2290
    %2299 = vst [vmem:[%s7 + $0x8] sm:$0xff] %v2291
    %v2300 = vld [vmem:[#allocation3] sm:$0xff]
    %v2301 = vld [vmem:[#allocation3 + $0x8] sm:$0xff]
    %v2302 = vld [vmem:[#allocation3 + $0x10] sm:$0xff]
    %v2303 = vld [vmem:[#allocation3 + $0x18] sm:$0xff]
    %v2304 = vld [vmem:[#allocation3 + $0x20] sm:$0xff]
    %v2305 = vld [vmem:[#allocation3 + $0x28] sm:$0xff]
    %v2306 = vld [vmem:[#allocation3 + $0x30] sm:$0xff]
    %v2307 = vld [vmem:[#allocation3 + $0x38] sm:$0xff]
    %v2308 = vld [vmem:[#allocation3 + $0x40] sm:$0xff]
    %v2309 = vld [vmem:[#allocation3 + $0x48] sm:$0xff]
    %v2310 = vld [vmem:[#allocation3 + $0x50] sm:$0xff]
    %v2311 = vld [vmem:[#allocation3 + $0x58] sm:$0xff]
    %v2312 = vld [vmem:[#allocation3 + $0x60] sm:$0xff]
    %v2313 = vld [vmem:[#allocation3 + $0x68] sm:$0xff]
    %v2314 = vld [vmem:[#allocation3 + $0x70] sm:$0xff]
    %v2315 = vld [vmem:[#allocation3 + $0x78] sm:$0xff]
    %v2316 = vrot.slane %v2300, 4
    %v2317 = vadd.f32 %v2300, %v2316
    %v2318 = vrot.slane %v2317, 2
    %v2319 = vadd.f32 %v2317, %v2318
    %v2320 = vrot.slane %v2319, 1
    %v2321 = vadd.f32 %v2319, %v2320
    %v2322 = vrot.slane %v2301, 4
    %v2323 = vadd.f32 %v2301, %v2322
    %v2324 = vrot.slane %v2323, 2
    %v2325 = vadd.f32 %v2323, %v2324
    %v2326 = vrot.slane %v2325, 1
    %v2327 = vadd.f32 %v2325, %v2326
    %v2328 = vrot.slane %v2302, 4
    %v2329 = vadd.f32 %v2302, %v2328
    %v2330 = vrot.slane %v2329, 2
    %v2331 = vadd.f32 %v2329, %v2330
    %v2332 = vrot.slane %v2331, 1
    %v2333 = vadd.f32 %v2331, %v2332
    %v2334 = vrot.slane %v2303, 4
    %v2335 = vadd.f32 %v2303, %v2334
    %v2336 = vrot.slane %v2335, 2
    %v2337 = vadd.f32 %v2335, %v2336
    %v2338 = vrot.slane %v2337, 1
    %v2339 = vadd.f32 %v2337, %v2338
    %v2340 = vrot.slane %v2304, 4
    %v2341 = vadd.f32 %v2304, %v2340
    %v2342 = vrot.slane %v2341, 2
    %v2343 = vadd.f32 %v2341, %v2342
    %v2344 = vrot.slane %v2343, 1
    %v2345 = vadd.f32 %v2343, %v2344
    %v2346 = vrot.slane %v2305, 4
    %v2347 = vadd.f32 %v2305, %v2346
    %v2348 = vrot.slane %v2347, 2
    %v2349 = vadd.f32 %v2347, %v2348
    %v2350 = vrot.slane %v2349, 1
    %v2351 = vadd.f32 %v2349, %v2350
    %v2352 = vrot.slane %v2306, 4
    %v2353 = vadd.f32 %v2306, %v2352
    %v2354 = vrot.slane %v2353, 2
    %v2355 = vadd.f32 %v2353, %v2354
    %v2356 = vrot.slane %v2355, 1
    %v2357 = vadd.f32 %v2355, %v2356
    %v2358 = vrot.slane %v2307, 4
    %v2359 = vadd.f32 %v2307, %v2358
    %v2360 = vrot.slane %v2359, 2
    %v2361 = vadd.f32 %v2359, %v2360
    %v2362 = vrot.slane %v2361, 1
    %v2363 = vadd.f32 %v2361, %v2362
    %v2364 = vrot.slane %v2308, 4
    %v2365 = vadd.f32 %v2308, %v2364
    %v2366 = vrot.slane %v2365, 2
    %v2367 = vadd.f32 %v2365, %v2366
    %v2368 = vrot.slane %v2367, 1
    %v2369 = vadd.f32 %v2367, %v2368
    %v2370 = vrot.slane %v2309, 4
    %v2371 = vadd.f32 %v2309, %v2370
    %v2372 = vrot.slane %v2371, 2
    %v2373 = vadd.f32 %v2371, %v2372
    %v2374 = vrot.slane %v2373, 1
    %v2375 = vadd.f32 %v2373, %v2374
    %v2376 = vrot.slane %v2310, 4
    %v2377 = vadd.f32 %v2310, %v2376
    %v2378 = vrot.slane %v2377, 2
    %v2379 = vadd.f32 %v2377, %v2378
    %v2380 = vrot.slane %v2379, 1
    %v2381 = vadd.f32 %v2379, %v2380
    %v2382 = vrot.slane %v2311, 4
    %v2383 = vadd.f32 %v2311, %v2382
    %v2384 = vrot.slane %v2383, 2
    %v2385 = vadd.f32 %v2383, %v2384
    %v2386 = vrot.slane %v2385, 1
    %v2387 = vadd.f32 %v2385, %v2386
    %v2388 = vrot.slane %v2312, 4
    %v2389 = vadd.f32 %v2312, %v2388
    %v2390 = vrot.slane %v2389, 2
    %v2391 = vadd.f32 %v2389, %v2390
    %v2392 = vrot.slane %v2391, 1
    %v2393 = vadd.f32 %v2391, %v2392
    %v2394 = vrot.slane %v2313, 4
    %v2395 = vadd.f32 %v2313, %v2394
    %v2396 = vrot.slane %v2395, 2
    %v2397 = vadd.f32 %v2395, %v2396
    %v2398 = vrot.slane %v2397, 1
    %v2399 = vadd.f32 %v2397, %v2398
    %v2400 = vrot.slane %v2314, 4
    %v2401 = vadd.f32 %v2314, %v2400
    %v2402 = vrot.slane %v2401, 2
    %v2403 = vadd.f32 %v2401, %v2402
    %v2404 = vrot.slane %v2403, 1
    %v2405 = vadd.f32 %v2403, %v2404
    %v2406 = vrot.slane %v2315, 4
    %v2407 = vadd.f32 %v2315, %v2406
    %v2408 = vrot.slane %v2407, 2
    %v2409 = vadd.f32 %v2407, %v2408
    %v2410 = vrot.slane %v2409, 1
    %v2411 = vadd.f32 %v2409, %v2410
    %v2412 = vrcp.pop 8.0
    %v2413 = vmul.f32 %v2321, %v2412
    %v2414 = vmul.f32 %v2327, %v2412
    %v2415 = vmul.f32 %v2333, %v2412
    %v2416 = vmul.f32 %v2339, %v2412
    %v2417 = vmul.f32 %v2345, %v2412
    %v2418 = vmul.f32 %v2351, %v2412
    %v2419 = vmul.f32 %v2357, %v2412
    %v2420 = vmul.f32 %v2363, %v2412
    %v2421 = vmul.f32 %v2369, %v2412
    %v2422 = vmul.f32 %v2375, %v2412
    %v2423 = vmul.f32 %v2381, %v2412
    %v2424 = vmul.f32 %v2387, %v2412
    %v2425 = vmul.f32 %v2393, %v2412
    %v2426 = vmul.f32 %v2399, %v2412
    %v2427 = vmul.f32 %v2405, %v2412
    %v2428 = vmul.f32 %v2411, %v2412
    %vm2445 = vcmask 1041409
    %v2446 = vsel %vm2445, %v2414, %v2413
    %vm2447 = vcmask 1042434
    %v2448 = vsel %vm2447, %v2415, %v2446
    %vm2449 = vcmask 1043459
    %v2450 = vsel %vm2449, %v2416, %v2448
    %vm2451 = vcmask 1044484
    %v2452 = vsel %vm2451, %v2417, %v2450
    %vm2453 = vcmask 1045509
    %v2454 = vsel %vm2453, %v2418, %v2452
    %vm2455 = vcmask 1046534
    %v2456 = vsel %vm2455, %v2419, %v2454
    %vm2457 = vcmask 1047559
    %v2458 = vsel %vm2457, %v2420, %v2456
    %v2459 = vsel %vm2445, %v2422, %v2421
    %v2460 = vsel %vm2447, %v2423, %v2459
    %v2461 = vsel %vm2449, %v2424, %v2460
    %v2462 = vsel %vm2451, %v2425, %v2461
    %v2463 = vsel %vm2453, %v2426, %v2462
    %v2464 = vsel %vm2455, %v2427, %v2463
    %v2465 = vsel %vm2457, %v2428, %v2464
    %2468 = vst [vmem:[%s8] sm:$0xff] %v2458
    %2469 = vst [vmem:[%s8 + $0x8] sm:$0xff] %v2465
    // Predicated region
    $region38: #{seq2seq_forward.4} parent=1 // pred_check
      _
    $region39: #{seq2seq_forward.4} parent=1 // pred_check_branch
      %2471 = sbr.rel (0) target = $region41
    $region40: #{seq2seq_forward.4} parent=1 // pred_region
      _
    $region41: #{seq2seq_forward.4} parent=1 // pred_fallthru
      _
    // Predicated region
    $region42: #{seq2seq_forward.4} parent=1 // pred_check
      _
    $region43: #{seq2seq_forward.4} parent=1 // pred_check_branch
      %2473 = sbr.rel (0) target = $region45
    $region44: #{seq2seq_forward.4} parent=1 // pred_region
      _
    $region45: #{seq2seq_forward.4} parent=1 // pred_fallthru
      _
    // Predicated region
    $region46: #{seq2seq_forward.4} parent=1 // pred_check
      _
    $region47: #{seq2seq_forward.4} parent=1 // pred_check_branch
      %2475 = sbr.rel (0) target = $region49
    $region48: #{seq2seq_forward.4} parent=1 // pred_region
      _
    $region49: #{seq2seq_forward.4} parent=1 // pred_fallthru
      _
    // Predicated region
    $region50: #{seq2seq_forward.4} parent=1 // pred_check
      _
    $region51: #{seq2seq_forward.4} parent=1 // pred_check_branch
      %2477 = sbr.rel (0) target = $region53
    $region52: #{seq2seq_forward.4} parent=1 // pred_region
      _
    $region53: #{seq2seq_forward.4} parent=1 // pred_fallthru
      _
    // Predicated region
    $region54: #{seq2seq_forward.4} parent=1 // pred_check
      _
    $region55: #{seq2seq_forward.4} parent=1 // pred_check_branch
      %2479 = sbr.rel (0) target = $region57
    $region56: #{seq2seq_forward.4} parent=1 // pred_region
      _
    $region57: #{seq2seq_forward.4} parent=1 // pred_fallthru
      _
    // Predicated region
    $region58: #{seq2seq_forward.4} parent=1 // pred_check
      _
    $region59: #{seq2seq_forward.4} parent=1 // pred_check_branch
      %2481 = sbr.rel (0) target = $region61
    $region60: #{seq2seq_forward.4} parent=1 // pred_region
      _
    $region61: #{seq2seq_forward.4} parent=1 // pred_fallthru
      _
    %2482 = vsyncpa [#allocation4], 1
    %2483 = vsyncpa [#allocation6], 1

// kernel: seq2seq_forward.6
$region0: #{seq2seq_forward.6}
  #allocation0 [shape = 'u32[]', space=smem, size = 0x4, offset = 0x4, fixed_abs, tag = 'smem constant byte address 0x4 - core index']
  #allocation1 [shape = 'u32[144,128]{1,0:T(1,128)}', space=vmem, size = 0x12000, scoped, tag = 'internal scratch']
  #allocation2 [shape = 'bf16[128,128]{1,0:T(16,128)(2,1)}', space=vmem, size = 0x8000, scoped, tag = 'scratch operand']
  #allocation3 [shape = 'f32[128,1]{1,0:T(8,128)}', space=vmem, size = 0x10000, scoped, tag = 'scratch operand']
  #allocation4 [shape = 'f32[128,1]{1,0:T(8,128)}', space=vmem, size = 0x10000, scoped, tag = 'scratch operand']
  #allocation5 [shape = 'f32[128,1]{1,0:T(8,128)}', space=vmem, size = 0x10000, scoped, tag = 'scratch operand']
  %s0 = inlined_call_operand.vmem [shape: f32[128,128], index: 0, kind: input, shape index: {}]
  %s1 = inlined_call_operand.vmem [shape: bf16[128,2048], index: 1, kind: input, shape index: {}]
  %s2 = inlined_call_operand.vmem [shape: f32[1,2048], index: 2, kind: input, shape index: {}]
  %s3 = inlined_call_operand.vmem [shape: s32[128,1], index: 3, kind: input, shape index: {}]
  %s4 = inlined_call_operand.hbm [shape: f32[128,2048], index: 4, kind: output, shape index: {0}]
  %s5 = inlined_call_operand.vmem [shape: f32[128,1], index: 5, kind: output, shape index: {1}]
  %6 = xla_tuple %s4, %s5
  %s7 = sld [smem:[#allocation0]]
  $region88: #{seq2seq_forward.6} parent=0
    _
  %s9 = ssub.s32 1, %s7
  %s10 = scalar_select 0, %s9, %s7
  $region1: #{seq2seq_forward.6} parent=0
    #allocation6 [shape = 'u8[524288]{0}', space=vmem, size = 0x80000, scoped, tag = 'input window, operand 1']
    #allocation7 [shape = 'u8[1048576]{0}', space=vmem, size = 0x100000, scoped, tag = 'output window, operand 0']
    #allocation8 [shape = 's32[2]{0}', space=sflag, size = 0x8, scoped, tag = 'scoped memory for seq2seq_forward.6']
    %11 = vsyncpa [#allocation8], 0
    %s12 = scalar_lea.sflag [#allocation8], 1
    %13 = vsyncpa %s12, 0
    loop: start=0, step=1, limit=4
    $region2: #{seq2seq_forward.6} parent=1 // loop_pre_header
      _
    $region3: #{seq2seq_forward.6} parent=1 // loop_header
      %s15 = sphi 0, %s19
      %p16 = scmp.ge.s32.totalorder %s15, 4
      %s22 = sphi 0, %s34
      %s23 = sphi 0, %s30
      %s24 = sphi 0, %s22
      %s25 = sphi 0, %s23
      %s26 = sphi 0, %s24
      %s27 = sphi 0, %s25
      %s37 = sphi 0, %s39
      %s40 = sphi 0, %s37
      %s41 = sphi 0, %s40
      %s57 = sphi 0, %s41
      %s63 = sphi 0, %s65
      %s66 = sphi 0, %s63
      %s67 = sphi 0, %s66
      %s83 = sphi 0, %s67
      %s89 = sphi 0, %s91
      %s92 = sphi 0, %s89
      %s93 = sphi 0, %s92
      %s109 = sphi 0, %s93
      %s115 = sphi 0, %s117
      %s118 = sphi 0, %s115
      %s119 = sphi 0, %s118
      %s135 = sphi 0, %s119
      %s143 = sphi 0, %s145
      %s146 = sphi 0, %s143
      %s147 = sphi 0, %s146
      %s163 = sphi 0, %s147
      %s169 = sphi 0, %s171
      %s172 = sphi 0, %s169
      %s173 = sphi 0, %s172
      %s189 = sphi 0, %s173
    $region4: #{seq2seq_forward.6} parent=1 // loop_header_branch
      %18 = sbr.rel (%p16) target = $region8
    $region5: #{seq2seq_forward.6} parent=1 // loop_body
      %s20 = ssub.s32 %s15, 1
      %s21 = ssub.s32 %s15, 2
      %s28 = sadd.s32 1, %s23
      %p29 = scmp.ge.s32.totalorder %s28, 2
      %s30 = scalar_select %p29, 0, %s28
      %s31 = sadd.s32 1, %s22
      %s32 = scalar_select %p29, %s31, %s22
      %p33 = scmp.ge.s32.totalorder %s32, 1
      %s34 = scalar_select %p33, 0, %s32
      %s35 = ssub.s32 %s22, %s34
      %p36 = scmp.eq.s32.totalorder %s35, 0
      %s38 = sadd.s32 %s37, 1
      %s39 = scalar_select %p36, %s37, %s38
      %p42 = pneg %p36
      %p43 = scmp.eq.s32.totalorder %s15, 1
      %p44 = por %p42, %p43
      %p45 = scmp.ne.s32.totalorder %s37, %s40
      %p46 = scmp.eq.s32.totalorder %s15, 0
      %p47 = por %p45, %p46
      %p48 = scmp.ne.s32.totalorder %s37, %s40
      %p49 = scmp.eq.s32.totalorder %s20, 1
      %p50 = por %p48, %p49
      %p51 = scmp.ne.s32.totalorder %s40, %s41
      %p52 = scmp.eq.s32.totalorder %s20, 0
      %p53 = por %p51, %p52
      %p54 = scmp.ne.s32.totalorder %s40, %s41
      %p55 = scmp.eq.s32.totalorder %s21, 1
      %p56 = por %p54, %p55
      %p58 = scmp.ne.s32.totalorder %s41, %s57
      %p59 = scmp.eq.s32.totalorder %s21, 0
      %p60 = por %p58, %p59
      %s61 = ssub.s32 %s23, %s30
      %p62 = scmp.eq.s32.totalorder %s61, 0
      %s64 = sadd.s32 %s63, 1
      %s65 = scalar_select %p62, %s63, %s64
      %p68 = pneg %p62
      %p69 = scmp.eq.s32.totalorder %s15, 1
      %p70 = por %p68, %p69
      %p71 = scmp.ne.s32.totalorder %s63, %s66
      %p72 = scmp.eq.s32.totalorder %s15, 0
      %p73 = por %p71, %p72
      %p74 = scmp.ne.s32.totalorder %s63, %s66
      %p75 = scmp.eq.s32.totalorder %s20, 1
      %p76 = por %p74, %p75
      %p77 = scmp.ne.s32.totalorder %s66, %s67
      %p78 = scmp.eq.s32.totalorder %s20, 0
      %p79 = por %p77, %p78
      %p80 = scmp.ne.s32.totalorder %s66, %s67
      %p81 = scmp.eq.s32.totalorder %s21, 1
      %p82 = por %p80, %p81
      %p84 = scmp.ne.s32.totalorder %s67, %s83
      %p85 = scmp.eq.s32.totalorder %s21, 0
      %p86 = por %p84, %p85
      %s87 = ssub.s32 %s23, %s30
      %p88 = scmp.eq.s32.totalorder %s87, 0
      %s90 = sadd.s32 %s89, 1
      %s91 = scalar_select %p88, %s89, %s90
      %p94 = pneg %p88
      %p95 = scmp.eq.s32.totalorder %s15, 1
      %p96 = por %p94, %p95
      %p97 = scmp.ne.s32.totalorder %s89, %s92
      %p98 = scmp.eq.s32.totalorder %s15, 0
      %p99 = por %p97, %p98
      %p100 = scmp.ne.s32.totalorder %s89, %s92
      %p101 = scmp.eq.s32.totalorder %s20, 1
      %p102 = por %p100, %p101
      %p103 = scmp.ne.s32.totalorder %s92, %s93
      %p104 = scmp.eq.s32.totalorder %s20, 0
      %p105 = por %p103, %p104
      %p106 = scmp.ne.s32.totalorder %s92, %s93
      %p107 = scmp.eq.s32.totalorder %s21, 1
      %p108 = por %p106, %p107
      %p110 = scmp.ne.s32.totalorder %s93, %s109
      %p111 = scmp.eq.s32.totalorder %s21, 0
      %p112 = por %p110, %p111
      %s113 = ssub.s32 %s22, %s34
      %p114 = scmp.eq.s32.totalorder %s113, 0
      %s116 = sadd.s32 %s115, 1
      %s117 = scalar_select %p114, %s115, %s116
      %p120 = pneg %p114
      %p121 = scmp.eq.s32.totalorder %s15, 1
      %p122 = por %p120, %p121
      %p123 = scmp.ne.s32.totalorder %s115, %s118
      %p124 = scmp.eq.s32.totalorder %s15, 0
      %p125 = por %p123, %p124
      %p126 = scmp.ne.s32.totalorder %s115, %s118
      %p127 = scmp.eq.s32.totalorder %s20, 1
      %p128 = por %p126, %p127
      %p129 = scmp.ne.s32.totalorder %s118, %s119
      %p130 = scmp.eq.s32.totalorder %s20, 0
      %p131 = por %p129, %p130
      %p132 = scmp.ne.s32.totalorder %s118, %s119
      %p133 = scmp.eq.s32.totalorder %s21, 1
      %p134 = por %p132, %p133
      %p136 = scmp.ne.s32.totalorder %s119, %s135
      %p137 = scmp.eq.s32.totalorder %s21, 0
      %p138 = por %p136, %p137
      %s139 = ssub.s32 %s22, %s34
      %s140 = ssub.s32 %s23, %s30
      %s141 = sor.u32 %s139, %s140
      %p142 = scmp.eq.s32.totalorder %s141, 0
      %s144 = sadd.s32 %s143, 1
      %s145 = scalar_select %p142, %s143, %s144
      %p148 = pneg %p142
      %p149 = scmp.eq.s32.totalorder %s15, 1
      %p150 = por %p148, %p149
      %p151 = scmp.ne.s32.totalorder %s143, %s146
      %p152 = scmp.eq.s32.totalorder %s15, 0
      %p153 = por %p151, %p152
      %p154 = scmp.ne.s32.totalorder %s143, %s146
      %p155 = scmp.eq.s32.totalorder %s20, 1
      %p156 = por %p154, %p155
      %p157 = scmp.ne.s32.totalorder %s146, %s147
      %p158 = scmp.eq.s32.totalorder %s20, 0
      %p159 = por %p157, %p158
      %p160 = scmp.ne.s32.totalorder %s146, %s147
      %p161 = scmp.eq.s32.totalorder %s21, 1
      %p162 = por %p160, %p161
      %p164 = scmp.ne.s32.totalorder %s147, %s163
      %p165 = scmp.eq.s32.totalorder %s21, 0
      %p166 = por %p164, %p165
      %s167 = ssub.s32 %s22, %s34
      %p168 = scmp.eq.s32.totalorder %s167, 0
      %s170 = sadd.s32 %s169, 1
      %s171 = scalar_select %p168, %s169, %s170
      %p174 = pneg %p168
      %p175 = scmp.eq.s32.totalorder %s15, 1
      %p176 = por %p174, %p175
      %p177 = scmp.ne.s32.totalorder %s169, %s172
      %p178 = scmp.eq.s32.totalorder %s15, 0
      %p179 = por %p177, %p178
      %p180 = scmp.ne.s32.totalorder %s169, %s172
      %p181 = scmp.eq.s32.totalorder %s20, 1
      %p182 = por %p180, %p181
      %p183 = scmp.ne.s32.totalorder %s172, %s173
      %p184 = scmp.eq.s32.totalorder %s20, 0
      %p185 = por %p183, %p184
      %p186 = scmp.ne.s32.totalorder %s172, %s173
      %p187 = scmp.eq.s32.totalorder %s21, 1
      %p188 = por %p186, %p187
      %p190 = scmp.ne.s32.totalorder %s173, %s189
      %p191 = scmp.eq.s32.totalorder %s21, 0
      %p192 = por %p190, %p191
      %p193 = scmp.le.s32.totalorder 1, %s15
      %p194 = scmp.lt.s32.totalorder %s15, 3
      %p195 = pnand %p193, %p194
      %p196 = pneg %p195
      // Predicated region
      $region9: #{seq2seq_forward.6} parent=5 // pred_check
        _
      $region10: #{seq2seq_forward.6} parent=5 // pred_check_branch
        %198 = sbr.rel (%p195) target = $region12
      $region11: #{seq2seq_forward.6} parent=5 // pred_region
        %s199 = ssub.s32 %s15, 1
        // Predicated region
        $region13: #{seq2seq_forward.6} parent=11 // pred_check
          %p200 = pneg %p53
        $region14: #{seq2seq_forward.6} parent=11 // pred_check_branch
          %202 = sbr.rel (%p200) target = $region16
        $region15: #{seq2seq_forward.6} parent=11 // pred_region
          %s203 = smul.u32 16, %s24
          %p204 = scmp.lt.s32.totalorder %s203, 15
          %s205 = scalar_select %p204, %s203, 15
          %s206 = smul.addr %s205, 8
          %s207 = scalar_lea.vmem %s0, %s206
          %s208 = smul.u32 16, %s24
        $region16: #{seq2seq_forward.6} parent=11 // pred_fallthru
          _
        // Predicated region
        $region17: #{seq2seq_forward.6} parent=11 // pred_check
          %p209 = pneg %p131
        $region18: #{seq2seq_forward.6} parent=11 // pred_check_branch
          %211 = sbr.rel (%p209) target = $region20
        $region19: #{seq2seq_forward.6} parent=11 // pred_region
          %s212 = smul.u32 16, %s24
          %p213 = scmp.lt.s32.totalorder %s212, 15
          %s214 = scalar_select %p213, %s212, 15
          %s215 = smul.addr %s214, 8
          %s216 = scalar_lea.vmem %s3, %s215
          %s217 = smul.u32 16, %s24
        $region20: #{seq2seq_forward.6} parent=11 // pred_fallthru
          _
      $region12: #{seq2seq_forward.6} parent=5 // pred_fallthru
        _
      %p218 = scmp.lt.s32.totalorder %s15, 2
      // Predicated region
      $region21: #{seq2seq_forward.6} parent=5 // pred_check
        %p219 = pneg %p218
      $region22: #{seq2seq_forward.6} parent=5 // pred_check_branch
        %221 = sbr.rel (%p219) target = $region24
      $region23: #{seq2seq_forward.6} parent=5 // pred_region
        // Predicated region
        $region25: #{seq2seq_forward.6} parent=23 // pred_check
          %p222 = pneg %p73
        $region26: #{seq2seq_forward.6} parent=23 // pred_check_branch
          %224 = sbr.rel (%p222) target = $region28
        $region27: #{seq2seq_forward.6} parent=23 // pred_region
          %s225 = sand.u32 %s63, 1
          %s226 = sand.u32 %s63, 1
          %s227 = smul.addr %s226, 512
          %s228 = scalar_lea.vmem [#allocation6], %s227
          %s229 = smul.u32 8, %s23
          %s230 = smul.addr %s229, 4
          %s231 = scalar_lea.vmem %s1, %s230
          // Predicated region
          $region29: #{seq2seq_forward.6} parent=27 // pred_check
            _
          $region30: #{seq2seq_forward.6} parent=27 // pred_check_branch
            %233 = sbr.rel (0) target = $region32
          $region31: #{seq2seq_forward.6} parent=27 // pred_region
            // Predicated region
            $region33: #{seq2seq_forward.6} parent=31 // pred_check
              _
            $region34: #{seq2seq_forward.6} parent=31 // pred_check_branch
              %235 = sbr.rel (0) target = $region36
            $region35: #{seq2seq_forward.6} parent=31 // pred_region
              loop: start=0, step=1, limit=1
              $region37: #{seq2seq_forward.6} parent=35 // loop_pre_header
                _
              $region38: #{seq2seq_forward.6} parent=35 // loop_header
                %s237 = sphi 0, %s241
                %p238 = scmp.ge.s32.totalorder %s237, 1
                %s242 = sphi %s231, %s231
                %s243 = sphi %s228, %s228
              $region39: #{seq2seq_forward.6} parent=35 // loop_header_branch
                %240 = sbr.rel (%p238) target = $region43
              $region40: #{seq2seq_forward.6} parent=35 // loop_body
                %v244 = vld [vmem:[%s242] sm:$0xff]
                %245 = vst [vmem:[%s243] sm:$0xff] %v244
                %v246 = vld [vmem:[%s242 + $0x8] sm:$0xff]
                %247 = vst [vmem:[%s243 + $0x8] sm:$0xff] %v246
                %v248 = vld [vmem:[%s242 + $0x10] sm:$0xff]
                %249 = vst [vmem:[%s243 + $0x10] sm:$0xff] %v248
                %v250 = vld [vmem:[%s242 + $0x18] sm:$0xff]
                %251 = vst [vmem:[%s243 + $0x18] sm:$0xff] %v250
                %v252 = vld [vmem:[%s242 + $0x40] sm:$0xff]
                %253 = vst [vmem:[%s243 + $0x20] sm:$0xff] %v252
                %v254 = vld [vmem:[%s242 + $0x48] sm:$0xff]
                %255 = vst [vmem:[%s243 + $0x28] sm:$0xff] %v254
                %v256 = vld [vmem:[%s242 + $0x50] sm:$0xff]
                %257 = vst [vmem:[%s243 + $0x30] sm:$0xff] %v256
                %v258 = vld [vmem:[%s242 + $0x58] sm:$0xff]
                %259 = vst [vmem:[%s243 + $0x38] sm:$0xff] %v258
                %v260 = vld [vmem:[%s242 + $0x80] sm:$0xff]
                %261 = vst [vmem:[%s243 + $0x40] sm:$0xff] %v260
                %v262 = vld [vmem:[%s242 + $0x88] sm:$0xff]
                %263 = vst [vmem:[%s243 + $0x48] sm:$0xff] %v262
                %v264 = vld [vmem:[%s242 + $0x90] sm:$0xff]
                %265 = vst [vmem:[%s243 + $0x50] sm:$0xff] %v264
                %v266 = vld [vmem:[%s242 + $0x98] sm:$0xff]
                %267 = vst [vmem:[%s243 + $0x58] sm:$0xff] %v266
                %v268 = vld [vmem:[%s242 + $0xc0] sm:$0xff]
                %269 = vst [vmem:[%s243 + $0x60] sm:$0xff] %v268
                %v270 = vld [vmem:[%s242 + $0xc8] sm:$0xff]
                %271 = vst [vmem:[%s243 + $0x68] sm:$0xff] %v270
                %v272 = vld [vmem:[%s242 + $0xd0] sm:$0xff]
                %273 = vst [vmem:[%s243 + $0x70] sm:$0xff] %v272
                %v274 = vld [vmem:[%s242 + $0xd8] sm:$0xff]
                %275 = vst [vmem:[%s243 + $0x78] sm:$0xff] %v274
                %v276 = vld [vmem:[%s242 + $0x100] sm:$0xff]
                %277 = vst [vmem:[%s243 + $0x80] sm:$0xff] %v276
                %v278 = vld [vmem:[%s242 + $0x108] sm:$0xff]
                %279 = vst [vmem:[%s243 + $0x88] sm:$0xff] %v278
                %v280 = vld [vmem:[%s242 + $0x110] sm:$0xff]
                %281 = vst [vmem:[%s243 + $0x90] sm:$0xff] %v280
                %v282 = vld [vmem:[%s242 + $0x118] sm:$0xff]
                %283 = vst [vmem:[%s243 + $0x98] sm:$0xff] %v282
                %v284 = vld [vmem:[%s242 + $0x140] sm:$0xff]
                %285 = vst [vmem:[%s243 + $0xa0] sm:$0xff] %v284
                %v286 = vld [vmem:[%s242 + $0x148] sm:$0xff]
                %287 = vst [vmem:[%s243 + $0xa8] sm:$0xff] %v286
                %v288 = vld [vmem:[%s242 + $0x150] sm:$0xff]
                %289 = vst [vmem:[%s243 + $0xb0] sm:$0xff] %v288
                %v290 = vld [vmem:[%s242 + $0x158] sm:$0xff]
                %291 = vst [vmem:[%s243 + $0xb8] sm:$0xff] %v290
                %v292 = vld [vmem:[%s242 + $0x180] sm:$0xff]
                %293 = vst [vmem:[%s243 + $0xc0] sm:$0xff] %v292
                %v294 = vld [vmem:[%s242 + $0x188] sm:$0xff]
                %295 = vst [vmem:[%s243 + $0xc8] sm:$0xff] %v294
                %v296 = vld [vmem:[%s242 + $0x190] sm:$0xff]
                %297 = vst [vmem:[%s243 + $0xd0] sm:$0xff] %v296
                %v298 = vld [vmem:[%s242 + $0x198] sm:$0xff]
                %299 = vst [vmem:[%s243 + $0xd8] sm:$0xff] %v298
                %v300 = vld [vmem:[%s242 + $0x1c0] sm:$0xff]
                %301 = vst [vmem:[%s243 + $0xe0] sm:$0xff] %v300
                %v302 = vld [vmem:[%s242 + $0x1c8] sm:$0xff]
                %303 = vst [vmem:[%s243 + $0xe8] sm:$0xff] %v302
                %v304 = vld [vmem:[%s242 + $0x1d0] sm:$0xff]
                %305 = vst [vmem:[%s243 + $0xf0] sm:$0xff] %v304
                %v306 = vld [vmem:[%s242 + $0x1d8] sm:$0xff]
                %307 = vst [vmem:[%s243 + $0xf8] sm:$0xff] %v306
                %v308 = vld [vmem:[%s242 + $0x200] sm:$0xff]
                %309 = vst [vmem:[%s243 + $0x100] sm:$0xff] %v308
                %v310 = vld [vmem:[%s242 + $0x208] sm:$0xff]
                %311 = vst [vmem:[%s243 + $0x108] sm:$0xff] %v310
                %v312 = vld [vmem:[%s242 + $0x210] sm:$0xff]
                %313 = vst [vmem:[%s243 + $0x110] sm:$0xff] %v312
                %v314 = vld [vmem:[%s242 + $0x218] sm:$0xff]
                %315 = vst [vmem:[%s243 + $0x118] sm:$0xff] %v314
                %v316 = vld [vmem:[%s242 + $0x240] sm:$0xff]
                %317 = vst [vmem:[%s243 + $0x120] sm:$0xff] %v316
                %v318 = vld [vmem:[%s242 + $0x248] sm:$0xff]
                %319 = vst [vmem:[%s243 + $0x128] sm:$0xff] %v318
                %v320 = vld [vmem:[%s242 + $0x250] sm:$0xff]
                %321 = vst [vmem:[%s243 + $0x130] sm:$0xff] %v320
                %v322 = vld [vmem:[%s242 + $0x258] sm:$0xff]
                %323 = vst [vmem:[%s243 + $0x138] sm:$0xff] %v322
                %v324 = vld [vmem:[%s242 + $0x280] sm:$0xff]
                %325 = vst [vmem:[%s243 + $0x140] sm:$0xff] %v324
                %v326 = vld [vmem:[%s242 + $0x288] sm:$0xff]
                %327 = vst [vmem:[%s243 + $0x148] sm:$0xff] %v326
                %v328 = vld [vmem:[%s242 + $0x290] sm:$0xff]
                %329 = vst [vmem:[%s243 + $0x150] sm:$0xff] %v328
                %v330 = vld [vmem:[%s242 + $0x298] sm:$0xff]
                %331 = vst [vmem:[%s243 + $0x158] sm:$0xff] %v330
                %v332 = vld [vmem:[%s242 + $0x2c0] sm:$0xff]
                %333 = vst [vmem:[%s243 + $0x160] sm:$0xff] %v332
                %v334 = vld [vmem:[%s242 + $0x2c8] sm:$0xff]
                %335 = vst [vmem:[%s243 + $0x168] sm:$0xff] %v334
                %v336 = vld [vmem:[%s242 + $0x2d0] sm:$0xff]
                %337 = vst [vmem:[%s243 + $0x170] sm:$0xff] %v336
                %v338 = vld [vmem:[%s242 + $0x2d8] sm:$0xff]
                %339 = vst [vmem:[%s243 + $0x178] sm:$0xff] %v338
                %v340 = vld [vmem:[%s242 + $0x300] sm:$0xff]
                %341 = vst [vmem:[%s243 + $0x180] sm:$0xff] %v340
                %v342 = vld [vmem:[%s242 + $0x308] sm:$0xff]
                %343 = vst [vmem:[%s243 + $0x188] sm:$0xff] %v342
                %v344 = vld [vmem:[%s242 + $0x310] sm:$0xff]
                %345 = vst [vmem:[%s243 + $0x190] sm:$0xff] %v344
                %v346 = vld [vmem:[%s242 + $0x318] sm:$0xff]
                %347 = vst [vmem:[%s243 + $0x198] sm:$0xff] %v346
                %v348 = vld [vmem:[%s242 + $0x340] sm:$0xff]
                %349 = vst [vmem:[%s243 + $0x1a0] sm:$0xff] %v348
                %v350 = vld [vmem:[%s242 + $0x348] sm:$0xff]
                %351 = vst [vmem:[%s243 + $0x1a8] sm:$0xff] %v350
                %v352 = vld [vmem:[%s242 + $0x350] sm:$0xff]
                %353 = vst [vmem:[%s243 + $0x1b0] sm:$0xff] %v352
                %v354 = vld [vmem:[%s242 + $0x358] sm:$0xff]
                %355 = vst [vmem:[%s243 + $0x1b8] sm:$0xff] %v354
                %v356 = vld [vmem:[%s242 + $0x380] sm:$0xff]
                %357 = vst [vmem:[%s243 + $0x1c0] sm:$0xff] %v356
                %v358 = vld [vmem:[%s242 + $0x388] sm:$0xff]
                %359 = vst [vmem:[%s243 + $0x1c8] sm:$0xff] %v358
                %v360 = vld [vmem:[%s242 + $0x390] sm:$0xff]
                %361 = vst [vmem:[%s243 + $0x1d0] sm:$0xff] %v360
                %v362 = vld [vmem:[%s242 + $0x398] sm:$0xff]
                %363 = vst [vmem:[%s243 + $0x1d8] sm:$0xff] %v362
                %v364 = vld [vmem:[%s242 + $0x3c0] sm:$0xff]
                %365 = vst [vmem:[%s243 + $0x1e0] sm:$0xff] %v364
                %v366 = vld [vmem:[%s242 + $0x3c8] sm:$0xff]
                %367 = vst [vmem:[%s243 + $0x1e8] sm:$0xff] %v366
                %v368 = vld [vmem:[%s242 + $0x3d0] sm:$0xff]
                %369 = vst [vmem:[%s243 + $0x1f0] sm:$0xff] %v368
                %v370 = vld [vmem:[%s242 + $0x3d8] sm:$0xff]
                %371 = vst [vmem:[%s243 + $0x1f8] sm:$0xff] %v370
              $region41: #{seq2seq_forward.6} parent=35 // loop_footer
                %s241 = sadd.s32 1, %s237
              $region42: #{seq2seq_forward.6} parent=35 // loop_footer_branch
                %236 = sbr.rel target = $region38
              $region43: #{seq2seq_forward.6} parent=35 // loop_exit
                _
            $region36: #{seq2seq_forward.6} parent=31 // pred_fallthru
              _
            // Predicated region
            $region44: #{seq2seq_forward.6} parent=31 // pred_check
              _
            $region45: #{seq2seq_forward.6} parent=31 // pred_check_branch
              %373 = sbr.rel target = $region47
            $region46: #{seq2seq_forward.6} parent=31 // pred_region
              _
            $region47: #{seq2seq_forward.6} parent=31 // pred_fallthru
              _
          $region32: #{seq2seq_forward.6} parent=27 // pred_fallthru
            _
          %374 = vnop
        $region28: #{seq2seq_forward.6} parent=23 // pred_fallthru
          _
        // Predicated region
        $region48: #{seq2seq_forward.6} parent=23 // pred_check
          %p375 = pneg %p99
        $region49: #{seq2seq_forward.6} parent=23 // pred_check_branch
          %377 = sbr.rel (%p375) target = $region51
        $region50: #{seq2seq_forward.6} parent=23 // pred_region
          %s378 = smul.u32 8, %s23
          %p379 = scmp.lt.s32.totalorder %s378, 15
          %s380 = scalar_select %p379, %s378, 15
          %s381 = scalar_lea.vmem %s2, %s380
          %s382 = smul.u32 8, %s23
        $region51: #{seq2seq_forward.6} parent=23 // pred_fallthru
          _
      $region24: #{seq2seq_forward.6} parent=5 // pred_fallthru
        _
      %p383 = scmp.le.s32.totalorder 1, %s15
      %p384 = scmp.lt.s32.totalorder %s15, 3
      %p385 = pnand %p383, %p384
      %p386 = pneg %p385
      // Predicated region
      $region52: #{seq2seq_forward.6} parent=5 // pred_check
        _
      $region53: #{seq2seq_forward.6} parent=5 // pred_check_branch
        %388 = sbr.rel (%p385) target = $region55
      $region54: #{seq2seq_forward.6} parent=5 // pred_region
        %s389 = ssub.s32 %s15, 1
        %s390 = sand.u32 %s66, 1
        %s391 = sand.u32 %s66, 1
        %s392 = smul.addr %s391, 512
        %s393 = scalar_lea.vmem [#allocation6], %s392
        // Predicated region
        $region56: #{seq2seq_forward.6} parent=54 // pred_check
          %p394 = pneg %p79
        $region57: #{seq2seq_forward.6} parent=54 // pred_check_branch
          %396 = sbr.rel (%p394) target = $region59
        $region58: #{seq2seq_forward.6} parent=54 // pred_region
          _
        $region59: #{seq2seq_forward.6} parent=54 // pred_fallthru
          _
        %s397 = smul.u32 16, %s24
        %p398 = scmp.lt.s32.totalorder %s397, 15
        %s399 = scalar_select %p398, %s397, 15
        %s400 = smul.addr %s399, 8
        %s401 = scalar_lea.vmem %s0, %s400
        %p402 = pneg %p53
        %p403 = pneg %p50
        %s404 = sand.u32 %s66, 1
        %s405 = sand.u32 %s66, 1
        %s406 = smul.addr %s405, 512
        %s407 = scalar_lea.vmem [#allocation6], %s406
        %p408 = pneg %p79
        %p409 = pneg %p76
        %s410 = smul.u32 8, %s25
        %p411 = scmp.lt.s32.totalorder %s410, 15
        %s412 = scalar_select %p411, %s410, 15
        %s413 = scalar_lea.vmem %s2, %s412
        %p414 = pneg %p105
        %p415 = pneg %p102
        %s416 = smul.u32 16, %s24
        %p417 = scmp.lt.s32.totalorder %s416, 15
        %s418 = scalar_select %p417, %s416, 15
        %s419 = smul.addr %s418, 8
        %s420 = scalar_lea.vmem %s3, %s419
        %p421 = pneg %p131
        %p422 = pneg %p128
        %p423 = pneg %p159
        %p424 = pneg %p156
        %s425 = sand.u32 %s146, 1
        %s426 = scalar_lea.sflag [#allocation8], %s425
        %s427 = sand.u32 %s146, 1
        %s428 = smul.addr %s427, 1024
        %s429 = scalar_lea.vmem [#allocation7], %s428
        %p430 = pneg %p185
        %p431 = pneg %p182
        %s432 = smul.u32 16, %s24
        %p433 = scmp.lt.s32.totalorder %s432, 15
        %s434 = scalar_select %p433, %s432, 15
        %s435 = smul.addr %s434, 8
        %s436 = scalar_lea.vmem %s5, %s435
        %s437 = smul.u32 16, %s24
        %p438 = scmp.lt.s32.totalorder %s437, 15
        %s439 = scalar_select %p438, %s437, 15
        %s440 = smul.addr %s439, 8
        %s441 = scalar_lea.vmem %s0, %s440
        %s442 = smul.u32 16, %s24
        %s443 = smul.u32 8, %s25
        %s444 = smul.u32 8, %s25
        %p445 = scmp.lt.s32.totalorder %s444, 15
        %s446 = scalar_select %p445, %s444, 15
        %s447 = scalar_lea.vmem %s2, %s446
        %s448 = smul.u32 8, %s25
        %s449 = smul.u32 16, %s24
        %p450 = scmp.lt.s32.totalorder %s449, 15
        %s451 = scalar_select %p450, %s449, 15
        %s452 = smul.addr %s451, 8
        %s453 = scalar_lea.vmem %s3, %s452
        %s454 = smul.u32 16, %s24
        %s455 = smul.u32 16, %s24
        %s456 = smul.u32 8, %s25
        %s457 = smul.u32 16, %s24
        %p458 = scmp.lt.s32.totalorder %s457, 15
        %s459 = scalar_select %p458, %s457, 15
        %s460 = smul.addr %s459, 8
        %s461 = scalar_lea.vmem %s5, %s460
        %s462 = smul.u32 16, %s24
        %p464 = scmp.eq.s32.totalorder %s25, 0
        // Predicated region
        $region60: #{seq2seq_forward.6} parent=54 // pred_check
          %p465 = pneg %p464
        $region61: #{seq2seq_forward.6} parent=54 // pred_check_branch
          %467 = sbr.rel (%p465) target = $region63
        $region62: #{seq2seq_forward.6} parent=54 // pred_region
          %v468 = vld [vmem:[%s441] sm:$0xff]
          %v469 = vld [vmem:[%s441 + $0x8] sm:$0xff]
          %v470 = vld [vmem:[%s441 + $0x10] sm:$0xff]
          %v471 = vld [vmem:[%s441 + $0x18] sm:$0xff]
          %v472 = vld [vmem:[%s441 + $0x20] sm:$0xff]
          %v473 = vld [vmem:[%s441 + $0x28] sm:$0xff]
          %v474 = vld [vmem:[%s441 + $0x30] sm:$0xff]
          %v475 = vld [vmem:[%s441 + $0x38] sm:$0xff]
          %v476 = vld [vmem:[%s441 + $0x40] sm:$0xff]
          %v477 = vld [vmem:[%s441 + $0x48] sm:$0xff]
          %v478 = vld [vmem:[%s441 + $0x50] sm:$0xff]
          %v479 = vld [vmem:[%s441 + $0x58] sm:$0xff]
          %v480 = vld [vmem:[%s441 + $0x60] sm:$0xff]
          %v481 = vld [vmem:[%s441 + $0x68] sm:$0xff]
          %v482 = vld [vmem:[%s441 + $0x70] sm:$0xff]
          %v483 = vld [vmem:[%s441 + $0x78] sm:$0xff]
          %v484 = vpack.c.bf16 %v469, %v468
          %v485 = vpack.c.bf16 %v471, %v470
          %v486 = vpack.c.bf16 %v473, %v472
          %v487 = vpack.c.bf16 %v475, %v474
          %v488 = vpack.c.bf16 %v477, %v476
          %v489 = vpack.c.bf16 %v479, %v478
          %v490 = vpack.c.bf16 %v481, %v480
          %v491 = vpack.c.bf16 %v483, %v482
          %492 = vst [vmem:[#allocation2] sm:$0xff] %v484
          %493 = vst [vmem:[#allocation2 + $0x8] sm:$0xff] %v485
          %494 = vst [vmem:[#allocation2 + $0x10] sm:$0xff] %v486
          %495 = vst [vmem:[#allocation2 + $0x18] sm:$0xff] %v487
          %496 = vst [vmem:[#allocation2 + $0x20] sm:$0xff] %v488
          %497 = vst [vmem:[#allocation2 + $0x28] sm:$0xff] %v489
          %498 = vst [vmem:[#allocation2 + $0x30] sm:$0xff] %v490
          %499 = vst [vmem:[#allocation2 + $0x38] sm:$0xff] %v491
          %vm500 = vcmask 7168
          %501 = vst.msk [vmem:[#allocation3] sm:$0xff] %vm500, -inf
          %502 = vst.msk [vmem:[#allocation3 + $0x8] sm:$0xff] %vm500, -inf
          %503 = vst.msk [vmem:[#allocation3 + $0x10] sm:$0xff] %vm500, -inf
          %504 = vst.msk [vmem:[#allocation3 + $0x18] sm:$0xff] %vm500, -inf
          %505 = vst.msk [vmem:[#allocation3 + $0x20] sm:$0xff] %vm500, -inf
          %506 = vst.msk [vmem:[#allocation3 + $0x28] sm:$0xff] %vm500, -inf
          %507 = vst.msk [vmem:[#allocation3 + $0x30] sm:$0xff] %vm500, -inf
          %508 = vst.msk [vmem:[#allocation3 + $0x38] sm:$0xff] %vm500, -inf
          %509 = vst.msk [vmem:[#allocation3 + $0x40] sm:$0xff] %vm500, -inf
          %510 = vst.msk [vmem:[#allocation3 + $0x48] sm:$0xff] %vm500, -inf
          %511 = vst.msk [vmem:[#allocation3 + $0x50] sm:$0xff] %vm500, -inf
          %512 = vst.msk [vmem:[#allocation3 + $0x58] sm:$0xff] %vm500, -inf
          %513 = vst.msk [vmem:[#allocation3 + $0x60] sm:$0xff] %vm500, -inf
          %514 = vst.msk [vmem:[#allocation3 + $0x68] sm:$0xff] %vm500, -inf
          %515 = vst.msk [vmem:[#allocation3 + $0x70] sm:$0xff] %vm500, -inf
          %516 = vst.msk [vmem:[#allocation3 + $0x78] sm:$0xff] %vm500, -inf
          %517 = vst.msk [vmem:[#allocation4] sm:$0xff] %vm500, 0.0
          %518 = vst.msk [vmem:[#allocation4 + $0x8] sm:$0xff] %vm500, 0.0
          %519 = vst.msk [vmem:[#allocation4 + $0x10] sm:$0xff] %vm500, 0.0
          %520 = vst.msk [vmem:[#allocation4 + $0x18] sm:$0xff] %vm500, 0.0
          %521 = vst.msk [vmem:[#allocation4 + $0x20] sm:$0xff] %vm500, 0.0
          %522 = vst.msk [vmem:[#allocation4 + $0x28] sm:$0xff] %vm500, 0.0
          %523 = vst.msk [vmem:[#allocation4 + $0x30] sm:$0xff] %vm500, 0.0
          %524 = vst.msk [vmem:[#allocation4 + $0x38] sm:$0xff] %vm500, 0.0
          %525 = vst.msk [vmem:[#allocation4 + $0x40] sm:$0xff] %vm500, 0.0
          %526 = vst.msk [vmem:[#allocation4 + $0x48] sm:$0xff] %vm500, 0.0
          %527 = vst.msk [vmem:[#allocation4 + $0x50] sm:$0xff] %vm500, 0.0
          %528 = vst.msk [vmem:[#allocation4 + $0x58] sm:$0xff] %vm500, 0.0
          %529 = vst.msk [vmem:[#allocation4 + $0x60] sm:$0xff] %vm500, 0.0
          %530 = vst.msk [vmem:[#allocation4 + $0x68] sm:$0xff] %vm500, 0.0
          %531 = vst.msk [vmem:[#allocation4 + $0x70] sm:$0xff] %vm500, 0.0
          %532 = vst.msk [vmem:[#allocation4 + $0x78] sm:$0xff] %vm500, 0.0
          %533 = vst.msk [vmem:[#allocation5] sm:$0xff] %vm500, 0.0
          %534 = vst.msk [vmem:[#allocation5 + $0x8] sm:$0xff] %vm500, 0.0
          %535 = vst.msk [vmem:[#allocation5 + $0x10] sm:$0xff] %vm500, 0.0
          %536 = vst.msk [vmem:[#allocation5 + $0x18] sm:$0xff] %vm500, 0.0
          %537 = vst.msk [vmem:[#allocation5 + $0x20] sm:$0xff] %vm500, 0.0
          %538 = vst.msk [vmem:[#allocation5 + $0x28] sm:$0xff] %vm500, 0.0
          %539 = vst.msk [vmem:[#allocation5 + $0x30] sm:$0xff] %vm500, 0.0
          %540 = vst.msk [vmem:[#allocation5 + $0x38] sm:$0xff] %vm500, 0.0
          %541 = vst.msk [vmem:[#allocation5 + $0x40] sm:$0xff] %vm500, 0.0
          %542 = vst.msk [vmem:[#allocation5 + $0x48] sm:$0xff] %vm500, 0.0
          %543 = vst.msk [vmem:[#allocation5 + $0x50] sm:$0xff] %vm500, 0.0
          %544 = vst.msk [vmem:[#allocation5 + $0x58] sm:$0xff] %vm500, 0.0
          %545 = vst.msk [vmem:[#allocation5 + $0x60] sm:$0xff] %vm500, 0.0
          %546 = vst.msk [vmem:[#allocation5 + $0x68] sm:$0xff] %vm500, 0.0
          %547 = vst.msk [vmem:[#allocation5 + $0x70] sm:$0xff] %vm500, 0.0
          %548 = vst.msk [vmem:[#allocation5 + $0x78] sm:$0xff] %vm500, 0.0
        $region63: #{seq2seq_forward.6} parent=54 // pred_fallthru
          _
        %v549 = vld [vmem:[#allocation2] sm:$0xff]
        %v550 = vld [vmem:[#allocation2 + $0x8] sm:$0xff]
        %v551 = vld [vmem:[#allocation2 + $0x10] sm:$0xff]
        %v552 = vld [vmem:[#allocation2 + $0x18] sm:$0xff]
        %v553 = vld [vmem:[#allocation2 + $0x20] sm:$0xff]
        %v554 = vld [vmem:[#allocation2 + $0x28] sm:$0xff]
        %v555 = vld [vmem:[#allocation2 + $0x30] sm:$0xff]
        %v556 = vld [vmem:[#allocation2 + $0x38] sm:$0xff]
        %v557 = vld [vmem:[%s393] sm:$0xff]
        %v558 = vld [vmem:[%s393 + $0x8] sm:$0xff]
        %v559 = vld [vmem:[%s393 + $0x10] sm:$0xff]
        %v560 = vld [vmem:[%s393 + $0x18] sm:$0xff]
        %v561 = vld [vmem:[%s393 + $0x20] sm:$0xff]
        %v562 = vld [vmem:[%s393 + $0x28] sm:$0xff]
        %v563 = vld [vmem:[%s393 + $0x30] sm:$0xff]
        %v564 = vld [vmem:[%s393 + $0x38] sm:$0xff]
        %v565 = vld [vmem:[%s393 + $0x40] sm:$0xff]
        %v566 = vld [vmem:[%s393 + $0x48] sm:$0xff]
        %v567 = vld [vmem:[%s393 + $0x50] sm:$0xff]
        %v568 = vld [vmem:[%s393 + $0x58] sm:$0xff]
        %v569 = vld [vmem:[%s393 + $0x60] sm:$0xff]
        %v570 = vld [vmem:[%s393 + $0x68] sm:$0xff]
        %v571 = vld [vmem:[%s393 + $0x70] sm:$0xff]
        %v572 = vld [vmem:[%s393 + $0x78] sm:$0xff]
        %v573 = vld [vmem:[%s393 + $0x80] sm:$0xff]
        %v574 = vld [vmem:[%s393 + $0x88] sm:$0xff]
        %v575 = vld [vmem:[%s393 + $0x90] sm:$0xff]
        %v576 = vld [vmem:[%s393 + $0x98] sm:$0xff]
        %v577 = vld [vmem:[%s393 + $0xa0] sm:$0xff]
        %v578 = vld [vmem:[%s393 + $0xa8] sm:$0xff]
        %v579 = vld [vmem:[%s393 + $0xb0] sm:$0xff]
        %v580 = vld [vmem:[%s393 + $0xb8] sm:$0xff]
        %v581 = vld [vmem:[%s393 + $0xc0] sm:$0xff]
        %v582 = vld [vmem:[%s393 + $0xc8] sm:$0xff]
        %v583 = vld [vmem:[%s393 + $0xd0] sm:$0xff]
        %v584 = vld [vmem:[%s393 + $0xd8] sm:$0xff]
        %v585 = vld [vmem:[%s393 + $0xe0] sm:$0xff]
        %v586 = vld [vmem:[%s393 + $0xe8] sm:$0xff]
        %v587 = vld [vmem:[%s393 + $0xf0] sm:$0xff]
        %v588 = vld [vmem:[%s393 + $0xf8] sm:$0xff]
        %v589 = vld [vmem:[%s393 + $0x100] sm:$0xff]
        %v590 = vld [vmem:[%s393 + $0x108] sm:$0xff]
        %v591 = vld [vmem:[%s393 + $0x110] sm:$0xff]
        %v592 = vld [vmem:[%s393 + $0x118] sm:$0xff]
        %v593 = vld [vmem:[%s393 + $0x120] sm:$0xff]
        %v594 = vld [vmem:[%s393 + $0x128] sm:$0xff]
        %v595 = vld [vmem:[%s393 + $0x130] sm:$0xff]
        %v596 = vld [vmem:[%s393 + $0x138] sm:$0xff]
        %v597 = vld [vmem:[%s393 + $0x140] sm:$0xff]
        %v598 = vld [vmem:[%s393 + $0x148] sm:$0xff]
        %v599 = vld [vmem:[%s393 + $0x150] sm:$0xff]
        %v600 = vld [vmem:[%s393 + $0x158] sm:$0xff]
        %v601 = vld [vmem:[%s393 + $0x160] sm:$0xff]
        %v602 = vld [vmem:[%s393 + $0x168] sm:$0xff]
        %v603 = vld [vmem:[%s393 + $0x170] sm:$0xff]
        %v604 = vld [vmem:[%s393 + $0x178] sm:$0xff]
        %v605 = vld [vmem:[%s393 + $0x180] sm:$0xff]
        %v606 = vld [vmem:[%s393 + $0x188] sm:$0xff]
        %v607 = vld [vmem:[%s393 + $0x190] sm:$0xff]
        %v608 = vld [vmem:[%s393 + $0x198] sm:$0xff]
        %v609 = vld [vmem:[%s393 + $0x1a0] sm:$0xff]
        %v610 = vld [vmem:[%s393 + $0x1a8] sm:$0xff]
        %v611 = vld [vmem:[%s393 + $0x1b0] sm:$0xff]
        %v612 = vld [vmem:[%s393 + $0x1b8] sm:$0xff]
        %v613 = vld [vmem:[%s393 + $0x1c0] sm:$0xff]
        %v614 = vld [vmem:[%s393 + $0x1c8] sm:$0xff]
        %v615 = vld [vmem:[%s393 + $0x1d0] sm:$0xff]
        %v616 = vld [vmem:[%s393 + $0x1d8] sm:$0xff]
        %v617 = vld [vmem:[%s393 + $0x1e0] sm:$0xff]
        %v618 = vld [vmem:[%s393 + $0x1e8] sm:$0xff]
        %v619 = vld [vmem:[%s393 + $0x1f0] sm:$0xff]
        %v620 = vld [vmem:[%s393 + $0x1f8] sm:$0xff]
        %v621 = vld [vmem:[%s447] sm:$0xff]
        %v623 = vlaneseq
        %v624 = vshrl.u32 %v623, 7
        %v625 = vsub.s32 0, %v624
        %v626 = vrot.slane %v621, %v625
        %v627 = vlaneseq
        %v628 = vshrl.u32 %v627, 7
        %v629 = vsub.s32 1, %v628
        %v630 = vrot.slane %v621, %v629
        %v631 = vlaneseq
        %v632 = vshrl.u32 %v631, 7
        %v633 = vsub.s32 2, %v632
        %v634 = vrot.slane %v621, %v633
        %v635 = vlaneseq
        %v636 = vshrl.u32 %v635, 7
        %v637 = vsub.s32 3, %v636
        %v638 = vrot.slane %v621, %v637
        %v639 = vlaneseq
        %v640 = vshrl.u32 %v639, 7
        %v641 = vsub.s32 4, %v640
        %v642 = vrot.slane %v621, %v641
        %v643 = vlaneseq
        %v644 = vshrl.u32 %v643, 7
        %v645 = vsub.s32 5, %v644
        %v646 = vrot.slane %v621, %v645
        %v647 = vlaneseq
        %v648 = vshrl.u32 %v647, 7
        %v649 = vsub.s32 6, %v648
        %v650 = vrot.slane %v621, %v649
        %v651 = vlaneseq
        %v652 = vshrl.u32 %v651, 7
        %v653 = vsub.s32 7, %v652
        %v654 = vrot.slane %v621, %v653
        %v727 = vunpack.c.l.b16 %v557
        %v728 = vunpack.c.h.b16 %v557
        %v729 = vunpack.c.l.b16 %v558
        %v730 = vunpack.c.h.b16 %v558
        %v731 = vunpack.c.l.b16 %v559
        %v732 = vunpack.c.h.b16 %v559
        %v733 = vunpack.c.l.b16 %v560
        %v734 = vunpack.c.h.b16 %v560
        %v735 = vunpack.c.l.b16 %v561
        %v736 = vunpack.c.h.b16 %v561
        %v737 = vunpack.c.l.b16 %v562
        %v738 = vunpack.c.h.b16 %v562
        %v739 = vunpack.c.l.b16 %v563
        %v740 = vunpack.c.h.b16 %v563
        %v741 = vunpack.c.l.b16 %v564
        %v742 = vunpack.c.h.b16 %v564
        %v743 = vunpack.c.l.b16 %v565
        %v744 = vunpack.c.h.b16 %v565
        %v745 = vunpack.c.l.b16 %v566
        %v746 = vunpack.c.h.b16 %v566
        %v747 = vunpack.c.l.b16 %v567
        %v748 = vunpack.c.h.b16 %v567
        %v749 = vunpack.c.l.b16 %v568
        %v750 = vunpack.c.h.b16 %v568
        %v751 = vunpack.c.l.b16 %v569
        %v752 = vunpack.c.h.b16 %v569
        %v753 = vunpack.c.l.b16 %v570
        %v754 = vunpack.c.h.b16 %v570
        %v755 = vunpack.c.l.b16 %v571
        %v756 = vunpack.c.h.b16 %v571
        %v757 = vunpack.c.l.b16 %v572
        %v758 = vunpack.c.h.b16 %v572
        %v759 = vunpack.c.l.b16 %v573
        %v760 = vunpack.c.h.b16 %v573
        %v761 = vunpack.c.l.b16 %v574
        %v762 = vunpack.c.h.b16 %v574
        %v763 = vunpack.c.l.b16 %v575
        %v764 = vunpack.c.h.b16 %v575
        %v765 = vunpack.c.l.b16 %v576
        %v766 = vunpack.c.h.b16 %v576
        %v767 = vunpack.c.l.b16 %v577
        %v768 = vunpack.c.h.b16 %v577
        %v769 = vunpack.c.l.b16 %v578
        %v770 = vunpack.c.h.b16 %v578
        %v771 = vunpack.c.l.b16 %v579
        %v772 = vunpack.c.h.b16 %v579
        %v773 = vunpack.c.l.b16 %v580
        %v774 = vunpack.c.h.b16 %v580
        %v775 = vunpack.c.l.b16 %v581
        %v776 = vunpack.c.h.b16 %v581
        %v777 = vunpack.c.l.b16 %v582
        %v778 = vunpack.c.h.b16 %v582
        %v779 = vunpack.c.l.b16 %v583
        %v780 = vunpack.c.h.b16 %v583
        %v781 = vunpack.c.l.b16 %v584
        %v782 = vunpack.c.h.b16 %v584
        %v783 = vunpack.c.l.b16 %v585
        %v784 = vunpack.c.h.b16 %v585
        %v785 = vunpack.c.l.b16 %v586
        %v786 = vunpack.c.h.b16 %v586
        %v787 = vunpack.c.l.b16 %v587
        %v788 = vunpack.c.h.b16 %v587
        %v789 = vunpack.c.l.b16 %v588
        %v790 = vunpack.c.h.b16 %v588
        %v791 = vunpack.c.l.b16 %v589
        %v792 = vunpack.c.h.b16 %v589
        %v793 = vunpack.c.l.b16 %v590
        %v794 = vunpack.c.h.b16 %v590
        %v795 = vunpack.c.l.b16 %v591
        %v796 = vunpack.c.h.b16 %v591
        %v797 = vunpack.c.l.b16 %v592
        %v798 = vunpack.c.h.b16 %v592
        %v799 = vunpack.c.l.b16 %v593
        %v800 = vunpack.c.h.b16 %v593
        %v801 = vunpack.c.l.b16 %v594
        %v802 = vunpack.c.h.b16 %v594
        %v803 = vunpack.c.l.b16 %v595
        %v804 = vunpack.c.h.b16 %v595
        %v805 = vunpack.c.l.b16 %v596
        %v806 = vunpack.c.h.b16 %v596
        %v807 = vunpack.c.l.b16 %v597
        %v808 = vunpack.c.h.b16 %v597
        %v809 = vunpack.c.l.b16 %v598
        %v810 = vunpack.c.h.b16 %v598
        %v811 = vunpack.c.l.b16 %v599
        %v812 = vunpack.c.h.b16 %v599
        %v813 = vunpack.c.l.b16 %v600
        %v814 = vunpack.c.h.b16 %v600
        %v815 = vunpack.c.l.b16 %v601
        %v816 = vunpack.c.h.b16 %v601
        %v817 = vunpack.c.l.b16 %v602
        %v818 = vunpack.c.h.b16 %v602
        %v819 = vunpack.c.l.b16 %v603
        %v820 = vunpack.c.h.b16 %v603
        %v821 = vunpack.c.l.b16 %v604
        %v822 = vunpack.c.h.b16 %v604
        %v823 = vunpack.c.l.b16 %v605
        %v824 = vunpack.c.h.b16 %v605
        %v825 = vunpack.c.l.b16 %v606
        %v826 = vunpack.c.h.b16 %v606
        %v827 = vunpack.c.l.b16 %v607
        %v828 = vunpack.c.h.b16 %v607
        %v829 = vunpack.c.l.b16 %v608
        %v830 = vunpack.c.h.b16 %v608
        %v831 = vunpack.c.l.b16 %v609
        %v832 = vunpack.c.h.b16 %v609
        %v833 = vunpack.c.l.b16 %v610
        %v834 = vunpack.c.h.b16 %v610
        %v835 = vunpack.c.l.b16 %v611
        %v836 = vunpack.c.h.b16 %v611
        %v837 = vunpack.c.l.b16 %v612
        %v838 = vunpack.c.h.b16 %v612
        %v839 = vunpack.c.l.b16 %v613
        %v840 = vunpack.c.h.b16 %v613
        %v841 = vunpack.c.l.b16 %v614
        %v842 = vunpack.c.h.b16 %v614
        %v843 = vunpack.c.l.b16 %v615
        %v844 = vunpack.c.h.b16 %v615
        %v845 = vunpack.c.l.b16 %v616
        %v846 = vunpack.c.h.b16 %v616
        %v847 = vunpack.c.l.b16 %v617
        %v848 = vunpack.c.h.b16 %v617
        %v849 = vunpack.c.l.b16 %v618
        %v850 = vunpack.c.h.b16 %v618
        %v851 = vunpack.c.l.b16 %v619
        %v852 = vunpack.c.h.b16 %v619
        %v853 = vunpack.c.l.b16 %v620
        %v854 = vunpack.c.h.b16 %v620
        %v855 = vpack.c.b16 %v735, %v727
        %v856 = vpack.c.b16 %v736, %v728
        %v857 = vpack.c.b16 %v737, %v729
        %v858 = vpack.c.b16 %v738, %v730
        %v859 = vpack.c.b16 %v739, %v731
        %v860 = vpack.c.b16 %v740, %v732
        %v861 = vpack.c.b16 %v741, %v733
        %v862 = vpack.c.b16 %v742, %v734
        %v863 = vpack.c.b16 %v751, %v743
        %v864 = vpack.c.b16 %v752, %v744
        %v865 = vpack.c.b16 %v753, %v745
        %v866 = vpack.c.b16 %v754, %v746
        %v867 = vpack.c.b16 %v755, %v747
        %v868 = vpack.c.b16 %v756, %v748
        %v869 = vpack.c.b16 %v757, %v749
        %v870 = vpack.c.b16 %v758, %v750
        %v871 = vpack.c.b16 %v767, %v759
        %v872 = vpack.c.b16 %v768, %v760
        %v873 = vpack.c.b16 %v769, %v761
        %v874 = vpack.c.b16 %v770, %v762
        %v875 = vpack.c.b16 %v771, %v763
        %v876 = vpack.c.b16 %v772, %v764
        %v877 = vpack.c.b16 %v773, %v765
        %v878 = vpack.c.b16 %v774, %v766
        %v879 = vpack.c.b16 %v783, %v775
        %v880 = vpack.c.b16 %v784, %v776
        %v881 = vpack.c.b16 %v785, %v777
        %v882 = vpack.c.b16 %v786, %v778
        %v883 = vpack.c.b16 %v787, %v779
        %v884 = vpack.c.b16 %v788, %v780
        %v885 = vpack.c.b16 %v789, %v781
        %v886 = vpack.c.b16 %v790, %v782
        %v887 = vpack.c.b16 %v799, %v791
        %v888 = vpack.c.b16 %v800, %v792
        %v889 = vpack.c.b16 %v801, %v793
        %v890 = vpack.c.b16 %v802, %v794
        %v891 = vpack.c.b16 %v803, %v795
        %v892 = vpack.c.b16 %v804, %v796
        %v893 = vpack.c.b16 %v805, %v797
        %v894 = vpack.c.b16 %v806, %v798
        %v895 = vpack.c.b16 %v815, %v807
        %v896 = vpack.c.b16 %v816, %v808
        %v897 = vpack.c.b16 %v817, %v809
        %v898 = vpack.c.b16 %v818, %v810
        %v899 = vpack.c.b16 %v819, %v811
        %v900 = vpack.c.b16 %v820, %v812
        %v901 = vpack.c.b16 %v821, %v813
        %v902 = vpack.c.b16 %v822, %v814
        %v903 = vpack.c.b16 %v831, %v823
        %v904 = vpack.c.b16 %v832, %v824
        %v905 = vpack.c.b16 %v833, %v825
        %v906 = vpack.c.b16 %v834, %v826
        %v907 = vpack.c.b16 %v835, %v827
        %v908 = vpack.c.b16 %v836, %v828
        %v909 = vpack.c.b16 %v837, %v829
        %v910 = vpack.c.b16 %v838, %v830
        %v911 = vpack.c.b16 %v847, %v839
        %v912 = vpack.c.b16 %v848, %v840
        %v913 = vpack.c.b16 %v849, %v841
        %v914 = vpack.c.b16 %v850, %v842
        %v915 = vpack.c.b16 %v851, %v843
        %v916 = vpack.c.b16 %v852, %v844
        %v917 = vpack.c.b16 %v853, %v845
        %v918 = vpack.c.b16 %v854, %v846
        %983 = vmatprep.subr.bf16.mxu0 %v856
        %984 = vmatpush1.bf16.msra.mxu0 %v855
        %985 = vmatprep.subr.bf16.mxu0 %v864
        %986 = vmatpush1.bf16.msra.mxu0 %v863
        %987 = vmatprep.subr.bf16.mxu0 %v872
        %988 = vmatpush1.bf16.msra.mxu0 %v871
        %989 = vmatprep.subr.bf16.mxu0 %v880
        %990 = vmatpush1.bf16.msra.mxu0 %v879
        %991 = vmatprep.subr.bf16.mxu0 %v888
        %992 = vmatpush1.bf16.msra.mxu0 %v887
        %993 = vmatprep.subr.bf16.mxu0 %v896
        %994 = vmatpush1.bf16.msra.mxu0 %v895
        %995 = vmatprep.subr.bf16.mxu0 %v904
        %996 = vmatpush1.bf16.msra.mxu0 %v903
        %997 = vmatprep.subr.bf16.mxu0 %v912
        %998 = vmatpush1.bf16.msra.mxu0 %v911
        %999 = vmatprep.subr.bf16.mxu0 0
        %1000 = vmatpush1.bf16.msra.mxu0 0
        %1001 = vmatprep.subr.bf16.mxu0 0
        %1002 = vmatpush1.bf16.msra.mxu0 0
        %1003 = vmatprep.subr.bf16.mxu0 0
        %1004 = vmatpush1.bf16.msra.mxu0 0
        %1005 = vmatprep.subr.bf16.mxu0 0
        %1006 = vmatpush1.bf16.msra.mxu0 0
        %1007 = vmatprep.subr.bf16.mxu0 0
        %1008 = vmatpush1.bf16.msra.mxu0 0
        %1009 = vmatprep.subr.bf16.mxu0 0
        %1010 = vmatpush1.bf16.msra.mxu0 0
        %1011 = vmatprep.subr.bf16.mxu0 0
        %1012 = vmatpush1.bf16.msra.mxu0 0
        %1013 = vmatprep.subr.bf16.mxu0 0
        %1014 = vmatpush1.bf16.msra.mxu0 0
        %1015 = vmatprep.mubr.bf16.mxu0 0
        %1016 = vmatmul.mubr.bf16.gmra.mrb[0].mxu0 %v549
        %v1017 = vpop.f32.mrb[0].mxu0
        %v1018 = vadd.f32 %v626, %v1017
        %v1019 = vpop.f32.mrb[0].mxu0
        %v1020 = vadd.f32 %v630, %v1019
        %v1021 = vpop.f32.mrb[0].mxu0
        %v1022 = vadd.f32 %v626, %v1021
        %v1023 = vpop.f32.mrb[0].mxu0
        %v1024 = vadd.f32 %v630, %v1023
        %1025 = vmatprep.mubr.bf16.mxu0 0
        %1026 = vmatmul.mubr.bf16.gmra.mrb[0].mxu0 %v550
        %v1027 = vpop.f32.mrb[0].mxu0
        %v1028 = vadd.f32 %v626, %v1027
        %v1029 = vpop.f32.mrb[0].mxu0
        %v1030 = vadd.f32 %v630, %v1029
        %v1031 = vpop.f32.mrb[0].mxu0
        %v1032 = vadd.f32 %v626, %v1031
        %v1033 = vpop.f32.mrb[0].mxu0
        %v1034 = vadd.f32 %v630, %v1033
        %1035 = vmatprep.mubr.bf16.mxu0 0
        %1036 = vmatmul.mubr.bf16.gmra.mrb[0].mxu0 %v551
        %v1037 = vpop.f32.mrb[0].mxu0
        %v1038 = vadd.f32 %v626, %v1037
        %v1039 = vpop.f32.mrb[0].mxu0
        %v1040 = vadd.f32 %v630, %v1039
        %v1041 = vpop.f32.mrb[0].mxu0
        %v1042 = vadd.f32 %v626, %v1041
        %v1043 = vpop.f32.mrb[0].mxu0
        %v1044 = vadd.f32 %v630, %v1043
        %1045 = vmatprep.mubr.bf16.mxu0 0
        %1046 = vmatmul.mubr.bf16.gmra.mrb[0].mxu0 %v552
        %v1047 = vpop.f32.mrb[0].mxu0
        %v1048 = vadd.f32 %v626, %v1047
        %v1049 = vpop.f32.mrb[0].mxu0
        %v1050 = vadd.f32 %v630, %v1049
        %v1051 = vpop.f32.mrb[0].mxu0
        %v1052 = vadd.f32 %v626, %v1051
        %v1053 = vpop.f32.mrb[0].mxu0
        %v1054 = vadd.f32 %v630, %v1053
        %1055 = vmatprep.mubr.bf16.mxu0 0
        %1056 = vmatmul.mubr.bf16.gmra.mrb[0].mxu0 %v553
        %v1057 = vpop.f32.mrb[0].mxu0
        %v1058 = vadd.f32 %v626, %v1057
        %v1059 = vpop.f32.mrb[0].mxu0
        %v1060 = vadd.f32 %v630, %v1059
        %v1061 = vpop.f32.mrb[0].mxu0
        %v1062 = vadd.f32 %v626, %v1061
        %v1063 = vpop.f32.mrb[0].mxu0
        %v1064 = vadd.f32 %v630, %v1063
        %1065 = vmatprep.mubr.bf16.mxu0 0
        %1066 = vmatmul.mubr.bf16.gmra.mrb[0].mxu0 %v554
        %v1067 = vpop.f32.mrb[0].mxu0
        %v1068 = vadd.f32 %v626, %v1067
        %v1069 = vpop.f32.mrb[0].mxu0
        %v1070 = vadd.f32 %v630, %v1069
        %v1071 = vpop.f32.mrb[0].mxu0
        %v1072 = vadd.f32 %v626, %v1071
        %v1073 = vpop.f32.mrb[0].mxu0
        %v1074 = vadd.f32 %v630, %v1073
        %1075 = vmatprep.mubr.bf16.mxu0 0
        %1076 = vmatmul.mubr.bf16.gmra.mrb[0].mxu0 %v555
        %v1077 = vpop.f32.mrb[0].mxu0
        %v1078 = vadd.f32 %v626, %v1077
        %v1079 = vpop.f32.mrb[0].mxu0
        %v1080 = vadd.f32 %v630, %v1079
        %v1081 = vpop.f32.mrb[0].mxu0
        %v1082 = vadd.f32 %v626, %v1081
        %v1083 = vpop.f32.mrb[0].mxu0
        %v1084 = vadd.f32 %v630, %v1083
        %1085 = vmatprep.mubr.bf16.mxu0 0
        %1086 = vmatmul.mubr.bf16.gmra.mrb[0].mxu0 %v556
        %v1087 = vpop.f32.mrb[0].mxu0
        %v1088 = vadd.f32 %v626, %v1087
        %v1089 = vpop.f32.mrb[0].mxu0
        %v1090 = vadd.f32 %v630, %v1089
        %v1091 = vpop.f32.mrb[0].mxu0
        %v1092 = vadd.f32 %v626, %v1091
        %v1093 = vpop.f32.mrb[0].mxu0
        %v1094 = vadd.f32 %v630, %v1093
        %1095 = vdwg.mxu0
        %1096 = vmatprep.subr.bf16.mxu0 %v858
        %1097 = vmatpush1.bf16.msra.mxu0 %v857
        %1098 = vmatprep.subr.bf16.mxu0 %v866
        %1099 = vmatpush1.bf16.msra.mxu0 %v865
        %1100 = vmatprep.subr.bf16.mxu0 %v874
        %1101 = vmatpush1.bf16.msra.mxu0 %v873
        %1102 = vmatprep.subr.bf16.mxu0 %v882
        %1103 = vmatpush1.bf16.msra.mxu0 %v881
        %1104 = vmatprep.subr.bf16.mxu0 %v890
        %1105 = vmatpush1.bf16.msra.mxu0 %v889
        %1106 = vmatprep.subr.bf16.mxu0 %v898
        %1107 = vmatpush1.bf16.msra.mxu0 %v897
        %1108 = vmatprep.subr.bf16.mxu0 %v906
        %1109 = vmatpush1.bf16.msra.mxu0 %v905
        %1110 = vmatprep.subr.bf16.mxu0 %v914
        %1111 = vmatpush1.bf16.msra.mxu0 %v913
        %1112 = vmatprep.subr.bf16.mxu0 0
        %1113 = vmatpush1.bf16.msra.mxu0 0
        %1114 = vmatprep.subr.bf16.mxu0 0
        %1115 = vmatpush1.bf16.msra.mxu0 0
        %1116 = vmatprep.subr.bf16.mxu0 0
        %1117 = vmatpush1.bf16.msra.mxu0 0
        %1118 = vmatprep.subr.bf16.mxu0 0
        %1119 = vmatpush1.bf16.msra.mxu0 0
        %1120 = vmatprep.subr.bf16.mxu0 0
        %1121 = vmatpush1.bf16.msra.mxu0 0
        %1122 = vmatprep.subr.bf16.mxu0 0
        %1123 = vmatpush1.bf16.msra.mxu0 0
        %1124 = vmatprep.subr.bf16.mxu0 0
        %1125 = vmatpush1.bf16.msra.mxu0 0
        %1126 = vmatprep.subr.bf16.mxu0 0
        %1127 = vmatpush1.bf16.msra.mxu0 0
        %1128 = vmatprep.mubr.bf16.mxu0 0
        %1129 = vmatmul.mubr.bf16.gmra.mrb[0].mxu0 %v549
        %v1130 = vpop.f32.mrb[0].mxu0
        %v1131 = vadd.f32 %v634, %v1130
        %v1132 = vpop.f32.mrb[0].mxu0
        %v1133 = vadd.f32 %v638, %v1132
        %v1134 = vpop.f32.mrb[0].mxu0
        %v1135 = vadd.f32 %v634, %v1134
        %v1136 = vpop.f32.mrb[0].mxu0
        %v1137 = vadd.f32 %v638, %v1136
        %1138 = vmatprep.mubr.bf16.mxu0 0
        %1139 = vmatmul.mubr.bf16.gmra.mrb[0].mxu0 %v550
        %v1140 = vpop.f32.mrb[0].mxu0
        %v1141 = vadd.f32 %v634, %v1140
        %v1142 = vpop.f32.mrb[0].mxu0
        %v1143 = vadd.f32 %v638, %v1142
        %v1144 = vpop.f32.mrb[0].mxu0
        %v1145 = vadd.f32 %v634, %v1144
        %v1146 = vpop.f32.mrb[0].mxu0
        %v1147 = vadd.f32 %v638, %v1146
        %1148 = vmatprep.mubr.bf16.mxu0 0
        %1149 = vmatmul.mubr.bf16.gmra.mrb[0].mxu0 %v551
        %v1150 = vpop.f32.mrb[0].mxu0
        %v1151 = vadd.f32 %v634, %v1150
        %v1152 = vpop.f32.mrb[0].mxu0
        %v1153 = vadd.f32 %v638, %v1152
        %v1154 = vpop.f32.mrb[0].mxu0
        %v1155 = vadd.f32 %v634, %v1154
        %v1156 = vpop.f32.mrb[0].mxu0
        %v1157 = vadd.f32 %v638, %v1156
        %1158 = vmatprep.mubr.bf16.mxu0 0
        %1159 = vmatmul.mubr.bf16.gmra.mrb[0].mxu0 %v552
        %v1160 = vpop.f32.mrb[0].mxu0
        %v1161 = vadd.f32 %v634, %v1160
        %v1162 = vpop.f32.mrb[0].mxu0
        %v1163 = vadd.f32 %v638, %v1162
        %v1164 = vpop.f32.mrb[0].mxu0
        %v1165 = vadd.f32 %v634, %v1164
        %v1166 = vpop.f32.mrb[0].mxu0
        %v1167 = vadd.f32 %v638, %v1166
        %1168 = vmatprep.mubr.bf16.mxu0 0
        %1169 = vmatmul.mubr.bf16.gmra.mrb[0].mxu0 %v553
        %v1170 = vpop.f32.mrb[0].mxu0
        %v1171 = vadd.f32 %v634, %v1170
        %v1172 = vpop.f32.mrb[0].mxu0
        %v1173 = vadd.f32 %v638, %v1172
        %v1174 = vpop.f32.mrb[0].mxu0
        %v1175 = vadd.f32 %v634, %v1174
        %v1176 = vpop.f32.mrb[0].mxu0
        %v1177 = vadd.f32 %v638, %v1176
        %1178 = vmatprep.mubr.bf16.mxu0 0
        %1179 = vmatmul.mubr.bf16.gmra.mrb[0].mxu0 %v554
        %v1180 = vpop.f32.mrb[0].mxu0
        %v1181 = vadd.f32 %v634, %v1180
        %v1182 = vpop.f32.mrb[0].mxu0
        %v1183 = vadd.f32 %v638, %v1182
        %v1184 = vpop.f32.mrb[0].mxu0
        %v1185 = vadd.f32 %v634, %v1184
        %v1186 = vpop.f32.mrb[0].mxu0
        %v1187 = vadd.f32 %v638, %v1186
        %1188 = vmatprep.mubr.bf16.mxu0 0
        %1189 = vmatmul.mubr.bf16.gmra.mrb[0].mxu0 %v555
        %v1190 = vpop.f32.mrb[0].mxu0
        %v1191 = vadd.f32 %v634, %v1190
        %v1192 = vpop.f32.mrb[0].mxu0
        %v1193 = vadd.f32 %v638, %v1192
        %v1194 = vpop.f32.mrb[0].mxu0
        %v1195 = vadd.f32 %v634, %v1194
        %v1196 = vpop.f32.mrb[0].mxu0
        %v1197 = vadd.f32 %v638, %v1196
        %1198 = vmatprep.mubr.bf16.mxu0 0
        %1199 = vmatmul.mubr.bf16.gmra.mrb[0].mxu0 %v556
        %v1200 = vpop.f32.mrb[0].mxu0
        %v1201 = vadd.f32 %v634, %v1200
        %v1202 = vpop.f32.mrb[0].mxu0
        %v1203 = vadd.f32 %v638, %v1202
        %v1204 = vpop.f32.mrb[0].mxu0
        %v1205 = vadd.f32 %v634, %v1204
        %v1206 = vpop.f32.mrb[0].mxu0
        %v1207 = vadd.f32 %v638, %v1206
        %1208 = vdwg.mxu0
        %1209 = vmatprep.subr.bf16.mxu0 %v860
        %1210 = vmatpush1.bf16.msra.mxu0 %v859
        %1211 = vmatprep.subr.bf16.mxu0 %v868
        %1212 = vmatpush1.bf16.msra.mxu0 %v867
        %1213 = vmatprep.subr.bf16.mxu0 %v876
        %1214 = vmatpush1.bf16.msra.mxu0 %v875
        %1215 = vmatprep.subr.bf16.mxu0 %v884
        %1216 = vmatpush1.bf16.msra.mxu0 %v883
        %1217 = vmatprep.subr.bf16.mxu0 %v892
        %1218 = vmatpush1.bf16.msra.mxu0 %v891
        %1219 = vmatprep.subr.bf16.mxu0 %v900
        %1220 = vmatpush1.bf16.msra.mxu0 %v899
        %1221 = vmatprep.subr.bf16.mxu0 %v908
        %1222 = vmatpush1.bf16.msra.mxu0 %v907
        %1223 = vmatprep.subr.bf16.mxu0 %v916
        %1224 = vmatpush1.bf16.msra.mxu0 %v915
        %1225 = vmatprep.subr.bf16.mxu0 0
        %1226 = vmatpush1.bf16.msra.mxu0 0
        %1227 = vmatprep.subr.bf16.mxu0 0
        %1228 = vmatpush1.bf16.msra.mxu0 0
        %1229 = vmatprep.subr.bf16.mxu0 0
        %1230 = vmatpush1.bf16.msra.mxu0 0
        %1231 = vmatprep.subr.bf16.mxu0 0
        %1232 = vmatpush1.bf16.msra.mxu0 0
        %1233 = vmatprep.subr.bf16.mxu0 0
        %1234 = vmatpush1.bf16.msra.mxu0 0
        %1235 = vmatprep.subr.bf16.mxu0 0
        %1236 = vmatpush1.bf16.msra.mxu0 0
        %1237 = vmatprep.subr.bf16.mxu0 0
        %1238 = vmatpush1.bf16.msra.mxu0 0
        %1239 = vmatprep.subr.bf16.mxu0 0
        %1240 = vmatpush1.bf16.msra.mxu0 0
        %1241 = vmatprep.mubr.bf16.mxu0 0
        %1242 = vmatmul.mubr.bf16.gmra.mrb[0].mxu0 %v549
        %v1243 = vpop.f32.mrb[0].mxu0
        %v1244 = vadd.f32 %v642, %v1243
        %v1245 = vpop.f32.mrb[0].mxu0
        %v1246 = vadd.f32 %v646, %v1245
        %v1247 = vpop.f32.mrb[0].mxu0
        %v1248 = vadd.f32 %v642, %v1247
        %v1249 = vpop.f32.mrb[0].mxu0
        %v1250 = vadd.f32 %v646, %v1249
        %1251 = vmatprep.mubr.bf16.mxu0 0
        %1252 = vmatmul.mubr.bf16.gmra.mrb[0].mxu0 %v550
        %v1253 = vpop.f32.mrb[0].mxu0
        %v1254 = vadd.f32 %v642, %v1253
        %v1255 = vpop.f32.mrb[0].mxu0
        %v1256 = vadd.f32 %v646, %v1255
        %v1257 = vpop.f32.mrb[0].mxu0
        %v1258 = vadd.f32 %v642, %v1257
        %v1259 = vpop.f32.mrb[0].mxu0
        %v1260 = vadd.f32 %v646, %v1259
        %1261 = vmatprep.mubr.bf16.mxu0 0
        %1262 = vmatmul.mubr.bf16.gmra.mrb[0].mxu0 %v551
        %v1263 = vpop.f32.mrb[0].mxu0
        %v1264 = vadd.f32 %v642, %v1263
        %v1265 = vpop.f32.mrb[0].mxu0
        %v1266 = vadd.f32 %v646, %v1265
        %v1267 = vpop.f32.mrb[0].mxu0
        %v1268 = vadd.f32 %v642, %v1267
        %v1269 = vpop.f32.mrb[0].mxu0
        %v1270 = vadd.f32 %v646, %v1269
        %1271 = vmatprep.mubr.bf16.mxu0 0
        %1272 = vmatmul.mubr.bf16.gmra.mrb[0].mxu0 %v552
        %v1273 = vpop.f32.mrb[0].mxu0
        %v1274 = vadd.f32 %v642, %v1273
        %v1275 = vpop.f32.mrb[0].mxu0
        %v1276 = vadd.f32 %v646, %v1275
        %v1277 = vpop.f32.mrb[0].mxu0
        %v1278 = vadd.f32 %v642, %v1277
        %v1279 = vpop.f32.mrb[0].mxu0
        %v1280 = vadd.f32 %v646, %v1279
        %1281 = vmatprep.mubr.bf16.mxu0 0
        %1282 = vmatmul.mubr.bf16.gmra.mrb[0].mxu0 %v553
        %v1283 = vpop.f32.mrb[0].mxu0
        %v1284 = vadd.f32 %v642, %v1283
        %v1285 = vpop.f32.mrb[0].mxu0
        %v1286 = vadd.f32 %v646, %v1285
        %v1287 = vpop.f32.mrb[0].mxu0
        %v1288 = vadd.f32 %v642, %v1287
        %v1289 = vpop.f32.mrb[0].mxu0
        %v1290 = vadd.f32 %v646, %v1289
        %1291 = vmatprep.mubr.bf16.mxu0 0
        %1292 = vmatmul.mubr.bf16.gmra.mrb[0].mxu0 %v554
        %v1293 = vpop.f32.mrb[0].mxu0
        %v1294 = vadd.f32 %v642, %v1293
        %v1295 = vpop.f32.mrb[0].mxu0
        %v1296 = vadd.f32 %v646, %v1295
        %v1297 = vpop.f32.mrb[0].mxu0
        %v1298 = vadd.f32 %v642, %v1297
        %v1299 = vpop.f32.mrb[0].mxu0
        %v1300 = vadd.f32 %v646, %v1299
        %1301 = vmatprep.mubr.bf16.mxu0 0
        %1302 = vmatmul.mubr.bf16.gmra.mrb[0].mxu0 %v555
        %v1303 = vpop.f32.mrb[0].mxu0
        %v1304 = vadd.f32 %v642, %v1303
        %v1305 = vpop.f32.mrb[0].mxu0
        %v1306 = vadd.f32 %v646, %v1305
        %v1307 = vpop.f32.mrb[0].mxu0
        %v1308 = vadd.f32 %v642, %v1307
        %v1309 = vpop.f32.mrb[0].mxu0
        %v1310 = vadd.f32 %v646, %v1309
        %1311 = vmatprep.mubr.bf16.mxu0 0
        %1312 = vmatmul.mubr.bf16.gmra.mrb[0].mxu0 %v556
        %v1313 = vpop.f32.mrb[0].mxu0
        %v1314 = vadd.f32 %v642, %v1313
        %v1315 = vpop.f32.mrb[0].mxu0
        %v1316 = vadd.f32 %v646, %v1315
        %v1317 = vpop.f32.mrb[0].mxu0
        %v1318 = vadd.f32 %v642, %v1317
        %v1319 = vpop.f32.mrb[0].mxu0
        %v1320 = vadd.f32 %v646, %v1319
        %1321 = vdwg.mxu0
        %1322 = vmatprep.subr.bf16.mxu0 %v862
        %1323 = vmatpush1.bf16.msra.mxu0 %v861
        %1324 = vmatprep.subr.bf16.mxu0 %v870
        %1325 = vmatpush1.bf16.msra.mxu0 %v869
        %1326 = vmatprep.subr.bf16.mxu0 %v878
        %1327 = vmatpush1.bf16.msra.mxu0 %v877
        %1328 = vmatprep.subr.bf16.mxu0 %v886
        %1329 = vmatpush1.bf16.msra.mxu0 %v885
        %1330 = vmatprep.subr.bf16.mxu0 %v894
        %1331 = vmatpush1.bf16.msra.mxu0 %v893
        %1332 = vmatprep.subr.bf16.mxu0 %v902
        %1333 = vmatpush1.bf16.msra.mxu0 %v901
        %1334 = vmatprep.subr.bf16.mxu0 %v910
        %1335 = vmatpush1.bf16.msra.mxu0 %v909
        %1336 = vmatprep.subr.bf16.mxu0 %v918
        %1337 = vmatpush1.bf16.msra.mxu0 %v917
        %1338 = vmatprep.subr.bf16.mxu0 0
        %1339 = vmatpush1.bf16.msra.mxu0 0
        %1340 = vmatprep.subr.bf16.mxu0 0
        %1341 = vmatpush1.bf16.msra.mxu0 0
        %1342 = vmatprep.subr.bf16.mxu0 0
        %1343 = vmatpush1.bf16.msra.mxu0 0
        %1344 = vmatprep.subr.bf16.mxu0 0
        %1345 = vmatpush1.bf16.msra.mxu0 0
        %1346 = vmatprep.subr.bf16.mxu0 0
        %1347 = vmatpush1.bf16.msra.mxu0 0
        %1348 = vmatprep.subr.bf16.mxu0 0
        %1349 = vmatpush1.bf16.msra.mxu0 0
        %1350 = vmatprep.subr.bf16.mxu0 0
        %1351 = vmatpush1.bf16.msra.mxu0 0
        %1352 = vmatprep.subr.bf16.mxu0 0
        %1353 = vmatpush1.bf16.msra.mxu0 0
        %1354 = vmatprep.mubr.bf16.mxu0 0
        %1355 = vmatmul.mubr.bf16.gmra.mrb[0].mxu0 %v549
        %v1356 = vpop.f32.mrb[0].mxu0
        %v1357 = vadd.f32 %v650, %v1356
        %v1358 = vpop.f32.mrb[0].mxu0
        %v1359 = vadd.f32 %v654, %v1358
        %v1360 = vpop.f32.mrb[0].mxu0
        %v1361 = vadd.f32 %v650, %v1360
        %v1362 = vpop.f32.mrb[0].mxu0
        %v1363 = vadd.f32 %v654, %v1362
        %1364 = vmatprep.mubr.bf16.mxu0 0
        %1365 = vmatmul.mubr.bf16.gmra.mrb[0].mxu0 %v550
        %v1366 = vpop.f32.mrb[0].mxu0
        %v1367 = vadd.f32 %v650, %v1366
        %v1368 = vpop.f32.mrb[0].mxu0
        %v1369 = vadd.f32 %v654, %v1368
        %v1370 = vpop.f32.mrb[0].mxu0
        %v1371 = vadd.f32 %v650, %v1370
        %v1372 = vpop.f32.mrb[0].mxu0
        %v1373 = vadd.f32 %v654, %v1372
        %1374 = vmatprep.mubr.bf16.mxu0 0
        %1375 = vmatmul.mubr.bf16.gmra.mrb[0].mxu0 %v551
        %v1376 = vpop.f32.mrb[0].mxu0
        %v1377 = vadd.f32 %v650, %v1376
        %v1378 = vpop.f32.mrb[0].mxu0
        %v1379 = vadd.f32 %v654, %v1378
        %v1380 = vpop.f32.mrb[0].mxu0
        %v1381 = vadd.f32 %v650, %v1380
        %v1382 = vpop.f32.mrb[0].mxu0
        %v1383 = vadd.f32 %v654, %v1382
        %1384 = vmatprep.mubr.bf16.mxu0 0
        %1385 = vmatmul.mubr.bf16.gmra.mrb[0].mxu0 %v552
        %v1386 = vpop.f32.mrb[0].mxu0
        %v1387 = vadd.f32 %v650, %v1386
        %v1388 = vpop.f32.mrb[0].mxu0
        %v1389 = vadd.f32 %v654, %v1388
        %v1390 = vpop.f32.mrb[0].mxu0
        %v1391 = vadd.f32 %v650, %v1390
        %v1392 = vpop.f32.mrb[0].mxu0
        %v1393 = vadd.f32 %v654, %v1392
        %1394 = vmatprep.mubr.bf16.mxu0 0
        %1395 = vmatmul.mubr.bf16.gmra.mrb[0].mxu0 %v553
        %v1396 = vpop.f32.mrb[0].mxu0
        %v1397 = vadd.f32 %v650, %v1396
        %v1398 = vpop.f32.mrb[0].mxu0
        %v1399 = vadd.f32 %v654, %v1398
        %v1400 = vpop.f32.mrb[0].mxu0
        %v1401 = vadd.f32 %v650, %v1400
        %v1402 = vpop.f32.mrb[0].mxu0
        %v1403 = vadd.f32 %v654, %v1402
        %1404 = vmatprep.mubr.bf16.mxu0 0
        %1405 = vmatmul.mubr.bf16.gmra.mrb[0].mxu0 %v554
        %v1406 = vpop.f32.mrb[0].mxu0
        %v1407 = vadd.f32 %v650, %v1406
        %v1408 = vpop.f32.mrb[0].mxu0
        %v1409 = vadd.f32 %v654, %v1408
        %v1410 = vpop.f32.mrb[0].mxu0
        %v1411 = vadd.f32 %v650, %v1410
        %v1412 = vpop.f32.mrb[0].mxu0
        %v1413 = vadd.f32 %v654, %v1412
        %1414 = vmatprep.mubr.bf16.mxu0 0
        %1415 = vmatmul.mubr.bf16.gmra.mrb[0].mxu0 %v555
        %v1416 = vpop.f32.mrb[0].mxu0
        %v1417 = vadd.f32 %v650, %v1416
        %v1418 = vpop.f32.mrb[0].mxu0
        %v1419 = vadd.f32 %v654, %v1418
        %v1420 = vpop.f32.mrb[0].mxu0
        %v1421 = vadd.f32 %v650, %v1420
        %v1422 = vpop.f32.mrb[0].mxu0
        %v1423 = vadd.f32 %v654, %v1422
        %1424 = vmatprep.mubr.bf16.mxu0 0
        %1425 = vmatmul.mubr.bf16.gmra.mrb[0].mxu0 %v556
        %v1426 = vpop.f32.mrb[0].mxu0
        %v1427 = vadd.f32 %v650, %v1426
        %v1428 = vpop.f32.mrb[0].mxu0
        %v1429 = vadd.f32 %v654, %v1428
        %v1430 = vpop.f32.mrb[0].mxu0
        %v1431 = vadd.f32 %v650, %v1430
        %v1432 = vpop.f32.mrb[0].mxu0
        %v1433 = vadd.f32 %v654, %v1432
        %1434 = vdwg.mxu0
        %1435 = vst [vmem:[%s429] sm:$0xff] %v1018
        %1436 = vst [vmem:[%s429 + $0x8] sm:$0xff] %v1020
        %1437 = vst [vmem:[%s429 + $0x10] sm:$0xff] %v1131
        %1438 = vst [vmem:[%s429 + $0x18] sm:$0xff] %v1133
        %1439 = vst [vmem:[%s429 + $0x20] sm:$0xff] %v1244
        %1440 = vst [vmem:[%s429 + $0x28] sm:$0xff] %v1246
        %1441 = vst [vmem:[%s429 + $0x30] sm:$0xff] %v1357
        %1442 = vst [vmem:[%s429 + $0x38] sm:$0xff] %v1359
        %1443 = vst [vmem:[%s429 + $0x40] sm:$0xff] %v1022
        %1444 = vst [vmem:[%s429 + $0x48] sm:$0xff] %v1024
        %1445 = vst [vmem:[%s429 + $0x50] sm:$0xff] %v1135
        %1446 = vst [vmem:[%s429 + $0x58] sm:$0xff] %v1137
        %1447 = vst [vmem:[%s429 + $0x60] sm:$0xff] %v1248
        %1448 = vst [vmem:[%s429 + $0x68] sm:$0xff] %v1250
        %1449 = vst [vmem:[%s429 + $0x70] sm:$0xff] %v1361
        %1450 = vst [vmem:[%s429 + $0x78] sm:$0xff] %v1363
        %1451 = vst [vmem:[%s429 + $0x80] sm:$0xff] %v1028
        %1452 = vst [vmem:[%s429 + $0x88] sm:$0xff] %v1030
        %1453 = vst [vmem:[%s429 + $0x90] sm:$0xff] %v1141
        %1454 = vst [vmem:[%s429 + $0x98] sm:$0xff] %v1143
        %1455 = vst [vmem:[%s429 + $0xa0] sm:$0xff] %v1254
        %1456 = vst [vmem:[%s429 + $0xa8] sm:$0xff] %v1256
        %1457 = vst [vmem:[%s429 + $0xb0] sm:$0xff] %v1367
        %1458 = vst [vmem:[%s429 + $0xb8] sm:$0xff] %v1369
        %1459 = vst [vmem:[%s429 + $0xc0] sm:$0xff] %v1032
        %1460 = vst [vmem:[%s429 + $0xc8] sm:$0xff] %v1034
        %1461 = vst [vmem:[%s429 + $0xd0] sm:$0xff] %v1145
        %1462 = vst [vmem:[%s429 + $0xd8] sm:$0xff] %v1147
        %1463 = vst [vmem:[%s429 + $0xe0] sm:$0xff] %v1258
        %1464 = vst [vmem:[%s429 + $0xe8] sm:$0xff] %v1260
        %1465 = vst [vmem:[%s429 + $0xf0] sm:$0xff] %v1371
        %1466 = vst [vmem:[%s429 + $0xf8] sm:$0xff] %v1373
        %1467 = vst [vmem:[%s429 + $0x100] sm:$0xff] %v1038
        %1468 = vst [vmem:[%s429 + $0x108] sm:$0xff] %v1040
        %1469 = vst [vmem:[%s429 + $0x110] sm:$0xff] %v1151
        %1470 = vst [vmem:[%s429 + $0x118] sm:$0xff] %v1153
        %1471 = vst [vmem:[%s429 + $0x120] sm:$0xff] %v1264
        %1472 = vst [vmem:[%s429 + $0x128] sm:$0xff] %v1266
        %1473 = vst [vmem:[%s429 + $0x130] sm:$0xff] %v1377
        %1474 = vst [vmem:[%s429 + $0x138] sm:$0xff] %v1379
        %1475 = vst [vmem:[%s429 + $0x140] sm:$0xff] %v1042
        %1476 = vst [vmem:[%s429 + $0x148] sm:$0xff] %v1044
        %1477 = vst [vmem:[%s429 + $0x150] sm:$0xff] %v1155
        %1478 = vst [vmem:[%s429 + $0x158] sm:$0xff] %v1157
        %1479 = vst [vmem:[%s429 + $0x160] sm:$0xff] %v1268
        %1480 = vst [vmem:[%s429 + $0x168] sm:$0xff] %v1270
        %1481 = vst [vmem:[%s429 + $0x170] sm:$0xff] %v1381
        %1482 = vst [vmem:[%s429 + $0x178] sm:$0xff] %v1383
        %1483 = vst [vmem:[%s429 + $0x180] sm:$0xff] %v1048
        %1484 = vst [vmem:[%s429 + $0x188] sm:$0xff] %v1050
        %1485 = vst [vmem:[%s429 + $0x190] sm:$0xff] %v1161
        %1486 = vst [vmem:[%s429 + $0x198] sm:$0xff] %v1163
        %1487 = vst [vmem:[%s429 + $0x1a0] sm:$0xff] %v1274
        %1488 = vst [vmem:[%s429 + $0x1a8] sm:$0xff] %v1276
        %1489 = vst [vmem:[%s429 + $0x1b0] sm:$0xff] %v1387
        %1490 = vst [vmem:[%s429 + $0x1b8] sm:$0xff] %v1389
        %1491 = vst [vmem:[%s429 + $0x1c0] sm:$0xff] %v1052
        %1492 = vst [vmem:[%s429 + $0x1c8] sm:$0xff] %v1054
        %1493 = vst [vmem:[%s429 + $0x1d0] sm:$0xff] %v1165
        %1494 = vst [vmem:[%s429 + $0x1d8] sm:$0xff] %v1167
        %1495 = vst [vmem:[%s429 + $0x1e0] sm:$0xff] %v1278
        %1496 = vst [vmem:[%s429 + $0x1e8] sm:$0xff] %v1280
        %1497 = vst [vmem:[%s429 + $0x1f0] sm:$0xff] %v1391
        %1498 = vst [vmem:[%s429 + $0x1f8] sm:$0xff] %v1393
        %1499 = vst [vmem:[%s429 + $0x200] sm:$0xff] %v1058
        %1500 = vst [vmem:[%s429 + $0x208] sm:$0xff] %v1060
        %1501 = vst [vmem:[%s429 + $0x210] sm:$0xff] %v1171
        %1502 = vst [vmem:[%s429 + $0x218] sm:$0xff] %v1173
        %1503 = vst [vmem:[%s429 + $0x220] sm:$0xff] %v1284
        %1504 = vst [vmem:[%s429 + $0x228] sm:$0xff] %v1286
        %1505 = vst [vmem:[%s429 + $0x230] sm:$0xff] %v1397
        %1506 = vst [vmem:[%s429 + $0x238] sm:$0xff] %v1399
        %1507 = vst [vmem:[%s429 + $0x240] sm:$0xff] %v1062
        %1508 = vst [vmem:[%s429 + $0x248] sm:$0xff] %v1064
        %1509 = vst [vmem:[%s429 + $0x250] sm:$0xff] %v1175
        %1510 = vst [vmem:[%s429 + $0x258] sm:$0xff] %v1177
        %1511 = vst [vmem:[%s429 + $0x260] sm:$0xff] %v1288
        %1512 = vst [vmem:[%s429 + $0x268] sm:$0xff] %v1290
        %1513 = vst [vmem:[%s429 + $0x270] sm:$0xff] %v1401
        %1514 = vst [vmem:[%s429 + $0x278] sm:$0xff] %v1403
        %1515 = vst [vmem:[%s429 + $0x280] sm:$0xff] %v1068
        %1516 = vst [vmem:[%s429 + $0x288] sm:$0xff] %v1070
        %1517 = vst [vmem:[%s429 + $0x290] sm:$0xff] %v1181
        %1518 = vst [vmem:[%s429 + $0x298] sm:$0xff] %v1183
        %1519 = vst [vmem:[%s429 + $0x2a0] sm:$0xff] %v1294
        %1520 = vst [vmem:[%s429 + $0x2a8] sm:$0xff] %v1296
        %1521 = vst [vmem:[%s429 + $0x2b0] sm:$0xff] %v1407
        %1522 = vst [vmem:[%s429 + $0x2b8] sm:$0xff] %v1409
        %1523 = vst [vmem:[%s429 + $0x2c0] sm:$0xff] %v1072
        %1524 = vst [vmem:[%s429 + $0x2c8] sm:$0xff] %v1074
        %1525 = vst [vmem:[%s429 + $0x2d0] sm:$0xff] %v1185
        %1526 = vst [vmem:[%s429 + $0x2d8] sm:$0xff] %v1187
        %1527 = vst [vmem:[%s429 + $0x2e0] sm:$0xff] %v1298
        %1528 = vst [vmem:[%s429 + $0x2e8] sm:$0xff] %v1300
        %1529 = vst [vmem:[%s429 + $0x2f0] sm:$0xff] %v1411
        %1530 = vst [vmem:[%s429 + $0x2f8] sm:$0xff] %v1413
        %1531 = vst [vmem:[%s429 + $0x300] sm:$0xff] %v1078
        %1532 = vst [vmem:[%s429 + $0x308] sm:$0xff] %v1080
        %1533 = vst [vmem:[%s429 + $0x310] sm:$0xff] %v1191
        %1534 = vst [vmem:[%s429 + $0x318] sm:$0xff] %v1193
        %1535 = vst [vmem:[%s429 + $0x320] sm:$0xff] %v1304
        %1536 = vst [vmem:[%s429 + $0x328] sm:$0xff] %v1306
        %1537 = vst [vmem:[%s429 + $0x330] sm:$0xff] %v1417
        %1538 = vst [vmem:[%s429 + $0x338] sm:$0xff] %v1419
        %1539 = vst [vmem:[%s429 + $0x340] sm:$0xff] %v1082
        %1540 = vst [vmem:[%s429 + $0x348] sm:$0xff] %v1084
        %1541 = vst [vmem:[%s429 + $0x350] sm:$0xff] %v1195
        %1542 = vst [vmem:[%s429 + $0x358] sm:$0xff] %v1197
        %1543 = vst [vmem:[%s429 + $0x360] sm:$0xff] %v1308
        %1544 = vst [vmem:[%s429 + $0x368] sm:$0xff] %v1310
        %1545 = vst [vmem:[%s429 + $0x370] sm:$0xff] %v1421
        %1546 = vst [vmem:[%s429 + $0x378] sm:$0xff] %v1423
        %1547 = vst [vmem:[%s429 + $0x380] sm:$0xff] %v1088
        %1548 = vst [vmem:[%s429 + $0x388] sm:$0xff] %v1090
        %1549 = vst [vmem:[%s429 + $0x390] sm:$0xff] %v1201
        %1550 = vst [vmem:[%s429 + $0x398] sm:$0xff] %v1203
        %1551 = vst [vmem:[%s429 + $0x3a0] sm:$0xff] %v1314
        %1552 = vst [vmem:[%s429 + $0x3a8] sm:$0xff] %v1316
        %1553 = vst [vmem:[%s429 + $0x3b0] sm:$0xff] %v1427
        %1554 = vst [vmem:[%s429 + $0x3b8] sm:$0xff] %v1429
        %1555 = vst [vmem:[%s429 + $0x3c0] sm:$0xff] %v1092
        %1556 = vst [vmem:[%s429 + $0x3c8] sm:$0xff] %v1094
        %1557 = vst [vmem:[%s429 + $0x3d0] sm:$0xff] %v1205
        %1558 = vst [vmem:[%s429 + $0x3d8] sm:$0xff] %v1207
        %1559 = vst [vmem:[%s429 + $0x3e0] sm:$0xff] %v1318
        %1560 = vst [vmem:[%s429 + $0x3e8] sm:$0xff] %v1320
        %1561 = vst [vmem:[%s429 + $0x3f0] sm:$0xff] %v1431
        %1562 = vst [vmem:[%s429 + $0x3f8] sm:$0xff] %v1433
        %v1563 = vld [vmem:[#allocation3] sm:$0xff]
        %v1564 = vld [vmem:[#allocation3 + $0x8] sm:$0xff]
        %v1565 = vld [vmem:[#allocation3 + $0x10] sm:$0xff]
        %v1566 = vld [vmem:[#allocation3 + $0x18] sm:$0xff]
        %v1567 = vld [vmem:[#allocation3 + $0x20] sm:$0xff]
        %v1568 = vld [vmem:[#allocation3 + $0x28] sm:$0xff]
        %v1569 = vld [vmem:[#allocation3 + $0x30] sm:$0xff]
        %v1570 = vld [vmem:[#allocation3 + $0x38] sm:$0xff]
        %v1571 = vld [vmem:[#allocation3 + $0x40] sm:$0xff]
        %v1572 = vld [vmem:[#allocation3 + $0x48] sm:$0xff]
        %v1573 = vld [vmem:[#allocation3 + $0x50] sm:$0xff]
        %v1574 = vld [vmem:[#allocation3 + $0x58] sm:$0xff]
        %v1575 = vld [vmem:[#allocation3 + $0x60] sm:$0xff]
        %v1576 = vld [vmem:[#allocation3 + $0x68] sm:$0xff]
        %v1577 = vld [vmem:[#allocation3 + $0x70] sm:$0xff]
        %v1578 = vld [vmem:[#allocation3 + $0x78] sm:$0xff]
        %v1579 = vmax.f32 %v1018, %v1020
        %v1580 = vmax.f32 %v1579, %v1131
        %v1581 = vmax.f32 %v1580, %v1133
        %v1582 = vmax.f32 %v1581, %v1244
        %v1583 = vmax.f32 %v1582, %v1246
        %v1584 = vmax.f32 %v1583, %v1357
        %v1585 = vmax.f32 %v1584, %v1359
        %1586 = vmax.xlane.f32.xlu0 %v1585
        %v1587 = vpop.xlane.xlu0 %1586
        %v1588 = vmax.f32 %v1022, %v1024
        %v1589 = vmax.f32 %v1588, %v1135
        %v1590 = vmax.f32 %v1589, %v1137
        %v1591 = vmax.f32 %v1590, %v1248
        %v1592 = vmax.f32 %v1591, %v1250
        %v1593 = vmax.f32 %v1592, %v1361
        %v1594 = vmax.f32 %v1593, %v1363
        %1595 = vmax.xlane.f32.xlu0 %v1594
        %v1596 = vpop.xlane.xlu0 %1595
        %v1597 = vmax.f32 %v1028, %v1030
        %v1598 = vmax.f32 %v1597, %v1141
        %v1599 = vmax.f32 %v1598, %v1143
        %v1600 = vmax.f32 %v1599, %v1254
        %v1601 = vmax.f32 %v1600, %v1256
        %v1602 = vmax.f32 %v1601, %v1367
        %v1603 = vmax.f32 %v1602, %v1369
        %1604 = vmax.xlane.f32.xlu0 %v1603
        %v1605 = vpop.xlane.xlu0 %1604
        %v1606 = vmax.f32 %v1032, %v1034
        %v1607 = vmax.f32 %v1606, %v1145
        %v1608 = vmax.f32 %v1607, %v1147
        %v1609 = vmax.f32 %v1608, %v1258
        %v1610 = vmax.f32 %v1609, %v1260
        %v1611 = vmax.f32 %v1610, %v1371
        %v1612 = vmax.f32 %v1611, %v1373
        %1613 = vmax.xlane.f32.xlu0 %v1612
        %v1614 = vpop.xlane.xlu0 %1613
        %v1615 = vmax.f32 %v1038, %v1040
        %v1616 = vmax.f32 %v1615, %v1151
        %v1617 = vmax.f32 %v1616, %v1153
        %v1618 = vmax.f32 %v1617, %v1264
        %v1619 = vmax.f32 %v1618, %v1266
        %v1620 = vmax.f32 %v1619, %v1377
        %v1621 = vmax.f32 %v1620, %v1379
        %1622 = vmax.xlane.f32.xlu0 %v1621
        %v1623 = vpop.xlane.xlu0 %1622
        %v1624 = vmax.f32 %v1042, %v1044
        %v1625 = vmax.f32 %v1624, %v1155
        %v1626 = vmax.f32 %v1625, %v1157
        %v1627 = vmax.f32 %v1626, %v1268
        %v1628 = vmax.f32 %v1627, %v1270
        %v1629 = vmax.f32 %v1628, %v1381
        %v1630 = vmax.f32 %v1629, %v1383
        %1631 = vmax.xlane.f32.xlu0 %v1630
        %v1632 = vpop.xlane.xlu0 %1631
        %v1633 = vmax.f32 %v1048, %v1050
        %v1634 = vmax.f32 %v1633, %v1161
        %v1635 = vmax.f32 %v1634, %v1163
        %v1636 = vmax.f32 %v1635, %v1274
        %v1637 = vmax.f32 %v1636, %v1276
        %v1638 = vmax.f32 %v1637, %v1387
        %v1639 = vmax.f32 %v1638, %v1389
        %1640 = vmax.xlane.f32.xlu0 %v1639
        %v1641 = vpop.xlane.xlu0 %1640
        %v1642 = vmax.f32 %v1052, %v1054
        %v1643 = vmax.f32 %v1642, %v1165
        %v1644 = vmax.f32 %v1643, %v1167
        %v1645 = vmax.f32 %v1644, %v1278
        %v1646 = vmax.f32 %v1645, %v1280
        %v1647 = vmax.f32 %v1646, %v1391
        %v1648 = vmax.f32 %v1647, %v1393
        %1649 = vmax.xlane.f32.xlu0 %v1648
        %v1650 = vpop.xlane.xlu0 %1649
        %v1651 = vmax.f32 %v1058, %v1060
        %v1652 = vmax.f32 %v1651, %v1171
        %v1653 = vmax.f32 %v1652, %v1173
        %v1654 = vmax.f32 %v1653, %v1284
        %v1655 = vmax.f32 %v1654, %v1286
        %v1656 = vmax.f32 %v1655, %v1397
        %v1657 = vmax.f32 %v1656, %v1399
        %1658 = vmax.xlane.f32.xlu0 %v1657
        %v1659 = vpop.xlane.xlu0 %1658
        %v1660 = vmax.f32 %v1062, %v1064
        %v1661 = vmax.f32 %v1660, %v1175
        %v1662 = vmax.f32 %v1661, %v1177
        %v1663 = vmax.f32 %v1662, %v1288
        %v1664 = vmax.f32 %v1663, %v1290
        %v1665 = vmax.f32 %v1664, %v1401
        %v1666 = vmax.f32 %v1665, %v1403
        %1667 = vmax.xlane.f32.xlu0 %v1666
        %v1668 = vpop.xlane.xlu0 %1667
        %v1669 = vmax.f32 %v1068, %v1070
        %v1670 = vmax.f32 %v1669, %v1181
        %v1671 = vmax.f32 %v1670, %v1183
        %v1672 = vmax.f32 %v1671, %v1294
        %v1673 = vmax.f32 %v1672, %v1296
        %v1674 = vmax.f32 %v1673, %v1407
        %v1675 = vmax.f32 %v1674, %v1409
        %1676 = vmax.xlane.f32.xlu0 %v1675
        %v1677 = vpop.xlane.xlu0 %1676
        %v1678 = vmax.f32 %v1072, %v1074
        %v1679 = vmax.f32 %v1678, %v1185
        %v1680 = vmax.f32 %v1679, %v1187
        %v1681 = vmax.f32 %v1680, %v1298
        %v1682 = vmax.f32 %v1681, %v1300
        %v1683 = vmax.f32 %v1682, %v1411
        %v1684 = vmax.f32 %v1683, %v1413
        %1685 = vmax.xlane.f32.xlu0 %v1684
        %v1686 = vpop.xlane.xlu0 %1685
        %v1687 = vmax.f32 %v1078, %v1080
        %v1688 = vmax.f32 %v1687, %v1191
        %v1689 = vmax.f32 %v1688, %v1193
        %v1690 = vmax.f32 %v1689, %v1304
        %v1691 = vmax.f32 %v1690, %v1306
        %v1692 = vmax.f32 %v1691, %v1417
        %v1693 = vmax.f32 %v1692, %v1419
        %1694 = vmax.xlane.f32.xlu0 %v1693
        %v1695 = vpop.xlane.xlu0 %1694
        %v1696 = vmax.f32 %v1082, %v1084
        %v1697 = vmax.f32 %v1696, %v1195
        %v1698 = vmax.f32 %v1697, %v1197
        %v1699 = vmax.f32 %v1698, %v1308
        %v1700 = vmax.f32 %v1699, %v1310
        %v1701 = vmax.f32 %v1700, %v1421
        %v1702 = vmax.f32 %v1701, %v1423
        %1703 = vmax.xlane.f32.xlu0 %v1702
        %v1704 = vpop.xlane.xlu0 %1703
        %v1705 = vmax.f32 %v1088, %v1090
        %v1706 = vmax.f32 %v1705, %v1201
        %v1707 = vmax.f32 %v1706, %v1203
        %v1708 = vmax.f32 %v1707, %v1314
        %v1709 = vmax.f32 %v1708, %v1316
        %v1710 = vmax.f32 %v1709, %v1427
        %v1711 = vmax.f32 %v1710, %v1429
        %1712 = vmax.xlane.f32.xlu0 %v1711
        %v1713 = vpop.xlane.xlu0 %1712
        %v1714 = vmax.f32 %v1092, %v1094
        %v1715 = vmax.f32 %v1714, %v1205
        %v1716 = vmax.f32 %v1715, %v1207
        %v1717 = vmax.f32 %v1716, %v1318
        %v1718 = vmax.f32 %v1717, %v1320
        %v1719 = vmax.f32 %v1718, %v1431
        %v1720 = vmax.f32 %v1719, %v1433
        %1721 = vmax.xlane.f32.xlu0 %v1720
        %v1722 = vpop.xlane.xlu0 %1721
        %v1723 = vmax.f32 %v1563, %v1587
        %v1724 = vmax.f32 %v1564, %v1596
        %v1725 = vmax.f32 %v1565, %v1605
        %v1726 = vmax.f32 %v1566, %v1614
        %v1727 = vmax.f32 %v1567, %v1623
        %v1728 = vmax.f32 %v1568, %v1632
        %v1729 = vmax.f32 %v1569, %v1641
        %v1730 = vmax.f32 %v1570, %v1650
        %v1731 = vmax.f32 %v1571, %v1659
        %v1732 = vmax.f32 %v1572, %v1668
        %v1733 = vmax.f32 %v1573, %v1677
        %v1734 = vmax.f32 %v1574, %v1686
        %v1735 = vmax.f32 %v1575, %v1695
        %v1736 = vmax.f32 %v1576, %v1704
        %v1737 = vmax.f32 %v1577, %v1713
        %v1738 = vmax.f32 %v1578, %v1722
        %v1739 = vld [vmem:[#allocation4] sm:$0xff]
        %v1740 = vld [vmem:[#allocation4 + $0x8] sm:$0xff]
        %v1741 = vld [vmem:[#allocation4 + $0x10] sm:$0xff]
        %v1742 = vld [vmem:[#allocation4 + $0x18] sm:$0xff]
        %v1743 = vld [vmem:[#allocation4 + $0x20] sm:$0xff]
        %v1744 = vld [vmem:[#allocation4 + $0x28] sm:$0xff]
        %v1745 = vld [vmem:[#allocation4 + $0x30] sm:$0xff]
        %v1746 = vld [vmem:[#allocation4 + $0x38] sm:$0xff]
        %v1747 = vld [vmem:[#allocation4 + $0x40] sm:$0xff]
        %v1748 = vld [vmem:[#allocation4 + $0x48] sm:$0xff]
        %v1749 = vld [vmem:[#allocation4 + $0x50] sm:$0xff]
        %v1750 = vld [vmem:[#allocation4 + $0x58] sm:$0xff]
        %v1751 = vld [vmem:[#allocation4 + $0x60] sm:$0xff]
        %v1752 = vld [vmem:[#allocation4 + $0x68] sm:$0xff]
        %v1753 = vld [vmem:[#allocation4 + $0x70] sm:$0xff]
        %v1754 = vld [vmem:[#allocation4 + $0x78] sm:$0xff]
        %v1755 = vsub.f32 %v1563, %v1723
        %v1756 = vsub.f32 %v1564, %v1724
        %v1757 = vsub.f32 %v1565, %v1725
        %v1758 = vsub.f32 %v1566, %v1726
        %v1759 = vsub.f32 %v1567, %v1727
        %v1760 = vsub.f32 %v1568, %v1728
        %v1761 = vsub.f32 %v1569, %v1729
        %v1762 = vsub.f32 %v1570, %v1730
        %v1763 = vsub.f32 %v1571, %v1731
        %v1764 = vsub.f32 %v1572, %v1732
        %v1765 = vsub.f32 %v1573, %v1733
        %v1766 = vsub.f32 %v1574, %v1734
        %v1767 = vsub.f32 %v1575, %v1735
        %v1768 = vsub.f32 %v1576, %v1736
        %v1769 = vsub.f32 %v1577, %v1737
        %v1770 = vsub.f32 %v1578, %v1738
        %v1771 = vmul.f32 %v1755, 1.442695
        %v1772 = vpow.pop %v1771
        %v1773 = vmul.f32 %v1756, 1.442695
        %v1774 = vpow.pop %v1773
        %v1775 = vmul.f32 %v1757, 1.442695
        %v1776 = vpow.pop %v1775
        %v1777 = vmul.f32 %v1758, 1.442695
        %v1778 = vpow.pop %v1777
        %v1779 = vmul.f32 %v1759, 1.442695
        %v1780 = vpow.pop %v1779
        %v1781 = vmul.f32 %v1760, 1.442695
        %v1782 = vpow.pop %v1781
        %v1783 = vmul.f32 %v1761, 1.442695
        %v1784 = vpow.pop %v1783
        %v1785 = vmul.f32 %v1762, 1.442695
        %v1786 = vpow.pop %v1785
        %v1787 = vmul.f32 %v1763, 1.442695
        %v1788 = vpow.pop %v1787
        %v1789 = vmul.f32 %v1764, 1.442695
        %v1790 = vpow.pop %v1789
        %v1791 = vmul.f32 %v1765, 1.442695
        %v1792 = vpow.pop %v1791
        %v1793 = vmul.f32 %v1766, 1.442695
        %v1794 = vpow.pop %v1793
        %v1795 = vmul.f32 %v1767, 1.442695
        %v1796 = vpow.pop %v1795
        %v1797 = vmul.f32 %v1768, 1.442695
        %v1798 = vpow.pop %v1797
        %v1799 = vmul.f32 %v1769, 1.442695
        %v1800 = vpow.pop %v1799
        %v1801 = vmul.f32 %v1770, 1.442695
        %v1802 = vpow.pop %v1801
        %v1803 = vmul.f32 %v1739, %v1772
        %v1804 = vmul.f32 %v1740, %v1774
        %v1805 = vmul.f32 %v1741, %v1776
        %v1806 = vmul.f32 %v1742, %v1778
        %v1807 = vmul.f32 %v1743, %v1780
        %v1808 = vmul.f32 %v1744, %v1782
        %v1809 = vmul.f32 %v1745, %v1784
        %v1810 = vmul.f32 %v1746, %v1786
        %v1811 = vmul.f32 %v1747, %v1788
        %v1812 = vmul.f32 %v1748, %v1790
        %v1813 = vmul.f32 %v1749, %v1792
        %v1814 = vmul.f32 %v1750, %v1794
        %v1815 = vmul.f32 %v1751, %v1796
        %v1816 = vmul.f32 %v1752, %v1798
        %v1817 = vmul.f32 %v1753, %v1800
        %v1818 = vmul.f32 %v1754, %v1802
        %1820 = vset.pattern.permute.xlu0 0
        %1821 = vperm.xlu0 %1820, %v1723
        %v1822 = vpop.permute.xlu0 %1821
        %1825 = vset.pattern.permute.xlu0 0
        %1826 = vperm.xlu0 %1825, %v1724
        %v1827 = vpop.permute.xlu0 %1826
        %1830 = vset.pattern.permute.xlu0 0
        %1831 = vperm.xlu0 %1830, %v1725
        %v1832 = vpop.permute.xlu0 %1831
        %1835 = vset.pattern.permute.xlu0 0
        %1836 = vperm.xlu0 %1835, %v1726
        %v1837 = vpop.permute.xlu0 %1836
        %1840 = vset.pattern.permute.xlu0 0
        %1841 = vperm.xlu0 %1840, %v1727
        %v1842 = vpop.permute.xlu0 %1841
        %1845 = vset.pattern.permute.xlu0 0
        %1846 = vperm.xlu0 %1845, %v1728
        %v1847 = vpop.permute.xlu0 %1846
        %1850 = vset.pattern.permute.xlu0 0
        %1851 = vperm.xlu0 %1850, %v1729
        %v1852 = vpop.permute.xlu0 %1851
        %1855 = vset.pattern.permute.xlu0 0
        %1856 = vperm.xlu0 %1855, %v1730
        %v1857 = vpop.permute.xlu0 %1856
        %1860 = vset.pattern.permute.xlu0 0
        %1861 = vperm.xlu0 %1860, %v1731
        %v1862 = vpop.permute.xlu0 %1861
        %1865 = vset.pattern.permute.xlu0 0
        %1866 = vperm.xlu0 %1865, %v1732
        %v1867 = vpop.permute.xlu0 %1866
        %1870 = vset.pattern.permute.xlu0 0
        %1871 = vperm.xlu0 %1870, %v1733
        %v1872 = vpop.permute.xlu0 %1871
        %1875 = vset.pattern.permute.xlu0 0
        %1876 = vperm.xlu0 %1875, %v1734
        %v1877 = vpop.permute.xlu0 %1876
        %1880 = vset.pattern.permute.xlu0 0
        %1881 = vperm.xlu0 %1880, %v1735
        %v1882 = vpop.permute.xlu0 %1881
        %1885 = vset.pattern.permute.xlu0 0
        %1886 = vperm.xlu0 %1885, %v1736
        %v1887 = vpop.permute.xlu0 %1886
        %1890 = vset.pattern.permute.xlu0 0
        %1891 = vperm.xlu0 %1890, %v1737
        %v1892 = vpop.permute.xlu0 %1891
        %1895 = vset.pattern.permute.xlu0 0
        %1896 = vperm.xlu0 %1895, %v1738
        %v1897 = vpop.permute.xlu0 %1896
        %v1899 = vsub.f32 %v1018, %v1822
        %v1900 = vsub.f32 %v1020, %v1822
        %v1901 = vsub.f32 %v1131, %v1822
        %v1902 = vsub.f32 %v1133, %v1822
        %v1903 = vsub.f32 %v1244, %v1822
        %v1904 = vsub.f32 %v1246, %v1822
        %v1905 = vsub.f32 %v1357, %v1822
        %v1906 = vsub.f32 %v1359, %v1822
        %v1907 = vsub.f32 %v1022, %v1827
        %v1908 = vsub.f32 %v1024, %v1827
        %v1909 = vsub.f32 %v1135, %v1827
        %v1910 = vsub.f32 %v1137, %v1827
        %v1911 = vsub.f32 %v1248, %v1827
        %v1912 = vsub.f32 %v1250, %v1827
        %v1913 = vsub.f32 %v1361, %v1827
        %v1914 = vsub.f32 %v1363, %v1827
        %v1915 = vsub.f32 %v1028, %v1832
        %v1916 = vsub.f32 %v1030, %v1832
        %v1917 = vsub.f32 %v1141, %v1832
        %v1918 = vsub.f32 %v1143, %v1832
        %v1919 = vsub.f32 %v1254, %v1832
        %v1920 = vsub.f32 %v1256, %v1832
        %v1921 = vsub.f32 %v1367, %v1832
        %v1922 = vsub.f32 %v1369, %v1832
        %v1923 = vsub.f32 %v1032, %v1837
        %v1924 = vsub.f32 %v1034, %v1837
        %v1925 = vsub.f32 %v1145, %v1837
        %v1926 = vsub.f32 %v1147, %v1837
        %v1927 = vsub.f32 %v1258, %v1837
        %v1928 = vsub.f32 %v1260, %v1837
        %v1929 = vsub.f32 %v1371, %v1837
        %v1930 = vsub.f32 %v1373, %v1837
        %v1931 = vsub.f32 %v1038, %v1842
        %v1932 = vsub.f32 %v1040, %v1842
        %v1933 = vsub.f32 %v1151, %v1842
        %v1934 = vsub.f32 %v1153, %v1842
        %v1935 = vsub.f32 %v1264, %v1842
        %v1936 = vsub.f32 %v1266, %v1842
        %v1937 = vsub.f32 %v1377, %v1842
        %v1938 = vsub.f32 %v1379, %v1842
        %v1939 = vsub.f32 %v1042, %v1847
        %v1940 = vsub.f32 %v1044, %v1847
        %v1941 = vsub.f32 %v1155, %v1847
        %v1942 = vsub.f32 %v1157, %v1847
        %v1943 = vsub.f32 %v1268, %v1847
        %v1944 = vsub.f32 %v1270, %v1847
        %v1945 = vsub.f32 %v1381, %v1847
        %v1946 = vsub.f32 %v1383, %v1847
        %v1947 = vsub.f32 %v1048, %v1852
        %v1948 = vsub.f32 %v1050, %v1852
        %v1949 = vsub.f32 %v1161, %v1852
        %v1950 = vsub.f32 %v1163, %v1852
        %v1951 = vsub.f32 %v1274, %v1852
        %v1952 = vsub.f32 %v1276, %v1852
        %v1953 = vsub.f32 %v1387, %v1852
        %v1954 = vsub.f32 %v1389, %v1852
        %v1955 = vsub.f32 %v1052, %v1857
        %v1956 = vsub.f32 %v1054, %v1857
        %v1957 = vsub.f32 %v1165, %v1857
        %v1958 = vsub.f32 %v1167, %v1857
        %v1959 = vsub.f32 %v1278, %v1857
        %v1960 = vsub.f32 %v1280, %v1857
        %v1961 = vsub.f32 %v1391, %v1857
        %v1962 = vsub.f32 %v1393, %v1857
        %v1963 = vsub.f32 %v1058, %v1862
        %v1964 = vsub.f32 %v1060, %v1862
        %v1965 = vsub.f32 %v1171, %v1862
        %v1966 = vsub.f32 %v1173, %v1862
        %v1967 = vsub.f32 %v1284, %v1862
        %v1968 = vsub.f32 %v1286, %v1862
        %v1969 = vsub.f32 %v1397, %v1862
        %v1970 = vsub.f32 %v1399, %v1862
        %v1971 = vsub.f32 %v1062, %v1867
        %v1972 = vsub.f32 %v1064, %v1867
        %v1973 = vsub.f32 %v1175, %v1867
        %v1974 = vsub.f32 %v1177, %v1867
        %v1975 = vsub.f32 %v1288, %v1867
        %v1976 = vsub.f32 %v1290, %v1867
        %v1977 = vsub.f32 %v1401, %v1867
        %v1978 = vsub.f32 %v1403, %v1867
        %v1979 = vsub.f32 %v1068, %v1872
        %v1980 = vsub.f32 %v1070, %v1872
        %v1981 = vsub.f32 %v1181, %v1872
        %v1982 = vsub.f32 %v1183, %v1872
        %v1983 = vsub.f32 %v1294, %v1872
        %v1984 = vsub.f32 %v1296, %v1872
        %v1985 = vsub.f32 %v1407, %v1872
        %v1986 = vsub.f32 %v1409, %v1872
        %v1987 = vsub.f32 %v1072, %v1877
        %v1988 = vsub.f32 %v1074, %v1877
        %v1989 = vsub.f32 %v1185, %v1877
        %v1990 = vsub.f32 %v1187, %v1877
        %v1991 = vsub.f32 %v1298, %v1877
        %v1992 = vsub.f32 %v1300, %v1877
        %v1993 = vsub.f32 %v1411, %v1877
        %v1994 = vsub.f32 %v1413, %v1877
        %v1995 = vsub.f32 %v1078, %v1882
        %v1996 = vsub.f32 %v1080, %v1882
        %v1997 = vsub.f32 %v1191, %v1882
        %v1998 = vsub.f32 %v1193, %v1882
        %v1999 = vsub.f32 %v1304, %v1882
        %v2000 = vsub.f32 %v1306, %v1882
        %v2001 = vsub.f32 %v1417, %v1882
        %v2002 = vsub.f32 %v1419, %v1882
        %v2003 = vsub.f32 %v1082, %v1887
        %v2004 = vsub.f32 %v1084, %v1887
        %v2005 = vsub.f32 %v1195, %v1887
        %v2006 = vsub.f32 %v1197, %v1887
        %v2007 = vsub.f32 %v1308, %v1887
        %v2008 = vsub.f32 %v1310, %v1887
        %v2009 = vsub.f32 %v1421, %v1887
        %v2010 = vsub.f32 %v1423, %v1887
        %v2011 = vsub.f32 %v1088, %v1892
        %v2012 = vsub.f32 %v1090, %v1892
        %v2013 = vsub.f32 %v1201, %v1892
        %v2014 = vsub.f32 %v1203, %v1892
        %v2015 = vsub.f32 %v1314, %v1892
        %v2016 = vsub.f32 %v1316, %v1892
        %v2017 = vsub.f32 %v1427, %v1892
        %v2018 = vsub.f32 %v1429, %v1892
        %v2019 = vsub.f32 %v1092, %v1897
        %v2020 = vsub.f32 %v1094, %v1897
        %v2021 = vsub.f32 %v1205, %v1897
        %v2022 = vsub.f32 %v1207, %v1897
        %v2023 = vsub.f32 %v1318, %v1897
        %v2024 = vsub.f32 %v1320, %v1897
        %v2025 = vsub.f32 %v1431, %v1897
        %v2026 = vsub.f32 %v1433, %v1897
        %v2027 = vmul.f32 %v1899, 1.442695
        %v2028 = vpow.pop %v2027
        %v2029 = vmul.f32 %v1900, 1.442695
        %v2030 = vpow.pop %v2029
        %v2031 = vmul.f32 %v1901, 1.442695
        %v2032 = vpow.pop %v2031
        %v2033 = vmul.f32 %v1902, 1.442695
        %v2034 = vpow.pop %v2033
        %v2035 = vmul.f32 %v1903, 1.442695
        %v2036 = vpow.pop %v2035
        %v2037 = vmul.f32 %v1904, 1.442695
        %v2038 = vpow.pop %v2037
        %v2039 = vmul.f32 %v1905, 1.442695
        %v2040 = vpow.pop %v2039
        %v2041 = vmul.f32 %v1906, 1.442695
        %v2042 = vpow.pop %v2041
        %v2043 = vmul.f32 %v1907, 1.442695
        %v2044 = vpow.pop %v2043
        %v2045 = vmul.f32 %v1908, 1.442695
        %v2046 = vpow.pop %v2045
        %v2047 = vmul.f32 %v1909, 1.442695
        %v2048 = vpow.pop %v2047
        %v2049 = vmul.f32 %v1910, 1.442695
        %v2050 = vpow.pop %v2049
        %v2051 = vmul.f32 %v1911, 1.442695
        %v2052 = vpow.pop %v2051
        %v2053 = vmul.f32 %v1912, 1.442695
        %v2054 = vpow.pop %v2053
        %v2055 = vmul.f32 %v1913, 1.442695
        %v2056 = vpow.pop %v2055
        %v2057 = vmul.f32 %v1914, 1.442695
        %v2058 = vpow.pop %v2057
        %v2059 = vmul.f32 %v1915, 1.442695
        %v2060 = vpow.pop %v2059
        %v2061 = vmul.f32 %v1916, 1.442695
        %v2062 = vpow.pop %v2061
        %v2063 = vmul.f32 %v1917, 1.442695
        %v2064 = vpow.pop %v2063
        %v2065 = vmul.f32 %v1918, 1.442695
        %v2066 = vpow.pop %v2065
        %v2067 = vmul.f32 %v1919, 1.442695
        %v2068 = vpow.pop %v2067
        %v2069 = vmul.f32 %v1920, 1.442695
        %v2070 = vpow.pop %v2069
        %v2071 = vmul.f32 %v1921, 1.442695
        %v2072 = vpow.pop %v2071
        %v2073 = vmul.f32 %v1922, 1.442695
        %v2074 = vpow.pop %v2073
        %v2075 = vmul.f32 %v1923, 1.442695
        %v2076 = vpow.pop %v2075
        %v2077 = vmul.f32 %v1924, 1.442695
        %v2078 = vpow.pop %v2077
        %v2079 = vmul.f32 %v1925, 1.442695
        %v2080 = vpow.pop %v2079
        %v2081 = vmul.f32 %v1926, 1.442695
        %v2082 = vpow.pop %v2081
        %v2083 = vmul.f32 %v1927, 1.442695
        %v2084 = vpow.pop %v2083
        %v2085 = vmul.f32 %v1928, 1.442695
        %v2086 = vpow.pop %v2085
        %v2087 = vmul.f32 %v1929, 1.442695
        %v2088 = vpow.pop %v2087
        %v2089 = vmul.f32 %v1930, 1.442695
        %v2090 = vpow.pop %v2089
        %v2091 = vmul.f32 %v1931, 1.442695
        %v2092 = vpow.pop %v2091
        %v2093 = vmul.f32 %v1932, 1.442695
        %v2094 = vpow.pop %v2093
        %v2095 = vmul.f32 %v1933, 1.442695
        %v2096 = vpow.pop %v2095
        %v2097 = vmul.f32 %v1934, 1.442695
        %v2098 = vpow.pop %v2097
        %v2099 = vmul.f32 %v1935, 1.442695
        %v2100 = vpow.pop %v2099
        %v2101 = vmul.f32 %v1936, 1.442695
        %v2102 = vpow.pop %v2101
        %v2103 = vmul.f32 %v1937, 1.442695
        %v2104 = vpow.pop %v2103
        %v2105 = vmul.f32 %v1938, 1.442695
        %v2106 = vpow.pop %v2105
        %v2107 = vmul.f32 %v1939, 1.442695
        %v2108 = vpow.pop %v2107
        %v2109 = vmul.f32 %v1940, 1.442695
        %v2110 = vpow.pop %v2109
        %v2111 = vmul.f32 %v1941, 1.442695
        %v2112 = vpow.pop %v2111
        %v2113 = vmul.f32 %v1942, 1.442695
        %v2114 = vpow.pop %v2113
        %v2115 = vmul.f32 %v1943, 1.442695
        %v2116 = vpow.pop %v2115
        %v2117 = vmul.f32 %v1944, 1.442695
        %v2118 = vpow.pop %v2117
        %v2119 = vmul.f32 %v1945, 1.442695
        %v2120 = vpow.pop %v2119
        %v2121 = vmul.f32 %v1946, 1.442695
        %v2122 = vpow.pop %v2121
        %v2123 = vmul.f32 %v1947, 1.442695
        %v2124 = vpow.pop %v2123
        %v2125 = vmul.f32 %v1948, 1.442695
        %v2126 = vpow.pop %v2125
        %v2127 = vmul.f32 %v1949, 1.442695
        %v2128 = vpow.pop %v2127
        %v2129 = vmul.f32 %v1950, 1.442695
        %v2130 = vpow.pop %v2129
        %v2131 = vmul.f32 %v1951, 1.442695
        %v2132 = vpow.pop %v2131
        %v2133 = vmul.f32 %v1952, 1.442695
        %v2134 = vpow.pop %v2133
        %v2135 = vmul.f32 %v1953, 1.442695
        %v2136 = vpow.pop %v2135
        %v2137 = vmul.f32 %v1954, 1.442695
        %v2138 = vpow.pop %v2137
        %v2139 = vmul.f32 %v1955, 1.442695
        %v2140 = vpow.pop %v2139
        %v2141 = vmul.f32 %v1956, 1.442695
        %v2142 = vpow.pop %v2141
        %v2143 = vmul.f32 %v1957, 1.442695
        %v2144 = vpow.pop %v2143
        %v2145 = vmul.f32 %v1958, 1.442695
        %v2146 = vpow.pop %v2145
        %v2147 = vmul.f32 %v1959, 1.442695
        %v2148 = vpow.pop %v2147
        %v2149 = vmul.f32 %v1960, 1.442695
        %v2150 = vpow.pop %v2149
        %v2151 = vmul.f32 %v1961, 1.442695
        %v2152 = vpow.pop %v2151
        %v2153 = vmul.f32 %v1962, 1.442695
        %v2154 = vpow.pop %v2153
        %v2155 = vmul.f32 %v1963, 1.442695
        %v2156 = vpow.pop %v2155
        %v2157 = vmul.f32 %v1964, 1.442695
        %v2158 = vpow.pop %v2157
        %v2159 = vmul.f32 %v1965, 1.442695
        %v2160 = vpow.pop %v2159
        %v2161 = vmul.f32 %v1966, 1.442695
        %v2162 = vpow.pop %v2161
        %v2163 = vmul.f32 %v1967, 1.442695
        %v2164 = vpow.pop %v2163
        %v2165 = vmul.f32 %v1968, 1.442695
        %v2166 = vpow.pop %v2165
        %v2167 = vmul.f32 %v1969, 1.442695
        %v2168 = vpow.pop %v2167
        %v2169 = vmul.f32 %v1970, 1.442695
        %v2170 = vpow.pop %v2169
        %v2171 = vmul.f32 %v1971, 1.442695
        %v2172 = vpow.pop %v2171
        %v2173 = vmul.f32 %v1972, 1.442695
        %v2174 = vpow.pop %v2173
        %v2175 = vmul.f32 %v1973, 1.442695
        %v2176 = vpow.pop %v2175
        %v2177 = vmul.f32 %v1974, 1.442695
        %v2178 = vpow.pop %v2177
        %v2179 = vmul.f32 %v1975, 1.442695
        %v2180 = vpow.pop %v2179
        %v2181 = vmul.f32 %v1976, 1.442695
        %v2182 = vpow.pop %v2181
        %v2183 = vmul.f32 %v1977, 1.442695
        %v2184 = vpow.pop %v2183
        %v2185 = vmul.f32 %v1978, 1.442695
        %v2186 = vpow.pop %v2185
        %v2187 = vmul.f32 %v1979, 1.442695
        %v2188 = vpow.pop %v2187
        %v2189 = vmul.f32 %v1980, 1.442695
        %v2190 = vpow.pop %v2189
        %v2191 = vmul.f32 %v1981, 1.442695
        %v2192 = vpow.pop %v2191
        %v2193 = vmul.f32 %v1982, 1.442695
        %v2194 = vpow.pop %v2193
        %v2195 = vmul.f32 %v1983, 1.442695
        %v2196 = vpow.pop %v2195
        %v2197 = vmul.f32 %v1984, 1.442695
        %v2198 = vpow.pop %v2197
        %v2199 = vmul.f32 %v1985, 1.442695
        %v2200 = vpow.pop %v2199
        %v2201 = vmul.f32 %v1986, 1.442695
        %v2202 = vpow.pop %v2201
        %v2203 = vmul.f32 %v1987, 1.442695
        %v2204 = vpow.pop %v2203
        %v2205 = vmul.f32 %v1988, 1.442695
        %v2206 = vpow.pop %v2205
        %v2207 = vmul.f32 %v1989, 1.442695
        %v2208 = vpow.pop %v2207
        %v2209 = vmul.f32 %v1990, 1.442695
        %v2210 = vpow.pop %v2209
        %v2211 = vmul.f32 %v1991, 1.442695
        %v2212 = vpow.pop %v2211
        %v2213 = vmul.f32 %v1992, 1.442695
        %v2214 = vpow.pop %v2213
        %v2215 = vmul.f32 %v1993, 1.442695
        %v2216 = vpow.pop %v2215
        %v2217 = vmul.f32 %v1994, 1.442695
        %v2218 = vpow.pop %v2217
        %v2219 = vmul.f32 %v1995, 1.442695
        %v2220 = vpow.pop %v2219
        %v2221 = vmul.f32 %v1996, 1.442695
        %v2222 = vpow.pop %v2221
        %v2223 = vmul.f32 %v1997, 1.442695
        %v2224 = vpow.pop %v2223
        %v2225 = vmul.f32 %v1998, 1.442695
        %v2226 = vpow.pop %v2225
        %v2227 = vmul.f32 %v1999, 1.442695
        %v2228 = vpow.pop %v2227
        %v2229 = vmul.f32 %v2000, 1.442695
        %v2230 = vpow.pop %v2229
        %v2231 = vmul.f32 %v2001, 1.442695
        %v2232 = vpow.pop %v2231
        %v2233 = vmul.f32 %v2002, 1.442695
        %v2234 = vpow.pop %v2233
        %v2235 = vmul.f32 %v2003, 1.442695
        %v2236 = vpow.pop %v2235
        %v2237 = vmul.f32 %v2004, 1.442695
        %v2238 = vpow.pop %v2237
        %v2239 = vmul.f32 %v2005, 1.442695
        %v2240 = vpow.pop %v2239
        %v2241 = vmul.f32 %v2006, 1.442695
        %v2242 = vpow.pop %v2241
        %v2243 = vmul.f32 %v2007, 1.442695
        %v2244 = vpow.pop %v2243
        %v2245 = vmul.f32 %v2008, 1.442695
        %v2246 = vpow.pop %v2245
        %v2247 = vmul.f32 %v2009, 1.442695
        %v2248 = vpow.pop %v2247
        %v2249 = vmul.f32 %v2010, 1.442695
        %v2250 = vpow.pop %v2249
        %v2251 = vmul.f32 %v2011, 1.442695
        %v2252 = vpow.pop %v2251
        %v2253 = vmul.f32 %v2012, 1.442695
        %v2254 = vpow.pop %v2253
        %v2255 = vmul.f32 %v2013, 1.442695
        %v2256 = vpow.pop %v2255
        %v2257 = vmul.f32 %v2014, 1.442695
        %v2258 = vpow.pop %v2257
        %v2259 = vmul.f32 %v2015, 1.442695
        %v2260 = vpow.pop %v2259
        %v2261 = vmul.f32 %v2016, 1.442695
        %v2262 = vpow.pop %v2261
        %v2263 = vmul.f32 %v2017, 1.442695
        %v2264 = vpow.pop %v2263
        %v2265 = vmul.f32 %v2018, 1.442695
        %v2266 = vpow.pop %v2265
        %v2267 = vmul.f32 %v2019, 1.442695
        %v2268 = vpow.pop %v2267
        %v2269 = vmul.f32 %v2020, 1.442695
        %v2270 = vpow.pop %v2269
        %v2271 = vmul.f32 %v2021, 1.442695
        %v2272 = vpow.pop %v2271
        %v2273 = vmul.f32 %v2022, 1.442695
        %v2274 = vpow.pop %v2273
        %v2275 = vmul.f32 %v2023, 1.442695
        %v2276 = vpow.pop %v2275
        %v2277 = vmul.f32 %v2024, 1.442695
        %v2278 = vpow.pop %v2277
        %v2279 = vmul.f32 %v2025, 1.442695
        %v2280 = vpow.pop %v2279
        %v2281 = vmul.f32 %v2026, 1.442695
        %v2282 = vpow.pop %v2281
        %v2283 = vadd.f32 %v2028, %v2030
        %v2284 = vadd.f32 %v2283, %v2032
        %v2285 = vadd.f32 %v2284, %v2034
        %v2286 = vadd.f32 %v2285, %v2036
        %v2287 = vadd.f32 %v2286, %v2038
        %v2288 = vadd.f32 %v2287, %v2040
        %v2289 = vadd.f32 %v2288, %v2042
        %2290 = vadd.xlane.f32.xlu0 %v2289
        %v2291 = vpop.xlane.xlu0 %2290
        %v2292 = vadd.f32 %v2044, %v2046
        %v2293 = vadd.f32 %v2292, %v2048
        %v2294 = vadd.f32 %v2293, %v2050
        %v2295 = vadd.f32 %v2294, %v2052
        %v2296 = vadd.f32 %v2295, %v2054
        %v2297 = vadd.f32 %v2296, %v2056
        %v2298 = vadd.f32 %v2297, %v2058
        %2299 = vadd.xlane.f32.xlu0 %v2298
        %v2300 = vpop.xlane.xlu0 %2299
        %v2301 = vadd.f32 %v2060, %v2062
        %v2302 = vadd.f32 %v2301, %v2064
        %v2303 = vadd.f32 %v2302, %v2066
        %v2304 = vadd.f32 %v2303, %v2068
        %v2305 = vadd.f32 %v2304, %v2070
        %v2306 = vadd.f32 %v2305, %v2072
        %v2307 = vadd.f32 %v2306, %v2074
        %2308 = vadd.xlane.f32.xlu0 %v2307
        %v2309 = vpop.xlane.xlu0 %2308
        %v2310 = vadd.f32 %v2076, %v2078
        %v2311 = vadd.f32 %v2310, %v2080
        %v2312 = vadd.f32 %v2311, %v2082
        %v2313 = vadd.f32 %v2312, %v2084
        %v2314 = vadd.f32 %v2313, %v2086
        %v2315 = vadd.f32 %v2314, %v2088
        %v2316 = vadd.f32 %v2315, %v2090
        %2317 = vadd.xlane.f32.xlu0 %v2316
        %v2318 = vpop.xlane.xlu0 %2317
        %v2319 = vadd.f32 %v2092, %v2094
        %v2320 = vadd.f32 %v2319, %v2096
        %v2321 = vadd.f32 %v2320, %v2098
        %v2322 = vadd.f32 %v2321, %v2100
        %v2323 = vadd.f32 %v2322, %v2102
        %v2324 = vadd.f32 %v2323, %v2104
        %v2325 = vadd.f32 %v2324, %v2106
        %2326 = vadd.xlane.f32.xlu0 %v2325
        %v2327 = vpop.xlane.xlu0 %2326
        %v2328 = vadd.f32 %v2108, %v2110
        %v2329 = vadd.f32 %v2328, %v2112
        %v2330 = vadd.f32 %v2329, %v2114
        %v2331 = vadd.f32 %v2330, %v2116
        %v2332 = vadd.f32 %v2331, %v2118
        %v2333 = vadd.f32 %v2332, %v2120
        %v2334 = vadd.f32 %v2333, %v2122
        %2335 = vadd.xlane.f32.xlu0 %v2334
        %v2336 = vpop.xlane.xlu0 %2335
        %v2337 = vadd.f32 %v2124, %v2126
        %v2338 = vadd.f32 %v2337, %v2128
        %v2339 = vadd.f32 %v2338, %v2130
        %v2340 = vadd.f32 %v2339, %v2132
        %v2341 = vadd.f32 %v2340, %v2134
        %v2342 = vadd.f32 %v2341, %v2136
        %v2343 = vadd.f32 %v2342, %v2138
        %2344 = vadd.xlane.f32.xlu0 %v2343
        %v2345 = vpop.xlane.xlu0 %2344
        %v2346 = vadd.f32 %v2140, %v2142
        %v2347 = vadd.f32 %v2346, %v2144
        %v2348 = vadd.f32 %v2347, %v2146
        %v2349 = vadd.f32 %v2348, %v2148
        %v2350 = vadd.f32 %v2349, %v2150
        %v2351 = vadd.f32 %v2350, %v2152
        %v2352 = vadd.f32 %v2351, %v2154
        %2353 = vadd.xlane.f32.xlu0 %v2352
        %v2354 = vpop.xlane.xlu0 %2353
        %v2355 = vadd.f32 %v2156, %v2158
        %v2356 = vadd.f32 %v2355, %v2160
        %v2357 = vadd.f32 %v2356, %v2162
        %v2358 = vadd.f32 %v2357, %v2164
        %v2359 = vadd.f32 %v2358, %v2166
        %v2360 = vadd.f32 %v2359, %v2168
        %v2361 = vadd.f32 %v2360, %v2170
        %2362 = vadd.xlane.f32.xlu0 %v2361
        %v2363 = vpop.xlane.xlu0 %2362
        %v2364 = vadd.f32 %v2172, %v2174
        %v2365 = vadd.f32 %v2364, %v2176
        %v2366 = vadd.f32 %v2365, %v2178
        %v2367 = vadd.f32 %v2366, %v2180
        %v2368 = vadd.f32 %v2367, %v2182
        %v2369 = vadd.f32 %v2368, %v2184
        %v2370 = vadd.f32 %v2369, %v2186
        %2371 = vadd.xlane.f32.xlu0 %v2370
        %v2372 = vpop.xlane.xlu0 %2371
        %v2373 = vadd.f32 %v2188, %v2190
        %v2374 = vadd.f32 %v2373, %v2192
        %v2375 = vadd.f32 %v2374, %v2194
        %v2376 = vadd.f32 %v2375, %v2196
        %v2377 = vadd.f32 %v2376, %v2198
        %v2378 = vadd.f32 %v2377, %v2200
        %v2379 = vadd.f32 %v2378, %v2202
        %2380 = vadd.xlane.f32.xlu0 %v2379
        %v2381 = vpop.xlane.xlu0 %2380
        %v2382 = vadd.f32 %v2204, %v2206
        %v2383 = vadd.f32 %v2382, %v2208
        %v2384 = vadd.f32 %v2383, %v2210
        %v2385 = vadd.f32 %v2384, %v2212
        %v2386 = vadd.f32 %v2385, %v2214
        %v2387 = vadd.f32 %v2386, %v2216
        %v2388 = vadd.f32 %v2387, %v2218
        %2389 = vadd.xlane.f32.xlu0 %v2388
        %v2390 = vpop.xlane.xlu0 %2389
        %v2391 = vadd.f32 %v2220, %v2222
        %v2392 = vadd.f32 %v2391, %v2224
        %v2393 = vadd.f32 %v2392, %v2226
        %v2394 = vadd.f32 %v2393, %v2228
        %v2395 = vadd.f32 %v2394, %v2230
        %v2396 = vadd.f32 %v2395, %v2232
        %v2397 = vadd.f32 %v2396, %v2234
        %2398 = vadd.xlane.f32.xlu0 %v2397
        %v2399 = vpop.xlane.xlu0 %2398
        %v2400 = vadd.f32 %v2236, %v2238
        %v2401 = vadd.f32 %v2400, %v2240
        %v2402 = vadd.f32 %v2401, %v2242
        %v2403 = vadd.f32 %v2402, %v2244
        %v2404 = vadd.f32 %v2403, %v2246
        %v2405 = vadd.f32 %v2404, %v2248
        %v2406 = vadd.f32 %v2405, %v2250
        %2407 = vadd.xlane.f32.xlu0 %v2406
        %v2408 = vpop.xlane.xlu0 %2407
        %v2409 = vadd.f32 %v2252, %v2254
        %v2410 = vadd.f32 %v2409, %v2256
        %v2411 = vadd.f32 %v2410, %v2258
        %v2412 = vadd.f32 %v2411, %v2260
        %v2413 = vadd.f32 %v2412, %v2262
        %v2414 = vadd.f32 %v2413, %v2264
        %v2415 = vadd.f32 %v2414, %v2266
        %2416 = vadd.xlane.f32.xlu0 %v2415
        %v2417 = vpop.xlane.xlu0 %2416
        %v2418 = vadd.f32 %v2268, %v2270
        %v2419 = vadd.f32 %v2418, %v2272
        %v2420 = vadd.f32 %v2419, %v2274
        %v2421 = vadd.f32 %v2420, %v2276
        %v2422 = vadd.f32 %v2421, %v2278
        %v2423 = vadd.f32 %v2422, %v2280
        %v2424 = vadd.f32 %v2423, %v2282
        %2425 = vadd.xlane.f32.xlu0 %v2424
        %v2426 = vpop.xlane.xlu0 %2425
        %v2427 = vadd.f32 %v1803, %v2291
        %v2428 = vadd.f32 %v1804, %v2300
        %v2429 = vadd.f32 %v1805, %v2309
        %v2430 = vadd.f32 %v1806, %v2318
        %v2431 = vadd.f32 %v1807, %v2327
        %v2432 = vadd.f32 %v1808, %v2336
        %v2433 = vadd.f32 %v1809, %v2345
        %v2434 = vadd.f32 %v1810, %v2354
        %v2435 = vadd.f32 %v1811, %v2363
        %v2436 = vadd.f32 %v1812, %v2372
        %v2437 = vadd.f32 %v1813, %v2381
        %v2438 = vadd.f32 %v1814, %v2390
        %v2439 = vadd.f32 %v1815, %v2399
        %v2440 = vadd.f32 %v1816, %v2408
        %v2441 = vadd.f32 %v1817, %v2417
        %v2442 = vadd.f32 %v1818, %v2426
        %vm2443 = vcmask 7168
        %2444 = vst.msk [vmem:[#allocation4] sm:$0xff] %vm2443, %v2427
        %2445 = vst.msk [vmem:[#allocation4 + $0x8] sm:$0xff] %vm2443, %v2428
        %2446 = vst.msk [vmem:[#allocation4 + $0x10] sm:$0xff] %vm2443, %v2429
        %2447 = vst.msk [vmem:[#allocation4 + $0x18] sm:$0xff] %vm2443, %v2430
        %2448 = vst.msk [vmem:[#allocation4 + $0x20] sm:$0xff] %vm2443, %v2431
        %2449 = vst.msk [vmem:[#allocation4 + $0x28] sm:$0xff] %vm2443, %v2432
        %2450 = vst.msk [vmem:[#allocation4 + $0x30] sm:$0xff] %vm2443, %v2433
        %2451 = vst.msk [vmem:[#allocation4 + $0x38] sm:$0xff] %vm2443, %v2434
        %2452 = vst.msk [vmem:[#allocation4 + $0x40] sm:$0xff] %vm2443, %v2435
        %2453 = vst.msk [vmem:[#allocation4 + $0x48] sm:$0xff] %vm2443, %v2436
        %2454 = vst.msk [vmem:[#allocation4 + $0x50] sm:$0xff] %vm2443, %v2437
        %2455 = vst.msk [vmem:[#allocation4 + $0x58] sm:$0xff] %vm2443, %v2438
        %2456 = vst.msk [vmem:[#allocation4 + $0x60] sm:$0xff] %vm2443, %v2439
        %2457 = vst.msk [vmem:[#allocation4 + $0x68] sm:$0xff] %vm2443, %v2440
        %2458 = vst.msk [vmem:[#allocation4 + $0x70] sm:$0xff] %vm2443, %v2441
        %2459 = vst.msk [vmem:[#allocation4 + $0x78] sm:$0xff] %vm2443, %v2442
        %2460 = vst.msk [vmem:[#allocation3] sm:$0xff] %vm2443, %v1723
        %2461 = vst.msk [vmem:[#allocation3 + $0x8] sm:$0xff] %vm2443, %v1724
        %2462 = vst.msk [vmem:[#allocation3 + $0x10] sm:$0xff] %vm2443, %v1725
        %2463 = vst.msk [vmem:[#allocation3 + $0x18] sm:$0xff] %vm2443, %v1726
        %2464 = vst.msk [vmem:[#allocation3 + $0x20] sm:$0xff] %vm2443, %v1727
        %2465 = vst.msk [vmem:[#allocation3 + $0x28] sm:$0xff] %vm2443, %v1728
        %2466 = vst.msk [vmem:[#allocation3 + $0x30] sm:$0xff] %vm2443, %v1729
        %2467 = vst.msk [vmem:[#allocation3 + $0x38] sm:$0xff] %vm2443, %v1730
        %2468 = vst.msk [vmem:[#allocation3 + $0x40] sm:$0xff] %vm2443, %v1731
        %2469 = vst.msk [vmem:[#allocation3 + $0x48] sm:$0xff] %vm2443, %v1732
        %2470 = vst.msk [vmem:[#allocation3 + $0x50] sm:$0xff] %vm2443, %v1733
        %2471 = vst.msk [vmem:[#allocation3 + $0x58] sm:$0xff] %vm2443, %v1734
        %2472 = vst.msk [vmem:[#allocation3 + $0x60] sm:$0xff] %vm2443, %v1735
        %2473 = vst.msk [vmem:[#allocation3 + $0x68] sm:$0xff] %vm2443, %v1736
        %2474 = vst.msk [vmem:[#allocation3 + $0x70] sm:$0xff] %vm2443, %v1737
        %2475 = vst.msk [vmem:[#allocation3 + $0x78] sm:$0xff] %vm2443, %v1738
        %v2476 = vlaneseq
        %v2477 = vand.u32 %v2476, 127
        %v2478 = vadd.s32 %v2477, 128
        %v2479 = vadd.s32 %v2477, 256
        %v2480 = vadd.s32 %v2477, 384
        %v2481 = vadd.s32 %v2477, 512
        %v2482 = vadd.s32 %v2477, 640
        %v2483 = vadd.s32 %v2477, 768
        %v2484 = vadd.s32 %v2477, 896
        %s2485 = smul.u32 %s25, 1024
        %v2486 = vstv %s2485
        %v2487 = vadd.s32 %v2477, %v2486
        %v2488 = vadd.s32 %v2478, %v2486
        %v2489 = vadd.s32 %v2479, %v2486
        %v2490 = vadd.s32 %v2480, %v2486
        %v2491 = vadd.s32 %v2481, %v2486
        %v2492 = vadd.s32 %v2482, %v2486
        %v2493 = vadd.s32 %v2483, %v2486
        %v2494 = vadd.s32 %v2484, %v2486
        %v2495 = vld [vmem:[#allocation5] sm:$0xff]
        %v2496 = vld [vmem:[#allocation5 + $0x8] sm:$0xff]
        %v2497 = vld [vmem:[#allocation5 + $0x10] sm:$0xff]
        %v2498 = vld [vmem:[#allocation5 + $0x18] sm:$0xff]
        %v2499 = vld [vmem:[#allocation5 + $0x20] sm:$0xff]
        %v2500 = vld [vmem:[#allocation5 + $0x28] sm:$0xff]
        %v2501 = vld [vmem:[#allocation5 + $0x30] sm:$0xff]
        %v2502 = vld [vmem:[#allocation5 + $0x38] sm:$0xff]
        %v2503 = vld [vmem:[#allocation5 + $0x40] sm:$0xff]
        %v2504 = vld [vmem:[#allocation5 + $0x48] sm:$0xff]
        %v2505 = vld [vmem:[#allocation5 + $0x50] sm:$0xff]
        %v2506 = vld [vmem:[#allocation5 + $0x58] sm:$0xff]
        %v2507 = vld [vmem:[#allocation5 + $0x60] sm:$0xff]
        %v2508 = vld [vmem:[#allocation5 + $0x68] sm:$0xff]
        %v2509 = vld [vmem:[#allocation5 + $0x70] sm:$0xff]
        %v2510 = vld [vmem:[#allocation5 + $0x78] sm:$0xff]
        %v2511 = vld [vmem:[%s453] sm:$0xff]
        %v2512 = vld [vmem:[%s453 + $0x8] sm:$0xff]
        %v2513 = vld [vmem:[%s453 + $0x10] sm:$0xff]
        %v2514 = vld [vmem:[%s453 + $0x18] sm:$0xff]
        %v2515 = vld [vmem:[%s453 + $0x20] sm:$0xff]
        %v2516 = vld [vmem:[%s453 + $0x28] sm:$0xff]
        %v2517 = vld [vmem:[%s453 + $0x30] sm:$0xff]
        %v2518 = vld [vmem:[%s453 + $0x38] sm:$0xff]
        %v2519 = vld [vmem:[%s453 + $0x40] sm:$0xff]
        %v2520 = vld [vmem:[%s453 + $0x48] sm:$0xff]
        %v2521 = vld [vmem:[%s453 + $0x50] sm:$0xff]
        %v2522 = vld [vmem:[%s453 + $0x58] sm:$0xff]
        %v2523 = vld [vmem:[%s453 + $0x60] sm:$0xff]
        %v2524 = vld [vmem:[%s453 + $0x68] sm:$0xff]
        %v2525 = vld [vmem:[%s453 + $0x70] sm:$0xff]
        %v2526 = vld [vmem:[%s453 + $0x78] sm:$0xff]
        %2527 = vset.pattern.permute.xlu0 0
        %2528 = vperm.xlu0 %2527, %v2511
        %v2529 = vpop.permute.xlu0 %2528
        %2530 = vset.pattern.permute.xlu0 0
        %2531 = vperm.xlu0 %2530, %v2512
        %v2532 = vpop.permute.xlu0 %2531
        %2533 = vset.pattern.permute.xlu0 0
        %2534 = vperm.xlu0 %2533, %v2513
        %v2535 = vpop.permute.xlu0 %2534
        %2536 = vset.pattern.permute.xlu0 0
        %2537 = vperm.xlu0 %2536, %v2514
        %v2538 = vpop.permute.xlu0 %2537
        %2539 = vset.pattern.permute.xlu0 0
        %2540 = vperm.xlu0 %2539, %v2515
        %v2541 = vpop.permute.xlu0 %2540
        %2542 = vset.pattern.permute.xlu0 0
        %2543 = vperm.xlu0 %2542, %v2516
        %v2544 = vpop.permute.xlu0 %2543
        %2545 = vset.pattern.permute.xlu0 0
        %2546 = vperm.xlu0 %2545, %v2517
        %v2547 = vpop.permute.xlu0 %2546
        %2548 = vset.pattern.permute.xlu0 0
        %2549 = vperm.xlu0 %2548, %v2518
        %v2550 = vpop.permute.xlu0 %2549
        %2551 = vset.pattern.permute.xlu0 0
        %2552 = vperm.xlu0 %2551, %v2519
        %v2553 = vpop.permute.xlu0 %2552
        %2554 = vset.pattern.permute.xlu0 0
        %2555 = vperm.xlu0 %2554, %v2520
        %v2556 = vpop.permute.xlu0 %2555
        %2557 = vset.pattern.permute.xlu0 0
        %2558 = vperm.xlu0 %2557, %v2521
        %v2559 = vpop.permute.xlu0 %2558
        %2560 = vset.pattern.permute.xlu0 0
        %2561 = vperm.xlu0 %2560, %v2522
        %v2562 = vpop.permute.xlu0 %2561
        %2563 = vset.pattern.permute.xlu0 0
        %2564 = vperm.xlu0 %2563, %v2523
        %v2565 = vpop.permute.xlu0 %2564
        %2566 = vset.pattern.permute.xlu0 0
        %2567 = vperm.xlu0 %2566, %v2524
        %v2568 = vpop.permute.xlu0 %2567
        %2569 = vset.pattern.permute.xlu0 0
        %2570 = vperm.xlu0 %2569, %v2525
        %v2571 = vpop.permute.xlu0 %2570
        %2572 = vset.pattern.permute.xlu0 0
        %2573 = vperm.xlu0 %2572, %v2526
        %v2574 = vpop.permute.xlu0 %2573
        %vm2575 = vcmp.eq.s32.totalorder %v2487, %v2529
        %vm2576 = vcmp.eq.s32.totalorder %v2488, %v2529
        %vm2577 = vcmp.eq.s32.totalorder %v2489, %v2529
        %vm2578 = vcmp.eq.s32.totalorder %v2490, %v2529
        %vm2579 = vcmp.eq.s32.totalorder %v2491, %v2529
        %vm2580 = vcmp.eq.s32.totalorder %v2492, %v2529
        %vm2581 = vcmp.eq.s32.totalorder %v2493, %v2529
        %vm2582 = vcmp.eq.s32.totalorder %v2494, %v2529
        %vm2583 = vcmp.eq.s32.totalorder %v2487, %v2532
        %vm2584 = vcmp.eq.s32.totalorder %v2488, %v2532
        %vm2585 = vcmp.eq.s32.totalorder %v2489, %v2532
        %vm2586 = vcmp.eq.s32.totalorder %v2490, %v2532
        %vm2587 = vcmp.eq.s32.totalorder %v2491, %v2532
        %vm2588 = vcmp.eq.s32.totalorder %v2492, %v2532
        %vm2589 = vcmp.eq.s32.totalorder %v2493, %v2532
        %vm2590 = vcmp.eq.s32.totalorder %v2494, %v2532
        %vm2591 = vcmp.eq.s32.totalorder %v2487, %v2535
        %vm2592 = vcmp.eq.s32.totalorder %v2488, %v2535
        %vm2593 = vcmp.eq.s32.totalorder %v2489, %v2535
        %vm2594 = vcmp.eq.s32.totalorder %v2490, %v2535
        %vm2595 = vcmp.eq.s32.totalorder %v2491, %v2535
        %vm2596 = vcmp.eq.s32.totalorder %v2492, %v2535
        %vm2597 = vcmp.eq.s32.totalorder %v2493, %v2535
        %vm2598 = vcmp.eq.s32.totalorder %v2494, %v2535
        %vm2599 = vcmp.eq.s32.totalorder %v2487, %v2538
        %vm2600 = vcmp.eq.s32.totalorder %v2488, %v2538
        %vm2601 = vcmp.eq.s32.totalorder %v2489, %v2538
        %vm2602 = vcmp.eq.s32.totalorder %v2490, %v2538
        %vm2603 = vcmp.eq.s32.totalorder %v2491, %v2538
        %vm2604 = vcmp.eq.s32.totalorder %v2492, %v2538
        %vm2605 = vcmp.eq.s32.totalorder %v2493, %v2538
        %vm2606 = vcmp.eq.s32.totalorder %v2494, %v2538
        %vm2607 = vcmp.eq.s32.totalorder %v2487, %v2541
        %vm2608 = vcmp.eq.s32.totalorder %v2488, %v2541
        %vm2609 = vcmp.eq.s32.totalorder %v2489, %v2541
        %vm2610 = vcmp.eq.s32.totalorder %v2490, %v2541
        %vm2611 = vcmp.eq.s32.totalorder %v2491, %v2541
        %vm2612 = vcmp.eq.s32.totalorder %v2492, %v2541
        %vm2613 = vcmp.eq.s32.totalorder %v2493, %v2541
        %vm2614 = vcmp.eq.s32.totalorder %v2494, %v2541
        %vm2615 = vcmp.eq.s32.totalorder %v2487, %v2544
        %vm2616 = vcmp.eq.s32.totalorder %v2488, %v2544
        %vm2617 = vcmp.eq.s32.totalorder %v2489, %v2544
        %vm2618 = vcmp.eq.s32.totalorder %v2490, %v2544
        %vm2619 = vcmp.eq.s32.totalorder %v2491, %v2544
        %vm2620 = vcmp.eq.s32.totalorder %v2492, %v2544
        %vm2621 = vcmp.eq.s32.totalorder %v2493, %v2544
        %vm2622 = vcmp.eq.s32.totalorder %v2494, %v2544
        %vm2623 = vcmp.eq.s32.totalorder %v2487, %v2547
        %vm2624 = vcmp.eq.s32.totalorder %v2488, %v2547
        %vm2625 = vcmp.eq.s32.totalorder %v2489, %v2547
        %vm2626 = vcmp.eq.s32.totalorder %v2490, %v2547
        %vm2627 = vcmp.eq.s32.totalorder %v2491, %v2547
        %vm2628 = vcmp.eq.s32.totalorder %v2492, %v2547
        %vm2629 = vcmp.eq.s32.totalorder %v2493, %v2547
        %vm2630 = vcmp.eq.s32.totalorder %v2494, %v2547
        %vm2631 = vcmp.eq.s32.totalorder %v2487, %v2550
        %vm2632 = vcmp.eq.s32.totalorder %v2488, %v2550
        %vm2633 = vcmp.eq.s32.totalorder %v2489, %v2550
        %vm2634 = vcmp.eq.s32.totalorder %v2490, %v2550
        %vm2635 = vcmp.eq.s32.totalorder %v2491, %v2550
        %vm2636 = vcmp.eq.s32.totalorder %v2492, %v2550
        %vm2637 = vcmp.eq.s32.totalorder %v2493, %v2550
        %vm2638 = vcmp.eq.s32.totalorder %v2494, %v2550
        %vm2639 = vcmp.eq.s32.totalorder %v2487, %v2553
        %vm2640 = vcmp.eq.s32.totalorder %v2488, %v2553
        %vm2641 = vcmp.eq.s32.totalorder %v2489, %v2553
        %vm2642 = vcmp.eq.s32.totalorder %v2490, %v2553
        %vm2643 = vcmp.eq.s32.totalorder %v2491, %v2553
        %vm2644 = vcmp.eq.s32.totalorder %v2492, %v2553
        %vm2645 = vcmp.eq.s32.totalorder %v2493, %v2553
        %vm2646 = vcmp.eq.s32.totalorder %v2494, %v2553
        %vm2647 = vcmp.eq.s32.totalorder %v2487, %v2556
        %vm2648 = vcmp.eq.s32.totalorder %v2488, %v2556
        %vm2649 = vcmp.eq.s32.totalorder %v2489, %v2556
        %vm2650 = vcmp.eq.s32.totalorder %v2490, %v2556
        %vm2651 = vcmp.eq.s32.totalorder %v2491, %v2556
        %vm2652 = vcmp.eq.s32.totalorder %v2492, %v2556
        %vm2653 = vcmp.eq.s32.totalorder %v2493, %v2556
        %vm2654 = vcmp.eq.s32.totalorder %v2494, %v2556
        %vm2655 = vcmp.eq.s32.totalorder %v2487, %v2559
        %vm2656 = vcmp.eq.s32.totalorder %v2488, %v2559
        %vm2657 = vcmp.eq.s32.totalorder %v2489, %v2559
        %vm2658 = vcmp.eq.s32.totalorder %v2490, %v2559
        %vm2659 = vcmp.eq.s32.totalorder %v2491, %v2559
        %vm2660 = vcmp.eq.s32.totalorder %v2492, %v2559
        %vm2661 = vcmp.eq.s32.totalorder %v2493, %v2559
        %vm2662 = vcmp.eq.s32.totalorder %v2494, %v2559
        %vm2663 = vcmp.eq.s32.totalorder %v2487, %v2562
        %vm2664 = vcmp.eq.s32.totalorder %v2488, %v2562
        %vm2665 = vcmp.eq.s32.totalorder %v2489, %v2562
        %vm2666 = vcmp.eq.s32.totalorder %v2490, %v2562
        %vm2667 = vcmp.eq.s32.totalorder %v2491, %v2562
        %vm2668 = vcmp.eq.s32.totalorder %v2492, %v2562
        %vm2669 = vcmp.eq.s32.totalorder %v2493, %v2562
        %vm2670 = vcmp.eq.s32.totalorder %v2494, %v2562
        %vm2671 = vcmp.eq.s32.totalorder %v2487, %v2565
        %vm2672 = vcmp.eq.s32.totalorder %v2488, %v2565
        %vm2673 = vcmp.eq.s32.totalorder %v2489, %v2565
        %vm2674 = vcmp.eq.s32.totalorder %v2490, %v2565
        %vm2675 = vcmp.eq.s32.totalorder %v2491, %v2565
        %vm2676 = vcmp.eq.s32.totalorder %v2492, %v2565
        %vm2677 = vcmp.eq.s32.totalorder %v2493, %v2565
        %vm2678 = vcmp.eq.s32.totalorder %v2494, %v2565
        %vm2679 = vcmp.eq.s32.totalorder %v2487, %v2568
        %vm2680 = vcmp.eq.s32.totalorder %v2488, %v2568
        %vm2681 = vcmp.eq.s32.totalorder %v2489, %v2568
        %vm2682 = vcmp.eq.s32.totalorder %v2490, %v2568
        %vm2683 = vcmp.eq.s32.totalorder %v2491, %v2568
        %vm2684 = vcmp.eq.s32.totalorder %v2492, %v2568
        %vm2685 = vcmp.eq.s32.totalorder %v2493, %v2568
        %vm2686 = vcmp.eq.s32.totalorder %v2494, %v2568
        %vm2687 = vcmp.eq.s32.totalorder %v2487, %v2571
        %vm2688 = vcmp.eq.s32.totalorder %v2488, %v2571
        %vm2689 = vcmp.eq.s32.totalorder %v2489, %v2571
        %vm2690 = vcmp.eq.s32.totalorder %v2490, %v2571
        %vm2691 = vcmp.eq.s32.totalorder %v2491, %v2571
        %vm2692 = vcmp.eq.s32.totalorder %v2492, %v2571
        %vm2693 = vcmp.eq.s32.totalorder %v2493, %v2571
        %vm2694 = vcmp.eq.s32.totalorder %v2494, %v2571
        %vm2695 = vcmp.eq.s32.totalorder %v2487, %v2574
        %vm2696 = vcmp.eq.s32.totalorder %v2488, %v2574
        %vm2697 = vcmp.eq.s32.totalorder %v2489, %v2574
        %vm2698 = vcmp.eq.s32.totalorder %v2490, %v2574
        %vm2699 = vcmp.eq.s32.totalorder %v2491, %v2574
        %vm2700 = vcmp.eq.s32.totalorder %v2492, %v2574
        %vm2701 = vcmp.eq.s32.totalorder %v2493, %v2574
        %vm2702 = vcmp.eq.s32.totalorder %v2494, %v2574
        %v2703 = vsel %vm2575, %v1018, 0.0
        %v2704 = vsel %vm2576, %v1020, 0.0
        %v2705 = vsel %vm2577, %v1131, 0.0
        %v2706 = vsel %vm2578, %v1133, 0.0
        %v2707 = vsel %vm2579, %v1244, 0.0
        %v2708 = vsel %vm2580, %v1246, 0.0
        %v2709 = vsel %vm2581, %v1357, 0.0
        %v2710 = vsel %vm2582, %v1359, 0.0
        %v2711 = vsel %vm2583, %v1022, 0.0
        %v2712 = vsel %vm2584, %v1024, 0.0
        %v2713 = vsel %vm2585, %v1135, 0.0
        %v2714 = vsel %vm2586, %v1137, 0.0
        %v2715 = vsel %vm2587, %v1248, 0.0
        %v2716 = vsel %vm2588, %v1250, 0.0
        %v2717 = vsel %vm2589, %v1361, 0.0
        %v2718 = vsel %vm2590, %v1363, 0.0
        %v2719 = vsel %vm2591, %v1028, 0.0
        %v2720 = vsel %vm2592, %v1030, 0.0
        %v2721 = vsel %vm2593, %v1141, 0.0
        %v2722 = vsel %vm2594, %v1143, 0.0
        %v2723 = vsel %vm2595, %v1254, 0.0
        %v2724 = vsel %vm2596, %v1256, 0.0
        %v2725 = vsel %vm2597, %v1367, 0.0
        %v2726 = vsel %vm2598, %v1369, 0.0
        %v2727 = vsel %vm2599, %v1032, 0.0
        %v2728 = vsel %vm2600, %v1034, 0.0
        %v2729 = vsel %vm2601, %v1145, 0.0
        %v2730 = vsel %vm2602, %v1147, 0.0
        %v2731 = vsel %vm2603, %v1258, 0.0
        %v2732 = vsel %vm2604, %v1260, 0.0
        %v2733 = vsel %vm2605, %v1371, 0.0
        %v2734 = vsel %vm2606, %v1373, 0.0
        %v2735 = vsel %vm2607, %v1038, 0.0
        %v2736 = vsel %vm2608, %v1040, 0.0
        %v2737 = vsel %vm2609, %v1151, 0.0
        %v2738 = vsel %vm2610, %v1153, 0.0
        %v2739 = vsel %vm2611, %v1264, 0.0
        %v2740 = vsel %vm2612, %v1266, 0.0
        %v2741 = vsel %vm2613, %v1377, 0.0
        %v2742 = vsel %vm2614, %v1379, 0.0
        %v2743 = vsel %vm2615, %v1042, 0.0
        %v2744 = vsel %vm2616, %v1044, 0.0
        %v2745 = vsel %vm2617, %v1155, 0.0
        %v2746 = vsel %vm2618, %v1157, 0.0
        %v2747 = vsel %vm2619, %v1268, 0.0
        %v2748 = vsel %vm2620, %v1270, 0.0
        %v2749 = vsel %vm2621, %v1381, 0.0
        %v2750 = vsel %vm2622, %v1383, 0.0
        %v2751 = vsel %vm2623, %v1048, 0.0
        %v2752 = vsel %vm2624, %v1050, 0.0
        %v2753 = vsel %vm2625, %v1161, 0.0
        %v2754 = vsel %vm2626, %v1163, 0.0
        %v2755 = vsel %vm2627, %v1274, 0.0
        %v2756 = vsel %vm2628, %v1276, 0.0
        %v2757 = vsel %vm2629, %v1387, 0.0
        %v2758 = vsel %vm2630, %v1389, 0.0
        %v2759 = vsel %vm2631, %v1052, 0.0
        %v2760 = vsel %vm2632, %v1054, 0.0
        %v2761 = vsel %vm2633, %v1165, 0.0
        %v2762 = vsel %vm2634, %v1167, 0.0
        %v2763 = vsel %vm2635, %v1278, 0.0
        %v2764 = vsel %vm2636, %v1280, 0.0
        %v2765 = vsel %vm2637, %v1391, 0.0
        %v2766 = vsel %vm2638, %v1393, 0.0
        %v2767 = vsel %vm2639, %v1058, 0.0
        %v2768 = vsel %vm2640, %v1060, 0.0
        %v2769 = vsel %vm2641, %v1171, 0.0
        %v2770 = vsel %vm2642, %v1173, 0.0
        %v2771 = vsel %vm2643, %v1284, 0.0
        %v2772 = vsel %vm2644, %v1286, 0.0
        %v2773 = vsel %vm2645, %v1397, 0.0
        %v2774 = vsel %vm2646, %v1399, 0.0
        %v2775 = vsel %vm2647, %v1062, 0.0
        %v2776 = vsel %vm2648, %v1064, 0.0
        %v2777 = vsel %vm2649, %v1175, 0.0
        %v2778 = vsel %vm2650, %v1177, 0.0
        %v2779 = vsel %vm2651, %v1288, 0.0
        %v2780 = vsel %vm2652, %v1290, 0.0
        %v2781 = vsel %vm2653, %v1401, 0.0
        %v2782 = vsel %vm2654, %v1403, 0.0
        %v2783 = vsel %vm2655, %v1068, 0.0
        %v2784 = vsel %vm2656, %v1070, 0.0
        %v2785 = vsel %vm2657, %v1181, 0.0
        %v2786 = vsel %vm2658, %v1183, 0.0
        %v2787 = vsel %vm2659, %v1294, 0.0
        %v2788 = vsel %vm2660, %v1296, 0.0
        %v2789 = vsel %vm2661, %v1407, 0.0
        %v2790 = vsel %vm2662, %v1409, 0.0
        %v2791 = vsel %vm2663, %v1072, 0.0
        %v2792 = vsel %vm2664, %v1074, 0.0
        %v2793 = vsel %vm2665, %v1185, 0.0
        %v2794 = vsel %vm2666, %v1187, 0.0
        %v2795 = vsel %vm2667, %v1298, 0.0
        %v2796 = vsel %vm2668, %v1300, 0.0
        %v2797 = vsel %vm2669, %v1411, 0.0
        %v2798 = vsel %vm2670, %v1413, 0.0
        %v2799 = vsel %vm2671, %v1078, 0.0
        %v2800 = vsel %vm2672, %v1080, 0.0
        %v2801 = vsel %vm2673, %v1191, 0.0
        %v2802 = vsel %vm2674, %v1193, 0.0
        %v2803 = vsel %vm2675, %v1304, 0.0
        %v2804 = vsel %vm2676, %v1306, 0.0
        %v2805 = vsel %vm2677, %v1417, 0.0
        %v2806 = vsel %vm2678, %v1419, 0.0
        %v2807 = vsel %vm2679, %v1082, 0.0
        %v2808 = vsel %vm2680, %v1084, 0.0
        %v2809 = vsel %vm2681, %v1195, 0.0
        %v2810 = vsel %vm2682, %v1197, 0.0
        %v2811 = vsel %vm2683, %v1308, 0.0
        %v2812 = vsel %vm2684, %v1310, 0.0
        %v2813 = vsel %vm2685, %v1421, 0.0
        %v2814 = vsel %vm2686, %v1423, 0.0
        %v2815 = vsel %vm2687, %v1088, 0.0
        %v2816 = vsel %vm2688, %v1090, 0.0
        %v2817 = vsel %vm2689, %v1201, 0.0
        %v2818 = vsel %vm2690, %v1203, 0.0
        %v2819 = vsel %vm2691, %v1314, 0.0
        %v2820 = vsel %vm2692, %v1316, 0.0
        %v2821 = vsel %vm2693, %v1427, 0.0
        %v2822 = vsel %vm2694, %v1429, 0.0
        %v2823 = vsel %vm2695, %v1092, 0.0
        %v2824 = vsel %vm2696, %v1094, 0.0
        %v2825 = vsel %vm2697, %v1205, 0.0
        %v2826 = vsel %vm2698, %v1207, 0.0
        %v2827 = vsel %vm2699, %v1318, 0.0
        %v2828 = vsel %vm2700, %v1320, 0.0
        %v2829 = vsel %vm2701, %v1431, 0.0
        %v2830 = vsel %vm2702, %v1433, 0.0
        %v2831 = vadd.f32 %v2703, %v2704
        %v2832 = vadd.f32 %v2831, %v2705
        %v2833 = vadd.f32 %v2832, %v2706
        %v2834 = vadd.f32 %v2833, %v2707
        %v2835 = vadd.f32 %v2834, %v2708
        %v2836 = vadd.f32 %v2835, %v2709
        %v2837 = vadd.f32 %v2836, %v2710
        %2838 = vadd.xlane.f32.xlu0 %v2837
        %v2839 = vpop.xlane.xlu0 %2838
        %v2840 = vadd.f32 %v2711, %v2712
        %v2841 = vadd.f32 %v2840, %v2713
        %v2842 = vadd.f32 %v2841, %v2714
        %v2843 = vadd.f32 %v2842, %v2715
        %v2844 = vadd.f32 %v2843, %v2716
        %v2845 = vadd.f32 %v2844, %v2717
        %v2846 = vadd.f32 %v2845, %v2718
        %2847 = vadd.xlane.f32.xlu0 %v2846
        %v2848 = vpop.xlane.xlu0 %2847
        %v2849 = vadd.f32 %v2719, %v2720
        %v2850 = vadd.f32 %v2849, %v2721
        %v2851 = vadd.f32 %v2850, %v2722
        %v2852 = vadd.f32 %v2851, %v2723
        %v2853 = vadd.f32 %v2852, %v2724
        %v2854 = vadd.f32 %v2853, %v2725
        %v2855 = vadd.f32 %v2854, %v2726
        %2856 = vadd.xlane.f32.xlu0 %v2855
        %v2857 = vpop.xlane.xlu0 %2856
        %v2858 = vadd.f32 %v2727, %v2728
        %v2859 = vadd.f32 %v2858, %v2729
        %v2860 = vadd.f32 %v2859, %v2730
        %v2861 = vadd.f32 %v2860, %v2731
        %v2862 = vadd.f32 %v2861, %v2732
        %v2863 = vadd.f32 %v2862, %v2733
        %v2864 = vadd.f32 %v2863, %v2734
        %2865 = vadd.xlane.f32.xlu0 %v2864
        %v2866 = vpop.xlane.xlu0 %2865
        %v2867 = vadd.f32 %v2735, %v2736
        %v2868 = vadd.f32 %v2867, %v2737
        %v2869 = vadd.f32 %v2868, %v2738
        %v2870 = vadd.f32 %v2869, %v2739
        %v2871 = vadd.f32 %v2870, %v2740
        %v2872 = vadd.f32 %v2871, %v2741
        %v2873 = vadd.f32 %v2872, %v2742
        %2874 = vadd.xlane.f32.xlu0 %v2873
        %v2875 = vpop.xlane.xlu0 %2874
        %v2876 = vadd.f32 %v2743, %v2744
        %v2877 = vadd.f32 %v2876, %v2745
        %v2878 = vadd.f32 %v2877, %v2746
        %v2879 = vadd.f32 %v2878, %v2747
        %v2880 = vadd.f32 %v2879, %v2748
        %v2881 = vadd.f32 %v2880, %v2749
        %v2882 = vadd.f32 %v2881, %v2750
        %2883 = vadd.xlane.f32.xlu0 %v2882
        %v2884 = vpop.xlane.xlu0 %2883
        %v2885 = vadd.f32 %v2751, %v2752
        %v2886 = vadd.f32 %v2885, %v2753
        %v2887 = vadd.f32 %v2886, %v2754
        %v2888 = vadd.f32 %v2887, %v2755
        %v2889 = vadd.f32 %v2888, %v2756
        %v2890 = vadd.f32 %v2889, %v2757
        %v2891 = vadd.f32 %v2890, %v2758
        %2892 = vadd.xlane.f32.xlu0 %v2891
        %v2893 = vpop.xlane.xlu0 %2892
        %v2894 = vadd.f32 %v2759, %v2760
        %v2895 = vadd.f32 %v2894, %v2761
        %v2896 = vadd.f32 %v2895, %v2762
        %v2897 = vadd.f32 %v2896, %v2763
        %v2898 = vadd.f32 %v2897, %v2764
        %v2899 = vadd.f32 %v2898, %v2765
        %v2900 = vadd.f32 %v2899, %v2766
        %2901 = vadd.xlane.f32.xlu0 %v2900
        %v2902 = vpop.xlane.xlu0 %2901
        %v2903 = vadd.f32 %v2767, %v2768
        %v2904 = vadd.f32 %v2903, %v2769
        %v2905 = vadd.f32 %v2904, %v2770
        %v2906 = vadd.f32 %v2905, %v2771
        %v2907 = vadd.f32 %v2906, %v2772
        %v2908 = vadd.f32 %v2907, %v2773
        %v2909 = vadd.f32 %v2908, %v2774
        %2910 = vadd.xlane.f32.xlu0 %v2909
        %v2911 = vpop.xlane.xlu0 %2910
        %v2912 = vadd.f32 %v2775, %v2776
        %v2913 = vadd.f32 %v2912, %v2777
        %v2914 = vadd.f32 %v2913, %v2778
        %v2915 = vadd.f32 %v2914, %v2779
        %v2916 = vadd.f32 %v2915, %v2780
        %v2917 = vadd.f32 %v2916, %v2781
        %v2918 = vadd.f32 %v2917, %v2782
        %2919 = vadd.xlane.f32.xlu0 %v2918
        %v2920 = vpop.xlane.xlu0 %2919
        %v2921 = vadd.f32 %v2783, %v2784
        %v2922 = vadd.f32 %v2921, %v2785
        %v2923 = vadd.f32 %v2922, %v2786
        %v2924 = vadd.f32 %v2923, %v2787
        %v2925 = vadd.f32 %v2924, %v2788
        %v2926 = vadd.f32 %v2925, %v2789
        %v2927 = vadd.f32 %v2926, %v2790
        %2928 = vadd.xlane.f32.xlu0 %v2927
        %v2929 = vpop.xlane.xlu0 %2928
        %v2930 = vadd.f32 %v2791, %v2792
        %v2931 = vadd.f32 %v2930, %v2793
        %v2932 = vadd.f32 %v2931, %v2794
        %v2933 = vadd.f32 %v2932, %v2795
        %v2934 = vadd.f32 %v2933, %v2796
        %v2935 = vadd.f32 %v2934, %v2797
        %v2936 = vadd.f32 %v2935, %v2798
        %2937 = vadd.xlane.f32.xlu0 %v2936
        %v2938 = vpop.xlane.xlu0 %2937
        %v2939 = vadd.f32 %v2799, %v2800
        %v2940 = vadd.f32 %v2939, %v2801
        %v2941 = vadd.f32 %v2940, %v2802
        %v2942 = vadd.f32 %v2941, %v2803
        %v2943 = vadd.f32 %v2942, %v2804
        %v2944 = vadd.f32 %v2943, %v2805
        %v2945 = vadd.f32 %v2944, %v2806
        %2946 = vadd.xlane.f32.xlu0 %v2945
        %v2947 = vpop.xlane.xlu0 %2946
        %v2948 = vadd.f32 %v2807, %v2808
        %v2949 = vadd.f32 %v2948, %v2809
        %v2950 = vadd.f32 %v2949, %v2810
        %v2951 = vadd.f32 %v2950, %v2811
        %v2952 = vadd.f32 %v2951, %v2812
        %v2953 = vadd.f32 %v2952, %v2813
        %v2954 = vadd.f32 %v2953, %v2814
        %2955 = vadd.xlane.f32.xlu0 %v2954
        %v2956 = vpop.xlane.xlu0 %2955
        %v2957 = vadd.f32 %v2815, %v2816
        %v2958 = vadd.f32 %v2957, %v2817
        %v2959 = vadd.f32 %v2958, %v2818
        %v2960 = vadd.f32 %v2959, %v2819
        %v2961 = vadd.f32 %v2960, %v2820
        %v2962 = vadd.f32 %v2961, %v2821
        %v2963 = vadd.f32 %v2962, %v2822
        %2964 = vadd.xlane.f32.xlu0 %v2963
        %v2965 = vpop.xlane.xlu0 %2964
        %v2966 = vadd.f32 %v2823, %v2824
        %v2967 = vadd.f32 %v2966, %v2825
        %v2968 = vadd.f32 %v2967, %v2826
        %v2969 = vadd.f32 %v2968, %v2827
        %v2970 = vadd.f32 %v2969, %v2828
        %v2971 = vadd.f32 %v2970, %v2829
        %v2972 = vadd.f32 %v2971, %v2830
        %2973 = vadd.xlane.f32.xlu0 %v2972
        %v2974 = vpop.xlane.xlu0 %2973
        %v2975 = vadd.f32 %v2495, %v2839
        %v2976 = vadd.f32 %v2496, %v2848
        %v2977 = vadd.f32 %v2497, %v2857
        %v2978 = vadd.f32 %v2498, %v2866
        %v2979 = vadd.f32 %v2499, %v2875
        %v2980 = vadd.f32 %v2500, %v2884
        %v2981 = vadd.f32 %v2501, %v2893
        %v2982 = vadd.f32 %v2502, %v2902
        %v2983 = vadd.f32 %v2503, %v2911
        %v2984 = vadd.f32 %v2504, %v2920
        %v2985 = vadd.f32 %v2505, %v2929
        %v2986 = vadd.f32 %v2506, %v2938
        %v2987 = vadd.f32 %v2507, %v2947
        %v2988 = vadd.f32 %v2508, %v2956
        %v2989 = vadd.f32 %v2509, %v2965
        %v2990 = vadd.f32 %v2510, %v2974
        %2991 = vst.msk [vmem:[#allocation5] sm:$0xff] %vm2443, %v2975
        %2992 = vst.msk [vmem:[#allocation5 + $0x8] sm:$0xff] %vm2443, %v2976
        %2993 = vst.msk [vmem:[#allocation5 + $0x10] sm:$0xff] %vm2443, %v2977
        %2994 = vst.msk [vmem:[#allocation5 + $0x18] sm:$0xff] %vm2443, %v2978
        %2995 = vst.msk [vmem:[#allocation5 + $0x20] sm:$0xff] %vm2443, %v2979
        %2996 = vst.msk [vmem:[#allocation5 + $0x28] sm:$0xff] %vm2443, %v2980
        %2997 = vst.msk [vmem:[#allocation5 + $0x30] sm:$0xff] %vm2443, %v2981
        %2998 = vst.msk [vmem:[#allocation5 + $0x38] sm:$0xff] %vm2443, %v2982
        %2999 = vst.msk [vmem:[#allocation5 + $0x40] sm:$0xff] %vm2443, %v2983
        %3000 = vst.msk [vmem:[#allocation5 + $0x48] sm:$0xff] %vm2443, %v2984
        %3001 = vst.msk [vmem:[#allocation5 + $0x50] sm:$0xff] %vm2443, %v2985
        %3002 = vst.msk [vmem:[#allocation5 + $0x58] sm:$0xff] %vm2443, %v2986
        %3003 = vst.msk [vmem:[#allocation5 + $0x60] sm:$0xff] %vm2443, %v2987
        %3004 = vst.msk [vmem:[#allocation5 + $0x68] sm:$0xff] %vm2443, %v2988
        %3005 = vst.msk [vmem:[#allocation5 + $0x70] sm:$0xff] %vm2443, %v2989
        %3006 = vst.msk [vmem:[#allocation5 + $0x78] sm:$0xff] %vm2443, %v2990
        %p3007 = scmp.eq.s32.totalorder %s25, 1
        // Predicated region
        $region64: #{seq2seq_forward.6} parent=54 // pred_check
          %p3008 = pneg %p3007
        $region65: #{seq2seq_forward.6} parent=54 // pred_check_branch
          %3010 = sbr.rel (%p3008) target = $region67
        $region66: #{seq2seq_forward.6} parent=54 // pred_region
          %v3011 = vld [vmem:[#allocation3] sm:$0xff]
          %v3012 = vld [vmem:[#allocation3 + $0x8] sm:$0xff]
          %v3013 = vld [vmem:[#allocation3 + $0x10] sm:$0xff]
          %v3014 = vld [vmem:[#allocation3 + $0x18] sm:$0xff]
          %v3015 = vld [vmem:[#allocation3 + $0x20] sm:$0xff]
          %v3016 = vld [vmem:[#allocation3 + $0x28] sm:$0xff]
          %v3017 = vld [vmem:[#allocation3 + $0x30] sm:$0xff]
          %v3018 = vld [vmem:[#allocation3 + $0x38] sm:$0xff]
          %v3019 = vld [vmem:[#allocation3 + $0x40] sm:$0xff]
          %v3020 = vld [vmem:[#allocation3 + $0x48] sm:$0xff]
          %v3021 = vld [vmem:[#allocation3 + $0x50] sm:$0xff]
          %v3022 = vld [vmem:[#allocation3 + $0x58] sm:$0xff]
          %v3023 = vld [vmem:[#allocation3 + $0x60] sm:$0xff]
          %v3024 = vld [vmem:[#allocation3 + $0x68] sm:$0xff]
          %v3025 = vld [vmem:[#allocation3 + $0x70] sm:$0xff]
          %v3026 = vld [vmem:[#allocation3 + $0x78] sm:$0xff]
          %v3027 = vld [vmem:[#allocation4] sm:$0xff]
          %v3028 = vld [vmem:[#allocation4 + $0x8] sm:$0xff]
          %v3029 = vld [vmem:[#allocation4 + $0x10] sm:$0xff]
          %v3030 = vld [vmem:[#allocation4 + $0x18] sm:$0xff]
          %v3031 = vld [vmem:[#allocation4 + $0x20] sm:$0xff]
          %v3032 = vld [vmem:[#allocation4 + $0x28] sm:$0xff]
          %v3033 = vld [vmem:[#allocation4 + $0x30] sm:$0xff]
          %v3034 = vld [vmem:[#allocation4 + $0x38] sm:$0xff]
          %v3035 = vld [vmem:[#allocation4 + $0x40] sm:$0xff]
          %v3036 = vld [vmem:[#allocation4 + $0x48] sm:$0xff]
          %v3037 = vld [vmem:[#allocation4 + $0x50] sm:$0xff]
          %v3038 = vld [vmem:[#allocation4 + $0x58] sm:$0xff]
          %v3039 = vld [vmem:[#allocation4 + $0x60] sm:$0xff]
          %v3040 = vld [vmem:[#allocation4 + $0x68] sm:$0xff]
          %v3041 = vld [vmem:[#allocation4 + $0x70] sm:$0xff]
          %v3042 = vld [vmem:[#allocation4 + $0x78] sm:$0xff]
          %v3043 = vlog2.pop %v3027
          %v3044 = vmul.f32 %v3043, 0.6931472
          %v3045 = vlog2.pop %v3028
          %v3046 = vmul.f32 %v3045, 0.6931472
          %v3047 = vlog2.pop %v3029
          %v3048 = vmul.f32 %v3047, 0.6931472
          %v3049 = vlog2.pop %v3030
          %v3050 = vmul.f32 %v3049, 0.6931472
          %v3051 = vlog2.pop %v3031
          %v3052 = vmul.f32 %v3051, 0.6931472
          %v3053 = vlog2.pop %v3032
          %v3054 = vmul.f32 %v3053, 0.6931472
          %v3055 = vlog2.pop %v3033
          %v3056 = vmul.f32 %v3055, 0.6931472
          %v3057 = vlog2.pop %v3034
          %v3058 = vmul.f32 %v3057, 0.6931472
          %v3059 = vlog2.pop %v3035
          %v3060 = vmul.f32 %v3059, 0.6931472
          %v3061 = vlog2.pop %v3036
          %v3062 = vmul.f32 %v3061, 0.6931472
          %v3063 = vlog2.pop %v3037
          %v3064 = vmul.f32 %v3063, 0.6931472
          %v3065 = vlog2.pop %v3038
          %v3066 = vmul.f32 %v3065, 0.6931472
          %v3067 = vlog2.pop %v3039
          %v3068 = vmul.f32 %v3067, 0.6931472
          %v3069 = vlog2.pop %v3040
          %v3070 = vmul.f32 %v3069, 0.6931472
          %v3071 = vlog2.pop %v3041
          %v3072 = vmul.f32 %v3071, 0.6931472
          %v3073 = vlog2.pop %v3042
          %v3074 = vmul.f32 %v3073, 0.6931472
          %v3075 = vadd.f32 %v3011, %v3044
          %v3076 = vadd.f32 %v3012, %v3046
          %v3077 = vadd.f32 %v3013, %v3048
          %v3078 = vadd.f32 %v3014, %v3050
          %v3079 = vadd.f32 %v3015, %v3052
          %v3080 = vadd.f32 %v3016, %v3054
          %v3081 = vadd.f32 %v3017, %v3056
          %v3082 = vadd.f32 %v3018, %v3058
          %v3083 = vadd.f32 %v3019, %v3060
          %v3084 = vadd.f32 %v3020, %v3062
          %v3085 = vadd.f32 %v3021, %v3064
          %v3086 = vadd.f32 %v3022, %v3066
          %v3087 = vadd.f32 %v3023, %v3068
          %v3088 = vadd.f32 %v3024, %v3070
          %v3089 = vadd.f32 %v3025, %v3072
          %v3090 = vadd.f32 %v3026, %v3074
          %v3091 = vld [vmem:[#allocation5] sm:$0xff]
          %v3092 = vld [vmem:[#allocation5 + $0x8] sm:$0xff]
          %v3093 = vld [vmem:[#allocation5 + $0x10] sm:$0xff]
          %v3094 = vld [vmem:[#allocation5 + $0x18] sm:$0xff]
          %v3095 = vld [vmem:[#allocation5 + $0x20] sm:$0xff]
          %v3096 = vld [vmem:[#allocation5 + $0x28] sm:$0xff]
          %v3097 = vld [vmem:[#allocation5 + $0x30] sm:$0xff]
          %v3098 = vld [vmem:[#allocation5 + $0x38] sm:$0xff]
          %v3099 = vld [vmem:[#allocation5 + $0x40] sm:$0xff]
          %v3100 = vld [vmem:[#allocation5 + $0x48] sm:$0xff]
          %v3101 = vld [vmem:[#allocation5 + $0x50] sm:$0xff]
          %v3102 = vld [vmem:[#allocation5 + $0x58] sm:$0xff]
          %v3103 = vld [vmem:[#allocation5 + $0x60] sm:$0xff]
          %v3104 = vld [vmem:[#allocation5 + $0x68] sm:$0xff]
          %v3105 = vld [vmem:[#allocation5 + $0x70] sm:$0xff]
          %v3106 = vld [vmem:[#allocation5 + $0x78] sm:$0xff]
          %v3107 = vsub.f32 %v3075, %v3091
          %v3108 = vsub.f32 %v3076, %v3092
          %v3109 = vsub.f32 %v3077, %v3093
          %v3110 = vsub.f32 %v3078, %v3094
          %v3111 = vsub.f32 %v3079, %v3095
          %v3112 = vsub.f32 %v3080, %v3096
          %v3113 = vsub.f32 %v3081, %v3097
          %v3114 = vsub.f32 %v3082, %v3098
          %v3115 = vsub.f32 %v3083, %v3099
          %v3116 = vsub.f32 %v3084, %v3100
          %v3117 = vsub.f32 %v3085, %v3101
          %v3118 = vsub.f32 %v3086, %v3102
          %v3119 = vsub.f32 %v3087, %v3103
          %v3120 = vsub.f32 %v3088, %v3104
          %v3121 = vsub.f32 %v3089, %v3105
          %v3122 = vsub.f32 %v3090, %v3106
          %3123 = vst.msk [vmem:[%s461] sm:$0xff] %vm2443, %v3107
          %3124 = vst.msk [vmem:[%s461 + $0x8] sm:$0xff] %vm2443, %v3108
          %3125 = vst.msk [vmem:[%s461 + $0x10] sm:$0xff] %vm2443, %v3109
          %3126 = vst.msk [vmem:[%s461 + $0x18] sm:$0xff] %vm2443, %v3110
          %3127 = vst.msk [vmem:[%s461 + $0x20] sm:$0xff] %vm2443, %v3111
          %3128 = vst.msk [vmem:[%s461 + $0x28] sm:$0xff] %vm2443, %v3112
          %3129 = vst.msk [vmem:[%s461 + $0x30] sm:$0xff] %vm2443, %v3113
          %3130 = vst.msk [vmem:[%s461 + $0x38] sm:$0xff] %vm2443, %v3114
          %3131 = vst.msk [vmem:[%s461 + $0x40] sm:$0xff] %vm2443, %v3115
          %3132 = vst.msk [vmem:[%s461 + $0x48] sm:$0xff] %vm2443, %v3116
          %3133 = vst.msk [vmem:[%s461 + $0x50] sm:$0xff] %vm2443, %v3117
          %3134 = vst.msk [vmem:[%s461 + $0x58] sm:$0xff] %vm2443, %v3118
          %3135 = vst.msk [vmem:[%s461 + $0x60] sm:$0xff] %vm2443, %v3119
          %3136 = vst.msk [vmem:[%s461 + $0x68] sm:$0xff] %vm2443, %v3120
          %3137 = vst.msk [vmem:[%s461 + $0x70] sm:$0xff] %vm2443, %v3121
          %3138 = vst.msk [vmem:[%s461 + $0x78] sm:$0xff] %vm2443, %v3122
        $region67: #{seq2seq_forward.6} parent=54 // pred_fallthru
          _
        %s3139 = sand.u32 %s146, 1
        %s3140 = scalar_lea.sflag [#allocation8], %s3139
        %s3141 = sand.u32 %s146, 1
        %s3142 = smul.addr %s3141, 1024
        %s3143 = scalar_lea.vmem [#allocation7], %s3142
        %s3144 = smul.u32 16, %s24
        %p3145 = scmp.lt.s32.totalorder %s3144, 15
        %s3146 = scalar_select %p3145, %s3144, 15
        %s3147 = smul.addr %s3146, 8
        %s3148 = scalar_lea.vmem %s5, %s3147
        // Predicated region
        $region68: #{seq2seq_forward.6} parent=54 // pred_check
          %p3149 = pneg %p156
        $region69: #{seq2seq_forward.6} parent=54 // pred_check_branch
          %3151 = sbr.rel (%p3149) target = $region71
        $region70: #{seq2seq_forward.6} parent=54 // pred_region
          %s3152 = smul.u32 16, %s24
          %s3153 = smul.u32 8, %s25
          %s3155 = ssub.s32 16384, 16384
          %3156 = vsyncadd %s3140, %s3155
          %s3157 = smul.addr %s3152, 16
          %s3158 = sadd.s32 %s3153, %s3157
          %s3159 = smul.addr %s3158, 128
          %s3160 = scalar_lea.hbm %s4, %s3159
          %s3161 = sshll.u32 %s3143, 4
          %s3162 = int_to_ptr.vmem [resolvable:$true] %s3161
          %3167 = dma.vmem_to_hbm [thread:$0]  %s3162, 16384, %s3160, %s3140, 1024, 2048, 64
        $region71: #{seq2seq_forward.6} parent=54 // pred_fallthru
          _
        // Predicated region
        $region72: #{seq2seq_forward.6} parent=54 // pred_check
          %p3168 = pneg %p182
        $region73: #{seq2seq_forward.6} parent=54 // pred_check_branch
          %3170 = sbr.rel (%p3168) target = $region75
        $region74: #{seq2seq_forward.6} parent=54 // pred_region
          %s3171 = smul.u32 16, %s24
        $region75: #{seq2seq_forward.6} parent=54 // pred_fallthru
          _
        // Predicated region
        $region76: #{seq2seq_forward.6} parent=54 // pred_check
          %p3172 = pneg %p182
        $region77: #{seq2seq_forward.6} parent=54 // pred_check_branch
          %3174 = sbr.rel (%p3172) target = $region79
        $region78: #{seq2seq_forward.6} parent=54 // pred_region
          %s3175 = smul.u32 16, %s24
          %p3176 = scmp.lt.s32.totalorder %s3175, 15
          %s3177 = scalar_select %p3176, %s3175, 15
          %s3178 = smul.addr %s3177, 8
          %s3179 = scalar_lea.vmem %s5, %s3178
        $region79: #{seq2seq_forward.6} parent=54 // pred_fallthru
          _
      $region55: #{seq2seq_forward.6} parent=5 // pred_fallthru
        _
      %p3180 = scmp.le.s32.totalorder 2, %s15
      // Predicated region
      $region80: #{seq2seq_forward.6} parent=5 // pred_check
        %p3181 = pneg %p3180
      $region81: #{seq2seq_forward.6} parent=5 // pred_check_branch
        %3183 = sbr.rel (%p3181) target = $region83
      $region82: #{seq2seq_forward.6} parent=5 // pred_region
        %s3184 = ssub.s32 %s15, 2
        // Predicated region
        $region84: #{seq2seq_forward.6} parent=82 // pred_check
          %p3185 = pneg %p162
        $region85: #{seq2seq_forward.6} parent=82 // pred_check_branch
          %3187 = sbr.rel (%p3185) target = $region87
        $region86: #{seq2seq_forward.6} parent=82 // pred_region
          %s3188 = sand.u32 %s147, 1
          %s3189 = scalar_lea.sflag [#allocation8], %s3188
          %s3190 = sand.u32 %s147, 1
          %s3191 = smul.addr %s3190, 1024
          %s3192 = scalar_lea.vmem [#allocation7], %s3191
          %3193 = dma.done %s3189, 16384
        $region87: #{seq2seq_forward.6} parent=82 // pred_fallthru
          _
      $region83: #{seq2seq_forward.6} parent=5 // pred_fallthru
        _
    $region6: #{seq2seq_forward.6} parent=1 // loop_footer
      %s19 = sadd.s32 1, %s15
    $region7: #{seq2seq_forward.6} parent=1 // loop_footer_branch
      %14 = sbr.rel target = $region3
    $region8: #{seq2seq_forward.6} parent=1 // loop_exit
      _
    %3194 = vsyncpa [#allocation8], 1
    %s3195 = scalar_lea.sflag [#allocation8], 1
    %3196 = vsyncpa %s3195, 1

// kernel: seq2seq_forward.5
$region0: #{seq2seq_forward.5}
  #allocation0 [shape = 'u32[]', space=smem, size = 0x4, offset = 0x4, fixed_abs, tag = 'smem constant byte address 0x4 - core index']
  #allocation1 [shape = 'u32[144,128]{1,0:T(1,128)}', space=vmem, size = 0x12000, scoped, tag = 'internal scratch']
  #allocation2 [shape = 'f32[128,512]{1,0:T(8,128)}', space=vmem, size = 0x40000, scoped, tag = 'scratch operand']
  #allocation3 [shape = 'f32[128,128]{1,0:T(8,128)}', space=vmem, size = 0x10000, scoped, tag = 'scratch operand']
  %s0 = inlined_call_operand.hbm [shape: f32[16,8,128], index: 0, kind: input, shape index: {}]
  %s1 = inlined_call_operand.hbm [shape: bf16[128,512], index: 1, kind: input, shape index: {}]
  %s2 = inlined_call_operand.hbm [shape: bf16[128,512], index: 2, kind: input, shape index: {}]
  %s3 = inlined_call_operand.vmem [shape: f32[1,512], index: 3, kind: input, shape index: {}]
  %s4 = inlined_call_operand.vmem [shape: f32[16,128], index: 4, kind: input, shape index: {}]
  %s5 = inlined_call_operand.vmem [shape: f32[16,128], index: 5, kind: input, shape index: {}]
  %s6 = inlined_call_operand.vmem [shape: f32[16,8,128], index: 6, kind: output, shape index: {0}]
  %s7 = inlined_call_operand.hbm [shape: f32[16,128], index: 7, kind: output, shape index: {1}]
  %s8 = inlined_call_operand.hbm [shape: f32[16,128], index: 8, kind: output, shape index: {2}]
  %s9 = inlined_call_operand.vmem [shape: f32[16,128], index: 9, kind: output, shape index: {3}]
  %10 = xla_tuple %s6, %s7, %s8, %s9
  %s11 = sld [smem:[#allocation0]]
  $region70: #{seq2seq_forward.5} parent=0
    _
  %s13 = ssub.s32 1, %s11
  %s14 = scalar_select 0, %s13, %s11
  $region1: #{seq2seq_forward.5} parent=0
    #allocation4 [shape = 'u8[65536]{0}', space=vmem, size = 0x10000, scoped, tag = 'input window, operand 0, single buffered']
    #allocation5 [shape = 's32[1]{0}', space=sflag, size = 0x4, scoped, tag = 'scoped memory for seq2seq_forward.5']
    #allocation6 [shape = 's32[1]{0}', space=sflag, size = 0x4, scoped, tag = 'scoped memory for seq2seq_forward.5']
    #allocation7 [shape = 'u8[131072]{0}', space=vmem, size = 0x20000, scoped, tag = 'input window, operand 1, single buffered']
    #allocation8 [shape = 's32[1]{0}', space=sflag, size = 0x4, scoped, tag = 'scoped memory for seq2seq_forward.5']
    #allocation9 [shape = 'u8[131072]{0}', space=vmem, size = 0x20000, scoped, tag = 'input window, operand 2, single buffered']
    #allocation10 [shape = 'u8[8192]{0}', space=vmem, size = 0x2000, scoped, tag = 'output window, operand 1, single buffered']
    #allocation11 [shape = 'u8[8192]{0}', space=vmem, size = 0x2000, scoped, tag = 'output window, operand 2, single buffered']
    #allocation12 [shape = 's32[1]{0}', space=sflag, size = 0x4, scoped, tag = 'scoped memory for seq2seq_forward.5']
    %15 = vsyncpa [#allocation5], 0
    %16 = vsyncpa [#allocation8], 0
    %17 = vsyncpa [#allocation6], 0
    %18 = vsyncpa [#allocation12], 0
    // Predicated region
    $region2: #{seq2seq_forward.5} parent=1 // pred_check
      _
    $region3: #{seq2seq_forward.5} parent=1 // pred_check_branch
      %20 = sbr.rel (0) target = $region5
    $region4: #{seq2seq_forward.5} parent=1 // pred_region
      %s22 = ssub.s32 2048, 2048
      %23 = vsyncadd [#allocation5], %s22
      %s24 = sshll.u32 [#allocation4], 4
      %s25 = int_to_ptr.vmem [resolvable:$true] %s24
      %30 = dma.hbm_to_vmem [thread:$0]  %s0, 2048, %s25, [#allocation5], 128, 128, 8
    $region5: #{seq2seq_forward.5} parent=1 // pred_fallthru
      _
    // Predicated region
    $region6: #{seq2seq_forward.5} parent=1 // pred_check
      _
    $region7: #{seq2seq_forward.5} parent=1 // pred_check_branch
      %32 = sbr.rel (0) target = $region9
    $region8: #{seq2seq_forward.5} parent=1 // pred_region
      %s34 = ssub.s32 4096, 4096
      %35 = vsyncadd [#allocation8], %s34
      %s36 = sshll.u32 [#allocation7], 4
      %s37 = int_to_ptr.vmem [resolvable:$true] %s36
      %42 = dma.hbm_to_vmem [thread:$0]  %s1, 4096, %s37, [#allocation8], 256, 256, 16
    $region9: #{seq2seq_forward.5} parent=1 // pred_fallthru
      _
    // Predicated region
    $region10: #{seq2seq_forward.5} parent=1 // pred_check
      _
    $region11: #{seq2seq_forward.5} parent=1 // pred_check_branch
      %44 = sbr.rel (0) target = $region13
    $region12: #{seq2seq_forward.5} parent=1 // pred_region
      %s46 = ssub.s32 4096, 4096
      %47 = vsyncadd [#allocation8], %s46
      %s48 = sshll.u32 [#allocation9], 4
      %s49 = int_to_ptr.vmem [resolvable:$true] %s48
      %54 = dma.hbm_to_vmem [thread:$0]  %s2, 4096, %s49, [#allocation8], 256, 256, 16
    $region13: #{seq2seq_forward.5} parent=1 // pred_fallthru
      _
    // Predicated region
    $region14: #{seq2seq_forward.5} parent=1 // pred_check
      _
    $region15: #{seq2seq_forward.5} parent=1 // pred_check_branch
      %56 = sbr.rel (0) target = $region17
    $region16: #{seq2seq_forward.5} parent=1 // pred_region
      _
    $region17: #{seq2seq_forward.5} parent=1 // pred_fallthru
      _
    // Predicated region
    $region18: #{seq2seq_forward.5} parent=1 // pred_check
      _
    $region19: #{seq2seq_forward.5} parent=1 // pred_check_branch
      %58 = sbr.rel (0) target = $region21
    $region20: #{seq2seq_forward.5} parent=1 // pred_region
      _
    $region21: #{seq2seq_forward.5} parent=1 // pred_fallthru
      _
    // Predicated region
    $region22: #{seq2seq_forward.5} parent=1 // pred_check
      _
    $region23: #{seq2seq_forward.5} parent=1 // pred_check_branch
      %60 = sbr.rel (0) target = $region25
    $region24: #{seq2seq_forward.5} parent=1 // pred_region
      _
    $region25: #{seq2seq_forward.5} parent=1 // pred_fallthru
      _
    // Predicated region
    $region26: #{seq2seq_forward.5} parent=1 // pred_check
      _
    $region27: #{seq2seq_forward.5} parent=1 // pred_check_branch
      %62 = sbr.rel (0) target = $region29
    $region28: #{seq2seq_forward.5} parent=1 // pred_region
      %63 = dma.done [#allocation5], 2048
    $region29: #{seq2seq_forward.5} parent=1 // pred_fallthru
      _
    // Predicated region
    $region30: #{seq2seq_forward.5} parent=1 // pred_check
      _
    $region31: #{seq2seq_forward.5} parent=1 // pred_check_branch
      %65 = sbr.rel (0) target = $region33
    $region32: #{seq2seq_forward.5} parent=1 // pred_region
      %66 = dma.done [#allocation8], 4096
    $region33: #{seq2seq_forward.5} parent=1 // pred_fallthru
      _
    // Predicated region
    $region34: #{seq2seq_forward.5} parent=1 // pred_check
      _
    $region35: #{seq2seq_forward.5} parent=1 // pred_check_branch
      %68 = sbr.rel (0) target = $region37
    $region36: #{seq2seq_forward.5} parent=1 // pred_region
      %69 = dma.done [#allocation8], 4096
    $region37: #{seq2seq_forward.5} parent=1 // pred_fallthru
      _
    %v71 = vld [vmem:[#allocation4] sm:$0xff]
    %v72 = vld [vmem:[#allocation4 + $0x8] sm:$0xff]
    %v73 = vld [vmem:[#allocation4 + $0x10] sm:$0xff]
    %v74 = vld [vmem:[#allocation4 + $0x18] sm:$0xff]
    %v75 = vld [vmem:[#allocation4 + $0x20] sm:$0xff]
    %v76 = vld [vmem:[#allocation4 + $0x28] sm:$0xff]
    %v77 = vld [vmem:[#allocation4 + $0x30] sm:$0xff]
    %v78 = vld [vmem:[#allocation4 + $0x38] sm:$0xff]
    %v79 = vld [vmem:[#allocation4 + $0x40] sm:$0xff]
    %v80 = vld [vmem:[#allocation4 + $0x48] sm:$0xff]
    %v81 = vld [vmem:[#allocation4 + $0x50] sm:$0xff]
    %v82 = vld [vmem:[#allocation4 + $0x58] sm:$0xff]
    %v83 = vld [vmem:[#allocation4 + $0x60] sm:$0xff]
    %v84 = vld [vmem:[#allocation4 + $0x68] sm:$0xff]
    %v85 = vld [vmem:[#allocation4 + $0x70] sm:$0xff]
    %v86 = vld [vmem:[#allocation4 + $0x78] sm:$0xff]
    %v87 = vcombine.low %v71, %v73
    %v88 = vcombine.high %v71, %v73
    %v90 = vunpack.c.l.s4 1983009808
    %v91 = vunpack.c.0.s8 %v90
    %v92 = vlaneseq
    %v93 = vshrl.u32 %v92, 7
    %v94 = vsub.s32 %v91, %v93
    %v95 = vrot.slane %v87, %v94
    %v97 = vunpack.c.l.s4 1983009808
    %v98 = vunpack.c.0.s8 %v97
    %v99 = vlaneseq
    %v100 = vshrl.u32 %v99, 7
    %v101 = vsub.s32 %v98, %v100
    %v102 = vrot.slane %v88, %v101
    %v103 = vcombine.low %v72, %v74
    %v104 = vcombine.high %v72, %v74
    %v106 = vunpack.c.l.s4 1983009808
    %v107 = vunpack.c.0.s8 %v106
    %v108 = vlaneseq
    %v109 = vshrl.u32 %v108, 7
    %v110 = vsub.s32 %v107, %v109
    %v111 = vrot.slane %v103, %v110
    %v113 = vunpack.c.l.s4 1983009808
    %v114 = vunpack.c.0.s8 %v113
    %v115 = vlaneseq
    %v116 = vshrl.u32 %v115, 7
    %v117 = vsub.s32 %v114, %v116
    %v118 = vrot.slane %v104, %v117
    %v119 = vcombine.low %v75, %v77
    %v120 = vcombine.high %v75, %v77
    %v122 = vunpack.c.l.s4 1983009808
    %v123 = vunpack.c.0.s8 %v122
    %v124 = vlaneseq
    %v125 = vshrl.u32 %v124, 7
    %v126 = vsub.s32 %v123, %v125
    %v127 = vrot.slane %v119, %v126
    %v129 = vunpack.c.l.s4 1983009808
    %v130 = vunpack.c.0.s8 %v129
    %v131 = vlaneseq
    %v132 = vshrl.u32 %v131, 7
    %v133 = vsub.s32 %v130, %v132
    %v134 = vrot.slane %v120, %v133
    %v135 = vcombine.low %v76, %v78
    %v136 = vcombine.high %v76, %v78
    %v138 = vunpack.c.l.s4 1983009808
    %v139 = vunpack.c.0.s8 %v138
    %v140 = vlaneseq
    %v141 = vshrl.u32 %v140, 7
    %v142 = vsub.s32 %v139, %v141
    %v143 = vrot.slane %v135, %v142
    %v145 = vunpack.c.l.s4 1983009808
    %v146 = vunpack.c.0.s8 %v145
    %v147 = vlaneseq
    %v148 = vshrl.u32 %v147, 7
    %v149 = vsub.s32 %v146, %v148
    %v150 = vrot.slane %v136, %v149
    %v151 = vcombine.low %v95, %v111
    %v152 = vcombine.high %v95, %v111
    %v154 = vunpack.c.l.s4 1934713408
    %v155 = vunpack.c.0.s8 %v154
    %v156 = vlaneseq
    %v157 = vshrl.u32 %v156, 7
    %v158 = vsub.s32 %v155, %v157
    %v159 = vrot.slane %v151, %v158
    %v161 = vunpack.c.l.s4 1934713408
    %v162 = vunpack.c.0.s8 %v161
    %v163 = vlaneseq
    %v164 = vshrl.u32 %v163, 7
    %v165 = vsub.s32 %v162, %v164
    %v166 = vrot.slane %v152, %v165
    %v167 = vcombine.low %v102, %v118
    %v168 = vcombine.high %v102, %v118
    %v170 = vunpack.c.l.s4 1934713408
    %v171 = vunpack.c.0.s8 %v170
    %v172 = vlaneseq
    %v173 = vshrl.u32 %v172, 7
    %v174 = vsub.s32 %v171, %v173
    %v175 = vrot.slane %v167, %v174
    %v177 = vunpack.c.l.s4 1934713408
    %v178 = vunpack.c.0.s8 %v177
    %v179 = vlaneseq
    %v180 = vshrl.u32 %v179, 7
    %v181 = vsub.s32 %v178, %v180
    %v182 = vrot.slane %v168, %v181
    %v183 = vcombine.low %v127, %v143
    %v184 = vcombine.high %v127, %v143
    %v186 = vunpack.c.l.s4 1934713408
    %v187 = vunpack.c.0.s8 %v186
    %v188 = vlaneseq
    %v189 = vshrl.u32 %v188, 7
    %v190 = vsub.s32 %v187, %v189
    %v191 = vrot.slane %v183, %v190
    %v193 = vunpack.c.l.s4 1934713408
    %v194 = vunpack.c.0.s8 %v193
    %v195 = vlaneseq
    %v196 = vshrl.u32 %v195, 7
    %v197 = vsub.s32 %v194, %v196
    %v198 = vrot.slane %v184, %v197
    %v199 = vcombine.low %v134, %v150
    %v200 = vcombine.high %v134, %v150
    %v202 = vunpack.c.l.s4 1934713408
    %v203 = vunpack.c.0.s8 %v202
    %v204 = vlaneseq
    %v205 = vshrl.u32 %v204, 7
    %v206 = vsub.s32 %v203, %v205
    %v207 = vrot.slane %v199, %v206
    %v209 = vunpack.c.l.s4 1934713408
    %v210 = vunpack.c.0.s8 %v209
    %v211 = vlaneseq
    %v212 = vshrl.u32 %v211, 7
    %v213 = vsub.s32 %v210, %v212
    %v214 = vrot.slane %v200, %v213
    %v215 = vcombine.low %v159, %v191
    %v216 = vcombine.high %v159, %v191
    %v217 = vcombine.low %v166, %v198
    %v218 = vcombine.high %v166, %v198
    %v219 = vcombine.low %v175, %v207
    %v220 = vcombine.high %v175, %v207
    %v221 = vcombine.low %v182, %v214
    %v222 = vcombine.high %v182, %v214
    %v223 = vcombine.low %v79, %v81
    %v224 = vcombine.high %v79, %v81
    %v226 = vunpack.c.l.s4 1983009808
    %v227 = vunpack.c.0.s8 %v226
    %v228 = vlaneseq
    %v229 = vshrl.u32 %v228, 7
    %v230 = vsub.s32 %v227, %v229
    %v231 = vrot.slane %v223, %v230
    %v233 = vunpack.c.l.s4 1983009808
    %v234 = vunpack.c.0.s8 %v233
    %v235 = vlaneseq
    %v236 = vshrl.u32 %v235, 7
    %v237 = vsub.s32 %v234, %v236
    %v238 = vrot.slane %v224, %v237
    %v239 = vcombine.low %v80, %v82
    %v240 = vcombine.high %v80, %v82
    %v242 = vunpack.c.l.s4 1983009808
    %v243 = vunpack.c.0.s8 %v242
    %v244 = vlaneseq
    %v245 = vshrl.u32 %v244, 7
    %v246 = vsub.s32 %v243, %v245
    %v247 = vrot.slane %v239, %v246
    %v249 = vunpack.c.l.s4 1983009808
    %v250 = vunpack.c.0.s8 %v249
    %v251 = vlaneseq
    %v252 = vshrl.u32 %v251, 7
    %v253 = vsub.s32 %v250, %v252
    %v254 = vrot.slane %v240, %v253
    %v255 = vcombine.low %v83, %v85
    %v256 = vcombine.high %v83, %v85
    %v258 = vunpack.c.l.s4 1983009808
    %v259 = vunpack.c.0.s8 %v258
    %v260 = vlaneseq
    %v261 = vshrl.u32 %v260, 7
    %v262 = vsub.s32 %v259, %v261
    %v263 = vrot.slane %v255, %v262
    %v265 = vunpack.c.l.s4 1983009808
    %v266 = vunpack.c.0.s8 %v265
    %v267 = vlaneseq
    %v268 = vshrl.u32 %v267, 7
    %v269 = vsub.s32 %v266, %v268
    %v270 = vrot.slane %v256, %v269
    %v271 = vcombine.low %v84, %v86
    %v272 = vcombine.high %v84, %v86
    %v274 = vunpack.c.l.s4 1983009808
    %v275 = vunpack.c.0.s8 %v274
    %v276 = vlaneseq
    %v277 = vshrl.u32 %v276, 7
    %v278 = vsub.s32 %v275, %v277
    %v279 = vrot.slane %v271, %v278
    %v281 = vunpack.c.l.s4 1983009808
    %v282 = vunpack.c.0.s8 %v281
    %v283 = vlaneseq
    %v284 = vshrl.u32 %v283, 7
    %v285 = vsub.s32 %v282, %v284
    %v286 = vrot.slane %v272, %v285
    %v287 = vcombine.low %v231, %v247
    %v288 = vcombine.high %v231, %v247
    %v290 = vunpack.c.l.s4 1934713408
    %v291 = vunpack.c.0.s8 %v290
    %v292 = vlaneseq
    %v293 = vshrl.u32 %v292, 7
    %v294 = vsub.s32 %v291, %v293
    %v295 = vrot.slane %v287, %v294
    %v297 = vunpack.c.l.s4 1934713408
    %v298 = vunpack.c.0.s8 %v297
    %v299 = vlaneseq
    %v300 = vshrl.u32 %v299, 7
    %v301 = vsub.s32 %v298, %v300
    %v302 = vrot.slane %v288, %v301
    %v303 = vcombine.low %v238, %v254
    %v304 = vcombine.high %v238, %v254
    %v306 = vunpack.c.l.s4 1934713408
    %v307 = vunpack.c.0.s8 %v306
    %v308 = vlaneseq
    %v309 = vshrl.u32 %v308, 7
    %v310 = vsub.s32 %v307, %v309
    %v311 = vrot.slane %v303, %v310
    %v313 = vunpack.c.l.s4 1934713408
    %v314 = vunpack.c.0.s8 %v313
    %v315 = vlaneseq
    %v316 = vshrl.u32 %v315, 7
    %v317 = vsub.s32 %v314, %v316
    %v318 = vrot.slane %v304, %v317
    %v319 = vcombine.low %v263, %v279
    %v320 = vcombine.high %v263, %v279
    %v322 = vunpack.c.l.s4 1934713408
    %v323 = vunpack.c.0.s8 %v322
    %v324 = vlaneseq
    %v325 = vshrl.u32 %v324, 7
    %v326 = vsub.s32 %v323, %v325
    %v327 = vrot.slane %v319, %v326
    %v329 = vunpack.c.l.s4 1934713408
    %v330 = vunpack.c.0.s8 %v329
    %v331 = vlaneseq
    %v332 = vshrl.u32 %v331, 7
    %v333 = vsub.s32 %v330, %v332
    %v334 = vrot.slane %v320, %v333
    %v335 = vcombine.low %v270, %v286
    %v336 = vcombine.high %v270, %v286
    %v338 = vunpack.c.l.s4 1934713408
    %v339 = vunpack.c.0.s8 %v338
    %v340 = vlaneseq
    %v341 = vshrl.u32 %v340, 7
    %v342 = vsub.s32 %v339, %v341
    %v343 = vrot.slane %v335, %v342
    %v345 = vunpack.c.l.s4 1934713408
    %v346 = vunpack.c.0.s8 %v345
    %v347 = vlaneseq
    %v348 = vshrl.u32 %v347, 7
    %v349 = vsub.s32 %v346, %v348
    %v350 = vrot.slane %v336, %v349
    %v351 = vcombine.low %v295, %v327
    %v352 = vcombine.high %v295, %v327
    %v353 = vcombine.low %v302, %v334
    %v354 = vcombine.high %v302, %v334
    %v355 = vcombine.low %v311, %v343
    %v356 = vcombine.high %v311, %v343
    %v357 = vcombine.low %v318, %v350
    %v358 = vcombine.high %v318, %v350
    %v359 = vpack.c.bf16 %v351, %v215
    %v360 = vpack.c.bf16 %v352, %v216
    %v361 = vpack.c.bf16 %v353, %v217
    %v362 = vpack.c.bf16 %v354, %v218
    %v363 = vpack.c.bf16 %v355, %v219
    %v364 = vpack.c.bf16 %v356, %v220
    %v365 = vpack.c.bf16 %v357, %v221
    %v366 = vpack.c.bf16 %v358, %v222
    %v367 = vld [vmem:[#allocation7] sm:$0xff]
    %v368 = vld [vmem:[#allocation7 + $0x8] sm:$0xff]
    %v369 = vld [vmem:[#allocation7 + $0x10] sm:$0xff]
    %v370 = vld [vmem:[#allocation7 + $0x18] sm:$0xff]
    %v371 = vld [vmem:[#allocation7 + $0x20] sm:$0xff]
    %v372 = vld [vmem:[#allocation7 + $0x28] sm:$0xff]
    %v373 = vld [vmem:[#allocation7 + $0x30] sm:$0xff]
    %v374 = vld [vmem:[#allocation7 + $0x38] sm:$0xff]
    %v375 = vld [vmem:[#allocation7 + $0x40] sm:$0xff]
    %v376 = vld [vmem:[#allocation7 + $0x48] sm:$0xff]
    %v377 = vld [vmem:[#allocation7 + $0x50] sm:$0xff]
    %v378 = vld [vmem:[#allocation7 + $0x58] sm:$0xff]
    %v379 = vld [vmem:[#allocation7 + $0x60] sm:$0xff]
    %v380 = vld [vmem:[#allocation7 + $0x68] sm:$0xff]
    %v381 = vld [vmem:[#allocation7 + $0x70] sm:$0xff]
    %v382 = vld [vmem:[#allocation7 + $0x78] sm:$0xff]
    %v383 = vld [vmem:[#allocation7 + $0x80] sm:$0xff]
    %v384 = vld [vmem:[#allocation7 + $0x88] sm:$0xff]
    %v385 = vld [vmem:[#allocation7 + $0x90] sm:$0xff]
    %v386 = vld [vmem:[#allocation7 + $0x98] sm:$0xff]
    %v387 = vld [vmem:[#allocation7 + $0xa0] sm:$0xff]
    %v388 = vld [vmem:[#allocation7 + $0xa8] sm:$0xff]
    %v389 = vld [vmem:[#allocation7 + $0xb0] sm:$0xff]
    %v390 = vld [vmem:[#allocation7 + $0xb8] sm:$0xff]
    %v391 = vld [vmem:[#allocation7 + $0xc0] sm:$0xff]
    %v392 = vld [vmem:[#allocation7 + $0xc8] sm:$0xff]
    %v393 = vld [vmem:[#allocation7 + $0xd0] sm:$0xff]
    %v394 = vld [vmem:[#allocation7 + $0xd8] sm:$0xff]
    %v395 = vld [vmem:[#allocation7 + $0xe0] sm:$0xff]
    %v396 = vld [vmem:[#allocation7 + $0xe8] sm:$0xff]
    %v397 = vld [vmem:[#allocation7 + $0xf0] sm:$0xff]
    %v398 = vld [vmem:[#allocation7 + $0xf8] sm:$0xff]
    %v399 = vld [vmem:[%s3] sm:$0xf]
    %v401 = vlaneseq
    %v402 = vshrl.u32 %v401, 7
    %v403 = vsub.s32 0, %v402
    %v404 = vrot.slane %v399, %v403
    %v405 = vlaneseq
    %v406 = vshrl.u32 %v405, 7
    %v407 = vsub.s32 1, %v406
    %v408 = vrot.slane %v399, %v407
    %v409 = vlaneseq
    %v410 = vshrl.u32 %v409, 7
    %v411 = vsub.s32 2, %v410
    %v412 = vrot.slane %v399, %v411
    %v413 = vlaneseq
    %v414 = vshrl.u32 %v413, 7
    %v415 = vsub.s32 3, %v414
    %v416 = vrot.slane %v399, %v415
    %v453 = vunpack.c.l.b16 %v367
    %v454 = vunpack.c.h.b16 %v367
    %v455 = vunpack.c.l.b16 %v368
    %v456 = vunpack.c.h.b16 %v368
    %v457 = vunpack.c.l.b16 %v369
    %v458 = vunpack.c.h.b16 %v369
    %v459 = vunpack.c.l.b16 %v370
    %v460 = vunpack.c.h.b16 %v370
    %v461 = vunpack.c.l.b16 %v371
    %v462 = vunpack.c.h.b16 %v371
    %v463 = vunpack.c.l.b16 %v372
    %v464 = vunpack.c.h.b16 %v372
    %v465 = vunpack.c.l.b16 %v373
    %v466 = vunpack.c.h.b16 %v373
    %v467 = vunpack.c.l.b16 %v374
    %v468 = vunpack.c.h.b16 %v374
    %v469 = vunpack.c.l.b16 %v375
    %v470 = vunpack.c.h.b16 %v375
    %v471 = vunpack.c.l.b16 %v376
    %v472 = vunpack.c.h.b16 %v376
    %v473 = vunpack.c.l.b16 %v377
    %v474 = vunpack.c.h.b16 %v377
    %v475 = vunpack.c.l.b16 %v378
    %v476 = vunpack.c.h.b16 %v378
    %v477 = vunpack.c.l.b16 %v379
    %v478 = vunpack.c.h.b16 %v379
    %v479 = vunpack.c.l.b16 %v380
    %v480 = vunpack.c.h.b16 %v380
    %v481 = vunpack.c.l.b16 %v381
    %v482 = vunpack.c.h.b16 %v381
    %v483 = vunpack.c.l.b16 %v382
    %v484 = vunpack.c.h.b16 %v382
    %v485 = vunpack.c.l.b16 %v383
    %v486 = vunpack.c.h.b16 %v383
    %v487 = vunpack.c.l.b16 %v384
    %v488 = vunpack.c.h.b16 %v384
    %v489 = vunpack.c.l.b16 %v385
    %v490 = vunpack.c.h.b16 %v385
    %v491 = vunpack.c.l.b16 %v386
    %v492 = vunpack.c.h.b16 %v386
    %v493 = vunpack.c.l.b16 %v387
    %v494 = vunpack.c.h.b16 %v387
    %v495 = vunpack.c.l.b16 %v388
    %v496 = vunpack.c.h.b16 %v388
    %v497 = vunpack.c.l.b16 %v389
    %v498 = vunpack.c.h.b16 %v389
    %v499 = vunpack.c.l.b16 %v390
    %v500 = vunpack.c.h.b16 %v390
    %v501 = vunpack.c.l.b16 %v391
    %v502 = vunpack.c.h.b16 %v391
    %v503 = vunpack.c.l.b16 %v392
    %v504 = vunpack.c.h.b16 %v392
    %v505 = vunpack.c.l.b16 %v393
    %v506 = vunpack.c.h.b16 %v393
    %v507 = vunpack.c.l.b16 %v394
    %v508 = vunpack.c.h.b16 %v394
    %v509 = vunpack.c.l.b16 %v395
    %v510 = vunpack.c.h.b16 %v395
    %v511 = vunpack.c.l.b16 %v396
    %v512 = vunpack.c.h.b16 %v396
    %v513 = vunpack.c.l.b16 %v397
    %v514 = vunpack.c.h.b16 %v397
    %v515 = vunpack.c.l.b16 %v398
    %v516 = vunpack.c.h.b16 %v398
    %v517 = vpack.c.b16 %v457, %v453
    %v518 = vpack.c.b16 %v458, %v454
    %v519 = vpack.c.b16 %v459, %v455
    %v520 = vpack.c.b16 %v460, %v456
    %v521 = vpack.c.b16 %v465, %v461
    %v522 = vpack.c.b16 %v466, %v462
    %v523 = vpack.c.b16 %v467, %v463
    %v524 = vpack.c.b16 %v468, %v464
    %v525 = vpack.c.b16 %v473, %v469
    %v526 = vpack.c.b16 %v474, %v470
    %v527 = vpack.c.b16 %v475, %v471
    %v528 = vpack.c.b16 %v476, %v472
    %v529 = vpack.c.b16 %v481, %v477
    %v530 = vpack.c.b16 %v482, %v478
    %v531 = vpack.c.b16 %v483, %v479
    %v532 = vpack.c.b16 %v484, %v480
    %v533 = vpack.c.b16 %v489, %v485
    %v534 = vpack.c.b16 %v490, %v486
    %v535 = vpack.c.b16 %v491, %v487
    %v536 = vpack.c.b16 %v492, %v488
    %v537 = vpack.c.b16 %v497, %v493
    %v538 = vpack.c.b16 %v498, %v494
    %v539 = vpack.c.b16 %v499, %v495
    %v540 = vpack.c.b16 %v500, %v496
    %v541 = vpack.c.b16 %v505, %v501
    %v542 = vpack.c.b16 %v506, %v502
    %v543 = vpack.c.b16 %v507, %v503
    %v544 = vpack.c.b16 %v508, %v504
    %v545 = vpack.c.b16 %v513, %v509
    %v546 = vpack.c.b16 %v514, %v510
    %v547 = vpack.c.b16 %v515, %v511
    %v548 = vpack.c.b16 %v516, %v512
    %581 = vmatprep.subr.bf16.mxu0 %v518
    %582 = vmatpush1.bf16.msra.mxu0 %v517
    %583 = vmatprep.subr.bf16.mxu0 %v522
    %584 = vmatpush1.bf16.msra.mxu0 %v521
    %585 = vmatprep.subr.bf16.mxu0 %v526
    %586 = vmatpush1.bf16.msra.mxu0 %v525
    %587 = vmatprep.subr.bf16.mxu0 %v530
    %588 = vmatpush1.bf16.msra.mxu0 %v529
    %589 = vmatprep.subr.bf16.mxu0 %v534
    %590 = vmatpush1.bf16.msra.mxu0 %v533
    %591 = vmatprep.subr.bf16.mxu0 %v538
    %592 = vmatpush1.bf16.msra.mxu0 %v537
    %593 = vmatprep.subr.bf16.mxu0 %v542
    %594 = vmatpush1.bf16.msra.mxu0 %v541
    %595 = vmatprep.subr.bf16.mxu0 %v546
    %596 = vmatpush1.bf16.msra.mxu0 %v545
    %597 = vmatprep.subr.bf16.mxu0 0
    %598 = vmatpush1.bf16.msra.mxu0 0
    %599 = vmatprep.subr.bf16.mxu0 0
    %600 = vmatpush1.bf16.msra.mxu0 0
    %601 = vmatprep.subr.bf16.mxu0 0
    %602 = vmatpush1.bf16.msra.mxu0 0
    %603 = vmatprep.subr.bf16.mxu0 0
    %604 = vmatpush1.bf16.msra.mxu0 0
    %605 = vmatprep.subr.bf16.mxu0 0
    %606 = vmatpush1.bf16.msra.mxu0 0
    %607 = vmatprep.subr.bf16.mxu0 0
    %608 = vmatpush1.bf16.msra.mxu0 0
    %609 = vmatprep.subr.bf16.mxu0 0
    %610 = vmatpush1.bf16.msra.mxu0 0
    %611 = vmatprep.subr.bf16.mxu0 0
    %612 = vmatpush1.bf16.msra.mxu0 0
    %613 = vmatprep.mubr.bf16.mxu0 0
    %614 = vmatmul.mubr.bf16.gmra.mrb[0].mxu0 %v359
    %v615 = vpop.f32.mrb[0].mxu0
    %v616 = vadd.f32 %v404, %v615
    %v617 = vpop.f32.mrb[0].mxu0
    %v618 = vadd.f32 %v408, %v617
    %v619 = vpop.f32.mrb[0].mxu0
    %v620 = vadd.f32 %v404, %v619
    %v621 = vpop.f32.mrb[0].mxu0
    %v622 = vadd.f32 %v408, %v621
    %623 = vmatprep.mubr.bf16.mxu0 0
    %624 = vmatmul.mubr.bf16.gmra.mrb[0].mxu0 %v360
    %v625 = vpop.f32.mrb[0].mxu0
    %v626 = vadd.f32 %v404, %v625
    %v627 = vpop.f32.mrb[0].mxu0
    %v628 = vadd.f32 %v408, %v627
    %v629 = vpop.f32.mrb[0].mxu0
    %v630 = vadd.f32 %v404, %v629
    %v631 = vpop.f32.mrb[0].mxu0
    %v632 = vadd.f32 %v408, %v631
    %633 = vmatprep.mubr.bf16.mxu0 0
    %634 = vmatmul.mubr.bf16.gmra.mrb[0].mxu0 %v361
    %v635 = vpop.f32.mrb[0].mxu0
    %v636 = vadd.f32 %v404, %v635
    %v637 = vpop.f32.mrb[0].mxu0
    %v638 = vadd.f32 %v408, %v637
    %v639 = vpop.f32.mrb[0].mxu0
    %v640 = vadd.f32 %v404, %v639
    %v641 = vpop.f32.mrb[0].mxu0
    %v642 = vadd.f32 %v408, %v641
    %643 = vmatprep.mubr.bf16.mxu0 0
    %644 = vmatmul.mubr.bf16.gmra.mrb[0].mxu0 %v362
    %v645 = vpop.f32.mrb[0].mxu0
    %v646 = vadd.f32 %v404, %v645
    %v647 = vpop.f32.mrb[0].mxu0
    %v648 = vadd.f32 %v408, %v647
    %v649 = vpop.f32.mrb[0].mxu0
    %v650 = vadd.f32 %v404, %v649
    %v651 = vpop.f32.mrb[0].mxu0
    %v652 = vadd.f32 %v408, %v651
    %653 = vmatprep.mubr.bf16.mxu0 0
    %654 = vmatmul.mubr.bf16.gmra.mrb[0].mxu0 %v363
    %v655 = vpop.f32.mrb[0].mxu0
    %v656 = vadd.f32 %v404, %v655
    %v657 = vpop.f32.mrb[0].mxu0
    %v658 = vadd.f32 %v408, %v657
    %v659 = vpop.f32.mrb[0].mxu0
    %v660 = vadd.f32 %v404, %v659
    %v661 = vpop.f32.mrb[0].mxu0
    %v662 = vadd.f32 %v408, %v661
    %663 = vmatprep.mubr.bf16.mxu0 0
    %664 = vmatmul.mubr.bf16.gmra.mrb[0].mxu0 %v364
    %v665 = vpop.f32.mrb[0].mxu0
    %v666 = vadd.f32 %v404, %v665
    %v667 = vpop.f32.mrb[0].mxu0
    %v668 = vadd.f32 %v408, %v667
    %v669 = vpop.f32.mrb[0].mxu0
    %v670 = vadd.f32 %v404, %v669
    %v671 = vpop.f32.mrb[0].mxu0
    %v672 = vadd.f32 %v408, %v671
    %673 = vmatprep.mubr.bf16.mxu0 0
    %674 = vmatmul.mubr.bf16.gmra.mrb[0].mxu0 %v365
    %v675 = vpop.f32.mrb[0].mxu0
    %v676 = vadd.f32 %v404, %v675
    %v677 = vpop.f32.mrb[0].mxu0
    %v678 = vadd.f32 %v408, %v677
    %v679 = vpop.f32.mrb[0].mxu0
    %v680 = vadd.f32 %v404, %v679
    %v681 = vpop.f32.mrb[0].mxu0
    %v682 = vadd.f32 %v408, %v681
    %683 = vmatprep.mubr.bf16.mxu0 0
    %684 = vmatmul.mubr.bf16.gmra.mrb[0].mxu0 %v366
    %v685 = vpop.f32.mrb[0].mxu0
    %v686 = vadd.f32 %v404, %v685
    %v687 = vpop.f32.mrb[0].mxu0
    %v688 = vadd.f32 %v408, %v687
    %v689 = vpop.f32.mrb[0].mxu0
    %v690 = vadd.f32 %v404, %v689
    %v691 = vpop.f32.mrb[0].mxu0
    %v692 = vadd.f32 %v408, %v691
    %693 = vdwg.mxu0
    %694 = vmatprep.subr.bf16.mxu0 %v520
    %695 = vmatpush1.bf16.msra.mxu0 %v519
    %696 = vmatprep.subr.bf16.mxu0 %v524
    %697 = vmatpush1.bf16.msra.mxu0 %v523
    %698 = vmatprep.subr.bf16.mxu0 %v528
    %699 = vmatpush1.bf16.msra.mxu0 %v527
    %700 = vmatprep.subr.bf16.mxu0 %v532
    %701 = vmatpush1.bf16.msra.mxu0 %v531
    %702 = vmatprep.subr.bf16.mxu0 %v536
    %703 = vmatpush1.bf16.msra.mxu0 %v535
    %704 = vmatprep.subr.bf16.mxu0 %v540
    %705 = vmatpush1.bf16.msra.mxu0 %v539
    %706 = vmatprep.subr.bf16.mxu0 %v544
    %707 = vmatpush1.bf16.msra.mxu0 %v543
    %708 = vmatprep.subr.bf16.mxu0 %v548
    %709 = vmatpush1.bf16.msra.mxu0 %v547
    %710 = vmatprep.subr.bf16.mxu0 0
    %711 = vmatpush1.bf16.msra.mxu0 0
    %712 = vmatprep.subr.bf16.mxu0 0
    %713 = vmatpush1.bf16.msra.mxu0 0
    %714 = vmatprep.subr.bf16.mxu0 0
    %715 = vmatpush1.bf16.msra.mxu0 0
    %716 = vmatprep.subr.bf16.mxu0 0
    %717 = vmatpush1.bf16.msra.mxu0 0
    %718 = vmatprep.subr.bf16.mxu0 0
    %719 = vmatpush1.bf16.msra.mxu0 0
    %720 = vmatprep.subr.bf16.mxu0 0
    %721 = vmatpush1.bf16.msra.mxu0 0
    %722 = vmatprep.subr.bf16.mxu0 0
    %723 = vmatpush1.bf16.msra.mxu0 0
    %724 = vmatprep.subr.bf16.mxu0 0
    %725 = vmatpush1.bf16.msra.mxu0 0
    %726 = vmatprep.mubr.bf16.mxu0 0
    %727 = vmatmul.mubr.bf16.gmra.mrb[0].mxu0 %v359
    %v728 = vpop.f32.mrb[0].mxu0
    %v729 = vadd.f32 %v412, %v728
    %v730 = vpop.f32.mrb[0].mxu0
    %v731 = vadd.f32 %v416, %v730
    %v732 = vpop.f32.mrb[0].mxu0
    %v733 = vadd.f32 %v412, %v732
    %v734 = vpop.f32.mrb[0].mxu0
    %v735 = vadd.f32 %v416, %v734
    %736 = vmatprep.mubr.bf16.mxu0 0
    %737 = vmatmul.mubr.bf16.gmra.mrb[0].mxu0 %v360
    %v738 = vpop.f32.mrb[0].mxu0
    %v739 = vadd.f32 %v412, %v738
    %v740 = vpop.f32.mrb[0].mxu0
    %v741 = vadd.f32 %v416, %v740
    %v742 = vpop.f32.mrb[0].mxu0
    %v743 = vadd.f32 %v412, %v742
    %v744 = vpop.f32.mrb[0].mxu0
    %v745 = vadd.f32 %v416, %v744
    %746 = vmatprep.mubr.bf16.mxu0 0
    %747 = vmatmul.mubr.bf16.gmra.mrb[0].mxu0 %v361
    %v748 = vpop.f32.mrb[0].mxu0
    %v749 = vadd.f32 %v412, %v748
    %v750 = vpop.f32.mrb[0].mxu0
    %v751 = vadd.f32 %v416, %v750
    %v752 = vpop.f32.mrb[0].mxu0
    %v753 = vadd.f32 %v412, %v752
    %v754 = vpop.f32.mrb[0].mxu0
    %v755 = vadd.f32 %v416, %v754
    %756 = vmatprep.mubr.bf16.mxu0 0
    %757 = vmatmul.mubr.bf16.gmra.mrb[0].mxu0 %v362
    %v758 = vpop.f32.mrb[0].mxu0
    %v759 = vadd.f32 %v412, %v758
    %v760 = vpop.f32.mrb[0].mxu0
    %v761 = vadd.f32 %v416, %v760
    %v762 = vpop.f32.mrb[0].mxu0
    %v763 = vadd.f32 %v412, %v762
    %v764 = vpop.f32.mrb[0].mxu0
    %v765 = vadd.f32 %v416, %v764
    %766 = vmatprep.mubr.bf16.mxu0 0
    %767 = vmatmul.mubr.bf16.gmra.mrb[0].mxu0 %v363
    %v768 = vpop.f32.mrb[0].mxu0
    %v769 = vadd.f32 %v412, %v768
    %v770 = vpop.f32.mrb[0].mxu0
    %v771 = vadd.f32 %v416, %v770
    %v772 = vpop.f32.mrb[0].mxu0
    %v773 = vadd.f32 %v412, %v772
    %v774 = vpop.f32.mrb[0].mxu0
    %v775 = vadd.f32 %v416, %v774
    %776 = vmatprep.mubr.bf16.mxu0 0
    %777 = vmatmul.mubr.bf16.gmra.mrb[0].mxu0 %v364
    %v778 = vpop.f32.mrb[0].mxu0
    %v779 = vadd.f32 %v412, %v778
    %v780 = vpop.f32.mrb[0].mxu0
    %v781 = vadd.f32 %v416, %v780
    %v782 = vpop.f32.mrb[0].mxu0
    %v783 = vadd.f32 %v412, %v782
    %v784 = vpop.f32.mrb[0].mxu0
    %v785 = vadd.f32 %v416, %v784
    %786 = vmatprep.mubr.bf16.mxu0 0
    %787 = vmatmul.mubr.bf16.gmra.mrb[0].mxu0 %v365
    %v788 = vpop.f32.mrb[0].mxu0
    %v789 = vadd.f32 %v412, %v788
    %v790 = vpop.f32.mrb[0].mxu0
    %v791 = vadd.f32 %v416, %v790
    %v792 = vpop.f32.mrb[0].mxu0
    %v793 = vadd.f32 %v412, %v792
    %v794 = vpop.f32.mrb[0].mxu0
    %v795 = vadd.f32 %v416, %v794
    %796 = vmatprep.mubr.bf16.mxu0 0
    %797 = vmatmul.mubr.bf16.gmra.mrb[0].mxu0 %v366
    %v798 = vpop.f32.mrb[0].mxu0
    %v799 = vadd.f32 %v412, %v798
    %v800 = vpop.f32.mrb[0].mxu0
    %v801 = vadd.f32 %v416, %v800
    %v802 = vpop.f32.mrb[0].mxu0
    %v803 = vadd.f32 %v412, %v802
    %v804 = vpop.f32.mrb[0].mxu0
    %v805 = vadd.f32 %v416, %v804
    %806 = vdwg.mxu0
    %807 = vst [vmem:[#allocation2] sm:$0xff] %v616
    %808 = vst [vmem:[#allocation2 + $0x8] sm:$0xff] %v618
    %809 = vst [vmem:[#allocation2 + $0x10] sm:$0xff] %v729
    %810 = vst [vmem:[#allocation2 + $0x18] sm:$0xff] %v731
    %811 = vst [vmem:[#allocation2 + $0x20] sm:$0xff] %v620
    %812 = vst [vmem:[#allocation2 + $0x28] sm:$0xff] %v622
    %813 = vst [vmem:[#allocation2 + $0x30] sm:$0xff] %v733
    %814 = vst [vmem:[#allocation2 + $0x38] sm:$0xff] %v735
    %815 = vst [vmem:[#allocation2 + $0x40] sm:$0xff] %v626
    %816 = vst [vmem:[#allocation2 + $0x48] sm:$0xff] %v628
    %817 = vst [vmem:[#allocation2 + $0x50] sm:$0xff] %v739
    %818 = vst [vmem:[#allocation2 + $0x58] sm:$0xff] %v741
    %819 = vst [vmem:[#allocation2 + $0x60] sm:$0xff] %v630
    %820 = vst [vmem:[#allocation2 + $0x68] sm:$0xff] %v632
    %821 = vst [vmem:[#allocation2 + $0x70] sm:$0xff] %v743
    %822 = vst [vmem:[#allocation2 + $0x78] sm:$0xff] %v745
    %823 = vst [vmem:[#allocation2 + $0x80] sm:$0xff] %v636
    %824 = vst [vmem:[#allocation2 + $0x88] sm:$0xff] %v638
    %825 = vst [vmem:[#allocation2 + $0x90] sm:$0xff] %v749
    %826 = vst [vmem:[#allocation2 + $0x98] sm:$0xff] %v751
    %827 = vst [vmem:[#allocation2 + $0xa0] sm:$0xff] %v640
    %828 = vst [vmem:[#allocation2 + $0xa8] sm:$0xff] %v642
    %829 = vst [vmem:[#allocation2 + $0xb0] sm:$0xff] %v753
    %830 = vst [vmem:[#allocation2 + $0xb8] sm:$0xff] %v755
    %831 = vst [vmem:[#allocation2 + $0xc0] sm:$0xff] %v646
    %832 = vst [vmem:[#allocation2 + $0xc8] sm:$0xff] %v648
    %833 = vst [vmem:[#allocation2 + $0xd0] sm:$0xff] %v759
    %834 = vst [vmem:[#allocation2 + $0xd8] sm:$0xff] %v761
    %835 = vst [vmem:[#allocation2 + $0xe0] sm:$0xff] %v650
    %836 = vst [vmem:[#allocation2 + $0xe8] sm:$0xff] %v652
    %837 = vst [vmem:[#allocation2 + $0xf0] sm:$0xff] %v763
    %838 = vst [vmem:[#allocation2 + $0xf8] sm:$0xff] %v765
    %839 = vst [vmem:[#allocation2 + $0x100] sm:$0xff] %v656
    %840 = vst [vmem:[#allocation2 + $0x108] sm:$0xff] %v658
    %841 = vst [vmem:[#allocation2 + $0x110] sm:$0xff] %v769
    %842 = vst [vmem:[#allocation2 + $0x118] sm:$0xff] %v771
    %843 = vst [vmem:[#allocation2 + $0x120] sm:$0xff] %v660
    %844 = vst [vmem:[#allocation2 + $0x128] sm:$0xff] %v662
    %845 = vst [vmem:[#allocation2 + $0x130] sm:$0xff] %v773
    %846 = vst [vmem:[#allocation2 + $0x138] sm:$0xff] %v775
    %847 = vst [vmem:[#allocation2 + $0x140] sm:$0xff] %v666
    %848 = vst [vmem:[#allocation2 + $0x148] sm:$0xff] %v668
    %849 = vst [vmem:[#allocation2 + $0x150] sm:$0xff] %v779
    %850 = vst [vmem:[#allocation2 + $0x158] sm:$0xff] %v781
    %851 = vst [vmem:[#allocation2 + $0x160] sm:$0xff] %v670
    %852 = vst [vmem:[#allocation2 + $0x168] sm:$0xff] %v672
    %853 = vst [vmem:[#allocation2 + $0x170] sm:$0xff] %v783
    %854 = vst [vmem:[#allocation2 + $0x178] sm:$0xff] %v785
    %855 = vst [vmem:[#allocation2 + $0x180] sm:$0xff] %v676
    %856 = vst [vmem:[#allocation2 + $0x188] sm:$0xff] %v678
    %857 = vst [vmem:[#allocation2 + $0x190] sm:$0xff] %v789
    %858 = vst [vmem:[#allocation2 + $0x198] sm:$0xff] %v791
    %859 = vst [vmem:[#allocation2 + $0x1a0] sm:$0xff] %v680
    %860 = vst [vmem:[#allocation2 + $0x1a8] sm:$0xff] %v682
    %861 = vst [vmem:[#allocation2 + $0x1b0] sm:$0xff] %v793
    %862 = vst [vmem:[#allocation2 + $0x1b8] sm:$0xff] %v795
    %863 = vst [vmem:[#allocation2 + $0x1c0] sm:$0xff] %v686
    %864 = vst [vmem:[#allocation2 + $0x1c8] sm:$0xff] %v688
    %865 = vst [vmem:[#allocation2 + $0x1d0] sm:$0xff] %v799
    %866 = vst [vmem:[#allocation2 + $0x1d8] sm:$0xff] %v801
    %867 = vst [vmem:[#allocation2 + $0x1e0] sm:$0xff] %v690
    %868 = vst [vmem:[#allocation2 + $0x1e8] sm:$0xff] %v692
    %869 = vst [vmem:[#allocation2 + $0x1f0] sm:$0xff] %v803
    %870 = vst [vmem:[#allocation2 + $0x1f8] sm:$0xff] %v805
    %v871 = vld [vmem:[%s4] sm:$0xff]
    %v872 = vld [vmem:[%s4 + $0x8] sm:$0xff]
    %v873 = vld [vmem:[%s5] sm:$0xff]
    %v874 = vld [vmem:[%s5 + $0x8] sm:$0xff]
    %s875 = smul.u32 0, 4
    %s876 = smul.addr %s875, 8
    %s877 = scalar_lea.vmem [#allocation2], %s876
    %v878 = vld [vmem:[%s877] sm:$0xff]
    %v879 = vld [vmem:[%s877 + $0x8] sm:$0xff]
    %v880 = vld [vmem:[%s877 + $0x10] sm:$0xff]
    %v881 = vld [vmem:[%s877 + $0x18] sm:$0xff]
    %v882 = vld [vmem:[%s877 + $0x20] sm:$0xff]
    %v883 = vld [vmem:[%s877 + $0x28] sm:$0xff]
    %v884 = vld [vmem:[%s877 + $0x30] sm:$0xff]
    %v885 = vld [vmem:[%s877 + $0x38] sm:$0xff]
    %v886 = vpack.c.bf16 %v872, %v871
    %v887 = vld [vmem:[#allocation9] sm:$0xff]
    %v888 = vld [vmem:[#allocation9 + $0x8] sm:$0xff]
    %v889 = vld [vmem:[#allocation9 + $0x10] sm:$0xff]
    %v890 = vld [vmem:[#allocation9 + $0x18] sm:$0xff]
    %v891 = vld [vmem:[#allocation9 + $0x20] sm:$0xff]
    %v892 = vld [vmem:[#allocation9 + $0x28] sm:$0xff]
    %v893 = vld [vmem:[#allocation9 + $0x30] sm:$0xff]
    %v894 = vld [vmem:[#allocation9 + $0x38] sm:$0xff]
    %v895 = vld [vmem:[#allocation9 + $0x40] sm:$0xff]
    %v896 = vld [vmem:[#allocation9 + $0x48] sm:$0xff]
    %v897 = vld [vmem:[#allocation9 + $0x50] sm:$0xff]
    %v898 = vld [vmem:[#allocation9 + $0x58] sm:$0xff]
    %v899 = vld [vmem:[#allocation9 + $0x60] sm:$0xff]
    %v900 = vld [vmem:[#allocation9 + $0x68] sm:$0xff]
    %v901 = vld [vmem:[#allocation9 + $0x70] sm:$0xff]
    %v902 = vld [vmem:[#allocation9 + $0x78] sm:$0xff]
    %v903 = vld [vmem:[#allocation9 + $0x80] sm:$0xff]
    %v904 = vld [vmem:[#allocation9 + $0x88] sm:$0xff]
    %v905 = vld [vmem:[#allocation9 + $0x90] sm:$0xff]
    %v906 = vld [vmem:[#allocation9 + $0x98] sm:$0xff]
    %v907 = vld [vmem:[#allocation9 + $0xa0] sm:$0xff]
    %v908 = vld [vmem:[#allocation9 + $0xa8] sm:$0xff]
    %v909 = vld [vmem:[#allocation9 + $0xb0] sm:$0xff]
    %v910 = vld [vmem:[#allocation9 + $0xb8] sm:$0xff]
    %v911 = vld [vmem:[#allocation9 + $0xc0] sm:$0xff]
    %v912 = vld [vmem:[#allocation9 + $0xc8] sm:$0xff]
    %v913 = vld [vmem:[#allocation9 + $0xd0] sm:$0xff]
    %v914 = vld [vmem:[#allocation9 + $0xd8] sm:$0xff]
    %v915 = vld [vmem:[#allocation9 + $0xe0] sm:$0xff]
    %v916 = vld [vmem:[#allocation9 + $0xe8] sm:$0xff]
    %v917 = vld [vmem:[#allocation9 + $0xf0] sm:$0xff]
    %v918 = vld [vmem:[#allocation9 + $0xf8] sm:$0xff]
    %v951 = vunpack.c.l.b16 %v887
    %v952 = vunpack.c.h.b16 %v887
    %v953 = vunpack.c.l.b16 %v888
    %v954 = vunpack.c.h.b16 %v888
    %v955 = vunpack.c.l.b16 %v889
    %v956 = vunpack.c.h.b16 %v889
    %v957 = vunpack.c.l.b16 %v890
    %v958 = vunpack.c.h.b16 %v890
    %v959 = vunpack.c.l.b16 %v891
    %v960 = vunpack.c.h.b16 %v891
    %v961 = vunpack.c.l.b16 %v892
    %v962 = vunpack.c.h.b16 %v892
    %v963 = vunpack.c.l.b16 %v893
    %v964 = vunpack.c.h.b16 %v893
    %v965 = vunpack.c.l.b16 %v894
    %v966 = vunpack.c.h.b16 %v894
    %v967 = vunpack.c.l.b16 %v895
    %v968 = vunpack.c.h.b16 %v895
    %v969 = vunpack.c.l.b16 %v896
    %v970 = vunpack.c.h.b16 %v896
    %v971 = vunpack.c.l.b16 %v897
    %v972 = vunpack.c.h.b16 %v897
    %v973 = vunpack.c.l.b16 %v898
    %v974 = vunpack.c.h.b16 %v898
    %v975 = vunpack.c.l.b16 %v899
    %v976 = vunpack.c.h.b16 %v899
    %v977 = vunpack.c.l.b16 %v900
    %v978 = vunpack.c.h.b16 %v900
    %v979 = vunpack.c.l.b16 %v901
    %v980 = vunpack.c.h.b16 %v901
    %v981 = vunpack.c.l.b16 %v902
    %v982 = vunpack.c.h.b16 %v902
    %v983 = vunpack.c.l.b16 %v903
    %v984 = vunpack.c.h.b16 %v903
    %v985 = vunpack.c.l.b16 %v904
    %v986 = vunpack.c.h.b16 %v904
    %v987 = vunpack.c.l.b16 %v905
    %v988 = vunpack.c.h.b16 %v905
    %v989 = vunpack.c.l.b16 %v906
    %v990 = vunpack.c.h.b16 %v906
    %v991 = vunpack.c.l.b16 %v907
    %v992 = vunpack.c.h.b16 %v907
    %v993 = vunpack.c.l.b16 %v908
    %v994 = vunpack.c.h.b16 %v908
    %v995 = vunpack.c.l.b16 %v909
    %v996 = vunpack.c.h.b16 %v909
    %v997 = vunpack.c.l.b16 %v910
    %v998 = vunpack.c.h.b16 %v910
    %v999 = vunpack.c.l.b16 %v911
    %v1000 = vunpack.c.h.b16 %v911
    %v1001 = vunpack.c.l.b16 %v912
    %v1002 = vunpack.c.h.b16 %v912
    %v1003 = vunpack.c.l.b16 %v913
    %v1004 = vunpack.c.h.b16 %v913
    %v1005 = vunpack.c.l.b16 %v914
    %v1006 = vunpack.c.h.b16 %v914
    %v1007 = vunpack.c.l.b16 %v915
    %v1008 = vunpack.c.h.b16 %v915
    %v1009 = vunpack.c.l.b16 %v916
    %v1010 = vunpack.c.h.b16 %v916
    %v1011 = vunpack.c.l.b16 %v917
    %v1012 = vunpack.c.h.b16 %v917
    %v1013 = vunpack.c.l.b16 %v918
    %v1014 = vunpack.c.h.b16 %v918
    %v1015 = vpack.c.b16 %v955, %v951
    %v1016 = vpack.c.b16 %v956, %v952
    %v1017 = vpack.c.b16 %v957, %v953
    %v1018 = vpack.c.b16 %v958, %v954
    %v1019 = vpack.c.b16 %v963, %v959
    %v1020 = vpack.c.b16 %v964, %v960
    %v1021 = vpack.c.b16 %v965, %v961
    %v1022 = vpack.c.b16 %v966, %v962
    %v1023 = vpack.c.b16 %v971, %v967
    %v1024 = vpack.c.b16 %v972, %v968
    %v1025 = vpack.c.b16 %v973, %v969
    %v1026 = vpack.c.b16 %v974, %v970
    %v1027 = vpack.c.b16 %v979, %v975
    %v1028 = vpack.c.b16 %v980, %v976
    %v1029 = vpack.c.b16 %v981, %v977
    %v1030 = vpack.c.b16 %v982, %v978
    %v1031 = vpack.c.b16 %v987, %v983
    %v1032 = vpack.c.b16 %v988, %v984
    %v1033 = vpack.c.b16 %v989, %v985
    %v1034 = vpack.c.b16 %v990, %v986
    %v1035 = vpack.c.b16 %v995, %v991
    %v1036 = vpack.c.b16 %v996, %v992
    %v1037 = vpack.c.b16 %v997, %v993
    %v1038 = vpack.c.b16 %v998, %v994
    %v1039 = vpack.c.b16 %v1003, %v999
    %v1040 = vpack.c.b16 %v1004, %v1000
    %v1041 = vpack.c.b16 %v1005, %v1001
    %v1042 = vpack.c.b16 %v1006, %v1002
    %v1043 = vpack.c.b16 %v1011, %v1007
    %v1044 = vpack.c.b16 %v1012, %v1008
    %v1045 = vpack.c.b16 %v1013, %v1009
    %v1046 = vpack.c.b16 %v1014, %v1010
    %1079 = vmatprep.subr.bf16.mxu0 %v1016
    %1080 = vmatpush1.bf16.msra.mxu0 %v1015
    %1081 = vmatprep.subr.bf16.mxu0 %v1020
    %1082 = vmatpush1.bf16.msra.mxu0 %v1019
    %1083 = vmatprep.subr.bf16.mxu0 %v1024
    %1084 = vmatpush1.bf16.msra.mxu0 %v1023
    %1085 = vmatprep.subr.bf16.mxu0 %v1028
    %1086 = vmatpush1.bf16.msra.mxu0 %v1027
    %1087 = vmatprep.subr.bf16.mxu0 %v1032
    %1088 = vmatpush1.bf16.msra.mxu0 %v1031
    %1089 = vmatprep.subr.bf16.mxu0 %v1036
    %1090 = vmatpush1.bf16.msra.mxu0 %v1035
    %1091 = vmatprep.subr.bf16.mxu0 %v1040
    %1092 = vmatpush1.bf16.msra.mxu0 %v1039
    %1093 = vmatprep.subr.bf16.mxu0 %v1044
    %1094 = vmatpush1.bf16.msra.mxu0 %v1043
    %1095 = vmatprep.subr.bf16.mxu0 0
    %1096 = vmatpush1.bf16.msra.mxu0 0
    %1097 = vmatprep.subr.bf16.mxu0 0
    %1098 = vmatpush1.bf16.msra.mxu0 0
    %1099 = vmatprep.subr.bf16.mxu0 0
    %1100 = vmatpush1.bf16.msra.mxu0 0
    %1101 = vmatprep.subr.bf16.mxu0 0
    %1102 = vmatpush1.bf16.msra.mxu0 0
    %1103 = vmatprep.subr.bf16.mxu0 0
    %1104 = vmatpush1.bf16.msra.mxu0 0
    %1105 = vmatprep.subr.bf16.mxu0 0
    %1106 = vmatpush1.bf16.msra.mxu0 0
    %1107 = vmatprep.subr.bf16.mxu0 0
    %1108 = vmatpush1.bf16.msra.mxu0 0
    %1109 = vmatprep.subr.bf16.mxu0 0
    %1110 = vmatpush1.bf16.msra.mxu0 0
    %1111 = vmatprep.mubr.bf16.mxu0 0
    %1112 = vmatmul.mubr.bf16.gmra.mrb[0].mxu0 %v886
    %v1113 = vpop.f32.mrb[0].mxu0
    %v1114 = vadd.f32 0.0, %v1113
    %v1115 = vpop.f32.mrb[0].mxu0
    %v1116 = vadd.f32 0.0, %v1115
    %v1117 = vpop.f32.mrb[0].mxu0
    %v1118 = vadd.f32 0.0, %v1117
    %v1119 = vpop.f32.mrb[0].mxu0
    %v1120 = vadd.f32 0.0, %v1119
    %1121 = vdwg.mxu0
    %1122 = vmatprep.subr.bf16.mxu0 %v1018
    %1123 = vmatpush1.bf16.msra.mxu0 %v1017
    %1124 = vmatprep.subr.bf16.mxu0 %v1022
    %1125 = vmatpush1.bf16.msra.mxu0 %v1021
    %1126 = vmatprep.subr.bf16.mxu0 %v1026
    %1127 = vmatpush1.bf16.msra.mxu0 %v1025
    %1128 = vmatprep.subr.bf16.mxu0 %v1030
    %1129 = vmatpush1.bf16.msra.mxu0 %v1029
    %1130 = vmatprep.subr.bf16.mxu0 %v1034
    %1131 = vmatpush1.bf16.msra.mxu0 %v1033
    %1132 = vmatprep.subr.bf16.mxu0 %v1038
    %1133 = vmatpush1.bf16.msra.mxu0 %v1037
    %1134 = vmatprep.subr.bf16.mxu0 %v1042
    %1135 = vmatpush1.bf16.msra.mxu0 %v1041
    %1136 = vmatprep.subr.bf16.mxu0 %v1046
    %1137 = vmatpush1.bf16.msra.mxu0 %v1045
    %1138 = vmatprep.subr.bf16.mxu0 0
    %1139 = vmatpush1.bf16.msra.mxu0 0
    %1140 = vmatprep.subr.bf16.mxu0 0
    %1141 = vmatpush1.bf16.msra.mxu0 0
    %1142 = vmatprep.subr.bf16.mxu0 0
    %1143 = vmatpush1.bf16.msra.mxu0 0
    %1144 = vmatprep.subr.bf16.mxu0 0
    %1145 = vmatpush1.bf16.msra.mxu0 0
    %1146 = vmatprep.subr.bf16.mxu0 0
    %1147 = vmatpush1.bf16.msra.mxu0 0
    %1148 = vmatprep.subr.bf16.mxu0 0
    %1149 = vmatpush1.bf16.msra.mxu0 0
    %1150 = vmatprep.subr.bf16.mxu0 0
    %1151 = vmatpush1.bf16.msra.mxu0 0
    %1152 = vmatprep.subr.bf16.mxu0 0
    %1153 = vmatpush1.bf16.msra.mxu0 0
    %1154 = vmatprep.mubr.bf16.mxu0 0
    %1155 = vmatmul.mubr.bf16.gmra.mrb[0].mxu0 %v886
    %v1156 = vpop.f32.mrb[0].mxu0
    %v1157 = vadd.f32 0.0, %v1156
    %v1158 = vpop.f32.mrb[0].mxu0
    %v1159 = vadd.f32 0.0, %v1158
    %v1160 = vpop.f32.mrb[0].mxu0
    %v1161 = vadd.f32 0.0, %v1160
    %v1162 = vpop.f32.mrb[0].mxu0
    %v1163 = vadd.f32 0.0, %v1162
    %1164 = vdwg.mxu0
    %v1165 = vadd.f32 %v878, %v1114
    %v1166 = vadd.f32 %v879, %v1116
    %v1167 = vadd.f32 %v880, %v1157
    %v1168 = vadd.f32 %v881, %v1159
    %v1169 = vadd.f32 %v882, %v1118
    %v1170 = vadd.f32 %v883, %v1120
    %v1171 = vadd.f32 %v884, %v1161
    %v1172 = vadd.f32 %v885, %v1163
    %v1173 = vxor.u32 %v1165, 2147483648
    %v1174 = vxor.u32 %v1169, 2147483648
    %v1175 = vmul.f32 %v1173, 1.442695
    %v1176 = vpow.pop %v1175
    %v1177 = vmul.f32 %v1174, 1.442695
    %v1178 = vpow.pop %v1177
    %v1179 = vadd.f32 %v1176, 1.0
    %v1180 = vadd.f32 %v1178, 1.0
    %v1181 = vrcp.pop %v1179
    %v1182 = vmul.f32 1.0, %v1181
    %v1183 = vrcp.pop %v1180
    %v1184 = vmul.f32 1.0, %v1183
    %v1185 = vxor.u32 %v1166, 2147483648
    %v1186 = vxor.u32 %v1170, 2147483648
    %v1187 = vmul.f32 %v1185, 1.442695
    %v1188 = vpow.pop %v1187
    %v1189 = vmul.f32 %v1186, 1.442695
    %v1190 = vpow.pop %v1189
    %v1191 = vadd.f32 %v1188, 1.0
    %v1192 = vadd.f32 %v1190, 1.0
    %v1193 = vrcp.pop %v1191
    %v1194 = vmul.f32 1.0, %v1193
    %v1195 = vrcp.pop %v1192
    %v1196 = vmul.f32 1.0, %v1195
    %v1197 = vtanh.pop %v1167
    %v1198 = vtanh.pop %v1171
    %v1199 = vxor.u32 %v1168, 2147483648
    %v1200 = vxor.u32 %v1172, 2147483648
    %v1201 = vmul.f32 %v1199, 1.442695
    %v1202 = vpow.pop %v1201
    %v1203 = vmul.f32 %v1200, 1.442695
    %v1204 = vpow.pop %v1203
    %v1205 = vadd.f32 %v1202, 1.0
    %v1206 = vadd.f32 %v1204, 1.0
    %v1207 = vrcp.pop %v1205
    %v1208 = vmul.f32 1.0, %v1207
    %v1209 = vrcp.pop %v1206
    %v1210 = vmul.f32 1.0, %v1209
    %v1211 = vmul.f32 %v1194, %v873
    %v1212 = vmul.f32 %v1196, %v874
    %v1213 = vmul.f32 %v1182, %v1197
    %v1214 = vmul.f32 %v1184, %v1198
    %v1215 = vadd.f32 %v1211, %v1213
    %v1216 = vadd.f32 %v1212, %v1214
    %v1217 = vtanh.pop %v1215
    %v1218 = vtanh.pop %v1216
    %v1219 = vmul.f32 %v1208, %v1217
    %v1220 = vmul.f32 %v1210, %v1218
    %1221 = vst [vmem:[#allocation3] sm:$0xff] %v1219
    %1222 = vst [vmem:[#allocation3 + $0x8] sm:$0xff] %v1220
    %s1223 = smul.u32 2, 4
    %s1224 = smul.addr %s1223, 8
    %s1225 = scalar_lea.vmem [#allocation2], %s1224
    %v1226 = vld [vmem:[%s1225] sm:$0xff]
    %v1227 = vld [vmem:[%s1225 + $0x8] sm:$0xff]
    %v1228 = vld [vmem:[%s1225 + $0x10] sm:$0xff]
    %v1229 = vld [vmem:[%s1225 + $0x18] sm:$0xff]
    %v1230 = vld [vmem:[%s1225 + $0x20] sm:$0xff]
    %v1231 = vld [vmem:[%s1225 + $0x28] sm:$0xff]
    %v1232 = vld [vmem:[%s1225 + $0x30] sm:$0xff]
    %v1233 = vld [vmem:[%s1225 + $0x38] sm:$0xff]
    %v1234 = vpack.c.bf16 %v1220, %v1219
    %v1235 = vld [vmem:[#allocation9] sm:$0xff]
    %v1236 = vld [vmem:[#allocation9 + $0x8] sm:$0xff]
    %v1237 = vld [vmem:[#allocation9 + $0x10] sm:$0xff]
    %v1238 = vld [vmem:[#allocation9 + $0x18] sm:$0xff]
    %v1239 = vld [vmem:[#allocation9 + $0x20] sm:$0xff]
    %v1240 = vld [vmem:[#allocation9 + $0x28] sm:$0xff]
    %v1241 = vld [vmem:[#allocation9 + $0x30] sm:$0xff]
    %v1242 = vld [vmem:[#allocation9 + $0x38] sm:$0xff]
    %v1243 = vld [vmem:[#allocation9 + $0x40] sm:$0xff]
    %v1244 = vld [vmem:[#allocation9 + $0x48] sm:$0xff]
    %v1245 = vld [vmem:[#allocation9 + $0x50] sm:$0xff]
    %v1246 = vld [vmem:[#allocation9 + $0x58] sm:$0xff]
    %v1247 = vld [vmem:[#allocation9 + $0x60] sm:$0xff]
    %v1248 = vld [vmem:[#allocation9 + $0x68] sm:$0xff]
    %v1249 = vld [vmem:[#allocation9 + $0x70] sm:$0xff]
    %v1250 = vld [vmem:[#allocation9 + $0x78] sm:$0xff]
    %v1251 = vld [vmem:[#allocation9 + $0x80] sm:$0xff]
    %v1252 = vld [vmem:[#allocation9 + $0x88] sm:$0xff]
    %v1253 = vld [vmem:[#allocation9 + $0x90] sm:$0xff]
    %v1254 = vld [vmem:[#allocation9 + $0x98] sm:$0xff]
    %v1255 = vld [vmem:[#allocation9 + $0xa0] sm:$0xff]
    %v1256 = vld [vmem:[#allocation9 + $0xa8] sm:$0xff]
    %v1257 = vld [vmem:[#allocation9 + $0xb0] sm:$0xff]
    %v1258 = vld [vmem:[#allocation9 + $0xb8] sm:$0xff]
    %v1259 = vld [vmem:[#allocation9 + $0xc0] sm:$0xff]
    %v1260 = vld [vmem:[#allocation9 + $0xc8] sm:$0xff]
    %v1261 = vld [vmem:[#allocation9 + $0xd0] sm:$0xff]
    %v1262 = vld [vmem:[#allocation9 + $0xd8] sm:$0xff]
    %v1263 = vld [vmem:[#allocation9 + $0xe0] sm:$0xff]
    %v1264 = vld [vmem:[#allocation9 + $0xe8] sm:$0xff]
    %v1265 = vld [vmem:[#allocation9 + $0xf0] sm:$0xff]
    %v1266 = vld [vmem:[#allocation9 + $0xf8] sm:$0xff]
    %v1299 = vunpack.c.l.b16 %v1235
    %v1300 = vunpack.c.h.b16 %v1235
    %v1301 = vunpack.c.l.b16 %v1236
    %v1302 = vunpack.c.h.b16 %v1236
    %v1303 = vunpack.c.l.b16 %v1237
    %v1304 = vunpack.c.h.b16 %v1237
    %v1305 = vunpack.c.l.b16 %v1238
    %v1306 = vunpack.c.h.b16 %v1238
    %v1307 = vunpack.c.l.b16 %v1239
    %v1308 = vunpack.c.h.b16 %v1239
    %v1309 = vunpack.c.l.b16 %v1240
    %v1310 = vunpack.c.h.b16 %v1240
    %v1311 = vunpack.c.l.b16 %v1241
    %v1312 = vunpack.c.h.b16 %v1241
    %v1313 = vunpack.c.l.b16 %v1242
    %v1314 = vunpack.c.h.b16 %v1242
    %v1315 = vunpack.c.l.b16 %v1243
    %v1316 = vunpack.c.h.b16 %v1243
    %v1317 = vunpack.c.l.b16 %v1244
    %v1318 = vunpack.c.h.b16 %v1244
    %v1319 = vunpack.c.l.b16 %v1245
    %v1320 = vunpack.c.h.b16 %v1245
    %v1321 = vunpack.c.l.b16 %v1246
    %v1322 = vunpack.c.h.b16 %v1246
    %v1323 = vunpack.c.l.b16 %v1247
    %v1324 = vunpack.c.h.b16 %v1247
    %v1325 = vunpack.c.l.b16 %v1248
    %v1326 = vunpack.c.h.b16 %v1248
    %v1327 = vunpack.c.l.b16 %v1249
    %v1328 = vunpack.c.h.b16 %v1249
    %v1329 = vunpack.c.l.b16 %v1250
    %v1330 = vunpack.c.h.b16 %v1250
    %v1331 = vunpack.c.l.b16 %v1251
    %v1332 = vunpack.c.h.b16 %v1251
    %v1333 = vunpack.c.l.b16 %v1252
    %v1334 = vunpack.c.h.b16 %v1252
    %v1335 = vunpack.c.l.b16 %v1253
    %v1336 = vunpack.c.h.b16 %v1253
    %v1337 = vunpack.c.l.b16 %v1254
    %v1338 = vunpack.c.h.b16 %v1254
    %v1339 = vunpack.c.l.b16 %v1255
    %v1340 = vunpack.c.h.b16 %v1255
    %v1341 = vunpack.c.l.b16 %v1256
    %v1342 = vunpack.c.h.b16 %v1256
    %v1343 = vunpack.c.l.b16 %v1257
    %v1344 = vunpack.c.h.b16 %v1257
    %v1345 = vunpack.c.l.b16 %v1258
    %v1346 = vunpack.c.h.b16 %v1258
    %v1347 = vunpack.c.l.b16 %v1259
    %v1348 = vunpack.c.h.b16 %v1259
    %v1349 = vunpack.c.l.b16 %v1260
    %v1350 = vunpack.c.h.b16 %v1260
    %v1351 = vunpack.c.l.b16 %v1261
    %v1352 = vunpack.c.h.b16 %v1261
    %v1353 = vunpack.c.l.b16 %v1262
    %v1354 = vunpack.c.h.b16 %v1262
    %v1355 = vunpack.c.l.b16 %v1263
    %v1356 = vunpack.c.h.b16 %v1263
    %v1357 = vunpack.c.l.b16 %v1264
    %v1358 = vunpack.c.h.b16 %v1264
    %v1359 = vunpack.c.l.b16 %v1265
    %v1360 = vunpack.c.h.b16 %v1265
    %v1361 = vunpack.c.l.b16 %v1266
    %v1362 = vunpack.c.h.b16 %v1266
    %v1363 = vpack.c.b16 %v1303, %v1299
    %v1364 = vpack.c.b16 %v1304, %v1300
    %v1365 = vpack.c.b16 %v1305, %v1301
    %v1366 = vpack.c.b16 %v1306, %v1302
    %v1367 = vpack.c.b16 %v1311, %v1307
    %v1368 = vpack.c.b16 %v1312, %v1308
    %v1369 = vpack.c.b16 %v1313, %v1309
    %v1370 = vpack.c.b16 %v1314, %v1310
    %v1371 = vpack.c.b16 %v1319, %v1315
    %v1372 = vpack.c.b16 %v1320, %v1316
    %v1373 = vpack.c.b16 %v1321, %v1317
    %v1374 = vpack.c.b16 %v1322, %v1318
    %v1375 = vpack.c.b16 %v1327, %v1323
    %v1376 = vpack.c.b16 %v1328, %v1324
    %v1377 = vpack.c.b16 %v1329, %v1325
    %v1378 = vpack.c.b16 %v1330, %v1326
    %v1379 = vpack.c.b16 %v1335, %v1331
    %v1380 = vpack.c.b16 %v1336, %v1332
    %v1381 = vpack.c.b16 %v1337, %v1333
    %v1382 = vpack.c.b16 %v1338, %v1334
    %v1383 = vpack.c.b16 %v1343, %v1339
    %v1384 = vpack.c.b16 %v1344, %v1340
    %v1385 = vpack.c.b16 %v1345, %v1341
    %v1386 = vpack.c.b16 %v1346, %v1342
    %v1387 = vpack.c.b16 %v1351, %v1347
    %v1388 = vpack.c.b16 %v1352, %v1348
    %v1389 = vpack.c.b16 %v1353, %v1349
    %v1390 = vpack.c.b16 %v1354, %v1350
    %v1391 = vpack.c.b16 %v1359, %v1355
    %v1392 = vpack.c.b16 %v1360, %v1356
    %v1393 = vpack.c.b16 %v1361, %v1357
    %v1394 = vpack.c.b16 %v1362, %v1358
    %1427 = vmatprep.subr.bf16.mxu0 %v1364
    %1428 = vmatpush1.bf16.msra.mxu0 %v1363
    %1429 = vmatprep.subr.bf16.mxu0 %v1368
    %1430 = vmatpush1.bf16.msra.mxu0 %v1367
    %1431 = vmatprep.subr.bf16.mxu0 %v1372
    %1432 = vmatpush1.bf16.msra.mxu0 %v1371
    %1433 = vmatprep.subr.bf16.mxu0 %v1376
    %1434 = vmatpush1.bf16.msra.mxu0 %v1375
    %1435 = vmatprep.subr.bf16.mxu0 %v1380
    %1436 = vmatpush1.bf16.msra.mxu0 %v1379
    %1437 = vmatprep.subr.bf16.mxu0 %v1384
    %1438 = vmatpush1.bf16.msra.mxu0 %v1383
    %1439 = vmatprep.subr.bf16.mxu0 %v1388
    %1440 = vmatpush1.bf16.msra.mxu0 %v1387
    %1441 = vmatprep.subr.bf16.mxu0 %v1392
    %1442 = vmatpush1.bf16.msra.mxu0 %v1391
    %1443 = vmatprep.subr.bf16.mxu0 0
    %1444 = vmatpush1.bf16.msra.mxu0 0
    %1445 = vmatprep.subr.bf16.mxu0 0
    %1446 = vmatpush1.bf16.msra.mxu0 0
    %1447 = vmatprep.subr.bf16.mxu0 0
    %1448 = vmatpush1.bf16.msra.mxu0 0
    %1449 = vmatprep.subr.bf16.mxu0 0
    %1450 = vmatpush1.bf16.msra.mxu0 0
    %1451 = vmatprep.subr.bf16.mxu0 0
    %1452 = vmatpush1.bf16.msra.mxu0 0
    %1453 = vmatprep.subr.bf16.mxu0 0
    %1454 = vmatpush1.bf16.msra.mxu0 0
    %1455 = vmatprep.subr.bf16.mxu0 0
    %1456 = vmatpush1.bf16.msra.mxu0 0
    %1457 = vmatprep.subr.bf16.mxu0 0
    %1458 = vmatpush1.bf16.msra.mxu0 0
    %1459 = vmatprep.mubr.bf16.mxu0 0
    %1460 = vmatmul.mubr.bf16.gmra.mrb[0].mxu0 %v1234
    %v1461 = vpop.f32.mrb[0].mxu0
    %v1462 = vadd.f32 0.0, %v1461
    %v1463 = vpop.f32.mrb[0].mxu0
    %v1464 = vadd.f32 0.0, %v1463
    %v1465 = vpop.f32.mrb[0].mxu0
    %v1466 = vadd.f32 0.0, %v1465
    %v1467 = vpop.f32.mrb[0].mxu0
    %v1468 = vadd.f32 0.0, %v1467
    %1469 = vdwg.mxu0
    %1470 = vmatprep.subr.bf16.mxu0 %v1366
    %1471 = vmatpush1.bf16.msra.mxu0 %v1365
    %1472 = vmatprep.subr.bf16.mxu0 %v1370
    %1473 = vmatpush1.bf16.msra.mxu0 %v1369
    %1474 = vmatprep.subr.bf16.mxu0 %v1374
    %1475 = vmatpush1.bf16.msra.mxu0 %v1373
    %1476 = vmatprep.subr.bf16.mxu0 %v1378
    %1477 = vmatpush1.bf16.msra.mxu0 %v1377
    %1478 = vmatprep.subr.bf16.mxu0 %v1382
    %1479 = vmatpush1.bf16.msra.mxu0 %v1381
    %1480 = vmatprep.subr.bf16.mxu0 %v1386
    %1481 = vmatpush1.bf16.msra.mxu0 %v1385
    %1482 = vmatprep.subr.bf16.mxu0 %v1390
    %1483 = vmatpush1.bf16.msra.mxu0 %v1389
    %1484 = vmatprep.subr.bf16.mxu0 %v1394
    %1485 = vmatpush1.bf16.msra.mxu0 %v1393
    %1486 = vmatprep.subr.bf16.mxu0 0
    %1487 = vmatpush1.bf16.msra.mxu0 0
    %1488 = vmatprep.subr.bf16.mxu0 0
    %1489 = vmatpush1.bf16.msra.mxu0 0
    %1490 = vmatprep.subr.bf16.mxu0 0
    %1491 = vmatpush1.bf16.msra.mxu0 0
    %1492 = vmatprep.subr.bf16.mxu0 0
    %1493 = vmatpush1.bf16.msra.mxu0 0
    %1494 = vmatprep.subr.bf16.mxu0 0
    %1495 = vmatpush1.bf16.msra.mxu0 0
    %1496 = vmatprep.subr.bf16.mxu0 0
    %1497 = vmatpush1.bf16.msra.mxu0 0
    %1498 = vmatprep.subr.bf16.mxu0 0
    %1499 = vmatpush1.bf16.msra.mxu0 0
    %1500 = vmatprep.subr.bf16.mxu0 0
    %1501 = vmatpush1.bf16.msra.mxu0 0
    %1502 = vmatprep.mubr.bf16.mxu0 0
    %1503 = vmatmul.mubr.bf16.gmra.mrb[0].mxu0 %v1234
    %v1504 = vpop.f32.mrb[0].mxu0
    %v1505 = vadd.f32 0.0, %v1504
    %v1506 = vpop.f32.mrb[0].mxu0
    %v1507 = vadd.f32 0.0, %v1506
    %v1508 = vpop.f32.mrb[0].mxu0
    %v1509 = vadd.f32 0.0, %v1508
    %v1510 = vpop.f32.mrb[0].mxu0
    %v1511 = vadd.f32 0.0, %v1510
    %1512 = vdwg.mxu0
    %v1513 = vadd.f32 %v1226, %v1462
    %v1514 = vadd.f32 %v1227, %v1464
    %v1515 = vadd.f32 %v1228, %v1505
    %v1516 = vadd.f32 %v1229, %v1507
    %v1517 = vadd.f32 %v1230, %v1466
    %v1518 = vadd.f32 %v1231, %v1468
    %v1519 = vadd.f32 %v1232, %v1509
    %v1520 = vadd.f32 %v1233, %v1511
    %v1521 = vxor.u32 %v1513, 2147483648
    %v1522 = vxor.u32 %v1517, 2147483648
    %v1523 = vmul.f32 %v1521, 1.442695
    %v1524 = vpow.pop %v1523
    %v1525 = vmul.f32 %v1522, 1.442695
    %v1526 = vpow.pop %v1525
    %v1527 = vadd.f32 %v1524, 1.0
    %v1528 = vadd.f32 %v1526, 1.0
    %v1529 = vrcp.pop %v1527
    %v1530 = vmul.f32 1.0, %v1529
    %v1531 = vrcp.pop %v1528
    %v1532 = vmul.f32 1.0, %v1531
    %v1533 = vxor.u32 %v1514, 2147483648
    %v1534 = vxor.u32 %v1518, 2147483648
    %v1535 = vmul.f32 %v1533, 1.442695
    %v1536 = vpow.pop %v1535
    %v1537 = vmul.f32 %v1534, 1.442695
    %v1538 = vpow.pop %v1537
    %v1539 = vadd.f32 %v1536, 1.0
    %v1540 = vadd.f32 %v1538, 1.0
    %v1541 = vrcp.pop %v1539
    %v1542 = vmul.f32 1.0, %v1541
    %v1543 = vrcp.pop %v1540
    %v1544 = vmul.f32 1.0, %v1543
    %v1545 = vtanh.pop %v1515
    %v1546 = vtanh.pop %v1519
    %v1547 = vxor.u32 %v1516, 2147483648
    %v1548 = vxor.u32 %v1520, 2147483648
    %v1549 = vmul.f32 %v1547, 1.442695
    %v1550 = vpow.pop %v1549
    %v1551 = vmul.f32 %v1548, 1.442695
    %v1552 = vpow.pop %v1551
    %v1553 = vadd.f32 %v1550, 1.0
    %v1554 = vadd.f32 %v1552, 1.0
    %v1555 = vrcp.pop %v1553
    %v1556 = vmul.f32 1.0, %v1555
    %v1557 = vrcp.pop %v1554
    %v1558 = vmul.f32 1.0, %v1557
    %v1559 = vmul.f32 %v1542, %v1215
    %v1560 = vmul.f32 %v1544, %v1216
    %v1561 = vmul.f32 %v1530, %v1545
    %v1562 = vmul.f32 %v1532, %v1546
    %v1563 = vadd.f32 %v1559, %v1561
    %v1564 = vadd.f32 %v1560, %v1562
    %v1565 = vtanh.pop %v1563
    %v1566 = vtanh.pop %v1564
    %v1567 = vmul.f32 %v1556, %v1565
    %v1568 = vmul.f32 %v1558, %v1566
    %s1569 = scalar_lea.vmem [#allocation3], 16
    %1570 = vst [vmem:[%s1569] sm:$0xff] %v1567
    %1571 = vst [vmem:[%s1569 + $0x8] sm:$0xff] %v1568
    %s1572 = smul.u32 4, 4
    %s1573 = smul.addr %s1572, 8
    %s1574 = scalar_lea.vmem [#allocation2], %s1573
    %v1575 = vld [vmem:[%s1574] sm:$0xff]
    %v1576 = vld [vmem:[%s1574 + $0x8] sm:$0xff]
    %v1577 = vld [vmem:[%s1574 + $0x10] sm:$0xff]
    %v1578 = vld [vmem:[%s1574 + $0x18] sm:$0xff]
    %v1579 = vld [vmem:[%s1574 + $0x20] sm:$0xff]
    %v1580 = vld [vmem:[%s1574 + $0x28] sm:$0xff]
    %v1581 = vld [vmem:[%s1574 + $0x30] sm:$0xff]
    %v1582 = vld [vmem:[%s1574 + $0x38] sm:$0xff]
    %v1583 = vpack.c.bf16 %v1568, %v1567
    %v1584 = vld [vmem:[#allocation9] sm:$0xff]
    %v1585 = vld [vmem:[#allocation9 + $0x8] sm:$0xff]
    %v1586 = vld [vmem:[#allocation9 + $0x10] sm:$0xff]
    %v1587 = vld [vmem:[#allocation9 + $0x18] sm:$0xff]
    %v1588 = vld [vmem:[#allocation9 + $0x20] sm:$0xff]
    %v1589 = vld [vmem:[#allocation9 + $0x28] sm:$0xff]
    %v1590 = vld [vmem:[#allocation9 + $0x30] sm:$0xff]
    %v1591 = vld [vmem:[#allocation9 + $0x38] sm:$0xff]
    %v1592 = vld [vmem:[#allocation9 + $0x40] sm:$0xff]
    %v1593 = vld [vmem:[#allocation9 + $0x48] sm:$0xff]
    %v1594 = vld [vmem:[#allocation9 + $0x50] sm:$0xff]
    %v1595 = vld [vmem:[#allocation9 + $0x58] sm:$0xff]
    %v1596 = vld [vmem:[#allocation9 + $0x60] sm:$0xff]
    %v1597 = vld [vmem:[#allocation9 + $0x68] sm:$0xff]
    %v1598 = vld [vmem:[#allocation9 + $0x70] sm:$0xff]
    %v1599 = vld [vmem:[#allocation9 + $0x78] sm:$0xff]
    %v1600 = vld [vmem:[#allocation9 + $0x80] sm:$0xff]
    %v1601 = vld [vmem:[#allocation9 + $0x88] sm:$0xff]
    %v1602 = vld [vmem:[#allocation9 + $0x90] sm:$0xff]
    %v1603 = vld [vmem:[#allocation9 + $0x98] sm:$0xff]
    %v1604 = vld [vmem:[#allocation9 + $0xa0] sm:$0xff]
    %v1605 = vld [vmem:[#allocation9 + $0xa8] sm:$0xff]
    %v1606 = vld [vmem:[#allocation9 + $0xb0] sm:$0xff]
    %v1607 = vld [vmem:[#allocation9 + $0xb8] sm:$0xff]
    %v1608 = vld [vmem:[#allocation9 + $0xc0] sm:$0xff]
    %v1609 = vld [vmem:[#allocation9 + $0xc8] sm:$0xff]
    %v1610 = vld [vmem:[#allocation9 + $0xd0] sm:$0xff]
    %v1611 = vld [vmem:[#allocation9 + $0xd8] sm:$0xff]
    %v1612 = vld [vmem:[#allocation9 + $0xe0] sm:$0xff]
    %v1613 = vld [vmem:[#allocation9 + $0xe8] sm:$0xff]
    %v1614 = vld [vmem:[#allocation9 + $0xf0] sm:$0xff]
    %v1615 = vld [vmem:[#allocation9 + $0xf8] sm:$0xff]
    %v1648 = vunpack.c.l.b16 %v1584
    %v1649 = vunpack.c.h.b16 %v1584
    %v1650 = vunpack.c.l.b16 %v1585
    %v1651 = vunpack.c.h.b16 %v1585
    %v1652 = vunpack.c.l.b16 %v1586
    %v1653 = vunpack.c.h.b16 %v1586
    %v1654 = vunpack.c.l.b16 %v1587
    %v1655 = vunpack.c.h.b16 %v1587
    %v1656 = vunpack.c.l.b16 %v1588
    %v1657 = vunpack.c.h.b16 %v1588
    %v1658 = vunpack.c.l.b16 %v1589
    %v1659 = vunpack.c.h.b16 %v1589
    %v1660 = vunpack.c.l.b16 %v1590
    %v1661 = vunpack.c.h.b16 %v1590
    %v1662 = vunpack.c.l.b16 %v1591
    %v1663 = vunpack.c.h.b16 %v1591
    %v1664 = vunpack.c.l.b16 %v1592
    %v1665 = vunpack.c.h.b16 %v1592
    %v1666 = vunpack.c.l.b16 %v1593
    %v1667 = vunpack.c.h.b16 %v1593
    %v1668 = vunpack.c.l.b16 %v1594
    %v1669 = vunpack.c.h.b16 %v1594
    %v1670 = vunpack.c.l.b16 %v1595
    %v1671 = vunpack.c.h.b16 %v1595
    %v1672 = vunpack.c.l.b16 %v1596
    %v1673 = vunpack.c.h.b16 %v1596
    %v1674 = vunpack.c.l.b16 %v1597
    %v1675 = vunpack.c.h.b16 %v1597
    %v1676 = vunpack.c.l.b16 %v1598
    %v1677 = vunpack.c.h.b16 %v1598
    %v1678 = vunpack.c.l.b16 %v1599
    %v1679 = vunpack.c.h.b16 %v1599
    %v1680 = vunpack.c.l.b16 %v1600
    %v1681 = vunpack.c.h.b16 %v1600
    %v1682 = vunpack.c.l.b16 %v1601
    %v1683 = vunpack.c.h.b16 %v1601
    %v1684 = vunpack.c.l.b16 %v1602
    %v1685 = vunpack.c.h.b16 %v1602
    %v1686 = vunpack.c.l.b16 %v1603
    %v1687 = vunpack.c.h.b16 %v1603
    %v1688 = vunpack.c.l.b16 %v1604
    %v1689 = vunpack.c.h.b16 %v1604
    %v1690 = vunpack.c.l.b16 %v1605
    %v1691 = vunpack.c.h.b16 %v1605
    %v1692 = vunpack.c.l.b16 %v1606
    %v1693 = vunpack.c.h.b16 %v1606
    %v1694 = vunpack.c.l.b16 %v1607
    %v1695 = vunpack.c.h.b16 %v1607
    %v1696 = vunpack.c.l.b16 %v1608
    %v1697 = vunpack.c.h.b16 %v1608
    %v1698 = vunpack.c.l.b16 %v1609
    %v1699 = vunpack.c.h.b16 %v1609
    %v1700 = vunpack.c.l.b16 %v1610
    %v1701 = vunpack.c.h.b16 %v1610
    %v1702 = vunpack.c.l.b16 %v1611
    %v1703 = vunpack.c.h.b16 %v1611
    %v1704 = vunpack.c.l.b16 %v1612
    %v1705 = vunpack.c.h.b16 %v1612
    %v1706 = vunpack.c.l.b16 %v1613
    %v1707 = vunpack.c.h.b16 %v1613
    %v1708 = vunpack.c.l.b16 %v1614
    %v1709 = vunpack.c.h.b16 %v1614
    %v1710 = vunpack.c.l.b16 %v1615
    %v1711 = vunpack.c.h.b16 %v1615
    %v1712 = vpack.c.b16 %v1652, %v1648
    %v1713 = vpack.c.b16 %v1653, %v1649
    %v1714 = vpack.c.b16 %v1654, %v1650
    %v1715 = vpack.c.b16 %v1655, %v1651
    %v1716 = vpack.c.b16 %v1660, %v1656
    %v1717 = vpack.c.b16 %v1661, %v1657
    %v1718 = vpack.c.b16 %v1662, %v1658
    %v1719 = vpack.c.b16 %v1663, %v1659
    %v1720 = vpack.c.b16 %v1668, %v1664
    %v1721 = vpack.c.b16 %v1669, %v1665
    %v1722 = vpack.c.b16 %v1670, %v1666
    %v1723 = vpack.c.b16 %v1671, %v1667
    %v1724 = vpack.c.b16 %v1676, %v1672
    %v1725 = vpack.c.b16 %v1677, %v1673
    %v1726 = vpack.c.b16 %v1678, %v1674
    %v1727 = vpack.c.b16 %v1679, %v1675
    %v1728 = vpack.c.b16 %v1684, %v1680
    %v1729 = vpack.c.b16 %v1685, %v1681
    %v1730 = vpack.c.b16 %v1686, %v1682
    %v1731 = vpack.c.b16 %v1687, %v1683
    %v1732 = vpack.c.b16 %v1692, %v1688
    %v1733 = vpack.c.b16 %v1693, %v1689
    %v1734 = vpack.c.b16 %v1694, %v1690
    %v1735 = vpack.c.b16 %v1695, %v1691
    %v1736 = vpack.c.b16 %v1700, %v1696
    %v1737 = vpack.c.b16 %v1701, %v1697
    %v1738 = vpack.c.b16 %v1702, %v1698
    %v1739 = vpack.c.b16 %v1703, %v1699
    %v1740 = vpack.c.b16 %v1708, %v1704
    %v1741 = vpack.c.b16 %v1709, %v1705
    %v1742 = vpack.c.b16 %v1710, %v1706
    %v1743 = vpack.c.b16 %v1711, %v1707
    %1776 = vmatprep.subr.bf16.mxu0 %v1713
    %1777 = vmatpush1.bf16.msra.mxu0 %v1712
    %1778 = vmatprep.subr.bf16.mxu0 %v1717
    %1779 = vmatpush1.bf16.msra.mxu0 %v1716
    %1780 = vmatprep.subr.bf16.mxu0 %v1721
    %1781 = vmatpush1.bf16.msra.mxu0 %v1720
    %1782 = vmatprep.subr.bf16.mxu0 %v1725
    %1783 = vmatpush1.bf16.msra.mxu0 %v1724
    %1784 = vmatprep.subr.bf16.mxu0 %v1729
    %1785 = vmatpush1.bf16.msra.mxu0 %v1728
    %1786 = vmatprep.subr.bf16.mxu0 %v1733
    %1787 = vmatpush1.bf16.msra.mxu0 %v1732
    %1788 = vmatprep.subr.bf16.mxu0 %v1737
    %1789 = vmatpush1.bf16.msra.mxu0 %v1736
    %1790 = vmatprep.subr.bf16.mxu0 %v1741
    %1791 = vmatpush1.bf16.msra.mxu0 %v1740
    %1792 = vmatprep.subr.bf16.mxu0 0
    %1793 = vmatpush1.bf16.msra.mxu0 0
    %1794 = vmatprep.subr.bf16.mxu0 0
    %1795 = vmatpush1.bf16.msra.mxu0 0
    %1796 = vmatprep.subr.bf16.mxu0 0
    %1797 = vmatpush1.bf16.msra.mxu0 0
    %1798 = vmatprep.subr.bf16.mxu0 0
    %1799 = vmatpush1.bf16.msra.mxu0 0
    %1800 = vmatprep.subr.bf16.mxu0 0
    %1801 = vmatpush1.bf16.msra.mxu0 0
    %1802 = vmatprep.subr.bf16.mxu0 0
    %1803 = vmatpush1.bf16.msra.mxu0 0
    %1804 = vmatprep.subr.bf16.mxu0 0
    %1805 = vmatpush1.bf16.msra.mxu0 0
    %1806 = vmatprep.subr.bf16.mxu0 0
    %1807 = vmatpush1.bf16.msra.mxu0 0
    %1808 = vmatprep.mubr.bf16.mxu0 0
    %1809 = vmatmul.mubr.bf16.gmra.mrb[0].mxu0 %v1583
    %v1810 = vpop.f32.mrb[0].mxu0
    %v1811 = vadd.f32 0.0, %v1810
    %v1812 = vpop.f32.mrb[0].mxu0
    %v1813 = vadd.f32 0.0, %v1812
    %v1814 = vpop.f32.mrb[0].mxu0
    %v1815 = vadd.f32 0.0, %v1814
    %v1816 = vpop.f32.mrb[0].mxu0
    %v1817 = vadd.f32 0.0, %v1816
    %1818 = vdwg.mxu0
    %1819 = vmatprep.subr.bf16.mxu0 %v1715
    %1820 = vmatpush1.bf16.msra.mxu0 %v1714
    %1821 = vmatprep.subr.bf16.mxu0 %v1719
    %1822 = vmatpush1.bf16.msra.mxu0 %v1718
    %1823 = vmatprep.subr.bf16.mxu0 %v1723
    %1824 = vmatpush1.bf16.msra.mxu0 %v1722
    %1825 = vmatprep.subr.bf16.mxu0 %v1727
    %1826 = vmatpush1.bf16.msra.mxu0 %v1726
    %1827 = vmatprep.subr.bf16.mxu0 %v1731
    %1828 = vmatpush1.bf16.msra.mxu0 %v1730
    %1829 = vmatprep.subr.bf16.mxu0 %v1735
    %1830 = vmatpush1.bf16.msra.mxu0 %v1734
    %1831 = vmatprep.subr.bf16.mxu0 %v1739
    %1832 = vmatpush1.bf16.msra.mxu0 %v1738
    %1833 = vmatprep.subr.bf16.mxu0 %v1743
    %1834 = vmatpush1.bf16.msra.mxu0 %v1742
    %1835 = vmatprep.subr.bf16.mxu0 0
    %1836 = vmatpush1.bf16.msra.mxu0 0
    %1837 = vmatprep.subr.bf16.mxu0 0
    %1838 = vmatpush1.bf16.msra.mxu0 0
    %1839 = vmatprep.subr.bf16.mxu0 0
    %1840 = vmatpush1.bf16.msra.mxu0 0
    %1841 = vmatprep.subr.bf16.mxu0 0
    %1842 = vmatpush1.bf16.msra.mxu0 0
    %1843 = vmatprep.subr.bf16.mxu0 0
    %1844 = vmatpush1.bf16.msra.mxu0 0
    %1845 = vmatprep.subr.bf16.mxu0 0
    %1846 = vmatpush1.bf16.msra.mxu0 0
    %1847 = vmatprep.subr.bf16.mxu0 0
    %1848 = vmatpush1.bf16.msra.mxu0 0
    %1849 = vmatprep.subr.bf16.mxu0 0
    %1850 = vmatpush1.bf16.msra.mxu0 0
    %1851 = vmatprep.mubr.bf16.mxu0 0
    %1852 = vmatmul.mubr.bf16.gmra.mrb[0].mxu0 %v1583
    %v1853 = vpop.f32.mrb[0].mxu0
    %v1854 = vadd.f32 0.0, %v1853
    %v1855 = vpop.f32.mrb[0].mxu0
    %v1856 = vadd.f32 0.0, %v1855
    %v1857 = vpop.f32.mrb[0].mxu0
    %v1858 = vadd.f32 0.0, %v1857
    %v1859 = vpop.f32.mrb[0].mxu0
    %v1860 = vadd.f32 0.0, %v1859
    %1861 = vdwg.mxu0
    %v1862 = vadd.f32 %v1575, %v1811
    %v1863 = vadd.f32 %v1576, %v1813
    %v1864 = vadd.f32 %v1577, %v1854
    %v1865 = vadd.f32 %v1578, %v1856
    %v1866 = vadd.f32 %v1579, %v1815
    %v1867 = vadd.f32 %v1580, %v1817
    %v1868 = vadd.f32 %v1581, %v1858
    %v1869 = vadd.f32 %v1582, %v1860
    %v1870 = vxor.u32 %v1862, 2147483648
    %v1871 = vxor.u32 %v1866, 2147483648
    %v1872 = vmul.f32 %v1870, 1.442695
    %v1873 = vpow.pop %v1872
    %v1874 = vmul.f32 %v1871, 1.442695
    %v1875 = vpow.pop %v1874
    %v1876 = vadd.f32 %v1873, 1.0
    %v1877 = vadd.f32 %v1875, 1.0
    %v1878 = vrcp.pop %v1876
    %v1879 = vmul.f32 1.0, %v1878
    %v1880 = vrcp.pop %v1877
    %v1881 = vmul.f32 1.0, %v1880
    %v1882 = vxor.u32 %v1863, 2147483648
    %v1883 = vxor.u32 %v1867, 2147483648
    %v1884 = vmul.f32 %v1882, 1.442695
    %v1885 = vpow.pop %v1884
    %v1886 = vmul.f32 %v1883, 1.442695
    %v1887 = vpow.pop %v1886
    %v1888 = vadd.f32 %v1885, 1.0
    %v1889 = vadd.f32 %v1887, 1.0
    %v1890 = vrcp.pop %v1888
    %v1891 = vmul.f32 1.0, %v1890
    %v1892 = vrcp.pop %v1889
    %v1893 = vmul.f32 1.0, %v1892
    %v1894 = vtanh.pop %v1864
    %v1895 = vtanh.pop %v1868
    %v1896 = vxor.u32 %v1865, 2147483648
    %v1897 = vxor.u32 %v1869, 2147483648
    %v1898 = vmul.f32 %v1896, 1.442695
    %v1899 = vpow.pop %v1898
    %v1900 = vmul.f32 %v1897, 1.442695
    %v1901 = vpow.pop %v1900
    %v1902 = vadd.f32 %v1899, 1.0
    %v1903 = vadd.f32 %v1901, 1.0
    %v1904 = vrcp.pop %v1902
    %v1905 = vmul.f32 1.0, %v1904
    %v1906 = vrcp.pop %v1903
    %v1907 = vmul.f32 1.0, %v1906
    %v1908 = vmul.f32 %v1891, %v1563
    %v1909 = vmul.f32 %v1893, %v1564
    %v1910 = vmul.f32 %v1879, %v1894
    %v1911 = vmul.f32 %v1881, %v1895
    %v1912 = vadd.f32 %v1908, %v1910
    %v1913 = vadd.f32 %v1909, %v1911
    %v1914 = vtanh.pop %v1912
    %v1915 = vtanh.pop %v1913
    %v1916 = vmul.f32 %v1905, %v1914
    %v1917 = vmul.f32 %v1907, %v1915
    %s1918 = scalar_lea.vmem [#allocation3], 32
    %1919 = vst [vmem:[%s1918] sm:$0xff] %v1916
    %1920 = vst [vmem:[%s1918 + $0x8] sm:$0xff] %v1917
    %s1921 = smul.u32 6, 4
    %s1922 = smul.addr %s1921, 8
    %s1923 = scalar_lea.vmem [#allocation2], %s1922
    %v1924 = vld [vmem:[%s1923] sm:$0xff]
    %v1925 = vld [vmem:[%s1923 + $0x8] sm:$0xff]
    %v1926 = vld [vmem:[%s1923 + $0x10] sm:$0xff]
    %v1927 = vld [vmem:[%s1923 + $0x18] sm:$0xff]
    %v1928 = vld [vmem:[%s1923 + $0x20] sm:$0xff]
    %v1929 = vld [vmem:[%s1923 + $0x28] sm:$0xff]
    %v1930 = vld [vmem:[%s1923 + $0x30] sm:$0xff]
    %v1931 = vld [vmem:[%s1923 + $0x38] sm:$0xff]
    %v1932 = vpack.c.bf16 %v1917, %v1916
    %v1933 = vld [vmem:[#allocation9] sm:$0xff]
    %v1934 = vld [vmem:[#allocation9 + $0x8] sm:$0xff]
    %v1935 = vld [vmem:[#allocation9 + $0x10] sm:$0xff]
    %v1936 = vld [vmem:[#allocation9 + $0x18] sm:$0xff]
    %v1937 = vld [vmem:[#allocation9 + $0x20] sm:$0xff]
    %v1938 = vld [vmem:[#allocation9 + $0x28] sm:$0xff]
    %v1939 = vld [vmem:[#allocation9 + $0x30] sm:$0xff]
    %v1940 = vld [vmem:[#allocation9 + $0x38] sm:$0xff]
    %v1941 = vld [vmem:[#allocation9 + $0x40] sm:$0xff]
    %v1942 = vld [vmem:[#allocation9 + $0x48] sm:$0xff]
    %v1943 = vld [vmem:[#allocation9 + $0x50] sm:$0xff]
    %v1944 = vld [vmem:[#allocation9 + $0x58] sm:$0xff]
    %v1945 = vld [vmem:[#allocation9 + $0x60] sm:$0xff]
    %v1946 = vld [vmem:[#allocation9 + $0x68] sm:$0xff]
    %v1947 = vld [vmem:[#allocation9 + $0x70] sm:$0xff]
    %v1948 = vld [vmem:[#allocation9 + $0x78] sm:$0xff]
    %v1949 = vld [vmem:[#allocation9 + $0x80] sm:$0xff]
    %v1950 = vld [vmem:[#allocation9 + $0x88] sm:$0xff]
    %v1951 = vld [vmem:[#allocation9 + $0x90] sm:$0xff]
    %v1952 = vld [vmem:[#allocation9 + $0x98] sm:$0xff]
    %v1953 = vld [vmem:[#allocation9 + $0xa0] sm:$0xff]
    %v1954 = vld [vmem:[#allocation9 + $0xa8] sm:$0xff]
    %v1955 = vld [vmem:[#allocation9 + $0xb0] sm:$0xff]
    %v1956 = vld [vmem:[#allocation9 + $0xb8] sm:$0xff]
    %v1957 = vld [vmem:[#allocation9 + $0xc0] sm:$0xff]
    %v1958 = vld [vmem:[#allocation9 + $0xc8] sm:$0xff]
    %v1959 = vld [vmem:[#allocation9 + $0xd0] sm:$0xff]
    %v1960 = vld [vmem:[#allocation9 + $0xd8] sm:$0xff]
    %v1961 = vld [vmem:[#allocation9 + $0xe0] sm:$0xff]
    %v1962 = vld [vmem:[#allocation9 + $0xe8] sm:$0xff]
    %v1963 = vld [vmem:[#allocation9 + $0xf0] sm:$0xff]
    %v1964 = vld [vmem:[#allocation9 + $0xf8] sm:$0xff]
    %v1997 = vunpack.c.l.b16 %v1933
    %v1998 = vunpack.c.h.b16 %v1933
    %v1999 = vunpack.c.l.b16 %v1934
    %v2000 = vunpack.c.h.b16 %v1934
    %v2001 = vunpack.c.l.b16 %v1935
    %v2002 = vunpack.c.h.b16 %v1935
    %v2003 = vunpack.c.l.b16 %v1936
    %v2004 = vunpack.c.h.b16 %v1936
    %v2005 = vunpack.c.l.b16 %v1937
    %v2006 = vunpack.c.h.b16 %v1937
    %v2007 = vunpack.c.l.b16 %v1938
    %v2008 = vunpack.c.h.b16 %v1938
    %v2009 = vunpack.c.l.b16 %v1939
    %v2010 = vunpack.c.h.b16 %v1939
    %v2011 = vunpack.c.l.b16 %v1940
    %v2012 = vunpack.c.h.b16 %v1940
    %v2013 = vunpack.c.l.b16 %v1941
    %v2014 = vunpack.c.h.b16 %v1941
    %v2015 = vunpack.c.l.b16 %v1942
    %v2016 = vunpack.c.h.b16 %v1942
    %v2017 = vunpack.c.l.b16 %v1943
    %v2018 = vunpack.c.h.b16 %v1943
    %v2019 = vunpack.c.l.b16 %v1944
    %v2020 = vunpack.c.h.b16 %v1944
    %v2021 = vunpack.c.l.b16 %v1945
    %v2022 = vunpack.c.h.b16 %v1945
    %v2023 = vunpack.c.l.b16 %v1946
    %v2024 = vunpack.c.h.b16 %v1946
    %v2025 = vunpack.c.l.b16 %v1947
    %v2026 = vunpack.c.h.b16 %v1947
    %v2027 = vunpack.c.l.b16 %v1948
    %v2028 = vunpack.c.h.b16 %v1948
    %v2029 = vunpack.c.l.b16 %v1949
    %v2030 = vunpack.c.h.b16 %v1949
    %v2031 = vunpack.c.l.b16 %v1950
    %v2032 = vunpack.c.h.b16 %v1950
    %v2033 = vunpack.c.l.b16 %v1951
    %v2034 = vunpack.c.h.b16 %v1951
    %v2035 = vunpack.c.l.b16 %v1952
    %v2036 = vunpack.c.h.b16 %v1952
    %v2037 = vunpack.c.l.b16 %v1953
    %v2038 = vunpack.c.h.b16 %v1953
    %v2039 = vunpack.c.l.b16 %v1954
    %v2040 = vunpack.c.h.b16 %v1954
    %v2041 = vunpack.c.l.b16 %v1955
    %v2042 = vunpack.c.h.b16 %v1955
    %v2043 = vunpack.c.l.b16 %v1956
    %v2044 = vunpack.c.h.b16 %v1956
    %v2045 = vunpack.c.l.b16 %v1957
    %v2046 = vunpack.c.h.b16 %v1957
    %v2047 = vunpack.c.l.b16 %v1958
    %v2048 = vunpack.c.h.b16 %v1958
    %v2049 = vunpack.c.l.b16 %v1959
    %v2050 = vunpack.c.h.b16 %v1959
    %v2051 = vunpack.c.l.b16 %v1960
    %v2052 = vunpack.c.h.b16 %v1960
    %v2053 = vunpack.c.l.b16 %v1961
    %v2054 = vunpack.c.h.b16 %v1961
    %v2055 = vunpack.c.l.b16 %v1962
    %v2056 = vunpack.c.h.b16 %v1962
    %v2057 = vunpack.c.l.b16 %v1963
    %v2058 = vunpack.c.h.b16 %v1963
    %v2059 = vunpack.c.l.b16 %v1964
    %v2060 = vunpack.c.h.b16 %v1964
    %v2061 = vpack.c.b16 %v2001, %v1997
    %v2062 = vpack.c.b16 %v2002, %v1998
    %v2063 = vpack.c.b16 %v2003, %v1999
    %v2064 = vpack.c.b16 %v2004, %v2000
    %v2065 = vpack.c.b16 %v2009, %v2005
    %v2066 = vpack.c.b16 %v2010, %v2006
    %v2067 = vpack.c.b16 %v2011, %v2007
    %v2068 = vpack.c.b16 %v2012, %v2008
    %v2069 = vpack.c.b16 %v2017, %v2013
    %v2070 = vpack.c.b16 %v2018, %v2014
    %v2071 = vpack.c.b16 %v2019, %v2015
    %v2072 = vpack.c.b16 %v2020, %v2016
    %v2073 = vpack.c.b16 %v2025, %v2021
    %v2074 = vpack.c.b16 %v2026, %v2022
    %v2075 = vpack.c.b16 %v2027, %v2023
    %v2076 = vpack.c.b16 %v2028, %v2024
    %v2077 = vpack.c.b16 %v2033, %v2029
    %v2078 = vpack.c.b16 %v2034, %v2030
    %v2079 = vpack.c.b16 %v2035, %v2031
    %v2080 = vpack.c.b16 %v2036, %v2032
    %v2081 = vpack.c.b16 %v2041, %v2037
    %v2082 = vpack.c.b16 %v2042, %v2038
    %v2083 = vpack.c.b16 %v2043, %v2039
    %v2084 = vpack.c.b16 %v2044, %v2040
    %v2085 = vpack.c.b16 %v2049, %v2045
    %v2086 = vpack.c.b16 %v2050, %v2046
    %v2087 = vpack.c.b16 %v2051, %v2047
    %v2088 = vpack.c.b16 %v2052, %v2048
    %v2089 = vpack.c.b16 %v2057, %v2053
    %v2090 = vpack.c.b16 %v2058, %v2054
    %v2091 = vpack.c.b16 %v2059, %v2055
    %v2092 = vpack.c.b16 %v2060, %v2056
    %2125 = vmatprep.subr.bf16.mxu0 %v2062
    %2126 = vmatpush1.bf16.msra.mxu0 %v2061
    %2127 = vmatprep.subr.bf16.mxu0 %v2066
    %2128 = vmatpush1.bf16.msra.mxu0 %v2065
    %2129 = vmatprep.subr.bf16.mxu0 %v2070
    %2130 = vmatpush1.bf16.msra.mxu0 %v2069
    %2131 = vmatprep.subr.bf16.mxu0 %v2074
    %2132 = vmatpush1.bf16.msra.mxu0 %v2073
    %2133 = vmatprep.subr.bf16.mxu0 %v2078
    %2134 = vmatpush1.bf16.msra.mxu0 %v2077
    %2135 = vmatprep.subr.bf16.mxu0 %v2082
    %2136 = vmatpush1.bf16.msra.mxu0 %v2081
    %2137 = vmatprep.subr.bf16.mxu0 %v2086
    %2138 = vmatpush1.bf16.msra.mxu0 %v2085
    %2139 = vmatprep.subr.bf16.mxu0 %v2090
    %2140 = vmatpush1.bf16.msra.mxu0 %v2089
    %2141 = vmatprep.subr.bf16.mxu0 0
    %2142 = vmatpush1.bf16.msra.mxu0 0
    %2143 = vmatprep.subr.bf16.mxu0 0
    %2144 = vmatpush1.bf16.msra.mxu0 0
    %2145 = vmatprep.subr.bf16.mxu0 0
    %2146 = vmatpush1.bf16.msra.mxu0 0
    %2147 = vmatprep.subr.bf16.mxu0 0
    %2148 = vmatpush1.bf16.msra.mxu0 0
    %2149 = vmatprep.subr.bf16.mxu0 0
    %2150 = vmatpush1.bf16.msra.mxu0 0
    %2151 = vmatprep.subr.bf16.mxu0 0
    %2152 = vmatpush1.bf16.msra.mxu0 0
    %2153 = vmatprep.subr.bf16.mxu0 0
    %2154 = vmatpush1.bf16.msra.mxu0 0
    %2155 = vmatprep.subr.bf16.mxu0 0
    %2156 = vmatpush1.bf16.msra.mxu0 0
    %2157 = vmatprep.mubr.bf16.mxu0 0
    %2158 = vmatmul.mubr.bf16.gmra.mrb[0].mxu0 %v1932
    %v2159 = vpop.f32.mrb[0].mxu0
    %v2160 = vadd.f32 0.0, %v2159
    %v2161 = vpop.f32.mrb[0].mxu0
    %v2162 = vadd.f32 0.0, %v2161
    %v2163 = vpop.f32.mrb[0].mxu0
    %v2164 = vadd.f32 0.0, %v2163
    %v2165 = vpop.f32.mrb[0].mxu0
    %v2166 = vadd.f32 0.0, %v2165
    %2167 = vdwg.mxu0
    %2168 = vmatprep.subr.bf16.mxu0 %v2064
    %2169 = vmatpush1.bf16.msra.mxu0 %v2063
    %2170 = vmatprep.subr.bf16.mxu0 %v2068
    %2171 = vmatpush1.bf16.msra.mxu0 %v2067
    %2172 = vmatprep.subr.bf16.mxu0 %v2072
    %2173 = vmatpush1.bf16.msra.mxu0 %v2071
    %2174 = vmatprep.subr.bf16.mxu0 %v2076
    %2175 = vmatpush1.bf16.msra.mxu0 %v2075
    %2176 = vmatprep.subr.bf16.mxu0 %v2080
    %2177 = vmatpush1.bf16.msra.mxu0 %v2079
    %2178 = vmatprep.subr.bf16.mxu0 %v2084
    %2179 = vmatpush1.bf16.msra.mxu0 %v2083
    %2180 = vmatprep.subr.bf16.mxu0 %v2088
    %2181 = vmatpush1.bf16.msra.mxu0 %v2087
    %2182 = vmatprep.subr.bf16.mxu0 %v2092
    %2183 = vmatpush1.bf16.msra.mxu0 %v2091
    %2184 = vmatprep.subr.bf16.mxu0 0
    %2185 = vmatpush1.bf16.msra.mxu0 0
    %2186 = vmatprep.subr.bf16.mxu0 0
    %2187 = vmatpush1.bf16.msra.mxu0 0
    %2188 = vmatprep.subr.bf16.mxu0 0
    %2189 = vmatpush1.bf16.msra.mxu0 0
    %2190 = vmatprep.subr.bf16.mxu0 0
    %2191 = vmatpush1.bf16.msra.mxu0 0
    %2192 = vmatprep.subr.bf16.mxu0 0
    %2193 = vmatpush1.bf16.msra.mxu0 0
    %2194 = vmatprep.subr.bf16.mxu0 0
    %2195 = vmatpush1.bf16.msra.mxu0 0
    %2196 = vmatprep.subr.bf16.mxu0 0
    %2197 = vmatpush1.bf16.msra.mxu0 0
    %2198 = vmatprep.subr.bf16.mxu0 0
    %2199 = vmatpush1.bf16.msra.mxu0 0
    %2200 = vmatprep.mubr.bf16.mxu0 0
    %2201 = vmatmul.mubr.bf16.gmra.mrb[0].mxu0 %v1932
    %v2202 = vpop.f32.mrb[0].mxu0
    %v2203 = vadd.f32 0.0, %v2202
    %v2204 = vpop.f32.mrb[0].mxu0
    %v2205 = vadd.f32 0.0, %v2204
    %v2206 = vpop.f32.mrb[0].mxu0
    %v2207 = vadd.f32 0.0, %v2206
    %v2208 = vpop.f32.mrb[0].mxu0
    %v2209 = vadd.f32 0.0, %v2208
    %2210 = vdwg.mxu0
    %v2211 = vadd.f32 %v1924, %v2160
    %v2212 = vadd.f32 %v1925, %v2162
    %v2213 = vadd.f32 %v1926, %v2203
    %v2214 = vadd.f32 %v1927, %v2205
    %v2215 = vadd.f32 %v1928, %v2164
    %v2216 = vadd.f32 %v1929, %v2166
    %v2217 = vadd.f32 %v1930, %v2207
    %v2218 = vadd.f32 %v1931, %v2209
    %v2219 = vxor.u32 %v2211, 2147483648
    %v2220 = vxor.u32 %v2215, 2147483648
    %v2221 = vmul.f32 %v2219, 1.442695
    %v2222 = vpow.pop %v2221
    %v2223 = vmul.f32 %v2220, 1.442695
    %v2224 = vpow.pop %v2223
    %v2225 = vadd.f32 %v2222, 1.0
    %v2226 = vadd.f32 %v2224, 1.0
    %v2227 = vrcp.pop %v2225
    %v2228 = vmul.f32 1.0, %v2227
    %v2229 = vrcp.pop %v2226
    %v2230 = vmul.f32 1.0, %v2229
    %v2231 = vxor.u32 %v2212, 2147483648
    %v2232 = vxor.u32 %v2216, 2147483648
    %v2233 = vmul.f32 %v2231, 1.442695
    %v2234 = vpow.pop %v2233
    %v2235 = vmul.f32 %v2232, 1.442695
    %v2236 = vpow.pop %v2235
    %v2237 = vadd.f32 %v2234, 1.0
    %v2238 = vadd.f32 %v2236, 1.0
    %v2239 = vrcp.pop %v2237
    %v2240 = vmul.f32 1.0, %v2239
    %v2241 = vrcp.pop %v2238
    %v2242 = vmul.f32 1.0, %v2241
    %v2243 = vtanh.pop %v2213
    %v2244 = vtanh.pop %v2217
    %v2245 = vxor.u32 %v2214, 2147483648
    %v2246 = vxor.u32 %v2218, 2147483648
    %v2247 = vmul.f32 %v2245, 1.442695
    %v2248 = vpow.pop %v2247
    %v2249 = vmul.f32 %v2246, 1.442695
    %v2250 = vpow.pop %v2249
    %v2251 = vadd.f32 %v2248, 1.0
    %v2252 = vadd.f32 %v2250, 1.0
    %v2253 = vrcp.pop %v2251
    %v2254 = vmul.f32 1.0, %v2253
    %v2255 = vrcp.pop %v2252
    %v2256 = vmul.f32 1.0, %v2255
    %v2257 = vmul.f32 %v2240, %v1912
    %v2258 = vmul.f32 %v2242, %v1913
    %v2259 = vmul.f32 %v2228, %v2243
    %v2260 = vmul.f32 %v2230, %v2244
    %v2261 = vadd.f32 %v2257, %v2259
    %v2262 = vadd.f32 %v2258, %v2260
    %v2263 = vtanh.pop %v2261
    %v2264 = vtanh.pop %v2262
    %v2265 = vmul.f32 %v2254, %v2263
    %v2266 = vmul.f32 %v2256, %v2264
    %s2267 = scalar_lea.vmem [#allocation3], 48
    %2268 = vst [vmem:[%s2267] sm:$0xff] %v2265
    %2269 = vst [vmem:[%s2267 + $0x8] sm:$0xff] %v2266
    %s2270 = smul.u32 8, 4
    %s2271 = smul.addr %s2270, 8
    %s2272 = scalar_lea.vmem [#allocation2], %s2271
    %v2273 = vld [vmem:[%s2272] sm:$0xff]
    %v2274 = vld [vmem:[%s2272 + $0x8] sm:$0xff]
    %v2275 = vld [vmem:[%s2272 + $0x10] sm:$0xff]
    %v2276 = vld [vmem:[%s2272 + $0x18] sm:$0xff]
    %v2277 = vld [vmem:[%s2272 + $0x20] sm:$0xff]
    %v2278 = vld [vmem:[%s2272 + $0x28] sm:$0xff]
    %v2279 = vld [vmem:[%s2272 + $0x30] sm:$0xff]
    %v2280 = vld [vmem:[%s2272 + $0x38] sm:$0xff]
    %v2281 = vpack.c.bf16 %v2266, %v2265
    %v2282 = vld [vmem:[#allocation9] sm:$0xff]
    %v2283 = vld [vmem:[#allocation9 + $0x8] sm:$0xff]
    %v2284 = vld [vmem:[#allocation9 + $0x10] sm:$0xff]
    %v2285 = vld [vmem:[#allocation9 + $0x18] sm:$0xff]
    %v2286 = vld [vmem:[#allocation9 + $0x20] sm:$0xff]
    %v2287 = vld [vmem:[#allocation9 + $0x28] sm:$0xff]
    %v2288 = vld [vmem:[#allocation9 + $0x30] sm:$0xff]
    %v2289 = vld [vmem:[#allocation9 + $0x38] sm:$0xff]
    %v2290 = vld [vmem:[#allocation9 + $0x40] sm:$0xff]
    %v2291 = vld [vmem:[#allocation9 + $0x48] sm:$0xff]
    %v2292 = vld [vmem:[#allocation9 + $0x50] sm:$0xff]
    %v2293 = vld [vmem:[#allocation9 + $0x58] sm:$0xff]
    %v2294 = vld [vmem:[#allocation9 + $0x60] sm:$0xff]
    %v2295 = vld [vmem:[#allocation9 + $0x68] sm:$0xff]
    %v2296 = vld [vmem:[#allocation9 + $0x70] sm:$0xff]
    %v2297 = vld [vmem:[#allocation9 + $0x78] sm:$0xff]
    %v2298 = vld [vmem:[#allocation9 + $0x80] sm:$0xff]
    %v2299 = vld [vmem:[#allocation9 + $0x88] sm:$0xff]
    %v2300 = vld [vmem:[#allocation9 + $0x90] sm:$0xff]
    %v2301 = vld [vmem:[#allocation9 + $0x98] sm:$0xff]
    %v2302 = vld [vmem:[#allocation9 + $0xa0] sm:$0xff]
    %v2303 = vld [vmem:[#allocation9 + $0xa8] sm:$0xff]
    %v2304 = vld [vmem:[#allocation9 + $0xb0] sm:$0xff]
    %v2305 = vld [vmem:[#allocation9 + $0xb8] sm:$0xff]
    %v2306 = vld [vmem:[#allocation9 + $0xc0] sm:$0xff]
    %v2307 = vld [vmem:[#allocation9 + $0xc8] sm:$0xff]
    %v2308 = vld [vmem:[#allocation9 + $0xd0] sm:$0xff]
    %v2309 = vld [vmem:[#allocation9 + $0xd8] sm:$0xff]
    %v2310 = vld [vmem:[#allocation9 + $0xe0] sm:$0xff]
    %v2311 = vld [vmem:[#allocation9 + $0xe8] sm:$0xff]
    %v2312 = vld [vmem:[#allocation9 + $0xf0] sm:$0xff]
    %v2313 = vld [vmem:[#allocation9 + $0xf8] sm:$0xff]
    %v2346 = vunpack.c.l.b16 %v2282
    %v2347 = vunpack.c.h.b16 %v2282
    %v2348 = vunpack.c.l.b16 %v2283
    %v2349 = vunpack.c.h.b16 %v2283
    %v2350 = vunpack.c.l.b16 %v2284
    %v2351 = vunpack.c.h.b16 %v2284
    %v2352 = vunpack.c.l.b16 %v2285
    %v2353 = vunpack.c.h.b16 %v2285
    %v2354 = vunpack.c.l.b16 %v2286
    %v2355 = vunpack.c.h.b16 %v2286
    %v2356 = vunpack.c.l.b16 %v2287
    %v2357 = vunpack.c.h.b16 %v2287
    %v2358 = vunpack.c.l.b16 %v2288
    %v2359 = vunpack.c.h.b16 %v2288
    %v2360 = vunpack.c.l.b16 %v2289
    %v2361 = vunpack.c.h.b16 %v2289
    %v2362 = vunpack.c.l.b16 %v2290
    %v2363 = vunpack.c.h.b16 %v2290
    %v2364 = vunpack.c.l.b16 %v2291
    %v2365 = vunpack.c.h.b16 %v2291
    %v2366 = vunpack.c.l.b16 %v2292
    %v2367 = vunpack.c.h.b16 %v2292
    %v2368 = vunpack.c.l.b16 %v2293
    %v2369 = vunpack.c.h.b16 %v2293
    %v2370 = vunpack.c.l.b16 %v2294
    %v2371 = vunpack.c.h.b16 %v2294
    %v2372 = vunpack.c.l.b16 %v2295
    %v2373 = vunpack.c.h.b16 %v2295
    %v2374 = vunpack.c.l.b16 %v2296
    %v2375 = vunpack.c.h.b16 %v2296
    %v2376 = vunpack.c.l.b16 %v2297
    %v2377 = vunpack.c.h.b16 %v2297
    %v2378 = vunpack.c.l.b16 %v2298
    %v2379 = vunpack.c.h.b16 %v2298
    %v2380 = vunpack.c.l.b16 %v2299
    %v2381 = vunpack.c.h.b16 %v2299
    %v2382 = vunpack.c.l.b16 %v2300
    %v2383 = vunpack.c.h.b16 %v2300
    %v2384 = vunpack.c.l.b16 %v2301
    %v2385 = vunpack.c.h.b16 %v2301
    %v2386 = vunpack.c.l.b16 %v2302
    %v2387 = vunpack.c.h.b16 %v2302
    %v2388 = vunpack.c.l.b16 %v2303
    %v2389 = vunpack.c.h.b16 %v2303
    %v2390 = vunpack.c.l.b16 %v2304
    %v2391 = vunpack.c.h.b16 %v2304
    %v2392 = vunpack.c.l.b16 %v2305
    %v2393 = vunpack.c.h.b16 %v2305
    %v2394 = vunpack.c.l.b16 %v2306
    %v2395 = vunpack.c.h.b16 %v2306
    %v2396 = vunpack.c.l.b16 %v2307
    %v2397 = vunpack.c.h.b16 %v2307
    %v2398 = vunpack.c.l.b16 %v2308
    %v2399 = vunpack.c.h.b16 %v2308
    %v2400 = vunpack.c.l.b16 %v2309
    %v2401 = vunpack.c.h.b16 %v2309
    %v2402 = vunpack.c.l.b16 %v2310
    %v2403 = vunpack.c.h.b16 %v2310
    %v2404 = vunpack.c.l.b16 %v2311
    %v2405 = vunpack.c.h.b16 %v2311
    %v2406 = vunpack.c.l.b16 %v2312
    %v2407 = vunpack.c.h.b16 %v2312
    %v2408 = vunpack.c.l.b16 %v2313
    %v2409 = vunpack.c.h.b16 %v2313
    %v2410 = vpack.c.b16 %v2350, %v2346
    %v2411 = vpack.c.b16 %v2351, %v2347
    %v2412 = vpack.c.b16 %v2352, %v2348
    %v2413 = vpack.c.b16 %v2353, %v2349
    %v2414 = vpack.c.b16 %v2358, %v2354
    %v2415 = vpack.c.b16 %v2359, %v2355
    %v2416 = vpack.c.b16 %v2360, %v2356
    %v2417 = vpack.c.b16 %v2361, %v2357
    %v2418 = vpack.c.b16 %v2366, %v2362
    %v2419 = vpack.c.b16 %v2367, %v2363
    %v2420 = vpack.c.b16 %v2368, %v2364
    %v2421 = vpack.c.b16 %v2369, %v2365
    %v2422 = vpack.c.b16 %v2374, %v2370
    %v2423 = vpack.c.b16 %v2375, %v2371
    %v2424 = vpack.c.b16 %v2376, %v2372
    %v2425 = vpack.c.b16 %v2377, %v2373
    %v2426 = vpack.c.b16 %v2382, %v2378
    %v2427 = vpack.c.b16 %v2383, %v2379
    %v2428 = vpack.c.b16 %v2384, %v2380
    %v2429 = vpack.c.b16 %v2385, %v2381
    %v2430 = vpack.c.b16 %v2390, %v2386
    %v2431 = vpack.c.b16 %v2391, %v2387
    %v2432 = vpack.c.b16 %v2392, %v2388
    %v2433 = vpack.c.b16 %v2393, %v2389
    %v2434 = vpack.c.b16 %v2398, %v2394
    %v2435 = vpack.c.b16 %v2399, %v2395
    %v2436 = vpack.c.b16 %v2400, %v2396
    %v2437 = vpack.c.b16 %v2401, %v2397
    %v2438 = vpack.c.b16 %v2406, %v2402
    %v2439 = vpack.c.b16 %v2407, %v2403
    %v2440 = vpack.c.b16 %v2408, %v2404
    %v2441 = vpack.c.b16 %v2409, %v2405
    %2474 = vmatprep.subr.bf16.mxu0 %v2411
    %2475 = vmatpush1.bf16.msra.mxu0 %v2410
    %2476 = vmatprep.subr.bf16.mxu0 %v2415
    %2477 = vmatpush1.bf16.msra.mxu0 %v2414
    %2478 = vmatprep.subr.bf16.mxu0 %v2419
    %2479 = vmatpush1.bf16.msra.mxu0 %v2418
    %2480 = vmatprep.subr.bf16.mxu0 %v2423
    %2481 = vmatpush1.bf16.msra.mxu0 %v2422
    %2482 = vmatprep.subr.bf16.mxu0 %v2427
    %2483 = vmatpush1.bf16.msra.mxu0 %v2426
    %2484 = vmatprep.subr.bf16.mxu0 %v2431
    %2485 = vmatpush1.bf16.msra.mxu0 %v2430
    %2486 = vmatprep.subr.bf16.mxu0 %v2435
    %2487 = vmatpush1.bf16.msra.mxu0 %v2434
    %2488 = vmatprep.subr.bf16.mxu0 %v2439
    %2489 = vmatpush1.bf16.msra.mxu0 %v2438
    %2490 = vmatprep.subr.bf16.mxu0 0
    %2491 = vmatpush1.bf16.msra.mxu0 0
    %2492 = vmatprep.subr.bf16.mxu0 0
    %2493 = vmatpush1.bf16.msra.mxu0 0
    %2494 = vmatprep.subr.bf16.mxu0 0
    %2495 = vmatpush1.bf16.msra.mxu0 0
    %2496 = vmatprep.subr.bf16.mxu0 0
    %2497 = vmatpush1.bf16.msra.mxu0 0
    %2498 = vmatprep.subr.bf16.mxu0 0
    %2499 = vmatpush1.bf16.msra.mxu0 0
    %2500 = vmatprep.subr.bf16.mxu0 0
    %2501 = vmatpush1.bf16.msra.mxu0 0
    %2502 = vmatprep.subr.bf16.mxu0 0
    %2503 = vmatpush1.bf16.msra.mxu0 0
    %2504 = vmatprep.subr.bf16.mxu0 0
    %2505 = vmatpush1.bf16.msra.mxu0 0
    %2506 = vmatprep.mubr.bf16.mxu0 0
    %2507 = vmatmul.mubr.bf16.gmra.mrb[0].mxu0 %v2281
    %v2508 = vpop.f32.mrb[0].mxu0
    %v2509 = vadd.f32 0.0, %v2508
    %v2510 = vpop.f32.mrb[0].mxu0
    %v2511 = vadd.f32 0.0, %v2510
    %v2512 = vpop.f32.mrb[0].mxu0
    %v2513 = vadd.f32 0.0, %v2512
    %v2514 = vpop.f32.mrb[0].mxu0
    %v2515 = vadd.f32 0.0, %v2514
    %2516 = vdwg.mxu0
    %2517 = vmatprep.subr.bf16.mxu0 %v2413
    %2518 = vmatpush1.bf16.msra.mxu0 %v2412
    %2519 = vmatprep.subr.bf16.mxu0 %v2417
    %2520 = vmatpush1.bf16.msra.mxu0 %v2416
    %2521 = vmatprep.subr.bf16.mxu0 %v2421
    %2522 = vmatpush1.bf16.msra.mxu0 %v2420
    %2523 = vmatprep.subr.bf16.mxu0 %v2425
    %2524 = vmatpush1.bf16.msra.mxu0 %v2424
    %2525 = vmatprep.subr.bf16.mxu0 %v2429
    %2526 = vmatpush1.bf16.msra.mxu0 %v2428
    %2527 = vmatprep.subr.bf16.mxu0 %v2433
    %2528 = vmatpush1.bf16.msra.mxu0 %v2432
    %2529 = vmatprep.subr.bf16.mxu0 %v2437
    %2530 = vmatpush1.bf16.msra.mxu0 %v2436
    %2531 = vmatprep.subr.bf16.mxu0 %v2441
    %2532 = vmatpush1.bf16.msra.mxu0 %v2440
    %2533 = vmatprep.subr.bf16.mxu0 0
    %2534 = vmatpush1.bf16.msra.mxu0 0
    %2535 = vmatprep.subr.bf16.mxu0 0
    %2536 = vmatpush1.bf16.msra.mxu0 0
    %2537 = vmatprep.subr.bf16.mxu0 0
    %2538 = vmatpush1.bf16.msra.mxu0 0
    %2539 = vmatprep.subr.bf16.mxu0 0
    %2540 = vmatpush1.bf16.msra.mxu0 0
    %2541 = vmatprep.subr.bf16.mxu0 0
    %2542 = vmatpush1.bf16.msra.mxu0 0
    %2543 = vmatprep.subr.bf16.mxu0 0
    %2544 = vmatpush1.bf16.msra.mxu0 0
    %2545 = vmatprep.subr.bf16.mxu0 0
    %2546 = vmatpush1.bf16.msra.mxu0 0
    %2547 = vmatprep.subr.bf16.mxu0 0
    %2548 = vmatpush1.bf16.msra.mxu0 0
    %2549 = vmatprep.mubr.bf16.mxu0 0
    %2550 = vmatmul.mubr.bf16.gmra.mrb[0].mxu0 %v2281
    %v2551 = vpop.f32.mrb[0].mxu0
    %v2552 = vadd.f32 0.0, %v2551
    %v2553 = vpop.f32.mrb[0].mxu0
    %v2554 = vadd.f32 0.0, %v2553
    %v2555 = vpop.f32.mrb[0].mxu0
    %v2556 = vadd.f32 0.0, %v2555
    %v2557 = vpop.f32.mrb[0].mxu0
    %v2558 = vadd.f32 0.0, %v2557
    %2559 = vdwg.mxu0
    %v2560 = vadd.f32 %v2273, %v2509
    %v2561 = vadd.f32 %v2274, %v2511
    %v2562 = vadd.f32 %v2275, %v2552
    %v2563 = vadd.f32 %v2276, %v2554
    %v2564 = vadd.f32 %v2277, %v2513
    %v2565 = vadd.f32 %v2278, %v2515
    %v2566 = vadd.f32 %v2279, %v2556
    %v2567 = vadd.f32 %v2280, %v2558
    %v2568 = vxor.u32 %v2560, 2147483648
    %v2569 = vxor.u32 %v2564, 2147483648
    %v2570 = vmul.f32 %v2568, 1.442695
    %v2571 = vpow.pop %v2570
    %v2572 = vmul.f32 %v2569, 1.442695
    %v2573 = vpow.pop %v2572
    %v2574 = vadd.f32 %v2571, 1.0
    %v2575 = vadd.f32 %v2573, 1.0
    %v2576 = vrcp.pop %v2574
    %v2577 = vmul.f32 1.0, %v2576
    %v2578 = vrcp.pop %v2575
    %v2579 = vmul.f32 1.0, %v2578
    %v2580 = vxor.u32 %v2561, 2147483648
    %v2581 = vxor.u32 %v2565, 2147483648
    %v2582 = vmul.f32 %v2580, 1.442695
    %v2583 = vpow.pop %v2582
    %v2584 = vmul.f32 %v2581, 1.442695
    %v2585 = vpow.pop %v2584
    %v2586 = vadd.f32 %v2583, 1.0
    %v2587 = vadd.f32 %v2585, 1.0
    %v2588 = vrcp.pop %v2586
    %v2589 = vmul.f32 1.0, %v2588
    %v2590 = vrcp.pop %v2587
    %v2591 = vmul.f32 1.0, %v2590
    %v2592 = vtanh.pop %v2562
    %v2593 = vtanh.pop %v2566
    %v2594 = vxor.u32 %v2563, 2147483648
    %v2595 = vxor.u32 %v2567, 2147483648
    %v2596 = vmul.f32 %v2594, 1.442695
    %v2597 = vpow.pop %v2596
    %v2598 = vmul.f32 %v2595, 1.442695
    %v2599 = vpow.pop %v2598
    %v2600 = vadd.f32 %v2597, 1.0
    %v2601 = vadd.f32 %v2599, 1.0
    %v2602 = vrcp.pop %v2600
    %v2603 = vmul.f32 1.0, %v2602
    %v2604 = vrcp.pop %v2601
    %v2605 = vmul.f32 1.0, %v2604
    %v2606 = vmul.f32 %v2589, %v2261
    %v2607 = vmul.f32 %v2591, %v2262
    %v2608 = vmul.f32 %v2577, %v2592
    %v2609 = vmul.f32 %v2579, %v2593
    %v2610 = vadd.f32 %v2606, %v2608
    %v2611 = vadd.f32 %v2607, %v2609
    %v2612 = vtanh.pop %v2610
    %v2613 = vtanh.pop %v2611
    %v2614 = vmul.f32 %v2603, %v2612
    %v2615 = vmul.f32 %v2605, %v2613
    %s2616 = scalar_lea.vmem [#allocation3], 64
    %2617 = vst [vmem:[%s2616] sm:$0xff] %v2614
    %2618 = vst [vmem:[%s2616 + $0x8] sm:$0xff] %v2615
    %s2619 = smul.u32 10, 4
    %s2620 = smul.addr %s2619, 8
    %s2621 = scalar_lea.vmem [#allocation2], %s2620
    %v2622 = vld [vmem:[%s2621] sm:$0xff]
    %v2623 = vld [vmem:[%s2621 + $0x8] sm:$0xff]
    %v2624 = vld [vmem:[%s2621 + $0x10] sm:$0xff]
    %v2625 = vld [vmem:[%s2621 + $0x18] sm:$0xff]
    %v2626 = vld [vmem:[%s2621 + $0x20] sm:$0xff]
    %v2627 = vld [vmem:[%s2621 + $0x28] sm:$0xff]
    %v2628 = vld [vmem:[%s2621 + $0x30] sm:$0xff]
    %v2629 = vld [vmem:[%s2621 + $0x38] sm:$0xff]
    %v2630 = vpack.c.bf16 %v2615, %v2614
    %v2631 = vld [vmem:[#allocation9] sm:$0xff]
    %v2632 = vld [vmem:[#allocation9 + $0x8] sm:$0xff]
    %v2633 = vld [vmem:[#allocation9 + $0x10] sm:$0xff]
    %v2634 = vld [vmem:[#allocation9 + $0x18] sm:$0xff]
    %v2635 = vld [vmem:[#allocation9 + $0x20] sm:$0xff]
    %v2636 = vld [vmem:[#allocation9 + $0x28] sm:$0xff]
    %v2637 = vld [vmem:[#allocation9 + $0x30] sm:$0xff]
    %v2638 = vld [vmem:[#allocation9 + $0x38] sm:$0xff]
    %v2639 = vld [vmem:[#allocation9 + $0x40] sm:$0xff]
    %v2640 = vld [vmem:[#allocation9 + $0x48] sm:$0xff]
    %v2641 = vld [vmem:[#allocation9 + $0x50] sm:$0xff]
    %v2642 = vld [vmem:[#allocation9 + $0x58] sm:$0xff]
    %v2643 = vld [vmem:[#allocation9 + $0x60] sm:$0xff]
    %v2644 = vld [vmem:[#allocation9 + $0x68] sm:$0xff]
    %v2645 = vld [vmem:[#allocation9 + $0x70] sm:$0xff]
    %v2646 = vld [vmem:[#allocation9 + $0x78] sm:$0xff]
    %v2647 = vld [vmem:[#allocation9 + $0x80] sm:$0xff]
    %v2648 = vld [vmem:[#allocation9 + $0x88] sm:$0xff]
    %v2649 = vld [vmem:[#allocation9 + $0x90] sm:$0xff]
    %v2650 = vld [vmem:[#allocation9 + $0x98] sm:$0xff]
    %v2651 = vld [vmem:[#allocation9 + $0xa0] sm:$0xff]
    %v2652 = vld [vmem:[#allocation9 + $0xa8] sm:$0xff]
    %v2653 = vld [vmem:[#allocation9 + $0xb0] sm:$0xff]
    %v2654 = vld [vmem:[#allocation9 + $0xb8] sm:$0xff]
    %v2655 = vld [vmem:[#allocation9 + $0xc0] sm:$0xff]
    %v2656 = vld [vmem:[#allocation9 + $0xc8] sm:$0xff]
    %v2657 = vld [vmem:[#allocation9 + $0xd0] sm:$0xff]
    %v2658 = vld [vmem:[#allocation9 + $0xd8] sm:$0xff]
    %v2659 = vld [vmem:[#allocation9 + $0xe0] sm:$0xff]
    %v2660 = vld [vmem:[#allocation9 + $0xe8] sm:$0xff]
    %v2661 = vld [vmem:[#allocation9 + $0xf0] sm:$0xff]
    %v2662 = vld [vmem:[#allocation9 + $0xf8] sm:$0xff]
    %v2695 = vunpack.c.l.b16 %v2631
    %v2696 = vunpack.c.h.b16 %v2631
    %v2697 = vunpack.c.l.b16 %v2632
    %v2698 = vunpack.c.h.b16 %v2632
    %v2699 = vunpack.c.l.b16 %v2633
    %v2700 = vunpack.c.h.b16 %v2633
    %v2701 = vunpack.c.l.b16 %v2634
    %v2702 = vunpack.c.h.b16 %v2634
    %v2703 = vunpack.c.l.b16 %v2635
    %v2704 = vunpack.c.h.b16 %v2635
    %v2705 = vunpack.c.l.b16 %v2636
    %v2706 = vunpack.c.h.b16 %v2636
    %v2707 = vunpack.c.l.b16 %v2637
    %v2708 = vunpack.c.h.b16 %v2637
    %v2709 = vunpack.c.l.b16 %v2638
    %v2710 = vunpack.c.h.b16 %v2638
    %v2711 = vunpack.c.l.b16 %v2639
    %v2712 = vunpack.c.h.b16 %v2639
    %v2713 = vunpack.c.l.b16 %v2640
    %v2714 = vunpack.c.h.b16 %v2640
    %v2715 = vunpack.c.l.b16 %v2641
    %v2716 = vunpack.c.h.b16 %v2641
    %v2717 = vunpack.c.l.b16 %v2642
    %v2718 = vunpack.c.h.b16 %v2642
    %v2719 = vunpack.c.l.b16 %v2643
    %v2720 = vunpack.c.h.b16 %v2643
    %v2721 = vunpack.c.l.b16 %v2644
    %v2722 = vunpack.c.h.b16 %v2644
    %v2723 = vunpack.c.l.b16 %v2645
    %v2724 = vunpack.c.h.b16 %v2645
    %v2725 = vunpack.c.l.b16 %v2646
    %v2726 = vunpack.c.h.b16 %v2646
    %v2727 = vunpack.c.l.b16 %v2647
    %v2728 = vunpack.c.h.b16 %v2647
    %v2729 = vunpack.c.l.b16 %v2648
    %v2730 = vunpack.c.h.b16 %v2648
    %v2731 = vunpack.c.l.b16 %v2649
    %v2732 = vunpack.c.h.b16 %v2649
    %v2733 = vunpack.c.l.b16 %v2650
    %v2734 = vunpack.c.h.b16 %v2650
    %v2735 = vunpack.c.l.b16 %v2651
    %v2736 = vunpack.c.h.b16 %v2651
    %v2737 = vunpack.c.l.b16 %v2652
    %v2738 = vunpack.c.h.b16 %v2652
    %v2739 = vunpack.c.l.b16 %v2653
    %v2740 = vunpack.c.h.b16 %v2653
    %v2741 = vunpack.c.l.b16 %v2654
    %v2742 = vunpack.c.h.b16 %v2654
    %v2743 = vunpack.c.l.b16 %v2655
    %v2744 = vunpack.c.h.b16 %v2655
    %v2745 = vunpack.c.l.b16 %v2656
    %v2746 = vunpack.c.h.b16 %v2656
    %v2747 = vunpack.c.l.b16 %v2657
    %v2748 = vunpack.c.h.b16 %v2657
    %v2749 = vunpack.c.l.b16 %v2658
    %v2750 = vunpack.c.h.b16 %v2658
    %v2751 = vunpack.c.l.b16 %v2659
    %v2752 = vunpack.c.h.b16 %v2659
    %v2753 = vunpack.c.l.b16 %v2660
    %v2754 = vunpack.c.h.b16 %v2660
    %v2755 = vunpack.c.l.b16 %v2661
    %v2756 = vunpack.c.h.b16 %v2661
    %v2757 = vunpack.c.l.b16 %v2662
    %v2758 = vunpack.c.h.b16 %v2662
    %v2759 = vpack.c.b16 %v2699, %v2695
    %v2760 = vpack.c.b16 %v2700, %v2696
    %v2761 = vpack.c.b16 %v2701, %v2697
    %v2762 = vpack.c.b16 %v2702, %v2698
    %v2763 = vpack.c.b16 %v2707, %v2703
    %v2764 = vpack.c.b16 %v2708, %v2704
    %v2765 = vpack.c.b16 %v2709, %v2705
    %v2766 = vpack.c.b16 %v2710, %v2706
    %v2767 = vpack.c.b16 %v2715, %v2711
    %v2768 = vpack.c.b16 %v2716, %v2712
    %v2769 = vpack.c.b16 %v2717, %v2713
    %v2770 = vpack.c.b16 %v2718, %v2714
    %v2771 = vpack.c.b16 %v2723, %v2719
    %v2772 = vpack.c.b16 %v2724, %v2720
    %v2773 = vpack.c.b16 %v2725, %v2721
    %v2774 = vpack.c.b16 %v2726, %v2722
    %v2775 = vpack.c.b16 %v2731, %v2727
    %v2776 = vpack.c.b16 %v2732, %v2728
    %v2777 = vpack.c.b16 %v2733, %v2729
    %v2778 = vpack.c.b16 %v2734, %v2730
    %v2779 = vpack.c.b16 %v2739, %v2735
    %v2780 = vpack.c.b16 %v2740, %v2736
    %v2781 = vpack.c.b16 %v2741, %v2737
    %v2782 = vpack.c.b16 %v2742, %v2738
    %v2783 = vpack.c.b16 %v2747, %v2743
    %v2784 = vpack.c.b16 %v2748, %v2744
    %v2785 = vpack.c.b16 %v2749, %v2745
    %v2786 = vpack.c.b16 %v2750, %v2746
    %v2787 = vpack.c.b16 %v2755, %v2751
    %v2788 = vpack.c.b16 %v2756, %v2752
    %v2789 = vpack.c.b16 %v2757, %v2753
    %v2790 = vpack.c.b16 %v2758, %v2754
    %2823 = vmatprep.subr.bf16.mxu0 %v2760
    %2824 = vmatpush1.bf16.msra.mxu0 %v2759
    %2825 = vmatprep.subr.bf16.mxu0 %v2764
    %2826 = vmatpush1.bf16.msra.mxu0 %v2763
    %2827 = vmatprep.subr.bf16.mxu0 %v2768
    %2828 = vmatpush1.bf16.msra.mxu0 %v2767
    %2829 = vmatprep.subr.bf16.mxu0 %v2772
    %2830 = vmatpush1.bf16.msra.mxu0 %v2771
    %2831 = vmatprep.subr.bf16.mxu0 %v2776
    %2832 = vmatpush1.bf16.msra.mxu0 %v2775
    %2833 = vmatprep.subr.bf16.mxu0 %v2780
    %2834 = vmatpush1.bf16.msra.mxu0 %v2779
    %2835 = vmatprep.subr.bf16.mxu0 %v2784
    %2836 = vmatpush1.bf16.msra.mxu0 %v2783
    %2837 = vmatprep.subr.bf16.mxu0 %v2788
    %2838 = vmatpush1.bf16.msra.mxu0 %v2787
    %2839 = vmatprep.subr.bf16.mxu0 0
    %2840 = vmatpush1.bf16.msra.mxu0 0
    %2841 = vmatprep.subr.bf16.mxu0 0
    %2842 = vmatpush1.bf16.msra.mxu0 0
    %2843 = vmatprep.subr.bf16.mxu0 0
    %2844 = vmatpush1.bf16.msra.mxu0 0
    %2845 = vmatprep.subr.bf16.mxu0 0
    %2846 = vmatpush1.bf16.msra.mxu0 0
    %2847 = vmatprep.subr.bf16.mxu0 0
    %2848 = vmatpush1.bf16.msra.mxu0 0
    %2849 = vmatprep.subr.bf16.mxu0 0
    %2850 = vmatpush1.bf16.msra.mxu0 0
    %2851 = vmatprep.subr.bf16.mxu0 0
    %2852 = vmatpush1.bf16.msra.mxu0 0
    %2853 = vmatprep.subr.bf16.mxu0 0
    %2854 = vmatpush1.bf16.msra.mxu0 0
    %2855 = vmatprep.mubr.bf16.mxu0 0
    %2856 = vmatmul.mubr.bf16.gmra.mrb[0].mxu0 %v2630
    %v2857 = vpop.f32.mrb[0].mxu0
    %v2858 = vadd.f32 0.0, %v2857
    %v2859 = vpop.f32.mrb[0].mxu0
    %v2860 = vadd.f32 0.0, %v2859
    %v2861 = vpop.f32.mrb[0].mxu0
    %v2862 = vadd.f32 0.0, %v2861
    %v2863 = vpop.f32.mrb[0].mxu0
    %v2864 = vadd.f32 0.0, %v2863
    %2865 = vdwg.mxu0
    %2866 = vmatprep.subr.bf16.mxu0 %v2762
    %2867 = vmatpush1.bf16.msra.mxu0 %v2761
    %2868 = vmatprep.subr.bf16.mxu0 %v2766
    %2869 = vmatpush1.bf16.msra.mxu0 %v2765
    %2870 = vmatprep.subr.bf16.mxu0 %v2770
    %2871 = vmatpush1.bf16.msra.mxu0 %v2769
    %2872 = vmatprep.subr.bf16.mxu0 %v2774
    %2873 = vmatpush1.bf16.msra.mxu0 %v2773
    %2874 = vmatprep.subr.bf16.mxu0 %v2778
    %2875 = vmatpush1.bf16.msra.mxu0 %v2777
    %2876 = vmatprep.subr.bf16.mxu0 %v2782
    %2877 = vmatpush1.bf16.msra.mxu0 %v2781
    %2878 = vmatprep.subr.bf16.mxu0 %v2786
    %2879 = vmatpush1.bf16.msra.mxu0 %v2785
    %2880 = vmatprep.subr.bf16.mxu0 %v2790
    %2881 = vmatpush1.bf16.msra.mxu0 %v2789
    %2882 = vmatprep.subr.bf16.mxu0 0
    %2883 = vmatpush1.bf16.msra.mxu0 0
    %2884 = vmatprep.subr.bf16.mxu0 0
    %2885 = vmatpush1.bf16.msra.mxu0 0
    %2886 = vmatprep.subr.bf16.mxu0 0
    %2887 = vmatpush1.bf16.msra.mxu0 0
    %2888 = vmatprep.subr.bf16.mxu0 0
    %2889 = vmatpush1.bf16.msra.mxu0 0
    %2890 = vmatprep.subr.bf16.mxu0 0
    %2891 = vmatpush1.bf16.msra.mxu0 0
    %2892 = vmatprep.subr.bf16.mxu0 0
    %2893 = vmatpush1.bf16.msra.mxu0 0
    %2894 = vmatprep.subr.bf16.mxu0 0
    %2895 = vmatpush1.bf16.msra.mxu0 0
    %2896 = vmatprep.subr.bf16.mxu0 0
    %2897 = vmatpush1.bf16.msra.mxu0 0
    %2898 = vmatprep.mubr.bf16.mxu0 0
    %2899 = vmatmul.mubr.bf16.gmra.mrb[0].mxu0 %v2630
    %v2900 = vpop.f32.mrb[0].mxu0
    %v2901 = vadd.f32 0.0, %v2900
    %v2902 = vpop.f32.mrb[0].mxu0
    %v2903 = vadd.f32 0.0, %v2902
    %v2904 = vpop.f32.mrb[0].mxu0
    %v2905 = vadd.f32 0.0, %v2904
    %v2906 = vpop.f32.mrb[0].mxu0
    %v2907 = vadd.f32 0.0, %v2906
    %2908 = vdwg.mxu0
    %v2909 = vadd.f32 %v2622, %v2858
    %v2910 = vadd.f32 %v2623, %v2860
    %v2911 = vadd.f32 %v2624, %v2901
    %v2912 = vadd.f32 %v2625, %v2903
    %v2913 = vadd.f32 %v2626, %v2862
    %v2914 = vadd.f32 %v2627, %v2864
    %v2915 = vadd.f32 %v2628, %v2905
    %v2916 = vadd.f32 %v2629, %v2907
    %v2917 = vxor.u32 %v2909, 2147483648
    %v2918 = vxor.u32 %v2913, 2147483648
    %v2919 = vmul.f32 %v2917, 1.442695
    %v2920 = vpow.pop %v2919
    %v2921 = vmul.f32 %v2918, 1.442695
    %v2922 = vpow.pop %v2921
    %v2923 = vadd.f32 %v2920, 1.0
    %v2924 = vadd.f32 %v2922, 1.0
    %v2925 = vrcp.pop %v2923
    %v2926 = vmul.f32 1.0, %v2925
    %v2927 = vrcp.pop %v2924
    %v2928 = vmul.f32 1.0, %v2927
    %v2929 = vxor.u32 %v2910, 2147483648
    %v2930 = vxor.u32 %v2914, 2147483648
    %v2931 = vmul.f32 %v2929, 1.442695
    %v2932 = vpow.pop %v2931
    %v2933 = vmul.f32 %v2930, 1.442695
    %v2934 = vpow.pop %v2933
    %v2935 = vadd.f32 %v2932, 1.0
    %v2936 = vadd.f32 %v2934, 1.0
    %v2937 = vrcp.pop %v2935
    %v2938 = vmul.f32 1.0, %v2937
    %v2939 = vrcp.pop %v2936
    %v2940 = vmul.f32 1.0, %v2939
    %v2941 = vtanh.pop %v2911
    %v2942 = vtanh.pop %v2915
    %v2943 = vxor.u32 %v2912, 2147483648
    %v2944 = vxor.u32 %v2916, 2147483648
    %v2945 = vmul.f32 %v2943, 1.442695
    %v2946 = vpow.pop %v2945
    %v2947 = vmul.f32 %v2944, 1.442695
    %v2948 = vpow.pop %v2947
    %v2949 = vadd.f32 %v2946, 1.0
    %v2950 = vadd.f32 %v2948, 1.0
    %v2951 = vrcp.pop %v2949
    %v2952 = vmul.f32 1.0, %v2951
    %v2953 = vrcp.pop %v2950
    %v2954 = vmul.f32 1.0, %v2953
    %v2955 = vmul.f32 %v2938, %v2610
    %v2956 = vmul.f32 %v2940, %v2611
    %v2957 = vmul.f32 %v2926, %v2941
    %v2958 = vmul.f32 %v2928, %v2942
    %v2959 = vadd.f32 %v2955, %v2957
    %v2960 = vadd.f32 %v2956, %v2958
    %v2961 = vtanh.pop %v2959
    %v2962 = vtanh.pop %v2960
    %v2963 = vmul.f32 %v2952, %v2961
    %v2964 = vmul.f32 %v2954, %v2962
    %s2965 = scalar_lea.vmem [#allocation3], 80
    %2966 = vst [vmem:[%s2965] sm:$0xff] %v2963
    %2967 = vst [vmem:[%s2965 + $0x8] sm:$0xff] %v2964
    %s2968 = smul.u32 12, 4
    %s2969 = smul.addr %s2968, 8
    %s2970 = scalar_lea.vmem [#allocation2], %s2969
    %v2971 = vld [vmem:[%s2970] sm:$0xff]
    %v2972 = vld [vmem:[%s2970 + $0x8] sm:$0xff]
    %v2973 = vld [vmem:[%s2970 + $0x10] sm:$0xff]
    %v2974 = vld [vmem:[%s2970 + $0x18] sm:$0xff]
    %v2975 = vld [vmem:[%s2970 + $0x20] sm:$0xff]
    %v2976 = vld [vmem:[%s2970 + $0x28] sm:$0xff]
    %v2977 = vld [vmem:[%s2970 + $0x30] sm:$0xff]
    %v2978 = vld [vmem:[%s2970 + $0x38] sm:$0xff]
    %v2979 = vpack.c.bf16 %v2964, %v2963
    %v2980 = vld [vmem:[#allocation9] sm:$0xff]
    %v2981 = vld [vmem:[#allocation9 + $0x8] sm:$0xff]
    %v2982 = vld [vmem:[#allocation9 + $0x10] sm:$0xff]
    %v2983 = vld [vmem:[#allocation9 + $0x18] sm:$0xff]
    %v2984 = vld [vmem:[#allocation9 + $0x20] sm:$0xff]
    %v2985 = vld [vmem:[#allocation9 + $0x28] sm:$0xff]
    %v2986 = vld [vmem:[#allocation9 + $0x30] sm:$0xff]
    %v2987 = vld [vmem:[#allocation9 + $0x38] sm:$0xff]
    %v2988 = vld [vmem:[#allocation9 + $0x40] sm:$0xff]
    %v2989 = vld [vmem:[#allocation9 + $0x48] sm:$0xff]
    %v2990 = vld [vmem:[#allocation9 + $0x50] sm:$0xff]
    %v2991 = vld [vmem:[#allocation9 + $0x58] sm:$0xff]
    %v2992 = vld [vmem:[#allocation9 + $0x60] sm:$0xff]
    %v2993 = vld [vmem:[#allocation9 + $0x68] sm:$0xff]
    %v2994 = vld [vmem:[#allocation9 + $0x70] sm:$0xff]
    %v2995 = vld [vmem:[#allocation9 + $0x78] sm:$0xff]
    %v2996 = vld [vmem:[#allocation9 + $0x80] sm:$0xff]
    %v2997 = vld [vmem:[#allocation9 + $0x88] sm:$0xff]
    %v2998 = vld [vmem:[#allocation9 + $0x90] sm:$0xff]
    %v2999 = vld [vmem:[#allocation9 + $0x98] sm:$0xff]
    %v3000 = vld [vmem:[#allocation9 + $0xa0] sm:$0xff]
    %v3001 = vld [vmem:[#allocation9 + $0xa8] sm:$0xff]
    %v3002 = vld [vmem:[#allocation9 + $0xb0] sm:$0xff]
    %v3003 = vld [vmem:[#allocation9 + $0xb8] sm:$0xff]
    %v3004 = vld [vmem:[#allocation9 + $0xc0] sm:$0xff]
    %v3005 = vld [vmem:[#allocation9 + $0xc8] sm:$0xff]
    %v3006 = vld [vmem:[#allocation9 + $0xd0] sm:$0xff]
    %v3007 = vld [vmem:[#allocation9 + $0xd8] sm:$0xff]
    %v3008 = vld [vmem:[#allocation9 + $0xe0] sm:$0xff]
    %v3009 = vld [vmem:[#allocation9 + $0xe8] sm:$0xff]
    %v3010 = vld [vmem:[#allocation9 + $0xf0] sm:$0xff]
    %v3011 = vld [vmem:[#allocation9 + $0xf8] sm:$0xff]
    %v3044 = vunpack.c.l.b16 %v2980
    %v3045 = vunpack.c.h.b16 %v2980
    %v3046 = vunpack.c.l.b16 %v2981
    %v3047 = vunpack.c.h.b16 %v2981
    %v3048 = vunpack.c.l.b16 %v2982
    %v3049 = vunpack.c.h.b16 %v2982
    %v3050 = vunpack.c.l.b16 %v2983
    %v3051 = vunpack.c.h.b16 %v2983
    %v3052 = vunpack.c.l.b16 %v2984
    %v3053 = vunpack.c.h.b16 %v2984
    %v3054 = vunpack.c.l.b16 %v2985
    %v3055 = vunpack.c.h.b16 %v2985
    %v3056 = vunpack.c.l.b16 %v2986
    %v3057 = vunpack.c.h.b16 %v2986
    %v3058 = vunpack.c.l.b16 %v2987
    %v3059 = vunpack.c.h.b16 %v2987
    %v3060 = vunpack.c.l.b16 %v2988
    %v3061 = vunpack.c.h.b16 %v2988
    %v3062 = vunpack.c.l.b16 %v2989
    %v3063 = vunpack.c.h.b16 %v2989
    %v3064 = vunpack.c.l.b16 %v2990
    %v3065 = vunpack.c.h.b16 %v2990
    %v3066 = vunpack.c.l.b16 %v2991
    %v3067 = vunpack.c.h.b16 %v2991
    %v3068 = vunpack.c.l.b16 %v2992
    %v3069 = vunpack.c.h.b16 %v2992
    %v3070 = vunpack.c.l.b16 %v2993
    %v3071 = vunpack.c.h.b16 %v2993
    %v3072 = vunpack.c.l.b16 %v2994
    %v3073 = vunpack.c.h.b16 %v2994
    %v3074 = vunpack.c.l.b16 %v2995
    %v3075 = vunpack.c.h.b16 %v2995
    %v3076 = vunpack.c.l.b16 %v2996
    %v3077 = vunpack.c.h.b16 %v2996
    %v3078 = vunpack.c.l.b16 %v2997
    %v3079 = vunpack.c.h.b16 %v2997
    %v3080 = vunpack.c.l.b16 %v2998
    %v3081 = vunpack.c.h.b16 %v2998
    %v3082 = vunpack.c.l.b16 %v2999
    %v3083 = vunpack.c.h.b16 %v2999
    %v3084 = vunpack.c.l.b16 %v3000
    %v3085 = vunpack.c.h.b16 %v3000
    %v3086 = vunpack.c.l.b16 %v3001
    %v3087 = vunpack.c.h.b16 %v3001
    %v3088 = vunpack.c.l.b16 %v3002
    %v3089 = vunpack.c.h.b16 %v3002
    %v3090 = vunpack.c.l.b16 %v3003
    %v3091 = vunpack.c.h.b16 %v3003
    %v3092 = vunpack.c.l.b16 %v3004
    %v3093 = vunpack.c.h.b16 %v3004
    %v3094 = vunpack.c.l.b16 %v3005
    %v3095 = vunpack.c.h.b16 %v3005
    %v3096 = vunpack.c.l.b16 %v3006
    %v3097 = vunpack.c.h.b16 %v3006
    %v3098 = vunpack.c.l.b16 %v3007
    %v3099 = vunpack.c.h.b16 %v3007
    %v3100 = vunpack.c.l.b16 %v3008
    %v3101 = vunpack.c.h.b16 %v3008
    %v3102 = vunpack.c.l.b16 %v3009
    %v3103 = vunpack.c.h.b16 %v3009
    %v3104 = vunpack.c.l.b16 %v3010
    %v3105 = vunpack.c.h.b16 %v3010
    %v3106 = vunpack.c.l.b16 %v3011
    %v3107 = vunpack.c.h.b16 %v3011
    %v3108 = vpack.c.b16 %v3048, %v3044
    %v3109 = vpack.c.b16 %v3049, %v3045
    %v3110 = vpack.c.b16 %v3050, %v3046
    %v3111 = vpack.c.b16 %v3051, %v3047
    %v3112 = vpack.c.b16 %v3056, %v3052
    %v3113 = vpack.c.b16 %v3057, %v3053
    %v3114 = vpack.c.b16 %v3058, %v3054
    %v3115 = vpack.c.b16 %v3059, %v3055
    %v3116 = vpack.c.b16 %v3064, %v3060
    %v3117 = vpack.c.b16 %v3065, %v3061
    %v3118 = vpack.c.b16 %v3066, %v3062
    %v3119 = vpack.c.b16 %v3067, %v3063
    %v3120 = vpack.c.b16 %v3072, %v3068
    %v3121 = vpack.c.b16 %v3073, %v3069
    %v3122 = vpack.c.b16 %v3074, %v3070
    %v3123 = vpack.c.b16 %v3075, %v3071
    %v3124 = vpack.c.b16 %v3080, %v3076
    %v3125 = vpack.c.b16 %v3081, %v3077
    %v3126 = vpack.c.b16 %v3082, %v3078
    %v3127 = vpack.c.b16 %v3083, %v3079
    %v3128 = vpack.c.b16 %v3088, %v3084
    %v3129 = vpack.c.b16 %v3089, %v3085
    %v3130 = vpack.c.b16 %v3090, %v3086
    %v3131 = vpack.c.b16 %v3091, %v3087
    %v3132 = vpack.c.b16 %v3096, %v3092
    %v3133 = vpack.c.b16 %v3097, %v3093
    %v3134 = vpack.c.b16 %v3098, %v3094
    %v3135 = vpack.c.b16 %v3099, %v3095
    %v3136 = vpack.c.b16 %v3104, %v3100
    %v3137 = vpack.c.b16 %v3105, %v3101
    %v3138 = vpack.c.b16 %v3106, %v3102
    %v3139 = vpack.c.b16 %v3107, %v3103
    %3172 = vmatprep.subr.bf16.mxu0 %v3109
    %3173 = vmatpush1.bf16.msra.mxu0 %v3108
    %3174 = vmatprep.subr.bf16.mxu0 %v3113
    %3175 = vmatpush1.bf16.msra.mxu0 %v3112
    %3176 = vmatprep.subr.bf16.mxu0 %v3117
    %3177 = vmatpush1.bf16.msra.mxu0 %v3116
    %3178 = vmatprep.subr.bf16.mxu0 %v3121
    %3179 = vmatpush1.bf16.msra.mxu0 %v3120
    %3180 = vmatprep.subr.bf16.mxu0 %v3125
    %3181 = vmatpush1.bf16.msra.mxu0 %v3124
    %3182 = vmatprep.subr.bf16.mxu0 %v3129
    %3183 = vmatpush1.bf16.msra.mxu0 %v3128
    %3184 = vmatprep.subr.bf16.mxu0 %v3133
    %3185 = vmatpush1.bf16.msra.mxu0 %v3132
    %3186 = vmatprep.subr.bf16.mxu0 %v3137
    %3187 = vmatpush1.bf16.msra.mxu0 %v3136
    %3188 = vmatprep.subr.bf16.mxu0 0
    %3189 = vmatpush1.bf16.msra.mxu0 0
    %3190 = vmatprep.subr.bf16.mxu0 0
    %3191 = vmatpush1.bf16.msra.mxu0 0
    %3192 = vmatprep.subr.bf16.mxu0 0
    %3193 = vmatpush1.bf16.msra.mxu0 0
    %3194 = vmatprep.subr.bf16.mxu0 0
    %3195 = vmatpush1.bf16.msra.mxu0 0
    %3196 = vmatprep.subr.bf16.mxu0 0
    %3197 = vmatpush1.bf16.msra.mxu0 0
    %3198 = vmatprep.subr.bf16.mxu0 0
    %3199 = vmatpush1.bf16.msra.mxu0 0
    %3200 = vmatprep.subr.bf16.mxu0 0
    %3201 = vmatpush1.bf16.msra.mxu0 0
    %3202 = vmatprep.subr.bf16.mxu0 0
    %3203 = vmatpush1.bf16.msra.mxu0 0
    %3204 = vmatprep.mubr.bf16.mxu0 0
    %3205 = vmatmul.mubr.bf16.gmra.mrb[0].mxu0 %v2979
    %v3206 = vpop.f32.mrb[0].mxu0
    %v3207 = vadd.f32 0.0, %v3206
    %v3208 = vpop.f32.mrb[0].mxu0
    %v3209 = vadd.f32 0.0, %v3208
    %v3210 = vpop.f32.mrb[0].mxu0
    %v3211 = vadd.f32 0.0, %v3210
    %v3212 = vpop.f32.mrb[0].mxu0
    %v3213 = vadd.f32 0.0, %v3212
    %3214 = vdwg.mxu0
    %3215 = vmatprep.subr.bf16.mxu0 %v3111
    %3216 = vmatpush1.bf16.msra.mxu0 %v3110
    %3217 = vmatprep.subr.bf16.mxu0 %v3115
    %3218 = vmatpush1.bf16.msra.mxu0 %v3114
    %3219 = vmatprep.subr.bf16.mxu0 %v3119
    %3220 = vmatpush1.bf16.msra.mxu0 %v3118
    %3221 = vmatprep.subr.bf16.mxu0 %v3123
    %3222 = vmatpush1.bf16.msra.mxu0 %v3122
    %3223 = vmatprep.subr.bf16.mxu0 %v3127
    %3224 = vmatpush1.bf16.msra.mxu0 %v3126
    %3225 = vmatprep.subr.bf16.mxu0 %v3131
    %3226 = vmatpush1.bf16.msra.mxu0 %v3130
    %3227 = vmatprep.subr.bf16.mxu0 %v3135
    %3228 = vmatpush1.bf16.msra.mxu0 %v3134
    %3229 = vmatprep.subr.bf16.mxu0 %v3139
    %3230 = vmatpush1.bf16.msra.mxu0 %v3138
    %3231 = vmatprep.subr.bf16.mxu0 0
    %3232 = vmatpush1.bf16.msra.mxu0 0
    %3233 = vmatprep.subr.bf16.mxu0 0
    %3234 = vmatpush1.bf16.msra.mxu0 0
    %3235 = vmatprep.subr.bf16.mxu0 0
    %3236 = vmatpush1.bf16.msra.mxu0 0
    %3237 = vmatprep.subr.bf16.mxu0 0
    %3238 = vmatpush1.bf16.msra.mxu0 0
    %3239 = vmatprep.subr.bf16.mxu0 0
    %3240 = vmatpush1.bf16.msra.mxu0 0
    %3241 = vmatprep.subr.bf16.mxu0 0
    %3242 = vmatpush1.bf16.msra.mxu0 0
    %3243 = vmatprep.subr.bf16.mxu0 0
    %3244 = vmatpush1.bf16.msra.mxu0 0
    %3245 = vmatprep.subr.bf16.mxu0 0
    %3246 = vmatpush1.bf16.msra.mxu0 0
    %3247 = vmatprep.mubr.bf16.mxu0 0
    %3248 = vmatmul.mubr.bf16.gmra.mrb[0].mxu0 %v2979
    %v3249 = vpop.f32.mrb[0].mxu0
    %v3250 = vadd.f32 0.0, %v3249
    %v3251 = vpop.f32.mrb[0].mxu0
    %v3252 = vadd.f32 0.0, %v3251
    %v3253 = vpop.f32.mrb[0].mxu0
    %v3254 = vadd.f32 0.0, %v3253
    %v3255 = vpop.f32.mrb[0].mxu0
    %v3256 = vadd.f32 0.0, %v3255
    %3257 = vdwg.mxu0
    %v3258 = vadd.f32 %v2971, %v3207
    %v3259 = vadd.f32 %v2972, %v3209
    %v3260 = vadd.f32 %v2973, %v3250
    %v3261 = vadd.f32 %v2974, %v3252
    %v3262 = vadd.f32 %v2975, %v3211
    %v3263 = vadd.f32 %v2976, %v3213
    %v3264 = vadd.f32 %v2977, %v3254
    %v3265 = vadd.f32 %v2978, %v3256
    %v3266 = vxor.u32 %v3258, 2147483648
    %v3267 = vxor.u32 %v3262, 2147483648
    %v3268 = vmul.f32 %v3266, 1.442695
    %v3269 = vpow.pop %v3268
    %v3270 = vmul.f32 %v3267, 1.442695
    %v3271 = vpow.pop %v3270
    %v3272 = vadd.f32 %v3269, 1.0
    %v3273 = vadd.f32 %v3271, 1.0
    %v3274 = vrcp.pop %v3272
    %v3275 = vmul.f32 1.0, %v3274
    %v3276 = vrcp.pop %v3273
    %v3277 = vmul.f32 1.0, %v3276
    %v3278 = vxor.u32 %v3259, 2147483648
    %v3279 = vxor.u32 %v3263, 2147483648
    %v3280 = vmul.f32 %v3278, 1.442695
    %v3281 = vpow.pop %v3280
    %v3282 = vmul.f32 %v3279, 1.442695
    %v3283 = vpow.pop %v3282
    %v3284 = vadd.f32 %v3281, 1.0
    %v3285 = vadd.f32 %v3283, 1.0
    %v3286 = vrcp.pop %v3284
    %v3287 = vmul.f32 1.0, %v3286
    %v3288 = vrcp.pop %v3285
    %v3289 = vmul.f32 1.0, %v3288
    %v3290 = vtanh.pop %v3260
    %v3291 = vtanh.pop %v3264
    %v3292 = vxor.u32 %v3261, 2147483648
    %v3293 = vxor.u32 %v3265, 2147483648
    %v3294 = vmul.f32 %v3292, 1.442695
    %v3295 = vpow.pop %v3294
    %v3296 = vmul.f32 %v3293, 1.442695
    %v3297 = vpow.pop %v3296
    %v3298 = vadd.f32 %v3295, 1.0
    %v3299 = vadd.f32 %v3297, 1.0
    %v3300 = vrcp.pop %v3298
    %v3301 = vmul.f32 1.0, %v3300
    %v3302 = vrcp.pop %v3299
    %v3303 = vmul.f32 1.0, %v3302
    %v3304 = vmul.f32 %v3287, %v2959
    %v3305 = vmul.f32 %v3289, %v2960
    %v3306 = vmul.f32 %v3275, %v3290
    %v3307 = vmul.f32 %v3277, %v3291
    %v3308 = vadd.f32 %v3304, %v3306
    %v3309 = vadd.f32 %v3305, %v3307
    %v3310 = vtanh.pop %v3308
    %v3311 = vtanh.pop %v3309
    %v3312 = vmul.f32 %v3301, %v3310
    %v3313 = vmul.f32 %v3303, %v3311
    %s3314 = scalar_lea.vmem [#allocation3], 96
    %3315 = vst [vmem:[%s3314] sm:$0xff] %v3312
    %3316 = vst [vmem:[%s3314 + $0x8] sm:$0xff] %v3313
    %s3317 = smul.u32 14, 4
    %s3318 = smul.addr %s3317, 8
    %s3319 = scalar_lea.vmem [#allocation2], %s3318
    %v3320 = vld [vmem:[%s3319] sm:$0xff]
    %v3321 = vld [vmem:[%s3319 + $0x8] sm:$0xff]
    %v3322 = vld [vmem:[%s3319 + $0x10] sm:$0xff]
    %v3323 = vld [vmem:[%s3319 + $0x18] sm:$0xff]
    %v3324 = vld [vmem:[%s3319 + $0x20] sm:$0xff]
    %v3325 = vld [vmem:[%s3319 + $0x28] sm:$0xff]
    %v3326 = vld [vmem:[%s3319 + $0x30] sm:$0xff]
    %v3327 = vld [vmem:[%s3319 + $0x38] sm:$0xff]
    %v3328 = vpack.c.bf16 %v3313, %v3312
    %v3329 = vld [vmem:[#allocation9] sm:$0xff]
    %v3330 = vld [vmem:[#allocation9 + $0x8] sm:$0xff]
    %v3331 = vld [vmem:[#allocation9 + $0x10] sm:$0xff]
    %v3332 = vld [vmem:[#allocation9 + $0x18] sm:$0xff]
    %v3333 = vld [vmem:[#allocation9 + $0x20] sm:$0xff]
    %v3334 = vld [vmem:[#allocation9 + $0x28] sm:$0xff]
    %v3335 = vld [vmem:[#allocation9 + $0x30] sm:$0xff]
    %v3336 = vld [vmem:[#allocation9 + $0x38] sm:$0xff]
    %v3337 = vld [vmem:[#allocation9 + $0x40] sm:$0xff]
    %v3338 = vld [vmem:[#allocation9 + $0x48] sm:$0xff]
    %v3339 = vld [vmem:[#allocation9 + $0x50] sm:$0xff]
    %v3340 = vld [vmem:[#allocation9 + $0x58] sm:$0xff]
    %v3341 = vld [vmem:[#allocation9 + $0x60] sm:$0xff]
    %v3342 = vld [vmem:[#allocation9 + $0x68] sm:$0xff]
    %v3343 = vld [vmem:[#allocation9 + $0x70] sm:$0xff]
    %v3344 = vld [vmem:[#allocation9 + $0x78] sm:$0xff]
    %v3345 = vld [vmem:[#allocation9 + $0x80] sm:$0xff]
    %v3346 = vld [vmem:[#allocation9 + $0x88] sm:$0xff]
    %v3347 = vld [vmem:[#allocation9 + $0x90] sm:$0xff]
    %v3348 = vld [vmem:[#allocation9 + $0x98] sm:$0xff]
    %v3349 = vld [vmem:[#allocation9 + $0xa0] sm:$0xff]
    %v3350 = vld [vmem:[#allocation9 + $0xa8] sm:$0xff]
    %v3351 = vld [vmem:[#allocation9 + $0xb0] sm:$0xff]
    %v3352 = vld [vmem:[#allocation9 + $0xb8] sm:$0xff]
    %v3353 = vld [vmem:[#allocation9 + $0xc0] sm:$0xff]
    %v3354 = vld [vmem:[#allocation9 + $0xc8] sm:$0xff]
    %v3355 = vld [vmem:[#allocation9 + $0xd0] sm:$0xff]
    %v3356 = vld [vmem:[#allocation9 + $0xd8] sm:$0xff]
    %v3357 = vld [vmem:[#allocation9 + $0xe0] sm:$0xff]
    %v3358 = vld [vmem:[#allocation9 + $0xe8] sm:$0xff]
    %v3359 = vld [vmem:[#allocation9 + $0xf0] sm:$0xff]
    %v3360 = vld [vmem:[#allocation9 + $0xf8] sm:$0xff]
    %v3393 = vunpack.c.l.b16 %v3329
    %v3394 = vunpack.c.h.b16 %v3329
    %v3395 = vunpack.c.l.b16 %v3330
    %v3396 = vunpack.c.h.b16 %v3330
    %v3397 = vunpack.c.l.b16 %v3331
    %v3398 = vunpack.c.h.b16 %v3331
    %v3399 = vunpack.c.l.b16 %v3332
    %v3400 = vunpack.c.h.b16 %v3332
    %v3401 = vunpack.c.l.b16 %v3333
    %v3402 = vunpack.c.h.b16 %v3333
    %v3403 = vunpack.c.l.b16 %v3334
    %v3404 = vunpack.c.h.b16 %v3334
    %v3405 = vunpack.c.l.b16 %v3335
    %v3406 = vunpack.c.h.b16 %v3335
    %v3407 = vunpack.c.l.b16 %v3336
    %v3408 = vunpack.c.h.b16 %v3336
    %v3409 = vunpack.c.l.b16 %v3337
    %v3410 = vunpack.c.h.b16 %v3337
    %v3411 = vunpack.c.l.b16 %v3338
    %v3412 = vunpack.c.h.b16 %v3338
    %v3413 = vunpack.c.l.b16 %v3339
    %v3414 = vunpack.c.h.b16 %v3339
    %v3415 = vunpack.c.l.b16 %v3340
    %v3416 = vunpack.c.h.b16 %v3340
    %v3417 = vunpack.c.l.b16 %v3341
    %v3418 = vunpack.c.h.b16 %v3341
    %v3419 = vunpack.c.l.b16 %v3342
    %v3420 = vunpack.c.h.b16 %v3342
    %v3421 = vunpack.c.l.b16 %v3343
    %v3422 = vunpack.c.h.b16 %v3343
    %v3423 = vunpack.c.l.b16 %v3344
    %v3424 = vunpack.c.h.b16 %v3344
    %v3425 = vunpack.c.l.b16 %v3345
    %v3426 = vunpack.c.h.b16 %v3345
    %v3427 = vunpack.c.l.b16 %v3346
    %v3428 = vunpack.c.h.b16 %v3346
    %v3429 = vunpack.c.l.b16 %v3347
    %v3430 = vunpack.c.h.b16 %v3347
    %v3431 = vunpack.c.l.b16 %v3348
    %v3432 = vunpack.c.h.b16 %v3348
    %v3433 = vunpack.c.l.b16 %v3349
    %v3434 = vunpack.c.h.b16 %v3349
    %v3435 = vunpack.c.l.b16 %v3350
    %v3436 = vunpack.c.h.b16 %v3350
    %v3437 = vunpack.c.l.b16 %v3351
    %v3438 = vunpack.c.h.b16 %v3351
    %v3439 = vunpack.c.l.b16 %v3352
    %v3440 = vunpack.c.h.b16 %v3352
    %v3441 = vunpack.c.l.b16 %v3353
    %v3442 = vunpack.c.h.b16 %v3353
    %v3443 = vunpack.c.l.b16 %v3354
    %v3444 = vunpack.c.h.b16 %v3354
    %v3445 = vunpack.c.l.b16 %v3355
    %v3446 = vunpack.c.h.b16 %v3355
    %v3447 = vunpack.c.l.b16 %v3356
    %v3448 = vunpack.c.h.b16 %v3356
    %v3449 = vunpack.c.l.b16 %v3357
    %v3450 = vunpack.c.h.b16 %v3357
    %v3451 = vunpack.c.l.b16 %v3358
    %v3452 = vunpack.c.h.b16 %v3358
    %v3453 = vunpack.c.l.b16 %v3359
    %v3454 = vunpack.c.h.b16 %v3359
    %v3455 = vunpack.c.l.b16 %v3360
    %v3456 = vunpack.c.h.b16 %v3360
    %v3457 = vpack.c.b16 %v3397, %v3393
    %v3458 = vpack.c.b16 %v3398, %v3394
    %v3459 = vpack.c.b16 %v3399, %v3395
    %v3460 = vpack.c.b16 %v3400, %v3396
    %v3461 = vpack.c.b16 %v3405, %v3401
    %v3462 = vpack.c.b16 %v3406, %v3402
    %v3463 = vpack.c.b16 %v3407, %v3403
    %v3464 = vpack.c.b16 %v3408, %v3404
    %v3465 = vpack.c.b16 %v3413, %v3409
    %v3466 = vpack.c.b16 %v3414, %v3410
    %v3467 = vpack.c.b16 %v3415, %v3411
    %v3468 = vpack.c.b16 %v3416, %v3412
    %v3469 = vpack.c.b16 %v3421, %v3417
    %v3470 = vpack.c.b16 %v3422, %v3418
    %v3471 = vpack.c.b16 %v3423, %v3419
    %v3472 = vpack.c.b16 %v3424, %v3420
    %v3473 = vpack.c.b16 %v3429, %v3425
    %v3474 = vpack.c.b16 %v3430, %v3426
    %v3475 = vpack.c.b16 %v3431, %v3427
    %v3476 = vpack.c.b16 %v3432, %v3428
    %v3477 = vpack.c.b16 %v3437, %v3433
    %v3478 = vpack.c.b16 %v3438, %v3434
    %v3479 = vpack.c.b16 %v3439, %v3435
    %v3480 = vpack.c.b16 %v3440, %v3436
    %v3481 = vpack.c.b16 %v3445, %v3441
    %v3482 = vpack.c.b16 %v3446, %v3442
    %v3483 = vpack.c.b16 %v3447, %v3443
    %v3484 = vpack.c.b16 %v3448, %v3444
    %v3485 = vpack.c.b16 %v3453, %v3449
    %v3486 = vpack.c.b16 %v3454, %v3450
    %v3487 = vpack.c.b16 %v3455, %v3451
    %v3488 = vpack.c.b16 %v3456, %v3452
    %3521 = vmatprep.subr.bf16.mxu0 %v3458
    %3522 = vmatpush1.bf16.msra.mxu0 %v3457
    %3523 = vmatprep.subr.bf16.mxu0 %v3462
    %3524 = vmatpush1.bf16.msra.mxu0 %v3461
    %3525 = vmatprep.subr.bf16.mxu0 %v3466
    %3526 = vmatpush1.bf16.msra.mxu0 %v3465
    %3527 = vmatprep.subr.bf16.mxu0 %v3470
    %3528 = vmatpush1.bf16.msra.mxu0 %v3469
    %3529 = vmatprep.subr.bf16.mxu0 %v3474
    %3530 = vmatpush1.bf16.msra.mxu0 %v3473
    %3531 = vmatprep.subr.bf16.mxu0 %v3478
    %3532 = vmatpush1.bf16.msra.mxu0 %v3477
    %3533 = vmatprep.subr.bf16.mxu0 %v3482
    %3534 = vmatpush1.bf16.msra.mxu0 %v3481
    %3535 = vmatprep.subr.bf16.mxu0 %v3486
    %3536 = vmatpush1.bf16.msra.mxu0 %v3485
    %3537 = vmatprep.subr.bf16.mxu0 0
    %3538 = vmatpush1.bf16.msra.mxu0 0
    %3539 = vmatprep.subr.bf16.mxu0 0
    %3540 = vmatpush1.bf16.msra.mxu0 0
    %3541 = vmatprep.subr.bf16.mxu0 0
    %3542 = vmatpush1.bf16.msra.mxu0 0
    %3543 = vmatprep.subr.bf16.mxu0 0
    %3544 = vmatpush1.bf16.msra.mxu0 0
    %3545 = vmatprep.subr.bf16.mxu0 0
    %3546 = vmatpush1.bf16.msra.mxu0 0
    %3547 = vmatprep.subr.bf16.mxu0 0
    %3548 = vmatpush1.bf16.msra.mxu0 0
    %3549 = vmatprep.subr.bf16.mxu0 0
    %3550 = vmatpush1.bf16.msra.mxu0 0
    %3551 = vmatprep.subr.bf16.mxu0 0
    %3552 = vmatpush1.bf16.msra.mxu0 0
    %3553 = vmatprep.mubr.bf16.mxu0 0
    %3554 = vmatmul.mubr.bf16.gmra.mrb[0].mxu0 %v3328
    %v3555 = vpop.f32.mrb[0].mxu0
    %v3556 = vadd.f32 0.0, %v3555
    %v3557 = vpop.f32.mrb[0].mxu0
    %v3558 = vadd.f32 0.0, %v3557
    %v3559 = vpop.f32.mrb[0].mxu0
    %v3560 = vadd.f32 0.0, %v3559
    %v3561 = vpop.f32.mrb[0].mxu0
    %v3562 = vadd.f32 0.0, %v3561
    %3563 = vdwg.mxu0
    %3564 = vmatprep.subr.bf16.mxu0 %v3460
    %3565 = vmatpush1.bf16.msra.mxu0 %v3459
    %3566 = vmatprep.subr.bf16.mxu0 %v3464
    %3567 = vmatpush1.bf16.msra.mxu0 %v3463
    %3568 = vmatprep.subr.bf16.mxu0 %v3468
    %3569 = vmatpush1.bf16.msra.mxu0 %v3467
    %3570 = vmatprep.subr.bf16.mxu0 %v3472
    %3571 = vmatpush1.bf16.msra.mxu0 %v3471
    %3572 = vmatprep.subr.bf16.mxu0 %v3476
    %3573 = vmatpush1.bf16.msra.mxu0 %v3475
    %3574 = vmatprep.subr.bf16.mxu0 %v3480
    %3575 = vmatpush1.bf16.msra.mxu0 %v3479
    %3576 = vmatprep.subr.bf16.mxu0 %v3484
    %3577 = vmatpush1.bf16.msra.mxu0 %v3483
    %3578 = vmatprep.subr.bf16.mxu0 %v3488
    %3579 = vmatpush1.bf16.msra.mxu0 %v3487
    %3580 = vmatprep.subr.bf16.mxu0 0
    %3581 = vmatpush1.bf16.msra.mxu0 0
    %3582 = vmatprep.subr.bf16.mxu0 0
    %3583 = vmatpush1.bf16.msra.mxu0 0
    %3584 = vmatprep.subr.bf16.mxu0 0
    %3585 = vmatpush1.bf16.msra.mxu0 0
    %3586 = vmatprep.subr.bf16.mxu0 0
    %3587 = vmatpush1.bf16.msra.mxu0 0
    %3588 = vmatprep.subr.bf16.mxu0 0
    %3589 = vmatpush1.bf16.msra.mxu0 0
    %3590 = vmatprep.subr.bf16.mxu0 0
    %3591 = vmatpush1.bf16.msra.mxu0 0
    %3592 = vmatprep.subr.bf16.mxu0 0
    %3593 = vmatpush1.bf16.msra.mxu0 0
    %3594 = vmatprep.subr.bf16.mxu0 0
    %3595 = vmatpush1.bf16.msra.mxu0 0
    %3596 = vmatprep.mubr.bf16.mxu0 0
    %3597 = vmatmul.mubr.bf16.gmra.mrb[0].mxu0 %v3328
    %v3598 = vpop.f32.mrb[0].mxu0
    %v3599 = vadd.f32 0.0, %v3598
    %v3600 = vpop.f32.mrb[0].mxu0
    %v3601 = vadd.f32 0.0, %v3600
    %v3602 = vpop.f32.mrb[0].mxu0
    %v3603 = vadd.f32 0.0, %v3602
    %v3604 = vpop.f32.mrb[0].mxu0
    %v3605 = vadd.f32 0.0, %v3604
    %3606 = vdwg.mxu0
    %v3607 = vadd.f32 %v3320, %v3556
    %v3608 = vadd.f32 %v3321, %v3558
    %v3609 = vadd.f32 %v3322, %v3599
    %v3610 = vadd.f32 %v3323, %v3601
    %v3611 = vadd.f32 %v3324, %v3560
    %v3612 = vadd.f32 %v3325, %v3562
    %v3613 = vadd.f32 %v3326, %v3603
    %v3614 = vadd.f32 %v3327, %v3605
    %v3615 = vxor.u32 %v3607, 2147483648
    %v3616 = vxor.u32 %v3611, 2147483648
    %v3617 = vmul.f32 %v3615, 1.442695
    %v3618 = vpow.pop %v3617
    %v3619 = vmul.f32 %v3616, 1.442695
    %v3620 = vpow.pop %v3619
    %v3621 = vadd.f32 %v3618, 1.0
    %v3622 = vadd.f32 %v3620, 1.0
    %v3623 = vrcp.pop %v3621
    %v3624 = vmul.f32 1.0, %v3623
    %v3625 = vrcp.pop %v3622
    %v3626 = vmul.f32 1.0, %v3625
    %v3627 = vxor.u32 %v3608, 2147483648
    %v3628 = vxor.u32 %v3612, 2147483648
    %v3629 = vmul.f32 %v3627, 1.442695
    %v3630 = vpow.pop %v3629
    %v3631 = vmul.f32 %v3628, 1.442695
    %v3632 = vpow.pop %v3631
    %v3633 = vadd.f32 %v3630, 1.0
    %v3634 = vadd.f32 %v3632, 1.0
    %v3635 = vrcp.pop %v3633
    %v3636 = vmul.f32 1.0, %v3635
    %v3637 = vrcp.pop %v3634
    %v3638 = vmul.f32 1.0, %v3637
    %v3639 = vtanh.pop %v3609
    %v3640 = vtanh.pop %v3613
    %v3641 = vxor.u32 %v3610, 2147483648
    %v3642 = vxor.u32 %v3614, 2147483648
    %v3643 = vmul.f32 %v3641, 1.442695
    %v3644 = vpow.pop %v3643
    %v3645 = vmul.f32 %v3642, 1.442695
    %v3646 = vpow.pop %v3645
    %v3647 = vadd.f32 %v3644, 1.0
    %v3648 = vadd.f32 %v3646, 1.0
    %v3649 = vrcp.pop %v3647
    %v3650 = vmul.f32 1.0, %v3649
    %v3651 = vrcp.pop %v3648
    %v3652 = vmul.f32 1.0, %v3651
    %v3653 = vmul.f32 %v3636, %v3308
    %v3654 = vmul.f32 %v3638, %v3309
    %v3655 = vmul.f32 %v3624, %v3639
    %v3656 = vmul.f32 %v3626, %v3640
    %v3657 = vadd.f32 %v3653, %v3655
    %v3658 = vadd.f32 %v3654, %v3656
    %v3659 = vtanh.pop %v3657
    %v3660 = vtanh.pop %v3658
    %v3661 = vmul.f32 %v3650, %v3659
    %v3662 = vmul.f32 %v3652, %v3660
    %s3663 = scalar_lea.vmem [#allocation3], 112
    %3664 = vst [vmem:[%s3663] sm:$0xff] %v3661
    %3665 = vst [vmem:[%s3663 + $0x8] sm:$0xff] %v3662
    %3666 = vst [vmem:[#allocation10] sm:$0xff] %v3661
    %3667 = vst [vmem:[#allocation10 + $0x8] sm:$0xff] %v3662
    %3668 = vst [vmem:[#allocation11] sm:$0xff] %v3657
    %3669 = vst [vmem:[#allocation11 + $0x8] sm:$0xff] %v3658
    %v3670 = vld [vmem:[#allocation3] sm:$0xff]
    %v3671 = vld [vmem:[#allocation3 + $0x8] sm:$0xff]
    %v3672 = vld [vmem:[#allocation3 + $0x10] sm:$0xff]
    %v3673 = vld [vmem:[#allocation3 + $0x18] sm:$0xff]
    %v3674 = vld [vmem:[#allocation3 + $0x20] sm:$0xff]
    %v3675 = vld [vmem:[#allocation3 + $0x28] sm:$0xff]
    %v3676 = vld [vmem:[#allocation3 + $0x30] sm:$0xff]
    %v3677 = vld [vmem:[#allocation3 + $0x38] sm:$0xff]
    %v3678 = vld [vmem:[#allocation3 + $0x40] sm:$0xff]
    %v3679 = vld [vmem:[#allocation3 + $0x48] sm:$0xff]
    %v3680 = vld [vmem:[#allocation3 + $0x50] sm:$0xff]
    %v3681 = vld [vmem:[#allocation3 + $0x58] sm:$0xff]
    %v3682 = vld [vmem:[#allocation3 + $0x60] sm:$0xff]
    %v3683 = vld [vmem:[#allocation3 + $0x68] sm:$0xff]
    %v3684 = vld [vmem:[#allocation3 + $0x70] sm:$0xff]
    %v3685 = vld [vmem:[#allocation3 + $0x78] sm:$0xff]
    %v3686 = vcombine.low %v3670, %v3674
    %v3687 = vcombine.high %v3670, %v3674
    %v3689 = vunpack.c.l.s4 1983009808
    %v3690 = vunpack.c.0.s8 %v3689
    %v3691 = vlaneseq
    %v3692 = vshrl.u32 %v3691, 7
    %v3693 = vsub.s32 %v3690, %v3692
    %v3694 = vrot.slane %v3686, %v3693
    %v3696 = vunpack.c.l.s4 1983009808
    %v3697 = vunpack.c.0.s8 %v3696
    %v3698 = vlaneseq
    %v3699 = vshrl.u32 %v3698, 7
    %v3700 = vsub.s32 %v3697, %v3699
    %v3701 = vrot.slane %v3687, %v3700
    %v3702 = vcombine.low %v3672, %v3676
    %v3703 = vcombine.high %v3672, %v3676
    %v3705 = vunpack.c.l.s4 1983009808
    %v3706 = vunpack.c.0.s8 %v3705
    %v3707 = vlaneseq
    %v3708 = vshrl.u32 %v3707, 7
    %v3709 = vsub.s32 %v3706, %v3708
    %v3710 = vrot.slane %v3702, %v3709
    %v3712 = vunpack.c.l.s4 1983009808
    %v3713 = vunpack.c.0.s8 %v3712
    %v3714 = vlaneseq
    %v3715 = vshrl.u32 %v3714, 7
    %v3716 = vsub.s32 %v3713, %v3715
    %v3717 = vrot.slane %v3703, %v3716
    %v3718 = vcombine.low %v3678, %v3682
    %v3719 = vcombine.high %v3678, %v3682
    %v3721 = vunpack.c.l.s4 1983009808
    %v3722 = vunpack.c.0.s8 %v3721
    %v3723 = vlaneseq
    %v3724 = vshrl.u32 %v3723, 7
    %v3725 = vsub.s32 %v3722, %v3724
    %v3726 = vrot.slane %v3718, %v3725
    %v3728 = vunpack.c.l.s4 1983009808
    %v3729 = vunpack.c.0.s8 %v3728
    %v3730 = vlaneseq
    %v3731 = vshrl.u32 %v3730, 7
    %v3732 = vsub.s32 %v3729, %v3731
    %v3733 = vrot.slane %v3719, %v3732
    %v3734 = vcombine.low %v3680, %v3684
    %v3735 = vcombine.high %v3680, %v3684
    %v3737 = vunpack.c.l.s4 1983009808
    %v3738 = vunpack.c.0.s8 %v3737
    %v3739 = vlaneseq
    %v3740 = vshrl.u32 %v3739, 7
    %v3741 = vsub.s32 %v3738, %v3740
    %v3742 = vrot.slane %v3734, %v3741
    %v3744 = vunpack.c.l.s4 1983009808
    %v3745 = vunpack.c.0.s8 %v3744
    %v3746 = vlaneseq
    %v3747 = vshrl.u32 %v3746, 7
    %v3748 = vsub.s32 %v3745, %v3747
    %v3749 = vrot.slane %v3735, %v3748
    %v3750 = vcombine.low %v3694, %v3710
    %v3751 = vcombine.high %v3694, %v3710
    %v3753 = vunpack.c.l.s4 1934713408
    %v3754 = vunpack.c.0.s8 %v3753
    %v3755 = vlaneseq
    %v3756 = vshrl.u32 %v3755, 7
    %v3757 = vsub.s32 %v3754, %v3756
    %v3758 = vrot.slane %v3750, %v3757
    %v3760 = vunpack.c.l.s4 1934713408
    %v3761 = vunpack.c.0.s8 %v3760
    %v3762 = vlaneseq
    %v3763 = vshrl.u32 %v3762, 7
    %v3764 = vsub.s32 %v3761, %v3763
    %v3765 = vrot.slane %v3751, %v3764
    %v3766 = vcombine.low %v3701, %v3717
    %v3767 = vcombine.high %v3701, %v3717
    %v3769 = vunpack.c.l.s4 1934713408
    %v3770 = vunpack.c.0.s8 %v3769
    %v3771 = vlaneseq
    %v3772 = vshrl.u32 %v3771, 7
    %v3773 = vsub.s32 %v3770, %v3772
    %v3774 = vrot.slane %v3766, %v3773
    %v3776 = vunpack.c.l.s4 1934713408
    %v3777 = vunpack.c.0.s8 %v3776
    %v3778 = vlaneseq
    %v3779 = vshrl.u32 %v3778, 7
    %v3780 = vsub.s32 %v3777, %v3779
    %v3781 = vrot.slane %v3767, %v3780
    %v3782 = vcombine.low %v3726, %v3742
    %v3783 = vcombine.high %v3726, %v3742
    %v3785 = vunpack.c.l.s4 1934713408
    %v3786 = vunpack.c.0.s8 %v3785
    %v3787 = vlaneseq
    %v3788 = vshrl.u32 %v3787, 7
    %v3789 = vsub.s32 %v3786, %v3788
    %v3790 = vrot.slane %v3782, %v3789
    %v3792 = vunpack.c.l.s4 1934713408
    %v3793 = vunpack.c.0.s8 %v3792
    %v3794 = vlaneseq
    %v3795 = vshrl.u32 %v3794, 7
    %v3796 = vsub.s32 %v3793, %v3795
    %v3797 = vrot.slane %v3783, %v3796
    %v3798 = vcombine.low %v3733, %v3749
    %v3799 = vcombine.high %v3733, %v3749
    %v3801 = vunpack.c.l.s4 1934713408
    %v3802 = vunpack.c.0.s8 %v3801
    %v3803 = vlaneseq
    %v3804 = vshrl.u32 %v3803, 7
    %v3805 = vsub.s32 %v3802, %v3804
    %v3806 = vrot.slane %v3798, %v3805
    %v3808 = vunpack.c.l.s4 1934713408
    %v3809 = vunpack.c.0.s8 %v3808
    %v3810 = vlaneseq
    %v3811 = vshrl.u32 %v3810, 7
    %v3812 = vsub.s32 %v3809, %v3811
    %v3813 = vrot.slane %v3799, %v3812
    %v3814 = vcombine.low %v3758, %v3790
    %v3815 = vcombine.high %v3758, %v3790
    %v3816 = vcombine.low %v3765, %v3797
    %v3817 = vcombine.high %v3765, %v3797
    %v3818 = vcombine.low %v3774, %v3806
    %v3819 = vcombine.high %v3774, %v3806
    %v3820 = vcombine.low %v3781, %v3813
    %v3821 = vcombine.high %v3781, %v3813
    %v3822 = vcombine.low %v3671, %v3675
    %v3823 = vcombine.high %v3671, %v3675
    %v3825 = vunpack.c.l.s4 1983009808
    %v3826 = vunpack.c.0.s8 %v3825
    %v3827 = vlaneseq
    %v3828 = vshrl.u32 %v3827, 7
    %v3829 = vsub.s32 %v3826, %v3828
    %v3830 = vrot.slane %v3822, %v3829
    %v3832 = vunpack.c.l.s4 1983009808
    %v3833 = vunpack.c.0.s8 %v3832
    %v3834 = vlaneseq
    %v3835 = vshrl.u32 %v3834, 7
    %v3836 = vsub.s32 %v3833, %v3835
    %v3837 = vrot.slane %v3823, %v3836
    %v3838 = vcombine.low %v3673, %v3677
    %v3839 = vcombine.high %v3673, %v3677
    %v3841 = vunpack.c.l.s4 1983009808
    %v3842 = vunpack.c.0.s8 %v3841
    %v3843 = vlaneseq
    %v3844 = vshrl.u32 %v3843, 7
    %v3845 = vsub.s32 %v3842, %v3844
    %v3846 = vrot.slane %v3838, %v3845
    %v3848 = vunpack.c.l.s4 1983009808
    %v3849 = vunpack.c.0.s8 %v3848
    %v3850 = vlaneseq
    %v3851 = vshrl.u32 %v3850, 7
    %v3852 = vsub.s32 %v3849, %v3851
    %v3853 = vrot.slane %v3839, %v3852
    %v3854 = vcombine.low %v3679, %v3683
    %v3855 = vcombine.high %v3679, %v3683
    %v3857 = vunpack.c.l.s4 1983009808
    %v3858 = vunpack.c.0.s8 %v3857
    %v3859 = vlaneseq
    %v3860 = vshrl.u32 %v3859, 7
    %v3861 = vsub.s32 %v3858, %v3860
    %v3862 = vrot.slane %v3854, %v3861
    %v3864 = vunpack.c.l.s4 1983009808
    %v3865 = vunpack.c.0.s8 %v3864
    %v3866 = vlaneseq
    %v3867 = vshrl.u32 %v3866, 7
    %v3868 = vsub.s32 %v3865, %v3867
    %v3869 = vrot.slane %v3855, %v3868
    %v3870 = vcombine.low %v3681, %v3685
    %v3871 = vcombine.high %v3681, %v3685
    %v3873 = vunpack.c.l.s4 1983009808
    %v3874 = vunpack.c.0.s8 %v3873
    %v3875 = vlaneseq
    %v3876 = vshrl.u32 %v3875, 7
    %v3877 = vsub.s32 %v3874, %v3876
    %v3878 = vrot.slane %v3870, %v3877
    %v3880 = vunpack.c.l.s4 1983009808
    %v3881 = vunpack.c.0.s8 %v3880
    %v3882 = vlaneseq
    %v3883 = vshrl.u32 %v3882, 7
    %v3884 = vsub.s32 %v3881, %v3883
    %v3885 = vrot.slane %v3871, %v3884
    %v3886 = vcombine.low %v3830, %v3846
    %v3887 = vcombine.high %v3830, %v3846
    %v3889 = vunpack.c.l.s4 1934713408
    %v3890 = vunpack.c.0.s8 %v3889
    %v3891 = vlaneseq
    %v3892 = vshrl.u32 %v3891, 7
    %v3893 = vsub.s32 %v3890, %v3892
    %v3894 = vrot.slane %v3886, %v3893
    %v3896 = vunpack.c.l.s4 1934713408
    %v3897 = vunpack.c.0.s8 %v3896
    %v3898 = vlaneseq
    %v3899 = vshrl.u32 %v3898, 7
    %v3900 = vsub.s32 %v3897, %v3899
    %v3901 = vrot.slane %v3887, %v3900
    %v3902 = vcombine.low %v3837, %v3853
    %v3903 = vcombine.high %v3837, %v3853
    %v3905 = vunpack.c.l.s4 1934713408
    %v3906 = vunpack.c.0.s8 %v3905
    %v3907 = vlaneseq
    %v3908 = vshrl.u32 %v3907, 7
    %v3909 = vsub.s32 %v3906, %v3908
    %v3910 = vrot.slane %v3902, %v3909
    %v3912 = vunpack.c.l.s4 1934713408
    %v3913 = vunpack.c.0.s8 %v3912
    %v3914 = vlaneseq
    %v3915 = vshrl.u32 %v3914, 7
    %v3916 = vsub.s32 %v3913, %v3915
    %v3917 = vrot.slane %v3903, %v3916
    %v3918 = vcombine.low %v3862, %v3878
    %v3919 = vcombine.high %v3862, %v3878
    %v3921 = vunpack.c.l.s4 1934713408
    %v3922 = vunpack.c.0.s8 %v3921
    %v3923 = vlaneseq
    %v3924 = vshrl.u32 %v3923, 7
    %v3925 = vsub.s32 %v3922, %v3924
    %v3926 = vrot.slane %v3918, %v3925
    %v3928 = vunpack.c.l.s4 1934713408
    %v3929 = vunpack.c.0.s8 %v3928
    %v3930 = vlaneseq
    %v3931 = vshrl.u32 %v3930, 7
    %v3932 = vsub.s32 %v3929, %v3931
    %v3933 = vrot.slane %v3919, %v3932
    %v3934 = vcombine.low %v3869, %v3885
    %v3935 = vcombine.high %v3869, %v3885
    %v3937 = vunpack.c.l.s4 1934713408
    %v3938 = vunpack.c.0.s8 %v3937
    %v3939 = vlaneseq
    %v3940 = vshrl.u32 %v3939, 7
    %v3941 = vsub.s32 %v3938, %v3940
    %v3942 = vrot.slane %v3934, %v3941
    %v3944 = vunpack.c.l.s4 1934713408
    %v3945 = vunpack.c.0.s8 %v3944
    %v3946 = vlaneseq
    %v3947 = vshrl.u32 %v3946, 7
    %v3948 = vsub.s32 %v3945, %v3947
    %v3949 = vrot.slane %v3935, %v3948
    %v3950 = vcombine.low %v3894, %v3926
    %v3951 = vcombine.high %v3894, %v3926
    %v3952 = vcombine.low %v3901, %v3933
    %v3953 = vcombine.high %v3901, %v3933
    %v3954 = vcombine.low %v3910, %v3942
    %v3955 = vcombine.high %v3910, %v3942
    %v3956 = vcombine.low %v3917, %v3949
    %v3957 = vcombine.high %v3917, %v3949
    %3958 = vst [vmem:[%s6] sm:$0xff] %v3814
    %3959 = vst [vmem:[%s6 + $0x8] sm:$0xff] %v3815
    %3960 = vst [vmem:[%s6 + $0x10] sm:$0xff] %v3816
    %3961 = vst [vmem:[%s6 + $0x18] sm:$0xff] %v3817
    %3962 = vst [vmem:[%s6 + $0x20] sm:$0xff] %v3818
    %3963 = vst [vmem:[%s6 + $0x28] sm:$0xff] %v3819
    %3964 = vst [vmem:[%s6 + $0x30] sm:$0xff] %v3820
    %3965 = vst [vmem:[%s6 + $0x38] sm:$0xff] %v3821
    %3966 = vst [vmem:[%s6 + $0x40] sm:$0xff] %v3950
    %3967 = vst [vmem:[%s6 + $0x48] sm:$0xff] %v3951
    %3968 = vst [vmem:[%s6 + $0x50] sm:$0xff] %v3952
    %3969 = vst [vmem:[%s6 + $0x58] sm:$0xff] %v3953
    %3970 = vst [vmem:[%s6 + $0x60] sm:$0xff] %v3954
    %3971 = vst [vmem:[%s6 + $0x68] sm:$0xff] %v3955
    %3972 = vst [vmem:[%s6 + $0x70] sm:$0xff] %v3956
    %3973 = vst [vmem:[%s6 + $0x78] sm:$0xff] %v3957
    %v3974 = vadd.f32 %v3670, %v3672
    %v3975 = vadd.f32 %v3974, %v3674
    %v3976 = vadd.f32 %v3975, %v3676
    %v3977 = vadd.f32 %v3976, %v3678
    %v3978 = vadd.f32 %v3977, %v3680
    %v3979 = vadd.f32 %v3978, %v3682
    %v3980 = vadd.f32 %v3979, %v3684
    %v3981 = vadd.f32 %v3671, %v3673
    %v3982 = vadd.f32 %v3981, %v3675
    %v3983 = vadd.f32 %v3982, %v3677
    %v3984 = vadd.f32 %v3983, %v3679
    %v3985 = vadd.f32 %v3984, %v3681
    %v3986 = vadd.f32 %v3985, %v3683
    %v3987 = vadd.f32 %v3986, %v3685
    %v3988 = vrcp.pop 8.0
    %v3989 = vmul.f32 %v3980, %v3988
    %v3990 = vmul.f32 %v3987, %v3988
    %3991 = vst [vmem:[%s9] sm:$0xff] %v3989
    %3992 = vst [vmem:[%s9 + $0x8] sm:$0xff] %v3990
    // Predicated region
    $region38: #{seq2seq_forward.5} parent=1 // pred_check
      _
    $region39: #{seq2seq_forward.5} parent=1 // pred_check_branch
      %3994 = sbr.rel (0) target = $region41
    $region40: #{seq2seq_forward.5} parent=1 // pred_region
      _
    $region41: #{seq2seq_forward.5} parent=1 // pred_fallthru
      _
    // Predicated region
    $region42: #{seq2seq_forward.5} parent=1 // pred_check
      _
    $region43: #{seq2seq_forward.5} parent=1 // pred_check_branch
      %3996 = sbr.rel (0) target = $region45
    $region44: #{seq2seq_forward.5} parent=1 // pred_region
      %s3998 = ssub.s32 256, 256
      %3999 = vsyncadd [#allocation6], %s3998
      %s4000 = sshll.u32 [#allocation10], 4
      %s4001 = int_to_ptr.vmem [resolvable:$true] %s4000
      %4006 = dma.vmem_to_hbm [thread:$0]  %s4001, 256, %s7, [#allocation6], 128, 128, 8
    $region45: #{seq2seq_forward.5} parent=1 // pred_fallthru
      _
    // Predicated region
    $region46: #{seq2seq_forward.5} parent=1 // pred_check
      _
    $region47: #{seq2seq_forward.5} parent=1 // pred_check_branch
      %4008 = sbr.rel (0) target = $region49
    $region48: #{seq2seq_forward.5} parent=1 // pred_region
      %s4010 = ssub.s32 256, 256
      %4011 = vsyncadd [#allocation12], %s4010
      %s4012 = sshll.u32 [#allocation11], 4
      %s4013 = int_to_ptr.vmem [resolvable:$true] %s4012
      %4018 = dma.vmem_to_hbm [thread:$0]  %s4013, 256, %s8, [#allocation12], 128, 128, 8
    $region49: #{seq2seq_forward.5} parent=1 // pred_fallthru
      _
    // Predicated region
    $region50: #{seq2seq_forward.5} parent=1 // pred_check
      _
    $region51: #{seq2seq_forward.5} parent=1 // pred_check_branch
      %4020 = sbr.rel (0) target = $region53
    $region52: #{seq2seq_forward.5} parent=1 // pred_region
      _
    $region53: #{seq2seq_forward.5} parent=1 // pred_fallthru
      _
    // Predicated region
    $region54: #{seq2seq_forward.5} parent=1 // pred_check
      _
    $region55: #{seq2seq_forward.5} parent=1 // pred_check_branch
      %4022 = sbr.rel (0) target = $region57
    $region56: #{seq2seq_forward.5} parent=1 // pred_region
      _
    $region57: #{seq2seq_forward.5} parent=1 // pred_fallthru
      _
    // Predicated region
    $region58: #{seq2seq_forward.5} parent=1 // pred_check
      _
    $region59: #{seq2seq_forward.5} parent=1 // pred_check_branch
      %4024 = sbr.rel (0) target = $region61
    $region60: #{seq2seq_forward.5} parent=1 // pred_region
      %4025 = dma.done [#allocation6], 256
    $region61: #{seq2seq_forward.5} parent=1 // pred_fallthru
      _
    // Predicated region
    $region62: #{seq2seq_forward.5} parent=1 // pred_check
      _
    $region63: #{seq2seq_forward.5} parent=1 // pred_check_branch
      %4027 = sbr.rel (0) target = $region65
    $region64: #{seq2seq_forward.5} parent=1 // pred_region
      %4028 = dma.done [#allocation12], 256
    $region65: #{seq2seq_forward.5} parent=1 // pred_fallthru
      _
    // Predicated region
    $region66: #{seq2seq_forward.5} parent=1 // pred_check
      _
    $region67: #{seq2seq_forward.5} parent=1 // pred_check_branch
      %4030 = sbr.rel (0) target = $region69
    $region68: #{seq2seq_forward.5} parent=1 // pred_region
      _
    $region69: #{seq2seq_forward.5} parent=1 // pred_fallthru
      _
    %4031 = vsyncpa [#allocation5], 1
    %4032 = vsyncpa [#allocation8], 1
    %4033 = vsyncpa [#allocation6], 1
    %4034 = vsyncpa [#allocation12], 1

</llo_original>
